<compile_context>
chip_gen: v5e
topology: v5e:2x2
jax: 0.10.0
libtpu: 0.0.40
codegen_flags: <defaults>
</compile_context>

<pallas_src>
import functools

import jax
import jax.numpy as jnp
from jax.experimental import pallas as pl
from jax.experimental.pallas import tpu as pltpu

# ------------------------------- configuration -------------------------------
B = 2                     # batch
CIN = 3                   # RGB input channels
IMG = 16                  # small spatial size (real model uses 64x64)
PATCH = 4                 # patchify stride of the stand-in stem
S = IMG // PATCH          # 4  -> backbone feature map is (B, 512, 4, 4)
P = S * S                 # 16 spatial positions
CSTEM = 512               # backbone output channels (matches BatchNorm2d(512))
K_IM2COL = PATCH * PATCH * CIN        # 48
K_PAD = 128               # im2col K zero-padded to a full lane group
PROJ_IN = CSTEM * P       # 8192 = 512 * 4 * 4
FEAT_DIM = 512            # self.feat_dim
K_HALF = FEAT_DIM // 2    # self.k = 256
NUM_CLASSES = 1000
NCLS_PAD = 1024           # class dim padded to a multiple of 128 (masked in-kernel)


# ----------------------------- Pallas kernel bodies --------------------------
def stem_kernel(p_ref, w_ref, s1_ref, b1_ref, a_ref, s2_ref, b2_ref, o_ref):
    """Patchify conv as ONE padded im2col MXU matmul + BN + PReLU + BN2d.

    p_ref : (B*P, 128)  bf16 im2col patches (K zero-padded 48 -> 128)
    w_ref : (128, 512)  bf16 conv weight (padded K rows are zero)
    s1/b1 : stem BatchNorm folded affine;  a : PReLU alpha
    s2/b2 : output_layer BatchNorm2d folded affine (eval mode)
    o_ref : (B*P, 512)  bf16, lane-dense output (512 = 4*128)
    """
    y = jnp.dot(p_ref[...], w_ref[...], preferred_element_type=jnp.float32)
    y = y * s1_ref[...] + b1_ref[...]                 # stem BatchNorm (affine)
    y = jnp.where(y >= 0.0, y, y * a_ref[...])        # PReLU (per-channel alpha)
    y = y * s2_ref[...] + b2_ref[...]                 # output_layer BatchNorm2d
    # Dropout(): identity at inference.
    o_ref[...] = y.astype(o_ref.dtype)


def head_kernel(x_ref, pw_ref, pb_ref, g1_ref, be1_ref,
                stw_ref, stb_ref, eps_ref, fcw_ref, fcb_ref,
                feat_ref, out_ref, iden_ref, mu_ref, std_ref,
                acc_ref, *, k_half, n_classes):
    """Fused head: Linear(8192,512)+BN1d -> st_layer -> reparam -> fc+softmax+argmax.

    Grid axis 0 is the K reduction of the projection Linear (bf16 x bf16 -> f32).
    Everything else runs once under the final pl.when.
    """
    k = pl.program_id(0)

    @pl.when(k == 0)
    def _():
        acc_ref[...] = jnp.zeros_like(acc_ref)

    acc_ref[...] += jnp.dot(x_ref[...], pw_ref[...],
                            preferred_element_type=jnp.float32)

    @pl.when(k == pl.num_programs(0) - 1)
    def _():
        # output_layer: Linear bias + BatchNorm1d(512) (eval-mode folded affine)
        feat = (acc_ref[...] + pb_ref[...]) * g1_ref[...] + be1_ref[...]   # (B, 512)
        feat_ref[...] = feat

        # st_layer: Linear(512, 2*k)
        statis = jnp.dot(feat.astype(stw_ref.dtype), stw_ref[...],
                         preferred_element_type=jnp.float32) + stb_ref[...]
        mu = statis[:, :k_half]
        sr = statis[:, k_half:] - 5.0
        # softplus(sr), numerically stable form
        std = jnp.maximum(sr, 0.0) + jnp.log(1.0 + jnp.exp(-jnp.abs(sr)))
        mu_ref[...] = mu
        std_ref[...] = std

        # reparameterization: res = mu + std * eps
        res = mu + std * eps_ref[...]

        # fc_layer: Linear(k, n_classes) + Softmax(dim=1).  Class dim is padded to
        # a multiple of 128; padded columns are masked so they never contribute.
        logits = jnp.dot(res.astype(fcw_ref.dtype), fcw_ref[...],
                         preferred_element_type=jnp.float32) + fcb_ref[...]
        col = jax.lax.broadcasted_iota(jnp.int32, logits.shape, 1)
        logits = jnp.where(col < n_classes, logits, -1e30)
        m = jnp.max(logits, axis=-1, keepdims=True)
        e = jnp.exp(logits - m)
        probs = e / jnp.sum(e, axis=-1, keepdims=True)
        out_ref[...] = probs

        # iden = argmax(out, dim=1)  (first index attaining the max, like torch.max)
        is_max = probs == jnp.max(probs, axis=-1, keepdims=True)
        cand = jnp.where(is_max, col.astype(jnp.float32),
                         jnp.float32(logits.shape[-1]))
        iden_ref[...] = jnp.min(cand, axis=-1, keepdims=True).astype(jnp.int32)


# ------------------------------- kernel wrappers ------------------------------
def pallas_stem(patches, w, s1, b1, alpha, s2, b2):
    M = patches.shape[0]
    vec = lambda v: v.reshape(1, CSTEM)
    const = lambda i: (0, 0)
    return pl.pallas_call(
        stem_kernel,
        out_shape=jax.ShapeDtypeStruct((M, CSTEM), jnp.bfloat16),
        grid_spec=pltpu.PrefetchScalarGridSpec(
            num_scalar_prefetch=0,
            grid=(1,),
            in_specs=[
                pl.BlockSpec((M, K_PAD), const),
                pl.BlockSpec((K_PAD, CSTEM), const),
                pl.BlockSpec((1, CSTEM), const),
                pl.BlockSpec((1, CSTEM), const),
                pl.BlockSpec((1, CSTEM), const),
                pl.BlockSpec((1, CSTEM), const),
                pl.BlockSpec((1, CSTEM), const),
            ],
            out_specs=pl.BlockSpec((M, CSTEM), const),
        ),
        compiler_params=pltpu.CompilerParams(
            dimension_semantics=("arbitrary",)),
    )(patches, w, vec(s1), vec(b1), vec(alpha), vec(s2), vec(b2))


def pallas_head(flat, proj_w, proj_b, bn1_scale, bn1_shift,
                st_w, st_b, eps, fc_w, fc_b, *, tk=2048):
    Bb, Kp = flat.shape
    assert Kp % tk == 0
    n_pad = fc_w.shape[1]
    const = lambda k: (0, 0)
    kern = functools.partial(head_kernel, k_half=K_HALF, n_classes=NUM_CLASSES)
    out_shape = (
        jax.ShapeDtypeStruct((Bb, FEAT_DIM), jnp.float32),   # feat
        jax.ShapeDtypeStruct((Bb, n_pad), jnp.float32),      # out (softmax, padded)
        jax.ShapeDtypeStruct((Bb, 1), jnp.int32),            # iden
        jax.ShapeDtypeStruct((Bb, K_HALF), jnp.float32),     # mu
        jax.ShapeDtypeStruct((Bb, K_HALF), jnp.float32),     # std
    )
    out_specs = (
        pl.BlockSpec((Bb, FEAT_DIM), const),
        pl.BlockSpec((Bb, n_pad), const),
        pl.BlockSpec((Bb, 1), const),
        pl.BlockSpec((Bb, K_HALF), const),
        pl.BlockSpec((Bb, K_HALF), const),
    )
    return pl.pallas_call(
        kern,
        out_shape=out_shape,
        grid_spec=pltpu.PrefetchScalarGridSpec(
            num_scalar_prefetch=0,
            grid=(Kp // tk,),
            in_specs=[
                pl.BlockSpec((Bb, tk), lambda k: (0, k)),        # flat activations
                pl.BlockSpec((tk, FEAT_DIM), lambda k: (k, 0)),  # proj_w K-tiles
                pl.BlockSpec((1, FEAT_DIM), const),              # proj_b   (DMA'd once)
                pl.BlockSpec((1, FEAT_DIM), const),              # bn1d scale
                pl.BlockSpec((1, FEAT_DIM), const),              # bn1d shift
                pl.BlockSpec((FEAT_DIM, FEAT_DIM), const),       # st_w
                pl.BlockSpec((1, FEAT_DIM), const),              # st_b
                pl.BlockSpec((Bb, K_HALF), const),               # eps
                pl.BlockSpec((K_HALF, n_pad), const),            # fc_w
                pl.BlockSpec((1, n_pad), const),                 # fc_b
            ],
            out_specs=out_specs,
            scratch_shapes=[pltpu.VMEM((Bb, FEAT_DIM), jnp.float32)],
        ),
        compiler_params=pltpu.CompilerParams(
            dimension_semantics=("arbitrary",)),
    )(flat, proj_w, proj_b.reshape(1, FEAT_DIM),
      bn1_scale.reshape(1, FEAT_DIM), bn1_shift.reshape(1, FEAT_DIM),
      st_w, st_b.reshape(1, FEAT_DIM), eps, fc_w, fc_b.reshape(1, n_pad))


# ----------------------------------- glue -------------------------------------
def extract_patches(x_nchw):
    """NCHW -> (B*P, 128) bf16 im2col patches for the stride-4 patchify stem."""
    x = jnp.transpose(x_nchw, (0, 2, 3, 1)).astype(jnp.float32)     # NHWC
    x = x.reshape(B, S, PATCH, S, PATCH, CIN)
    x = jnp.transpose(x, (0, 1, 3, 2, 4, 5))                        # (B,S,S,PATCH,PATCH,CIN)
    p = x.reshape(B * P, K_IM2COL)
    p = jnp.pad(p, ((0, 0), (0, K_PAD - K_IM2COL)))
    return p.astype(jnp.bfloat16)


@jax.jit
def ir50_vib_forward(params, x_nchw, eps):
    """Returns (feat, out, iden, mu, std), mirroring IR50_vib.forward."""
    patches = extract_patches(x_nchw)
    fmap = pallas_stem(patches, params["stem_w"], params["stem_bn_scale"],
                       params["stem_bn_shift"], params["prelu_alpha"],
                       params["obn_scale"], params["obn_shift"])    # (B*P, 512) bf16
    # Flatten: free row-major reshape (B*P, 512) -> (B, 8192).  Ordering is
    # spatial-major/channel-minor; equivalent to the PyTorch NCHW flatten up to a
    # fixed permutation of proj_w rows (weights here are synthetic anyway).
    flat = fmap.reshape(B, PROJ_IN)
    feat, out_pad, iden, mu, std = pallas_head(
        flat, params["proj_w"], params["proj_b"],
        params["bn1_scale"], params["bn1_shift"],
        params["st_w"], params["st_b"], eps,
        params["fc_w"], params["fc_b"], tk=2048)
    out = out_pad[:, :NUM_CLASSES]                                  # drop padded classes
    return feat, out, iden, mu, std


def reference_forward(params, x_nchw, eps):
    """Pure-JAX reference (same bf16 cast points) for correctness checking."""
    patches = extract_patches(x_nchw)
    y = jnp.dot(patches, params["stem_w"], preferred_element_type=jnp.float32)
    y = y * params["stem_bn_scale"] + params["stem_bn_shift"]
    y = jnp.where(y >= 0.0, y, y * params["prelu_alpha"])
    y = y * params["obn_scale"] + params["obn_shift"]
    flat = y.astype(jnp.bfloat16).reshape(B, PROJ_IN)
    feat = jnp.dot(flat, params["proj_w"], preferred_element_type=jnp.float32)
    feat = (feat + params["proj_b"]) * params["bn1_scale"] + params["bn1_shift"]
    statis = jnp.dot(feat.astype(jnp.bfloat16), params["st_w"],
                     preferred_element_type=jnp.float32) + params["st_b"]
    mu = statis[:, :K_HALF]
    sr = statis[:, K_HALF:] - 5.0
    std = jnp.maximum(sr, 0.0) + jnp.log(1.0 + jnp.exp(-jnp.abs(sr)))
    res = mu + std * eps
    logits = jnp.dot(res.astype(jnp.bfloat16), params["fc_w"],
                     preferred_element_type=jnp.float32) + params["fc_b"]
    logits = logits[:, :NUM_CLASSES]
    m = jnp.max(logits, axis=-1, keepdims=True)
    e = jnp.exp(logits - m)
    out = e / jnp.sum(e, axis=-1, keepdims=True)
    iden = jnp.argmax(out, axis=1).reshape(-1, 1).astype(jnp.int32)
    return feat, out, iden, mu, std


def init_params(key):
    ks = jax.random.split(key, 13)
    n = jax.random.normal
    stem_w = 0.05 * n(ks[0], (K_PAD, CSTEM), jnp.float32)
    stem_w = stem_w * (jnp.arange(K_PAD) < K_IM2COL)[:, None]       # zero padded K rows
    cls_mask = (jnp.arange(NCLS_PAD) < NUM_CLASSES).astype(jnp.float32)
    fc_w = 0.05 * n(ks[1], (K_HALF, NCLS_PAD), jnp.float32) * cls_mask[None, :]
    return {
        # stand-in backbone stem (conv as im2col matmul, BN affine, PReLU)
        "stem_w": stem_w.astype(jnp.bfloat16),
        "stem_bn_scale": 1.0 + 0.1 * n(ks[2], (CSTEM,), jnp.float32),
        "stem_bn_shift": 0.1 * n(ks[3], (CSTEM,), jnp.float32),
        "prelu_alpha": jnp.full((CSTEM,), 0.25, jnp.float32),
        # output_layer: BatchNorm2d(512) eval-mode affine
        "obn_scale": 1.0 + 0.1 * n(ks[4], (CSTEM,), jnp.float32),
        "obn_shift": 0.1 * n(ks[5], (CSTEM,), jnp.float32),
        # output_layer: Linear(512*4*4, 512) + BatchNorm1d(512)
        "proj_w": (0.02 * n(ks[6], (PROJ_IN, FEAT_DIM), jnp.float32)).astype(jnp.bfloat16),
        "proj_b": 0.01 * n(ks[7], (FEAT_DIM,), jnp.float32),
        "bn1_scale": 1.0 + 0.1 * n(ks[8], (FEAT_DIM,), jnp.float32),
        "bn1_shift": 0.1 * n(ks[9], (FEAT_DIM,), jnp.float32),
        # st_layer: Linear(512, 512)
        "st_w": (0.05 * n(ks[10], (FEAT_DIM, FEAT_DIM), jnp.float32)).astype(jnp.bfloat16),
        "st_b": 0.01 * n(ks[11], (FEAT_DIM,), jnp.float32),
        # fc_layer: Linear(256, num_classes); classes padded 1000 -> 1024 with zeros
        "fc_w": fc_w.astype(jnp.bfloat16),
        "fc_b": 0.01 * n(ks[12], (NCLS_PAD,), jnp.float32) * cls_mask,
    }


if __name__ == "__main__":
    key = jax.random.PRNGKey(0)
    pkey, xkey, ekey = jax.random.split(key, 3)
    params = init_params(pkey)

    # PyTorch-style NCHW input: batch=2, channels=3, spatial=16
    x = jax.random.normal(xkey, (B, CIN, IMG, IMG), jnp.float32)
    # TODO(synk): torch.FloatTensor(std.size()).normal_().cuda() is device RNG; a
    # deterministic jax.random normal passed in as an input stands in for it.
    eps = jax.random.normal(ekey, (B, K_HALF), jnp.float32)

    feat, out, iden, mu, std = ir50_vib_forward(params, x, eps)
    jax.block_until_ready((feat, out, iden, mu, std))

    rfeat, rout, riden, rmu, rstd = reference_forward(params, x, eps)
    assert feat.shape == (B, FEAT_DIM) and out.shape == (B, NUM_CLASSES)
    assert iden.shape == (B, 1) and mu.shape == (B, K_HALF) and std.shape == (B, K_HALF)
    assert jnp.allclose(feat, rfeat, atol=1e-2, rtol=1e-2)
    assert jnp.allclose(mu, rmu, atol=1e-2, rtol=1e-2)
    assert jnp.allclose(std, rstd, atol=1e-3, rtol=1e-2)
    assert jnp.allclose(out, rout, atol=1e-3, rtol=1e-2)
    assert jnp.allclose(jnp.sum(out, axis=1), 1.0, atol=1e-3)
    assert jnp.all(iden == riden)

    print("KERNEL_OK")
</pallas_src>

<mosaic_0001>
module attributes {stable_mosaic.version = 11 : i64} {
  func.func @stem_kernel(%arg0: i32, %arg1: memref<32x128xbf16, #tpu.memory_space<vmem>>, %arg2: memref<128x512xbf16, #tpu.memory_space<vmem>>, %arg3: memref<1x512xf32, #tpu.memory_space<vmem>>, %arg4: memref<1x512xf32, #tpu.memory_space<vmem>>, %arg5: memref<1x512xf32, #tpu.memory_space<vmem>>, %arg6: memref<1x512xf32, #tpu.memory_space<vmem>>, %arg7: memref<1x512xf32, #tpu.memory_space<vmem>>, %arg8: memref<32x512xbf16, #tpu.memory_space<vmem>>) attributes {dimension_semantics = [#tpu.dimension_semantics<arbitrary>], iteration_bounds = array<i64: 1>, scalar_prefetch = 0 : i64, scratch_operands = 0 : i64, tpu.core_type = #tpu.core_type<tc>, window_params = [{pipeline_mode = #tpu.pipeline_mode<synchronous>, transform_indices = @transform_0, window_bounds = array<i64: 32, 128>}, {pipeline_mode = #tpu.pipeline_mode<synchronous>, transform_indices = @transform_1, window_bounds = array<i64: 128, 512>}, {pipeline_mode = #tpu.pipeline_mode<synchronous>, transform_indices = @transform_2, window_bounds = array<i64: 1, 512>}, {pipeline_mode = #tpu.pipeline_mode<synchronous>, transform_indices = @transform_3, window_bounds = array<i64: 1, 512>}, {pipeline_mode = #tpu.pipeline_mode<synchronous>, transform_indices = @transform_4, window_bounds = array<i64: 1, 512>}, {pipeline_mode = #tpu.pipeline_mode<synchronous>, transform_indices = @transform_5, window_bounds = array<i64: 1, 512>}, {pipeline_mode = #tpu.pipeline_mode<synchronous>, transform_indices = @transform_6, window_bounds = array<i64: 1, 512>}, {pipeline_mode = #tpu.pipeline_mode<synchronous>, transform_indices = @transform_7, window_bounds = array<i64: 32, 512>}]} {
    %c0 = arith.constant 0 : index
    %c0_0 = arith.constant 0 : index
    %0 = vector.load %arg1[%c0, %c0_0] : memref<32x128xbf16, #tpu.memory_space<vmem>>, vector<32x128xbf16>
    %c0_1 = arith.constant 0 : index
    %c0_2 = arith.constant 0 : index
    %1 = vector.load %arg2[%c0_1, %c0_2] : memref<128x512xbf16, #tpu.memory_space<vmem>>, vector<128x512xbf16>
    %cst = arith.constant dense<0.000000e+00> : vector<32x512xf32>
    %2 = tpu.matmul %0, %1, %cst {dimension_numbers = #tpu.dot_dimension_numbers<[1], [0], [0], [1], [0, 0, 1, 1], [], []>} : vector<32x128xbf16>, vector<128x512xbf16>, vector<32x512xf32> -> vector<32x512xf32>
    %c0_3 = arith.constant 0 : index
    %c0_4 = arith.constant 0 : index
    %3 = vector.load %arg3[%c0_3, %c0_4] : memref<1x512xf32, #tpu.memory_space<vmem>>, vector<1x512xf32>
    %4 = vector.broadcast %3 : vector<1x512xf32> to vector<32x512xf32>
    %5 = arith.mulf %2, %4 : vector<32x512xf32>
    %c0_5 = arith.constant 0 : index
    %c0_6 = arith.constant 0 : index
    %6 = vector.load %arg4[%c0_5, %c0_6] : memref<1x512xf32, #tpu.memory_space<vmem>>, vector<1x512xf32>
    %7 = vector.broadcast %6 : vector<1x512xf32> to vector<32x512xf32>
    %8 = arith.addf %5, %7 : vector<32x512xf32>
    %cst_7 = arith.constant 0.000000e+00 : f32
    %9 = vector.broadcast %cst_7 : f32 to vector<32x512xf32>
    %10 = arith.cmpf oge, %8, %9 : vector<32x512xf32>
    %c0_8 = arith.constant 0 : index
    %c0_9 = arith.constant 0 : index
    %11 = vector.load %arg5[%c0_8, %c0_9] : memref<1x512xf32, #tpu.memory_space<vmem>>, vector<1x512xf32>
    %12 = vector.broadcast %11 : vector<1x512xf32> to vector<32x512xf32>
    %13 = arith.mulf %8, %12 : vector<32x512xf32>
    %14 = arith.select %10, %8, %13 : vector<32x512xi1>, vector<32x512xf32>
    %c0_10 = arith.constant 0 : index
    %c0_11 = arith.constant 0 : index
    %15 = vector.load %arg6[%c0_10, %c0_11] : memref<1x512xf32, #tpu.memory_space<vmem>>, vector<1x512xf32>
    %16 = vector.broadcast %15 : vector<1x512xf32> to vector<32x512xf32>
    %17 = arith.mulf %14, %16 : vector<32x512xf32>
    %c0_12 = arith.constant 0 : index
    %c0_13 = arith.constant 0 : index
    %18 = vector.load %arg7[%c0_12, %c0_13] : memref<1x512xf32, #tpu.memory_space<vmem>>, vector<1x512xf32>
    %19 = vector.broadcast %18 : vector<1x512xf32> to vector<32x512xf32>
    %20 = arith.addf %17, %19 : vector<32x512xf32>
    %21 = arith.truncf %20 : vector<32x512xf32> to vector<32x512xbf16>
    %c0_14 = arith.constant 0 : index
    %c0_15 = arith.constant 0 : index
    %22 = vector.load %arg8[%c0_14, %c0_15] : memref<32x512xbf16, #tpu.memory_space<vmem>>, vector<32x512xbf16>
    tpu.vector_store %arg8[%c0_14, %c0_15], %21 {strides = array<i32>} : memref<32x512xbf16, #tpu.memory_space<vmem>>, vector<32x512xbf16>,
    return
  }
  func.func @transform_0(%arg0: i32) -> (i32, i32) {
    %c0_i32 = arith.constant 0 : i32
    %c0_i32_0 = arith.constant 0 : i32
    %c0_i32_1 = arith.constant 0 : i32
    return %c0_i32, %c0_i32_0 : i32, i32
  }
  func.func @transform_1(%arg0: i32) -> (i32, i32) {
    %c0_i32 = arith.constant 0 : i32
    %c0_i32_0 = arith.constant 0 : i32
    %c0_i32_1 = arith.constant 0 : i32
    return %c0_i32, %c0_i32_0 : i32, i32
  }
  func.func @transform_2(%arg0: i32) -> (i32, i32) {
    %c0_i32 = arith.constant 0 : i32
    %c0_i32_0 = arith.constant 0 : i32
    %c0_i32_1 = arith.constant 0 : i32
    return %c0_i32, %c0_i32_0 : i32, i32
  }
  func.func @transform_3(%arg0: i32) -> (i32, i32) {
    %c0_i32 = arith.constant 0 : i32
    %c0_i32_0 = arith.constant 0 : i32
    %c0_i32_1 = arith.constant 0 : i32
    return %c0_i32, %c0_i32_0 : i32, i32
  }
  func.func @transform_4(%arg0: i32) -> (i32, i32) {
    %c0_i32 = arith.constant 0 : i32
    %c0_i32_0 = arith.constant 0 : i32
    %c0_i32_1 = arith.constant 0 : i32
    return %c0_i32, %c0_i32_0 : i32, i32
  }
  func.func @transform_5(%arg0: i32) -> (i32, i32) {
    %c0_i32 = arith.constant 0 : i32
    %c0_i32_0 = arith.constant 0 : i32
    %c0_i32_1 = arith.constant 0 : i32
    return %c0_i32, %c0_i32_0 : i32, i32
  }
  func.func @transform_6(%arg0: i32) -> (i32, i32) {
    %c0_i32 = arith.constant 0 : i32
    %c0_i32_0 = arith.constant 0 : i32
    %c0_i32_1 = arith.constant 0 : i32
    return %c0_i32, %c0_i32_0 : i32, i32
  }
  func.func @transform_7(%arg0: i32) -> (i32, i32) {
    %c0_i32 = arith.constant 0 : i32
    %c0_i32_0 = arith.constant 0 : i32
    %c0_i32_1 = arith.constant 0 : i32
    return %c0_i32, %c0_i32_0 : i32, i32
  }
}

module attributes {stable_mosaic.version = 11 : i64} {
  func.func @head_kernel(%arg0: i32, %arg1: memref<2x2048xbf16, #tpu.memory_space<vmem>>, %arg2: memref<2048x512xbf16, #tpu.memory_space<vmem>>, %arg3: memref<1x512xf32, #tpu.memory_space<vmem>>, %arg4: memref<1x512xf32, #tpu.memory_space<vmem>>, %arg5: memref<1x512xf32, #tpu.memory_space<vmem>>, %arg6: memref<512x512xbf16, #tpu.memory_space<vmem>>, %arg7: memref<1x512xf32, #tpu.memory_space<vmem>>, %arg8: memref<2x256xf32, #tpu.memory_space<vmem>>, %arg9: memref<256x1024xbf16, #tpu.memory_space<vmem>>, %arg10: memref<1x1024xf32, #tpu.memory_space<vmem>>, %arg11: memref<2x512xf32, #tpu.memory_space<vmem>>, %arg12: memref<2x1024xf32, #tpu.memory_space<vmem>>, %arg13: memref<2x1xi32, #tpu.memory_space<vmem>>, %arg14: memref<2x256xf32, #tpu.memory_space<vmem>>, %arg15: memref<2x256xf32, #tpu.memory_space<vmem>>, %arg16: memref<2x512xf32, #tpu.memory_space<vmem>>) attributes {dimension_semantics = [#tpu.dimension_semantics<arbitrary>], iteration_bounds = array<i64: 4>, scalar_prefetch = 0 : i64, scratch_operands = 1 : i64, tpu.core_type = #tpu.core_type<tc>, window_params = [{transform_indices = @transform_0, window_bounds = array<i64: 2, 2048>}, {transform_indices = @transform_1, window_bounds = array<i64: 2048, 512>}, {pipeline_mode = #tpu.pipeline_mode<synchronous>, transform_indices = @transform_2, window_bounds = array<i64: 1, 512>}, {pipeline_mode = #tpu.pipeline_mode<synchronous>, transform_indices = @transform_3, window_bounds = array<i64: 1, 512>}, {pipeline_mode = #tpu.pipeline_mode<synchronous>, transform_indices = @transform_4, window_bounds = array<i64: 1, 512>}, {pipeline_mode = #tpu.pipeline_mode<synchronous>, transform_indices = @transform_5, window_bounds = array<i64: 512, 512>}, {pipeline_mode = #tpu.pipeline_mode<synchronous>, transform_indices = @transform_6, window_bounds = array<i64: 1, 512>}, {pipeline_mode = #tpu.pipeline_mode<synchronous>, transform_indices = @transform_7, window_bounds = array<i64: 2, 256>}, {pipeline_mode = #tpu.pipeline_mode<synchronous>, transform_indices = @transform_8, window_bounds = array<i64: 256, 1024>}, {pipeline_mode = #tpu.pipeline_mode<synchronous>, transform_indices = @transform_9, window_bounds = array<i64: 1, 1024>}, {pipeline_mode = #tpu.pipeline_mode<synchronous>, transform_indices = @transform_10, window_bounds = array<i64: 2, 512>}, {pipeline_mode = #tpu.pipeline_mode<synchronous>, transform_indices = @transform_11, window_bounds = array<i64: 2, 1024>}, {pipeline_mode = #tpu.pipeline_mode<synchronous>, transform_indices = @transform_12, window_bounds = array<i64: 2, 1>}, {pipeline_mode = #tpu.pipeline_mode<synchronous>, transform_indices = @transform_13, window_bounds = array<i64: 2, 256>}, {pipeline_mode = #tpu.pipeline_mode<synchronous>, transform_indices = @transform_14, window_bounds = array<i64: 2, 256>}]} {
    %c0_i32 = arith.constant 0 : i32
    %0 = arith.cmpi eq, %arg0, %c0_i32 : i32
    %1 = arith.extui %0 : i1 to i32
    %c0_i32_0 = arith.constant 0 : i32
    %2 = arith.cmpi ne, %1, %c0_i32_0 : i32
    scf.if %2 {
      %cst_9 = arith.constant 0.000000e+00 : f32
      %12 = vector.broadcast %cst_9 : f32 to vector<2x512xf32>
      %c0_10 = arith.constant 0 : index
      %c0_11 = arith.constant 0 : index
      %13 = vector.load %arg16[%c0_10, %c0_11] : memref<2x512xf32, #tpu.memory_space<vmem>>, vector<2x512xf32>
      tpu.vector_store %arg16[%c0_10, %c0_11], %12 {strides = array<i32>} : memref<2x512xf32, #tpu.memory_space<vmem>>, vector<2x512xf32>,
    } else {
    }
    %c0 = arith.constant 0 : index
    %c0_1 = arith.constant 0 : index
    %3 = vector.load %arg16[%c0, %c0_1] : memref<2x512xf32, #tpu.memory_space<vmem>>, vector<2x512xf32>
    %c0_2 = arith.constant 0 : index
    %c0_3 = arith.constant 0 : index
    %4 = vector.load %arg1[%c0_2, %c0_3] : memref<2x2048xbf16, #tpu.memory_space<vmem>>, vector<2x2048xbf16>
    %c0_4 = arith.constant 0 : index
    %c0_5 = arith.constant 0 : index
    %5 = vector.load %arg2[%c0_4, %c0_5] : memref<2048x512xbf16, #tpu.memory_space<vmem>>, vector<2048x512xbf16>
    %cst = arith.constant dense<0.000000e+00> : vector<2x512xf32>
    %6 = tpu.matmul %4, %5, %cst {dimension_numbers = #tpu.dot_dimension_numbers<[1], [0], [0], [1], [0, 0, 1, 1], [], []>} : vector<2x2048xbf16>, vector<2048x512xbf16>, vector<2x512xf32> -> vector<2x512xf32>
    %7 = arith.addf %3, %6 : vector<2x512xf32>
    %c0_6 = arith.constant 0 : index
    %c0_7 = arith.constant 0 : index
    %8 = vector.load %arg16[%c0_6, %c0_7] : memref<2x512xf32, #tpu.memory_space<vmem>>, vector<2x512xf32>
    tpu.vector_store %arg16[%c0_6, %c0_7], %7 {strides = array<i32>} : memref<2x512xf32, #tpu.memory_space<vmem>>, vector<2x512xf32>,
    %c3_i32 = arith.constant 3 : i32
    %9 = arith.cmpi eq, %arg0, %c3_i32 : i32
    %10 = arith.extui %9 : i1 to i32
    %c0_i32_8 = arith.constant 0 : i32
    %11 = arith.cmpi ne, %10, %c0_i32_8 : i32
    scf.if %11 {
      %c0_9 = arith.constant 0 : index
      %c0_10 = arith.constant 0 : index
      %12 = vector.load %arg16[%c0_9, %c0_10] : memref<2x512xf32, #tpu.memory_space<vmem>>, vector<2x512xf32>
      %c0_11 = arith.constant 0 : index
      %c0_12 = arith.constant 0 : index
      %13 = vector.load %arg3[%c0_11, %c0_12] : memref<1x512xf32, #tpu.memory_space<vmem>>, vector<1x512xf32>
      %14 = vector.broadcast %13 : vector<1x512xf32> to vector<2x512xf32>
      %15 = arith.addf %12, %14 : vector<2x512xf32>
      %c0_13 = arith.constant 0 : index
      %c0_14 = arith.constant 0 : index
      %16 = vector.load %arg4[%c0_13, %c0_14] : memref<1x512xf32, #tpu.memory_space<vmem>>, vector<1x512xf32>
      %17 = vector.broadcast %16 : vector<1x512xf32> to vector<2x512xf32>
      %18 = arith.mulf %15, %17 : vector<2x512xf32>
      %c0_15 = arith.constant 0 : index
      %c0_16 = arith.constant 0 : index
      %19 = vector.load %arg5[%c0_15, %c0_16] : memref<1x512xf32, #tpu.memory_space<vmem>>, vector<1x512xf32>
      %20 = vector.broadcast %19 : vector<1x512xf32> to vector<2x512xf32>
      %21 = arith.addf %18, %20 : vector<2x512xf32>
      %c0_17 = arith.constant 0 : index
      %c0_18 = arith.constant 0 : index
      %22 = vector.load %arg11[%c0_17, %c0_18] : memref<2x512xf32, #tpu.memory_space<vmem>>, vector<2x512xf32>
      tpu.vector_store %arg11[%c0_17, %c0_18], %21 {strides = array<i32>} : memref<2x512xf32, #tpu.memory_space<vmem>>, vector<2x512xf32>,
      %23 = arith.truncf %21 : vector<2x512xf32> to vector<2x512xbf16>
      %c0_19 = arith.constant 0 : index
      %c0_20 = arith.constant 0 : index
      %24 = vector.load %arg6[%c0_19, %c0_20] : memref<512x512xbf16, #tpu.memory_space<vmem>>, vector<512x512xbf16>
      %cst_21 = arith.constant dense<0.000000e+00> : vector<2x512xf32>
      %25 = tpu.matmul %23, %24, %cst_21 {dimension_numbers = #tpu.dot_dimension_numbers<[1], [0], [0], [1], [0, 0, 1, 1], [], []>} : vector<2x512xbf16>, vector<512x512xbf16>, vector<2x512xf32> -> vector<2x512xf32>
      %c0_22 = arith.constant 0 : index
      %c0_23 = arith.constant 0 : index
      %26 = vector.load %arg7[%c0_22, %c0_23] : memref<1x512xf32, #tpu.memory_space<vmem>>, vector<1x512xf32>
      %27 = vector.broadcast %26 : vector<1x512xf32> to vector<2x512xf32>
      %28 = arith.addf %25, %27 : vector<2x512xf32>
      %29 = vector.extract_strided_slice %28 {offsets = [0, 0], sizes = [2, 256], strides = [1, 1]} : vector<2x512xf32> to vector<2x256xf32>
      %30 = vector.extract_strided_slice %28 {offsets = [0, 256], sizes = [2, 256], strides = [1, 1]} : vector<2x512xf32> to vector<2x256xf32>
      %cst_24 = arith.constant 5.000000e+00 : f32
      %31 = vector.broadcast %cst_24 : f32 to vector<2x256xf32>
      %32 = arith.subf %30, %31 : vector<2x256xf32>
      %cst_25 = arith.constant 0.000000e+00 : f32
      %33 = vector.broadcast %cst_25 : f32 to vector<2x256xf32>
      %34 = arith.maximumf %32, %33 : vector<2x256xf32>
      %35 = math.absf %32 : vector<2x256xf32>
      %cst_26 = arith.constant 0.000000e+00 : f32
      %36 = vector.broadcast %cst_26 : f32 to vector<2x256xf32>
      %37 = arith.subf %36, %35 : vector<2x256xf32>
      %38 = math.exp %37 : vector<2x256xf32>
      %cst_27 = arith.constant 1.000000e+00 : f32
      %39 = vector.broadcast %cst_27 : f32 to vector<2x256xf32>
      %40 = arith.addf %39, %38 : vector<2x256xf32>
      %41 = math.log %40 : vector<2x256xf32>
      %42 = arith.addf %34, %41 : vector<2x256xf32>
      %c0_28 = arith.constant 0 : index
      %c0_29 = arith.constant 0 : index
      %43 = vector.load %arg14[%c0_28, %c0_29] : memref<2x256xf32, #tpu.memory_space<vmem>>, vector<2x256xf32>
      tpu.vector_store %arg14[%c0_28, %c0_29], %29 {strides = array<i32>} : memref<2x256xf32, #tpu.memory_space<vmem>>, vector<2x256xf32>,
      %c0_30 = arith.constant 0 : index
      %c0_31 = arith.constant 0 : index
      %44 = vector.load %arg15[%c0_30, %c0_31] : memref<2x256xf32, #tpu.memory_space<vmem>>, vector<2x256xf32>
      tpu.vector_store %arg15[%c0_30, %c0_31], %42 {strides = array<i32>} : memref<2x256xf32, #tpu.memory_space<vmem>>, vector<2x256xf32>,
      %c0_32 = arith.constant 0 : index
      %c0_33 = arith.constant 0 : index
      %45 = vector.load %arg8[%c0_32, %c0_33] : memref<2x256xf32, #tpu.memory_space<vmem>>, vector<2x256xf32>
      %46 = arith.mulf %42, %45 : vector<2x256xf32>
      %47 = arith.addf %29, %46 : vector<2x256xf32>
      %48 = arith.truncf %47 : vector<2x256xf32> to vector<2x256xbf16>
      %c0_34 = arith.constant 0 : index
      %c0_35 = arith.constant 0 : index
      %49 = vector.load %arg9[%c0_34, %c0_35] : memref<256x1024xbf16, #tpu.memory_space<vmem>>, vector<256x1024xbf16>
      %cst_36 = arith.constant dense<0.000000e+00> : vector<2x1024xf32>
      %50 = tpu.matmul %48, %49, %cst_36 {dimension_numbers = #tpu.dot_dimension_numbers<[1], [0], [0], [1], [0, 0, 1, 1], [], []>} : vector<2x256xbf16>, vector<256x1024xbf16>, vector<2x1024xf32> -> vector<2x1024xf32>
      %c0_37 = arith.constant 0 : index
      %c0_38 = arith.constant 0 : index
      %51 = vector.load %arg10[%c0_37, %c0_38] : memref<1x1024xf32, #tpu.memory_space<vmem>>, vector<1x1024xf32>
      %52 = vector.broadcast %51 : vector<1x1024xf32> to vector<2x1024xf32>
      %53 = arith.addf %50, %52 : vector<2x1024xf32>
      %54 = tpu.iota {dimensions = array<i32: 1>} : vector<2x1024xi32>
      %c1000_i32 = arith.constant 1000 : i32
      %55 = vector.broadcast %c1000_i32 : i32 to vector<2x1024xi32>
      %56 = arith.cmpi slt, %54, %55 : vector<2x1024xi32>
      %cst_39 = arith.constant -1.000000e+30 : f32
      %57 = vector.broadcast %cst_39 : f32 to vector<2x1024xf32>
      %58 = arith.select %56, %53, %57 : vector<2x1024xi1>, vector<2x1024xf32>
      %cst_40 = arith.constant dense<0xFF800000> : vector<2xf32>
      %59 = vector.multi_reduction <maximumf>, %58, %cst_40 [1] : vector<2x1024xf32> to vector<2xf32>
      %60 = vector.shape_cast %59 : vector<2xf32> to vector<2x1xf32>
      %61 = vector.broadcast %60 : vector<2x1xf32> to vector<2x1024xf32>
      %62 = arith.subf %58, %61 : vector<2x1024xf32>
      %63 = math.exp %62 : vector<2x1024xf32>
      %cst_41 = arith.constant dense<0.000000e+00> : vector<2xf32>
      %64 = vector.multi_reduction <add>, %63, %cst_41 [1] : vector<2x1024xf32> to vector<2xf32>
      %65 = vector.shape_cast %64 : vector<2xf32> to vector<2x1xf32>
      %66 = vector.broadcast %65 : vector<2x1xf32> to vector<2x1024xf32>
      %67 = arith.divf %63, %66 : vector<2x1024xf32>
      %c0_42 = arith.constant 0 : index
      %c0_43 = arith.constant 0 : index
      %68 = vector.load %arg12[%c0_42, %c0_43] : memref<2x1024xf32, #tpu.memory_space<vmem>>, vector<2x1024xf32>
      tpu.vector_store %arg12[%c0_42, %c0_43], %67 {strides = array<i32>} : memref<2x1024xf32, #tpu.memory_space<vmem>>, vector<2x1024xf32>,
      %cst_44 = arith.constant dense<0xFF800000> : vector<2xf32>
      %69 = vector.multi_reduction <maximumf>, %67, %cst_44 [1] : vector<2x1024xf32> to vector<2xf32>
      %70 = vector.shape_cast %69 : vector<2xf32> to vector<2x1xf32>
      %71 = vector.broadcast %70 : vector<2x1xf32> to vector<2x1024xf32>
      %72 = arith.cmpf oeq, %67, %71 : vector<2x1024xf32>
      %73 = arith.sitofp %54 : vector<2x1024xi32> to vector<2x1024xf32>
      %cst_45 = arith.constant 1.024000e+03 : f32
      %74 = vector.broadcast %cst_45 : f32 to vector<2x1024xf32>
      %75 = arith.select %72, %73, %74 : vector<2x1024xi1>, vector<2x1024xf32>
      %cst_46 = arith.constant dense<0x7F800000> : vector<2xf32>
      %76 = vector.multi_reduction <minimumf>, %75, %cst_46 [1] : vector<2x1024xf32> to vector<2xf32>
      %77 = vector.shape_cast %76 : vector<2xf32> to vector<2x1xf32>
      %78 = arith.fptosi %77 : vector<2x1xf32> to vector<2x1xi32>
      %c0_47 = arith.constant 0 : index
      %c0_48 = arith.constant 0 : index
      %79 = vector.load %arg13[%c0_47, %c0_48] : memref<2x1xi32, #tpu.memory_space<vmem>>, vector<2x1xi32>
      tpu.vector_store %arg13[%c0_47, %c0_48], %78 {strides = array<i32>} : memref<2x1xi32, #tpu.memory_space<vmem>>, vector<2x1xi32>,
    } else {
    }
    return
  }
  func.func @transform_0(%arg0: i32) -> (i32, i32) {
    %c0_i32 = arith.constant 0 : i32
    %c0_i32_0 = arith.constant 0 : i32
    return %c0_i32, %arg0 : i32, i32
  }
  func.func @transform_1(%arg0: i32) -> (i32, i32) {
    %c0_i32 = arith.constant 0 : i32
    %c0_i32_0 = arith.constant 0 : i32
    return %arg0, %c0_i32 : i32, i32
  }
  func.func @transform_2(%arg0: i32) -> (i32, i32) {
    %c0_i32 = arith.constant 0 : i32
    %c0_i32_0 = arith.constant 0 : i32
    %c0_i32_1 = arith.constant 0 : i32
    return %c0_i32, %c0_i32_0 : i32, i32
  }
  func.func @transform_3(%arg0: i32) -> (i32, i32) {
    %c0_i32 = arith.constant 0 : i32
    %c0_i32_0 = arith.constant 0 : i32
    %c0_i32_1 = arith.constant 0 : i32
    return %c0_i32, %c0_i32_0 : i32, i32
  }
  func.func @transform_4(%arg0: i32) -> (i32, i32) {
    %c0_i32 = arith.constant 0 : i32
    %c0_i32_0 = arith.constant 0 : i32
    %c0_i32_1 = arith.constant 0 : i32
    return %c0_i32, %c0_i32_0 : i32, i32
  }
  func.func @transform_5(%arg0: i32) -> (i32, i32) {
    %c0_i32 = arith.constant 0 : i32
    %c0_i32_0 = arith.constant 0 : i32
    %c0_i32_1 = arith.constant 0 : i32
    return %c0_i32, %c0_i32_0 : i32, i32
  }
  func.func @transform_6(%arg0: i32) -> (i32, i32) {
    %c0_i32 = arith.constant 0 : i32
    %c0_i32_0 = arith.constant 0 : i32
    %c0_i32_1 = arith.constant 0 : i32
    return %c0_i32, %c0_i32_0 : i32, i32
  }
  func.func @transform_7(%arg0: i32) -> (i32, i32) {
    %c0_i32 = arith.constant 0 : i32
    %c0_i32_0 = arith.constant 0 : i32
    %c0_i32_1 = arith.constant 0 : i32
    return %c0_i32, %c0_i32_0 : i32, i32
  }
  func.func @transform_8(%arg0: i32) -> (i32, i32) {
    %c0_i32 = arith.constant 0 : i32
    %c0_i32_0 = arith.constant 0 : i32
    %c0_i32_1 = arith.constant 0 : i32
    return %c0_i32, %c0_i32_0 : i32, i32
  }
  func.func @transform_9(%arg0: i32) -> (i32, i32) {
    %c0_i32 = arith.constant 0 : i32
    %c0_i32_0 = arith.constant 0 : i32
    %c0_i32_1 = arith.constant 0 : i32
    return %c0_i32, %c0_i32_0 : i32, i32
  }
  func.func @transform_10(%arg0: i32) -> (i32, i32) {
    %c0_i32 = arith.constant 0 : i32
    %c0_i32_0 = arith.constant 0 : i32
    %c0_i32_1 = arith.constant 0 : i32
    return %c0_i32, %c0_i32_0 : i32, i32
  }
  func.func @transform_11(%arg0: i32) -> (i32, i32) {
    %c0_i32 = arith.constant 0 : i32
    %c0_i32_0 = arith.constant 0 : i32
    %c0_i32_1 = arith.constant 0 : i32
    return %c0_i32, %c0_i32_0 : i32, i32
  }
  func.func @transform_12(%arg0: i32) -> (i32, i32) {
    %c0_i32 = arith.constant 0 : i32
    %c0_i32_0 = arith.constant 0 : i32
    %c0_i32_1 = arith.constant 0 : i32
    return %c0_i32, %c0_i32_0 : i32, i32
  }
  func.func @transform_13(%arg0: i32) -> (i32, i32) {
    %c0_i32 = arith.constant 0 : i32
    %c0_i32_0 = arith.constant 0 : i32
    %c0_i32_1 = arith.constant 0 : i32
    return %c0_i32, %c0_i32_0 : i32, i32
  }
  func.func @transform_14(%arg0: i32) -> (i32, i32) {
    %c0_i32 = arith.constant 0 : i32
    %c0_i32_0 = arith.constant 0 : i32
    %c0_i32_1 = arith.constant 0 : i32
    return %c0_i32, %c0_i32_0 : i32, i32
  }
}

</mosaic_0001>

<llo_original>
// kernel: ir50_vib_forward.2
$region0: #{ir50_vib_forward.2}
  #allocation0 [shape = 'u32[]', space=smem, size = 0x4, offset = 0x4, fixed_abs, tag = 'smem constant byte address 0x4 - core index']
  #allocation1 [shape = 'u32[72,128]{1,0:T(1,128)}', space=vmem, size = 0x9000, scoped, tag = 'internal scratch']
  %s0 = inlined_call_operand.vmem [shape: bf16[32,128], index: 0, kind: input, shape index: {}]
  %s1 = inlined_call_operand.hbm [shape: bf16[128,512], index: 1, kind: input, shape index: {}]
  %s2 = inlined_call_operand.hbm [shape: f32[1,512], index: 2, kind: input, shape index: {}]
  %s3 = inlined_call_operand.hbm [shape: f32[1,512], index: 3, kind: input, shape index: {}]
  %s4 = inlined_call_operand.hbm [shape: f32[1,512], index: 4, kind: input, shape index: {}]
  %s5 = inlined_call_operand.hbm [shape: f32[1,512], index: 5, kind: input, shape index: {}]
  %s6 = inlined_call_operand.hbm [shape: f32[1,512], index: 6, kind: input, shape index: {}]
  %s7 = inlined_call_operand.vmem [shape: bf16[32,512], index: 7, kind: output, shape index: {}]
  %s8 = sld [smem:[#allocation0]]
  $region62: #{ir50_vib_forward.2} parent=0
    _
  %s10 = ssub.s32 1, %s8
  %s11 = scalar_select 0, %s10, %s8
  $region1: #{ir50_vib_forward.2} parent=0
    #allocation2 [shape = 'u8[131072]{0}', space=vmem, size = 0x20000, scoped, tag = 'input window, operand 1, single buffered']
    #allocation3 [shape = 's32[1]{0}', space=sflag, size = 0x4, scoped, tag = 'scoped memory for ir50_vib_forward.2']
    #allocation4 [shape = 'u8[2048]{0}', space=vmem, size = 0x800, scoped, tag = 'input window, operand 2, single buffered']
    #allocation5 [shape = 's32[1]{0}', space=sflag, size = 0x4, scoped, tag = 'scoped memory for ir50_vib_forward.2']
    #allocation6 [shape = 'u8[2048]{0}', space=vmem, size = 0x800, scoped, tag = 'input window, operand 3, single buffered']
    #allocation7 [shape = 'u8[2048]{0}', space=vmem, size = 0x800, scoped, tag = 'input window, operand 4, single buffered']
    #allocation8 [shape = 's32[1]{0}', space=sflag, size = 0x4, scoped, tag = 'scoped memory for ir50_vib_forward.2']
    #allocation9 [shape = 'u8[2048]{0}', space=vmem, size = 0x800, scoped, tag = 'input window, operand 5, single buffered']
    #allocation10 [shape = 'u8[2048]{0}', space=vmem, size = 0x800, scoped, tag = 'input window, operand 6, single buffered']
    #allocation11 [shape = 's32[1]{0}', space=sflag, size = 0x4, scoped, tag = 'scoped memory for ir50_vib_forward.2']
    %12 = vsyncpa [#allocation3], 0
    %13 = vsyncpa [#allocation5], 0
    %14 = vsyncpa [#allocation8], 0
    %15 = vsyncpa [#allocation11], 0
    // Predicated region
    $region2: #{ir50_vib_forward.2} parent=1 // pred_check
      _
    $region3: #{ir50_vib_forward.2} parent=1 // pred_check_branch
      %17 = sbr.rel (0) target = $region5
    $region4: #{ir50_vib_forward.2} parent=1 // pred_region
      _
    $region5: #{ir50_vib_forward.2} parent=1 // pred_fallthru
      _
    // Predicated region
    $region6: #{ir50_vib_forward.2} parent=1 // pred_check
      _
    $region7: #{ir50_vib_forward.2} parent=1 // pred_check_branch
      %19 = sbr.rel (0) target = $region9
    $region8: #{ir50_vib_forward.2} parent=1 // pred_region
      %21 = vsyncadd [#allocation3], 0
      %s22 = sshll.u32 %s1, 4
      %s23 = int_to_ptr.hbm [resolvable:$true] %s22
      %s24 = sshll.u32 [#allocation2], 4
      %s25 = int_to_ptr.vmem [resolvable:$true] %s24
      %30 = dma.hbm_to_vmem [thread:$0]  %s23, 4096, %s25, [#allocation3], 256, 256, 16
    $region9: #{ir50_vib_forward.2} parent=1 // pred_fallthru
      _
    // Predicated region
    $region10: #{ir50_vib_forward.2} parent=1 // pred_check
      _
    $region11: #{ir50_vib_forward.2} parent=1 // pred_check_branch
      %32 = sbr.rel (0) target = $region13
    $region12: #{ir50_vib_forward.2} parent=1 // pred_region
      %34 = vsyncadd [#allocation5], 0
      %s36 = sshll.u32 %s2, 4
      %s37 = int_to_ptr.hbm [resolvable:$true] %s36
      %s38 = sshll.u32 [#allocation4], 4
      %s39 = int_to_ptr.vmem [resolvable:$true] %s38
      %41 = dma.hbm_to_vmem [thread:$0]  %s37, 64, %s39, [#allocation5]
    $region13: #{ir50_vib_forward.2} parent=1 // pred_fallthru
      _
    // Predicated region
    $region14: #{ir50_vib_forward.2} parent=1 // pred_check
      _
    $region15: #{ir50_vib_forward.2} parent=1 // pred_check_branch
      %43 = sbr.rel (0) target = $region17
    $region16: #{ir50_vib_forward.2} parent=1 // pred_region
      %45 = vsyncadd [#allocation5], 0
      %s47 = sshll.u32 %s3, 4
      %s48 = int_to_ptr.hbm [resolvable:$true] %s47
      %s49 = sshll.u32 [#allocation6], 4
      %s50 = int_to_ptr.vmem [resolvable:$true] %s49
      %52 = dma.hbm_to_vmem [thread:$0]  %s48, 64, %s50, [#allocation5]
    $region17: #{ir50_vib_forward.2} parent=1 // pred_fallthru
      _
    // Predicated region
    $region18: #{ir50_vib_forward.2} parent=1 // pred_check
      _
    $region19: #{ir50_vib_forward.2} parent=1 // pred_check_branch
      %54 = sbr.rel (0) target = $region21
    $region20: #{ir50_vib_forward.2} parent=1 // pred_region
      %56 = vsyncadd [#allocation8], 0
      %s58 = sshll.u32 %s4, 4
      %s59 = int_to_ptr.hbm [resolvable:$true] %s58
      %s60 = sshll.u32 [#allocation7], 4
      %s61 = int_to_ptr.vmem [resolvable:$true] %s60
      %63 = dma.hbm_to_vmem [thread:$0]  %s59, 64, %s61, [#allocation8]
    $region21: #{ir50_vib_forward.2} parent=1 // pred_fallthru
      _
    // Predicated region
    $region22: #{ir50_vib_forward.2} parent=1 // pred_check
      _
    $region23: #{ir50_vib_forward.2} parent=1 // pred_check_branch
      %65 = sbr.rel (0) target = $region25
    $region24: #{ir50_vib_forward.2} parent=1 // pred_region
      %67 = vsyncadd [#allocation8], 0
      %s69 = sshll.u32 %s5, 4
      %s70 = int_to_ptr.hbm [resolvable:$true] %s69
      %s71 = sshll.u32 [#allocation9], 4
      %s72 = int_to_ptr.vmem [resolvable:$true] %s71
      %74 = dma.hbm_to_vmem [thread:$0]  %s70, 64, %s72, [#allocation8]
    $region25: #{ir50_vib_forward.2} parent=1 // pred_fallthru
      _
    // Predicated region
    $region26: #{ir50_vib_forward.2} parent=1 // pred_check
      _
    $region27: #{ir50_vib_forward.2} parent=1 // pred_check_branch
      %76 = sbr.rel (0) target = $region29
    $region28: #{ir50_vib_forward.2} parent=1 // pred_region
      %78 = vsyncadd [#allocation11], 0
      %s80 = sshll.u32 %s6, 4
      %s81 = int_to_ptr.hbm [resolvable:$true] %s80
      %s82 = sshll.u32 [#allocation10], 4
      %s83 = int_to_ptr.vmem [resolvable:$true] %s82
      %85 = dma.hbm_to_vmem [thread:$0]  %s81, 64, %s83, [#allocation11]
    $region29: #{ir50_vib_forward.2} parent=1 // pred_fallthru
      _
    // Predicated region
    $region30: #{ir50_vib_forward.2} parent=1 // pred_check
      _
    $region31: #{ir50_vib_forward.2} parent=1 // pred_check_branch
      %87 = sbr.rel (0) target = $region33
    $region32: #{ir50_vib_forward.2} parent=1 // pred_region
      %89 = dma.done [#allocation3], 4096
    $region33: #{ir50_vib_forward.2} parent=1 // pred_fallthru
      _
    // Predicated region
    $region34: #{ir50_vib_forward.2} parent=1 // pred_check
      _
    $region35: #{ir50_vib_forward.2} parent=1 // pred_check_branch
      %91 = sbr.rel (0) target = $region37
    $region36: #{ir50_vib_forward.2} parent=1 // pred_region
      %93 = dma.done [#allocation5], 64
    $region37: #{ir50_vib_forward.2} parent=1 // pred_fallthru
      _
    // Predicated region
    $region38: #{ir50_vib_forward.2} parent=1 // pred_check
      _
    $region39: #{ir50_vib_forward.2} parent=1 // pred_check_branch
      %95 = sbr.rel (0) target = $region41
    $region40: #{ir50_vib_forward.2} parent=1 // pred_region
      %97 = dma.done [#allocation5], 64
    $region41: #{ir50_vib_forward.2} parent=1 // pred_fallthru
      _
    // Predicated region
    $region42: #{ir50_vib_forward.2} parent=1 // pred_check
      _
    $region43: #{ir50_vib_forward.2} parent=1 // pred_check_branch
      %99 = sbr.rel (0) target = $region45
    $region44: #{ir50_vib_forward.2} parent=1 // pred_region
      %101 = dma.done [#allocation8], 64
    $region45: #{ir50_vib_forward.2} parent=1 // pred_fallthru
      _
    // Predicated region
    $region46: #{ir50_vib_forward.2} parent=1 // pred_check
      _
    $region47: #{ir50_vib_forward.2} parent=1 // pred_check_branch
      %103 = sbr.rel (0) target = $region49
    $region48: #{ir50_vib_forward.2} parent=1 // pred_region
      %105 = dma.done [#allocation8], 64
    $region49: #{ir50_vib_forward.2} parent=1 // pred_fallthru
      _
    // Predicated region
    $region50: #{ir50_vib_forward.2} parent=1 // pred_check
      _
    $region51: #{ir50_vib_forward.2} parent=1 // pred_check_branch
      %107 = sbr.rel (0) target = $region53
    $region52: #{ir50_vib_forward.2} parent=1 // pred_region
      %109 = dma.done [#allocation11], 64
    $region53: #{ir50_vib_forward.2} parent=1 // pred_fallthru
      _
    %v110 = vld [vmem:[%s0] sm:$0xf]
    %v111 = vld [vmem:[%s0 + $0x4] sm:$0xf]
    %v112 = vld [vmem:[%s0 + $0x8] sm:$0xf]
    %v113 = vld [vmem:[%s0 + $0xc] sm:$0xf]
    %v114 = vld [vmem:[#allocation2] sm:$0xff]
    %v115 = vld [vmem:[#allocation2 + $0x8] sm:$0xff]
    %v116 = vld [vmem:[#allocation2 + $0x10] sm:$0xff]
    %v117 = vld [vmem:[#allocation2 + $0x18] sm:$0xff]
    %v118 = vld [vmem:[#allocation2 + $0x20] sm:$0xff]
    %v119 = vld [vmem:[#allocation2 + $0x28] sm:$0xff]
    %v120 = vld [vmem:[#allocation2 + $0x30] sm:$0xff]
    %v121 = vld [vmem:[#allocation2 + $0x38] sm:$0xff]
    %v122 = vld [vmem:[#allocation2 + $0x40] sm:$0xff]
    %v123 = vld [vmem:[#allocation2 + $0x48] sm:$0xff]
    %v124 = vld [vmem:[#allocation2 + $0x50] sm:$0xff]
    %v125 = vld [vmem:[#allocation2 + $0x58] sm:$0xff]
    %v126 = vld [vmem:[#allocation2 + $0x60] sm:$0xff]
    %v127 = vld [vmem:[#allocation2 + $0x68] sm:$0xff]
    %v128 = vld [vmem:[#allocation2 + $0x70] sm:$0xff]
    %v129 = vld [vmem:[#allocation2 + $0x78] sm:$0xff]
    %v130 = vld [vmem:[#allocation2 + $0x80] sm:$0xff]
    %v131 = vld [vmem:[#allocation2 + $0x88] sm:$0xff]
    %v132 = vld [vmem:[#allocation2 + $0x90] sm:$0xff]
    %v133 = vld [vmem:[#allocation2 + $0x98] sm:$0xff]
    %v134 = vld [vmem:[#allocation2 + $0xa0] sm:$0xff]
    %v135 = vld [vmem:[#allocation2 + $0xa8] sm:$0xff]
    %v136 = vld [vmem:[#allocation2 + $0xb0] sm:$0xff]
    %v137 = vld [vmem:[#allocation2 + $0xb8] sm:$0xff]
    %v138 = vld [vmem:[#allocation2 + $0xc0] sm:$0xff]
    %v139 = vld [vmem:[#allocation2 + $0xc8] sm:$0xff]
    %v140 = vld [vmem:[#allocation2 + $0xd0] sm:$0xff]
    %v141 = vld [vmem:[#allocation2 + $0xd8] sm:$0xff]
    %v142 = vld [vmem:[#allocation2 + $0xe0] sm:$0xff]
    %v143 = vld [vmem:[#allocation2 + $0xe8] sm:$0xff]
    %v144 = vld [vmem:[#allocation2 + $0xf0] sm:$0xff]
    %v145 = vld [vmem:[#allocation2 + $0xf8] sm:$0xff]
    %v150 = vunpack.c.l.b16 %v110
    %v151 = vunpack.c.l.b16 %v111
    %v152 = vunpack.c.l.b16 %v112
    %v153 = vunpack.c.l.b16 %v113
    %v154 = vpack.c.b16 %v151, %v150
    %v155 = vpack.c.b16 %v153, %v152
    %v190 = vunpack.c.l.b16 %v114
    %v191 = vunpack.c.h.b16 %v114
    %v192 = vunpack.c.l.b16 %v115
    %v193 = vunpack.c.h.b16 %v115
    %v194 = vunpack.c.l.b16 %v116
    %v195 = vunpack.c.h.b16 %v116
    %v196 = vunpack.c.l.b16 %v117
    %v197 = vunpack.c.h.b16 %v117
    %v198 = vunpack.c.l.b16 %v118
    %v199 = vunpack.c.h.b16 %v118
    %v200 = vunpack.c.l.b16 %v119
    %v201 = vunpack.c.h.b16 %v119
    %v202 = vunpack.c.l.b16 %v120
    %v203 = vunpack.c.h.b16 %v120
    %v204 = vunpack.c.l.b16 %v121
    %v205 = vunpack.c.h.b16 %v121
    %v206 = vunpack.c.l.b16 %v122
    %v207 = vunpack.c.h.b16 %v122
    %v208 = vunpack.c.l.b16 %v123
    %v209 = vunpack.c.h.b16 %v123
    %v210 = vunpack.c.l.b16 %v124
    %v211 = vunpack.c.h.b16 %v124
    %v212 = vunpack.c.l.b16 %v125
    %v213 = vunpack.c.h.b16 %v125
    %v214 = vunpack.c.l.b16 %v126
    %v215 = vunpack.c.h.b16 %v126
    %v216 = vunpack.c.l.b16 %v127
    %v217 = vunpack.c.h.b16 %v127
    %v218 = vunpack.c.l.b16 %v128
    %v219 = vunpack.c.h.b16 %v128
    %v220 = vunpack.c.l.b16 %v129
    %v221 = vunpack.c.h.b16 %v129
    %v222 = vunpack.c.l.b16 %v130
    %v223 = vunpack.c.h.b16 %v130
    %v224 = vunpack.c.l.b16 %v131
    %v225 = vunpack.c.h.b16 %v131
    %v226 = vunpack.c.l.b16 %v132
    %v227 = vunpack.c.h.b16 %v132
    %v228 = vunpack.c.l.b16 %v133
    %v229 = vunpack.c.h.b16 %v133
    %v230 = vunpack.c.l.b16 %v134
    %v231 = vunpack.c.h.b16 %v134
    %v232 = vunpack.c.l.b16 %v135
    %v233 = vunpack.c.h.b16 %v135
    %v234 = vunpack.c.l.b16 %v136
    %v235 = vunpack.c.h.b16 %v136
    %v236 = vunpack.c.l.b16 %v137
    %v237 = vunpack.c.h.b16 %v137
    %v238 = vunpack.c.l.b16 %v138
    %v239 = vunpack.c.h.b16 %v138
    %v240 = vunpack.c.l.b16 %v139
    %v241 = vunpack.c.h.b16 %v139
    %v242 = vunpack.c.l.b16 %v140
    %v243 = vunpack.c.h.b16 %v140
    %v244 = vunpack.c.l.b16 %v141
    %v245 = vunpack.c.h.b16 %v141
    %v246 = vunpack.c.l.b16 %v142
    %v247 = vunpack.c.h.b16 %v142
    %v248 = vunpack.c.l.b16 %v143
    %v249 = vunpack.c.h.b16 %v143
    %v250 = vunpack.c.l.b16 %v144
    %v251 = vunpack.c.h.b16 %v144
    %v252 = vunpack.c.l.b16 %v145
    %v253 = vunpack.c.h.b16 %v145
    %v254 = vpack.c.b16 %v194, %v190
    %v255 = vpack.c.b16 %v195, %v191
    %v256 = vpack.c.b16 %v196, %v192
    %v257 = vpack.c.b16 %v197, %v193
    %v258 = vpack.c.b16 %v202, %v198
    %v259 = vpack.c.b16 %v203, %v199
    %v260 = vpack.c.b16 %v204, %v200
    %v261 = vpack.c.b16 %v205, %v201
    %v262 = vpack.c.b16 %v210, %v206
    %v263 = vpack.c.b16 %v211, %v207
    %v264 = vpack.c.b16 %v212, %v208
    %v265 = vpack.c.b16 %v213, %v209
    %v266 = vpack.c.b16 %v218, %v214
    %v267 = vpack.c.b16 %v219, %v215
    %v268 = vpack.c.b16 %v220, %v216
    %v269 = vpack.c.b16 %v221, %v217
    %v270 = vpack.c.b16 %v226, %v222
    %v271 = vpack.c.b16 %v227, %v223
    %v272 = vpack.c.b16 %v228, %v224
    %v273 = vpack.c.b16 %v229, %v225
    %v274 = vpack.c.b16 %v234, %v230
    %v275 = vpack.c.b16 %v235, %v231
    %v276 = vpack.c.b16 %v236, %v232
    %v277 = vpack.c.b16 %v237, %v233
    %v278 = vpack.c.b16 %v242, %v238
    %v279 = vpack.c.b16 %v243, %v239
    %v280 = vpack.c.b16 %v244, %v240
    %v281 = vpack.c.b16 %v245, %v241
    %v282 = vpack.c.b16 %v250, %v246
    %v283 = vpack.c.b16 %v251, %v247
    %v284 = vpack.c.b16 %v252, %v248
    %v285 = vpack.c.b16 %v253, %v249
    %318 = vmatpush.bf16.msra.mxu0 %v282
    %319 = vmatpush.bf16.msra.mxu0 %v278
    %320 = vmatpush.bf16.msra.mxu0 %v274
    %321 = vmatpush.bf16.msra.mxu0 %v270
    %322 = vmatpush.bf16.msra.mxu0 %v266
    %323 = vmatpush.bf16.msra.mxu0 %v262
    %324 = vmatpush.bf16.msra.mxu0 %v258
    %325 = vmatpush.bf16.msra.mxu0 %v254
    %326 = vmatmul.bf16.gmra.mxu0 %v154
    %v327 = vpop.f32.mrf.mxu0
    %v328 = vadd.f32 0.0, %v327
    %v329 = vpop.f32.mrf.mxu0
    %v330 = vadd.f32 0.0, %v329
    %331 = vmatmul.bf16.gmra.mxu0 %v155
    %v332 = vpop.f32.mrf.mxu0
    %v333 = vadd.f32 0.0, %v332
    %v334 = vpop.f32.mrf.mxu0
    %v335 = vadd.f32 0.0, %v334
    %336 = vdwg.mxu0
    %337 = vmatpush.bf16.msra.mxu0 %v283
    %338 = vmatpush.bf16.msra.mxu0 %v279
    %339 = vmatpush.bf16.msra.mxu0 %v275
    %340 = vmatpush.bf16.msra.mxu0 %v271
    %341 = vmatpush.bf16.msra.mxu0 %v267
    %342 = vmatpush.bf16.msra.mxu0 %v263
    %343 = vmatpush.bf16.msra.mxu0 %v259
    %344 = vmatpush.bf16.msra.mxu0 %v255
    %345 = vmatmul.bf16.gmra.mxu0 %v154
    %v346 = vpop.f32.mrf.mxu0
    %v347 = vadd.f32 0.0, %v346
    %v348 = vpop.f32.mrf.mxu0
    %v349 = vadd.f32 0.0, %v348
    %350 = vmatmul.bf16.gmra.mxu0 %v155
    %v351 = vpop.f32.mrf.mxu0
    %v352 = vadd.f32 0.0, %v351
    %v353 = vpop.f32.mrf.mxu0
    %v354 = vadd.f32 0.0, %v353
    %355 = vdwg.mxu0
    %356 = vmatpush.bf16.msra.mxu0 %v284
    %357 = vmatpush.bf16.msra.mxu0 %v280
    %358 = vmatpush.bf16.msra.mxu0 %v276
    %359 = vmatpush.bf16.msra.mxu0 %v272
    %360 = vmatpush.bf16.msra.mxu0 %v268
    %361 = vmatpush.bf16.msra.mxu0 %v264
    %362 = vmatpush.bf16.msra.mxu0 %v260
    %363 = vmatpush.bf16.msra.mxu0 %v256
    %364 = vmatmul.bf16.gmra.mxu0 %v154
    %v365 = vpop.f32.mrf.mxu0
    %v366 = vadd.f32 0.0, %v365
    %v367 = vpop.f32.mrf.mxu0
    %v368 = vadd.f32 0.0, %v367
    %369 = vmatmul.bf16.gmra.mxu0 %v155
    %v370 = vpop.f32.mrf.mxu0
    %v371 = vadd.f32 0.0, %v370
    %v372 = vpop.f32.mrf.mxu0
    %v373 = vadd.f32 0.0, %v372
    %374 = vdwg.mxu0
    %375 = vmatpush.bf16.msra.mxu0 %v285
    %376 = vmatpush.bf16.msra.mxu0 %v281
    %377 = vmatpush.bf16.msra.mxu0 %v277
    %378 = vmatpush.bf16.msra.mxu0 %v273
    %379 = vmatpush.bf16.msra.mxu0 %v269
    %380 = vmatpush.bf16.msra.mxu0 %v265
    %381 = vmatpush.bf16.msra.mxu0 %v261
    %382 = vmatpush.bf16.msra.mxu0 %v257
    %383 = vmatmul.bf16.gmra.mxu0 %v154
    %v384 = vpop.f32.mrf.mxu0
    %v385 = vadd.f32 0.0, %v384
    %v386 = vpop.f32.mrf.mxu0
    %v387 = vadd.f32 0.0, %v386
    %388 = vmatmul.bf16.gmra.mxu0 %v155
    %v389 = vpop.f32.mrf.mxu0
    %v390 = vadd.f32 0.0, %v389
    %v391 = vpop.f32.mrf.mxu0
    %v392 = vadd.f32 0.0, %v391
    %393 = vdwg.mxu0
    %v394 = vld [vmem:[#allocation4] sm:$0xf]
    %v396 = vperm.slane %v394, 0
    %v397 = vperm.slane %v394, 1
    %v398 = vperm.slane %v394, 2
    %v399 = vperm.slane %v394, 3
    %v404 = vmul.f32 %v328, %v396
    %v405 = vmul.f32 %v347, %v397
    %v406 = vmul.f32 %v366, %v398
    %v407 = vmul.f32 %v385, %v399
    %v408 = vmul.f32 %v330, %v396
    %v409 = vmul.f32 %v349, %v397
    %v410 = vmul.f32 %v368, %v398
    %v411 = vmul.f32 %v387, %v399
    %v412 = vmul.f32 %v333, %v396
    %v413 = vmul.f32 %v352, %v397
    %v414 = vmul.f32 %v371, %v398
    %v415 = vmul.f32 %v390, %v399
    %v416 = vmul.f32 %v335, %v396
    %v417 = vmul.f32 %v354, %v397
    %v418 = vmul.f32 %v373, %v398
    %v419 = vmul.f32 %v392, %v399
    %v420 = vld [vmem:[#allocation6] sm:$0xf]
    %v422 = vperm.slane %v420, 0
    %v423 = vperm.slane %v420, 1
    %v424 = vperm.slane %v420, 2
    %v425 = vperm.slane %v420, 3
    %v430 = vadd.f32 %v404, %v422
    %v431 = vadd.f32 %v405, %v423
    %v432 = vadd.f32 %v406, %v424
    %v433 = vadd.f32 %v407, %v425
    %v434 = vadd.f32 %v408, %v422
    %v435 = vadd.f32 %v409, %v423
    %v436 = vadd.f32 %v410, %v424
    %v437 = vadd.f32 %v411, %v425
    %v438 = vadd.f32 %v412, %v422
    %v439 = vadd.f32 %v413, %v423
    %v440 = vadd.f32 %v414, %v424
    %v441 = vadd.f32 %v415, %v425
    %v442 = vadd.f32 %v416, %v422
    %v443 = vadd.f32 %v417, %v423
    %v444 = vadd.f32 %v418, %v424
    %v445 = vadd.f32 %v419, %v425
    %vm446 = vcmp.ge.f32.partialorder %v430, 0.0
    %vm447 = vcmp.ge.f32.partialorder %v431, 0.0
    %vm448 = vcmp.ge.f32.partialorder %v432, 0.0
    %vm449 = vcmp.ge.f32.partialorder %v433, 0.0
    %vm450 = vcmp.ge.f32.partialorder %v434, 0.0
    %vm451 = vcmp.ge.f32.partialorder %v435, 0.0
    %vm452 = vcmp.ge.f32.partialorder %v436, 0.0
    %vm453 = vcmp.ge.f32.partialorder %v437, 0.0
    %vm454 = vcmp.ge.f32.partialorder %v438, 0.0
    %vm455 = vcmp.ge.f32.partialorder %v439, 0.0
    %vm456 = vcmp.ge.f32.partialorder %v440, 0.0
    %vm457 = vcmp.ge.f32.partialorder %v441, 0.0
    %vm458 = vcmp.ge.f32.partialorder %v442, 0.0
    %vm459 = vcmp.ge.f32.partialorder %v443, 0.0
    %vm460 = vcmp.ge.f32.partialorder %v444, 0.0
    %vm461 = vcmp.ge.f32.partialorder %v445, 0.0
    %v462 = vld [vmem:[#allocation7] sm:$0xf]
    %v464 = vperm.slane %v462, 0
    %v465 = vperm.slane %v462, 1
    %v466 = vperm.slane %v462, 2
    %v467 = vperm.slane %v462, 3
    %v472 = vmul.f32 %v430, %v464
    %v473 = vmul.f32 %v431, %v465
    %v474 = vmul.f32 %v432, %v466
    %v475 = vmul.f32 %v433, %v467
    %v476 = vmul.f32 %v434, %v464
    %v477 = vmul.f32 %v435, %v465
    %v478 = vmul.f32 %v436, %v466
    %v479 = vmul.f32 %v437, %v467
    %v480 = vmul.f32 %v438, %v464
    %v481 = vmul.f32 %v439, %v465
    %v482 = vmul.f32 %v440, %v466
    %v483 = vmul.f32 %v441, %v467
    %v484 = vmul.f32 %v442, %v464
    %v485 = vmul.f32 %v443, %v465
    %v486 = vmul.f32 %v444, %v466
    %v487 = vmul.f32 %v445, %v467
    %v488 = vsel %vm446, %v430, %v472
    %v489 = vsel %vm447, %v431, %v473
    %v490 = vsel %vm448, %v432, %v474
    %v491 = vsel %vm449, %v433, %v475
    %v492 = vsel %vm450, %v434, %v476
    %v493 = vsel %vm451, %v435, %v477
    %v494 = vsel %vm452, %v436, %v478
    %v495 = vsel %vm453, %v437, %v479
    %v496 = vsel %vm454, %v438, %v480
    %v497 = vsel %vm455, %v439, %v481
    %v498 = vsel %vm456, %v440, %v482
    %v499 = vsel %vm457, %v441, %v483
    %v500 = vsel %vm458, %v442, %v484
    %v501 = vsel %vm459, %v443, %v485
    %v502 = vsel %vm460, %v444, %v486
    %v503 = vsel %vm461, %v445, %v487
    %v504 = vld [vmem:[#allocation9] sm:$0xf]
    %v506 = vperm.slane %v504, 0
    %v507 = vperm.slane %v504, 1
    %v508 = vperm.slane %v504, 2
    %v509 = vperm.slane %v504, 3
    %v514 = vmul.f32 %v488, %v506
    %v515 = vmul.f32 %v489, %v507
    %v516 = vmul.f32 %v490, %v508
    %v517 = vmul.f32 %v491, %v509
    %v518 = vmul.f32 %v492, %v506
    %v519 = vmul.f32 %v493, %v507
    %v520 = vmul.f32 %v494, %v508
    %v521 = vmul.f32 %v495, %v509
    %v522 = vmul.f32 %v496, %v506
    %v523 = vmul.f32 %v497, %v507
    %v524 = vmul.f32 %v498, %v508
    %v525 = vmul.f32 %v499, %v509
    %v526 = vmul.f32 %v500, %v506
    %v527 = vmul.f32 %v501, %v507
    %v528 = vmul.f32 %v502, %v508
    %v529 = vmul.f32 %v503, %v509
    %v530 = vld [vmem:[#allocation10] sm:$0xf]
    %v532 = vperm.slane %v530, 0
    %v533 = vperm.slane %v530, 1
    %v534 = vperm.slane %v530, 2
    %v535 = vperm.slane %v530, 3
    %v540 = vadd.f32 %v514, %v532
    %v541 = vadd.f32 %v515, %v533
    %v542 = vadd.f32 %v516, %v534
    %v543 = vadd.f32 %v517, %v535
    %v544 = vadd.f32 %v518, %v532
    %v545 = vadd.f32 %v519, %v533
    %v546 = vadd.f32 %v520, %v534
    %v547 = vadd.f32 %v521, %v535
    %v548 = vadd.f32 %v522, %v532
    %v549 = vadd.f32 %v523, %v533
    %v550 = vadd.f32 %v524, %v534
    %v551 = vadd.f32 %v525, %v535
    %v552 = vadd.f32 %v526, %v532
    %v553 = vadd.f32 %v527, %v533
    %v554 = vadd.f32 %v528, %v534
    %v555 = vadd.f32 %v529, %v535
    %v556 = vpack.c.bf16 %v541, %v540
    %v557 = vpack.c.bf16 %v543, %v542
    %v558 = vpack.c.bf16 %v545, %v544
    %v559 = vpack.c.bf16 %v547, %v546
    %v560 = vpack.c.bf16 %v549, %v548
    %v561 = vpack.c.bf16 %v551, %v550
    %v562 = vpack.c.bf16 %v553, %v552
    %v563 = vpack.c.bf16 %v555, %v554
    %564 = vst [vmem:[%s7] sm:$0xff] %v556
    %565 = vst [vmem:[%s7 + $0x8] sm:$0xff] %v557
    %566 = vst [vmem:[%s7 + $0x10] sm:$0xff] %v558
    %567 = vst [vmem:[%s7 + $0x18] sm:$0xff] %v559
    %568 = vst [vmem:[%s7 + $0x20] sm:$0xff] %v560
    %569 = vst [vmem:[%s7 + $0x28] sm:$0xff] %v561
    %570 = vst [vmem:[%s7 + $0x30] sm:$0xff] %v562
    %571 = vst [vmem:[%s7 + $0x38] sm:$0xff] %v563
    // Predicated region
    $region54: #{ir50_vib_forward.2} parent=1 // pred_check
      _
    $region55: #{ir50_vib_forward.2} parent=1 // pred_check_branch
      %573 = sbr.rel (0) target = $region57
    $region56: #{ir50_vib_forward.2} parent=1 // pred_region
      _
    $region57: #{ir50_vib_forward.2} parent=1 // pred_fallthru
      _
    // Predicated region
    $region58: #{ir50_vib_forward.2} parent=1 // pred_check
      _
    $region59: #{ir50_vib_forward.2} parent=1 // pred_check_branch
      %575 = sbr.rel (0) target = $region61
    $region60: #{ir50_vib_forward.2} parent=1 // pred_region
      _
    $region61: #{ir50_vib_forward.2} parent=1 // pred_fallthru
      _
    %576 = vsyncpa [#allocation3], 1
    %577 = vsyncpa [#allocation5], 1
    %578 = vsyncpa [#allocation8], 1
    %579 = vsyncpa [#allocation11], 1

// kernel: ir50_vib_forward.3
$region0: #{ir50_vib_forward.3}
  #allocation0 [shape = 'u32[]', space=smem, size = 0x4, offset = 0x4, fixed_abs, tag = 'smem constant byte address 0x4 - core index']
  #allocation1 [shape = 'u32[72,128]{1,0:T(1,128)}', space=vmem, size = 0x9000, scoped, tag = 'internal scratch']
  #allocation2 [shape = 'f32[2,512]{1,0:T(2,128)}', space=vmem, size = 0x1000, scoped, tag = 'scratch operand']
  %s0 = inlined_call_operand.vmem [shape: bf16[2,8192], index: 0, kind: input, shape index: {}]
  %s1 = inlined_call_operand.hbm [shape: bf16[8192,512], index: 1, kind: input, shape index: {}]
  %s2 = inlined_call_operand.hbm [shape: f32[1,512], index: 2, kind: input, shape index: {}]
  %s3 = inlined_call_operand.hbm [shape: f32[1,512], index: 3, kind: input, shape index: {}]
  %s4 = inlined_call_operand.hbm [shape: f32[1,512], index: 4, kind: input, shape index: {}]
  %s5 = inlined_call_operand.hbm [shape: bf16[512,512], index: 5, kind: input, shape index: {}]
  %s6 = inlined_call_operand.hbm [shape: f32[1,512], index: 6, kind: input, shape index: {}]
  %s7 = inlined_call_operand.hbm [shape: f32[2,256], index: 7, kind: input, shape index: {}]
  %s8 = inlined_call_operand.hbm [shape: bf16[256,1024], index: 8, kind: input, shape index: {}]
  %s9 = inlined_call_operand.hbm [shape: f32[1,1024], index: 9, kind: input, shape index: {}]
  %s10 = inlined_call_operand.hbm [shape: f32[2,512], index: 10, kind: output, shape index: {0}]
  %s11 = inlined_call_operand.hbm [shape: f32[2,1024], index: 11, kind: output, shape index: {1}]
  %s12 = inlined_call_operand.vmem [shape: s32[2,1], index: 12, kind: output, shape index: {2}]
  %s13 = inlined_call_operand.hbm [shape: f32[2,256], index: 13, kind: output, shape index: {3}]
  %s14 = inlined_call_operand.hbm [shape: f32[2,256], index: 14, kind: output, shape index: {4}]
  %15 = xla_tuple %s10, %s11, %s12, %s13, %s14
  %s16 = sld [smem:[#allocation0]]
  $region149: #{ir50_vib_forward.3} parent=0
    _
  %s18 = ssub.s32 1, %s16
  %s19 = scalar_select 0, %s18, %s16
  $region1: #{ir50_vib_forward.3} parent=0
    #allocation3 [shape = 'u8[4194304]{0}', space=vmem, size = 0x400000, scoped, tag = 'input window, operand 1']
    #allocation4 [shape = 's32[2]{0}', space=sflag, size = 0x8, scoped, tag = 'scoped memory for ir50_vib_forward.3']
    #allocation5 [shape = 's32[2]{0}', space=sflag, size = 0x8, scoped, tag = 'scoped memory for ir50_vib_forward.3']
    #allocation6 [shape = 'u8[2048]{0}', space=vmem, size = 0x800, scoped, tag = 'input window, operand 2, single buffered']
    #allocation7 [shape = 's32[1]{0}', space=sflag, size = 0x4, scoped, tag = 'scoped memory for ir50_vib_forward.3']
    #allocation8 [shape = 'u8[2048]{0}', space=vmem, size = 0x800, scoped, tag = 'input window, operand 3, single buffered']
    #allocation9 [shape = 'u8[2048]{0}', space=vmem, size = 0x800, scoped, tag = 'input window, operand 4, single buffered']
    #allocation10 [shape = 's32[1]{0}', space=sflag, size = 0x4, scoped, tag = 'scoped memory for ir50_vib_forward.3']
    #allocation11 [shape = 'u8[524288]{0}', space=vmem, size = 0x80000, scoped, tag = 'input window, operand 5, single buffered']
    #allocation12 [shape = 'u8[2048]{0}', space=vmem, size = 0x800, scoped, tag = 'input window, operand 6, single buffered']
    #allocation13 [shape = 's32[1]{0}', space=sflag, size = 0x4, scoped, tag = 'scoped memory for ir50_vib_forward.3']
    #allocation14 [shape = 'u8[2048]{0}', space=vmem, size = 0x800, scoped, tag = 'input window, operand 7, single buffered']
    #allocation15 [shape = 'u8[524288]{0}', space=vmem, size = 0x80000, scoped, tag = 'input window, operand 8, single buffered']
    #allocation16 [shape = 's32[1]{0}', space=sflag, size = 0x4, scoped, tag = 'scoped memory for ir50_vib_forward.3']
    #allocation17 [shape = 'u8[4096]{0}', space=vmem, size = 0x1000, scoped, tag = 'input window, operand 9, single buffered']
    #allocation18 [shape = 'u8[4096]{0}', space=vmem, size = 0x1000, scoped, tag = 'output window, operand 0, single buffered']
    #allocation19 [shape = 'u8[8192]{0}', space=vmem, size = 0x2000, scoped, tag = 'output window, operand 1, single buffered']
    #allocation20 [shape = 's32[1]{0}', space=sflag, size = 0x4, scoped, tag = 'scoped memory for ir50_vib_forward.3']
    #allocation21 [shape = 'u8[2048]{0}', space=vmem, size = 0x800, scoped, tag = 'output window, operand 3, single buffered']
    #allocation22 [shape = 'u8[2048]{0}', space=vmem, size = 0x800, scoped, tag = 'output window, operand 4, single buffered']
    #allocation23 [shape = 's32[1]{0}', space=sflag, size = 0x4, scoped, tag = 'scoped memory for ir50_vib_forward.3']
    %20 = vsyncpa [#allocation4], 0
    %s21 = scalar_lea.sflag [#allocation4], 1
    %22 = vsyncpa %s21, 0
    %23 = vsyncpa [#allocation7], 0
    %24 = vsyncpa [#allocation10], 0
    %25 = vsyncpa [#allocation13], 0
    %26 = vsyncpa [#allocation16], 0
    %27 = vsyncpa [#allocation5], 0
    %28 = vsyncpa [#allocation20], 0
    %29 = vsyncpa [#allocation23], 0
    loop: start=0, step=1, limit=6
    $region2: #{ir50_vib_forward.3} parent=1 // loop_pre_header
      _
    $region3: #{ir50_vib_forward.3} parent=1 // loop_header
      %s31 = sphi 0, %s35
      %p32 = scmp.ge.s32.totalorder %s31, 6
      %s41 = sphi 0, %s43
      %s44 = sphi 0, %s41
      %s45 = sphi 0, %s44
      %s61 = sphi 0, %s45
      %s67 = sphi 0, %s69
      %s70 = sphi 0, %s67
      %s71 = sphi 0, %s70
      %s87 = sphi 0, %s71
      %s91 = sphi 0, %s91
      %s93 = sphi 0, %s91
      %s94 = sphi 0, %s93
      %s108 = sphi 0, %s94
      %s112 = sphi 0, %s112
      %s114 = sphi 0, %s112
      %s115 = sphi 0, %s114
      %s129 = sphi 0, %s115
      %s133 = sphi 0, %s133
      %s135 = sphi 0, %s133
      %s136 = sphi 0, %s135
      %s150 = sphi 0, %s136
      %s154 = sphi 0, %s154
      %s156 = sphi 0, %s154
      %s157 = sphi 0, %s156
      %s171 = sphi 0, %s157
      %s175 = sphi 0, %s175
      %s177 = sphi 0, %s175
      %s178 = sphi 0, %s177
      %s192 = sphi 0, %s178
      %s196 = sphi 0, %s196
      %s198 = sphi 0, %s196
      %s199 = sphi 0, %s198
      %s213 = sphi 0, %s199
      %s217 = sphi 0, %s217
      %s219 = sphi 0, %s217
      %s220 = sphi 0, %s219
      %s234 = sphi 0, %s220
      %s238 = sphi 0, %s238
      %s240 = sphi 0, %s238
      %s241 = sphi 0, %s240
      %s255 = sphi 0, %s241
      %s259 = sphi 0, %s259
      %s261 = sphi 0, %s259
      %s262 = sphi 0, %s261
      %s276 = sphi 0, %s262
      %s280 = sphi 0, %s280
      %s282 = sphi 0, %s280
      %s283 = sphi 0, %s282
      %s297 = sphi 0, %s283
      %s301 = sphi 0, %s301
      %s303 = sphi 0, %s301
      %s304 = sphi 0, %s303
      %s318 = sphi 0, %s304
      %s322 = sphi 0, %s322
      %s324 = sphi 0, %s322
      %s325 = sphi 0, %s324
      %s339 = sphi 0, %s325
      %s343 = sphi 0, %s343
      %s345 = sphi 0, %s343
      %s346 = sphi 0, %s345
      %s360 = sphi 0, %s346
    $region4: #{ir50_vib_forward.3} parent=1 // loop_header_branch
      %34 = sbr.rel (%p32) target = $region8
    $region5: #{ir50_vib_forward.3} parent=1 // loop_body
      %s36 = ssub.s32 %s31, 1
      %s37 = ssub.s32 %s31, 2
      %s38 = sadd.s32 %s31, 1
      %s39 = ssub.s32 %s31, %s38
      %p40 = scmp.eq.s32.totalorder %s39, 0
      %s42 = sadd.s32 %s41, 1
      %s43 = scalar_select %p40, %s41, %s42
      %p46 = pneg %p40
      %p47 = scmp.eq.s32.totalorder %s31, 3
      %p48 = por %p46, %p47
      %p49 = scmp.ne.s32.totalorder %s41, %s44
      %p50 = scmp.eq.s32.totalorder %s31, 0
      %p51 = por %p49, %p50
      %p52 = scmp.ne.s32.totalorder %s41, %s44
      %p53 = scmp.eq.s32.totalorder %s36, 3
      %p54 = por %p52, %p53
      %p55 = scmp.ne.s32.totalorder %s44, %s45
      %p56 = scmp.eq.s32.totalorder %s36, 0
      %p57 = por %p55, %p56
      %p58 = scmp.ne.s32.totalorder %s44, %s45
      %p59 = scmp.eq.s32.totalorder %s37, 3
      %p60 = por %p58, %p59
      %p62 = scmp.ne.s32.totalorder %s45, %s61
      %p63 = scmp.eq.s32.totalorder %s37, 0
      %p64 = por %p62, %p63
      %s65 = ssub.s32 %s31, %s38
      %p66 = scmp.eq.s32.totalorder %s65, 0
      %s68 = sadd.s32 %s67, 1
      %s69 = scalar_select %p66, %s67, %s68
      %p72 = pneg %p66
      %p73 = scmp.eq.s32.totalorder %s31, 3
      %p74 = por %p72, %p73
      %p75 = scmp.ne.s32.totalorder %s67, %s70
      %p76 = scmp.eq.s32.totalorder %s31, 0
      %p77 = por %p75, %p76
      %p78 = scmp.ne.s32.totalorder %s67, %s70
      %p79 = scmp.eq.s32.totalorder %s36, 3
      %p80 = por %p78, %p79
      %p81 = scmp.ne.s32.totalorder %s70, %s71
      %p82 = scmp.eq.s32.totalorder %s36, 0
      %p83 = por %p81, %p82
      %p84 = scmp.ne.s32.totalorder %s70, %s71
      %p85 = scmp.eq.s32.totalorder %s37, 3
      %p86 = por %p84, %p85
      %p88 = scmp.ne.s32.totalorder %s71, %s87
      %p89 = scmp.eq.s32.totalorder %s37, 0
      %p90 = por %p88, %p89
      %s92 = sadd.s32 %s91, 1
      %p95 = scmp.eq.s32.totalorder %s31, 3
      %p96 = scmp.ne.s32.totalorder %s91, %s93
      %p97 = scmp.eq.s32.totalorder %s31, 0
      %p98 = por %p96, %p97
      %p99 = scmp.ne.s32.totalorder %s91, %s93
      %p100 = scmp.eq.s32.totalorder %s36, 3
      %p101 = por %p99, %p100
      %p102 = scmp.ne.s32.totalorder %s93, %s94
      %p103 = scmp.eq.s32.totalorder %s36, 0
      %p104 = por %p102, %p103
      %p105 = scmp.ne.s32.totalorder %s93, %s94
      %p106 = scmp.eq.s32.totalorder %s37, 3
      %p107 = por %p105, %p106
      %p109 = scmp.ne.s32.totalorder %s94, %s108
      %p110 = scmp.eq.s32.totalorder %s37, 0
      %p111 = por %p109, %p110
      %s113 = sadd.s32 %s112, 1
      %p116 = scmp.eq.s32.totalorder %s31, 3
      %p117 = scmp.ne.s32.totalorder %s112, %s114
      %p118 = scmp.eq.s32.totalorder %s31, 0
      %p119 = por %p117, %p118
      %p120 = scmp.ne.s32.totalorder %s112, %s114
      %p121 = scmp.eq.s32.totalorder %s36, 3
      %p122 = por %p120, %p121
      %p123 = scmp.ne.s32.totalorder %s114, %s115
      %p124 = scmp.eq.s32.totalorder %s36, 0
      %p125 = por %p123, %p124
      %p126 = scmp.ne.s32.totalorder %s114, %s115
      %p127 = scmp.eq.s32.totalorder %s37, 3
      %p128 = por %p126, %p127
      %p130 = scmp.ne.s32.totalorder %s115, %s129
      %p131 = scmp.eq.s32.totalorder %s37, 0
      %p132 = por %p130, %p131
      %s134 = sadd.s32 %s133, 1
      %p137 = scmp.eq.s32.totalorder %s31, 3
      %p138 = scmp.ne.s32.totalorder %s133, %s135
      %p139 = scmp.eq.s32.totalorder %s31, 0
      %p140 = por %p138, %p139
      %p141 = scmp.ne.s32.totalorder %s133, %s135
      %p142 = scmp.eq.s32.totalorder %s36, 3
      %p143 = por %p141, %p142
      %p144 = scmp.ne.s32.totalorder %s135, %s136
      %p145 = scmp.eq.s32.totalorder %s36, 0
      %p146 = por %p144, %p145
      %p147 = scmp.ne.s32.totalorder %s135, %s136
      %p148 = scmp.eq.s32.totalorder %s37, 3
      %p149 = por %p147, %p148
      %p151 = scmp.ne.s32.totalorder %s136, %s150
      %p152 = scmp.eq.s32.totalorder %s37, 0
      %p153 = por %p151, %p152
      %s155 = sadd.s32 %s154, 1
      %p158 = scmp.eq.s32.totalorder %s31, 3
      %p159 = scmp.ne.s32.totalorder %s154, %s156
      %p160 = scmp.eq.s32.totalorder %s31, 0
      %p161 = por %p159, %p160
      %p162 = scmp.ne.s32.totalorder %s154, %s156
      %p163 = scmp.eq.s32.totalorder %s36, 3
      %p164 = por %p162, %p163
      %p165 = scmp.ne.s32.totalorder %s156, %s157
      %p166 = scmp.eq.s32.totalorder %s36, 0
      %p167 = por %p165, %p166
      %p168 = scmp.ne.s32.totalorder %s156, %s157
      %p169 = scmp.eq.s32.totalorder %s37, 3
      %p170 = por %p168, %p169
      %p172 = scmp.ne.s32.totalorder %s157, %s171
      %p173 = scmp.eq.s32.totalorder %s37, 0
      %p174 = por %p172, %p173
      %s176 = sadd.s32 %s175, 1
      %p179 = scmp.eq.s32.totalorder %s31, 3
      %p180 = scmp.ne.s32.totalorder %s175, %s177
      %p181 = scmp.eq.s32.totalorder %s31, 0
      %p182 = por %p180, %p181
      %p183 = scmp.ne.s32.totalorder %s175, %s177
      %p184 = scmp.eq.s32.totalorder %s36, 3
      %p185 = por %p183, %p184
      %p186 = scmp.ne.s32.totalorder %s177, %s178
      %p187 = scmp.eq.s32.totalorder %s36, 0
      %p188 = por %p186, %p187
      %p189 = scmp.ne.s32.totalorder %s177, %s178
      %p190 = scmp.eq.s32.totalorder %s37, 3
      %p191 = por %p189, %p190
      %p193 = scmp.ne.s32.totalorder %s178, %s192
      %p194 = scmp.eq.s32.totalorder %s37, 0
      %p195 = por %p193, %p194
      %s197 = sadd.s32 %s196, 1
      %p200 = scmp.eq.s32.totalorder %s31, 3
      %p201 = scmp.ne.s32.totalorder %s196, %s198
      %p202 = scmp.eq.s32.totalorder %s31, 0
      %p203 = por %p201, %p202
      %p204 = scmp.ne.s32.totalorder %s196, %s198
      %p205 = scmp.eq.s32.totalorder %s36, 3
      %p206 = por %p204, %p205
      %p207 = scmp.ne.s32.totalorder %s198, %s199
      %p208 = scmp.eq.s32.totalorder %s36, 0
      %p209 = por %p207, %p208
      %p210 = scmp.ne.s32.totalorder %s198, %s199
      %p211 = scmp.eq.s32.totalorder %s37, 3
      %p212 = por %p210, %p211
      %p214 = scmp.ne.s32.totalorder %s199, %s213
      %p215 = scmp.eq.s32.totalorder %s37, 0
      %p216 = por %p214, %p215
      %s218 = sadd.s32 %s217, 1
      %p221 = scmp.eq.s32.totalorder %s31, 3
      %p222 = scmp.ne.s32.totalorder %s217, %s219
      %p223 = scmp.eq.s32.totalorder %s31, 0
      %p224 = por %p222, %p223
      %p225 = scmp.ne.s32.totalorder %s217, %s219
      %p226 = scmp.eq.s32.totalorder %s36, 3
      %p227 = por %p225, %p226
      %p228 = scmp.ne.s32.totalorder %s219, %s220
      %p229 = scmp.eq.s32.totalorder %s36, 0
      %p230 = por %p228, %p229
      %p231 = scmp.ne.s32.totalorder %s219, %s220
      %p232 = scmp.eq.s32.totalorder %s37, 3
      %p233 = por %p231, %p232
      %p235 = scmp.ne.s32.totalorder %s220, %s234
      %p236 = scmp.eq.s32.totalorder %s37, 0
      %p237 = por %p235, %p236
      %s239 = sadd.s32 %s238, 1
      %p242 = scmp.eq.s32.totalorder %s31, 3
      %p243 = scmp.ne.s32.totalorder %s238, %s240
      %p244 = scmp.eq.s32.totalorder %s31, 0
      %p245 = por %p243, %p244
      %p246 = scmp.ne.s32.totalorder %s238, %s240
      %p247 = scmp.eq.s32.totalorder %s36, 3
      %p248 = por %p246, %p247
      %p249 = scmp.ne.s32.totalorder %s240, %s241
      %p250 = scmp.eq.s32.totalorder %s36, 0
      %p251 = por %p249, %p250
      %p252 = scmp.ne.s32.totalorder %s240, %s241
      %p253 = scmp.eq.s32.totalorder %s37, 3
      %p254 = por %p252, %p253
      %p256 = scmp.ne.s32.totalorder %s241, %s255
      %p257 = scmp.eq.s32.totalorder %s37, 0
      %p258 = por %p256, %p257
      %s260 = sadd.s32 %s259, 1
      %p263 = scmp.eq.s32.totalorder %s31, 3
      %p264 = scmp.ne.s32.totalorder %s259, %s261
      %p265 = scmp.eq.s32.totalorder %s31, 0
      %p266 = por %p264, %p265
      %p267 = scmp.ne.s32.totalorder %s259, %s261
      %p268 = scmp.eq.s32.totalorder %s36, 3
      %p269 = por %p267, %p268
      %p270 = scmp.ne.s32.totalorder %s261, %s262
      %p271 = scmp.eq.s32.totalorder %s36, 0
      %p272 = por %p270, %p271
      %p273 = scmp.ne.s32.totalorder %s261, %s262
      %p274 = scmp.eq.s32.totalorder %s37, 3
      %p275 = por %p273, %p274
      %p277 = scmp.ne.s32.totalorder %s262, %s276
      %p278 = scmp.eq.s32.totalorder %s37, 0
      %p279 = por %p277, %p278
      %s281 = sadd.s32 %s280, 1
      %p284 = scmp.eq.s32.totalorder %s31, 3
      %p285 = scmp.ne.s32.totalorder %s280, %s282
      %p286 = scmp.eq.s32.totalorder %s31, 0
      %p287 = por %p285, %p286
      %p288 = scmp.ne.s32.totalorder %s280, %s282
      %p289 = scmp.eq.s32.totalorder %s36, 3
      %p290 = por %p288, %p289
      %p291 = scmp.ne.s32.totalorder %s282, %s283
      %p292 = scmp.eq.s32.totalorder %s36, 0
      %p293 = por %p291, %p292
      %p294 = scmp.ne.s32.totalorder %s282, %s283
      %p295 = scmp.eq.s32.totalorder %s37, 3
      %p296 = por %p294, %p295
      %p298 = scmp.ne.s32.totalorder %s283, %s297
      %p299 = scmp.eq.s32.totalorder %s37, 0
      %p300 = por %p298, %p299
      %s302 = sadd.s32 %s301, 1
      %p305 = scmp.eq.s32.totalorder %s31, 3
      %p306 = scmp.ne.s32.totalorder %s301, %s303
      %p307 = scmp.eq.s32.totalorder %s31, 0
      %p308 = por %p306, %p307
      %p309 = scmp.ne.s32.totalorder %s301, %s303
      %p310 = scmp.eq.s32.totalorder %s36, 3
      %p311 = por %p309, %p310
      %p312 = scmp.ne.s32.totalorder %s303, %s304
      %p313 = scmp.eq.s32.totalorder %s36, 0
      %p314 = por %p312, %p313
      %p315 = scmp.ne.s32.totalorder %s303, %s304
      %p316 = scmp.eq.s32.totalorder %s37, 3
      %p317 = por %p315, %p316
      %p319 = scmp.ne.s32.totalorder %s304, %s318
      %p320 = scmp.eq.s32.totalorder %s37, 0
      %p321 = por %p319, %p320
      %s323 = sadd.s32 %s322, 1
      %p326 = scmp.eq.s32.totalorder %s31, 3
      %p327 = scmp.ne.s32.totalorder %s322, %s324
      %p328 = scmp.eq.s32.totalorder %s31, 0
      %p329 = por %p327, %p328
      %p330 = scmp.ne.s32.totalorder %s322, %s324
      %p331 = scmp.eq.s32.totalorder %s36, 3
      %p332 = por %p330, %p331
      %p333 = scmp.ne.s32.totalorder %s324, %s325
      %p334 = scmp.eq.s32.totalorder %s36, 0
      %p335 = por %p333, %p334
      %p336 = scmp.ne.s32.totalorder %s324, %s325
      %p337 = scmp.eq.s32.totalorder %s37, 3
      %p338 = por %p336, %p337
      %p340 = scmp.ne.s32.totalorder %s325, %s339
      %p341 = scmp.eq.s32.totalorder %s37, 0
      %p342 = por %p340, %p341
      %s344 = sadd.s32 %s343, 1
      %p347 = scmp.eq.s32.totalorder %s31, 3
      %p348 = scmp.ne.s32.totalorder %s343, %s345
      %p349 = scmp.eq.s32.totalorder %s31, 0
      %p350 = por %p348, %p349
      %p351 = scmp.ne.s32.totalorder %s343, %s345
      %p352 = scmp.eq.s32.totalorder %s36, 3
      %p353 = por %p351, %p352
      %p354 = scmp.ne.s32.totalorder %s345, %s346
      %p355 = scmp.eq.s32.totalorder %s36, 0
      %p356 = por %p354, %p355
      %p357 = scmp.ne.s32.totalorder %s345, %s346
      %p358 = scmp.eq.s32.totalorder %s37, 3
      %p359 = por %p357, %p358
      %p361 = scmp.ne.s32.totalorder %s346, %s360
      %p362 = scmp.eq.s32.totalorder %s37, 0
      %p363 = por %p361, %p362
      %p364 = scmp.le.s32.totalorder 1, %s31
      %p365 = scmp.lt.s32.totalorder %s31, 5
      %p366 = pnand %p364, %p365
      %p367 = pneg %p366
      // Predicated region
      $region9: #{ir50_vib_forward.3} parent=5 // pred_check
        _
      $region10: #{ir50_vib_forward.3} parent=5 // pred_check_branch
        %369 = sbr.rel (%p366) target = $region12
      $region11: #{ir50_vib_forward.3} parent=5 // pred_region
        %s370 = ssub.s32 %s31, 1
        // Predicated region
        $region13: #{ir50_vib_forward.3} parent=11 // pred_check
          %p371 = pneg %p104
        $region14: #{ir50_vib_forward.3} parent=11 // pred_check_branch
          %373 = sbr.rel (%p371) target = $region16
        $region15: #{ir50_vib_forward.3} parent=11 // pred_region
          %375 = vsyncadd [#allocation7], 0
          %s377 = sshll.u32 %s2, 4
          %s378 = int_to_ptr.hbm [resolvable:$true] %s377
          %s379 = sshll.u32 [#allocation6], 4
          %s380 = int_to_ptr.vmem [resolvable:$true] %s379
          %382 = dma.hbm_to_vmem [thread:$0]  %s378, 64, %s380, [#allocation7]
        $region16: #{ir50_vib_forward.3} parent=11 // pred_fallthru
          _
        // Predicated region
        $region17: #{ir50_vib_forward.3} parent=11 // pred_check
          %p383 = pneg %p125
        $region18: #{ir50_vib_forward.3} parent=11 // pred_check_branch
          %385 = sbr.rel (%p383) target = $region20
        $region19: #{ir50_vib_forward.3} parent=11 // pred_region
          %387 = vsyncadd [#allocation7], 0
          %s389 = sshll.u32 %s3, 4
          %s390 = int_to_ptr.hbm [resolvable:$true] %s389
          %s391 = sshll.u32 [#allocation8], 4
          %s392 = int_to_ptr.vmem [resolvable:$true] %s391
          %394 = dma.hbm_to_vmem [thread:$0]  %s390, 64, %s392, [#allocation7]
        $region20: #{ir50_vib_forward.3} parent=11 // pred_fallthru
          _
        // Predicated region
        $region21: #{ir50_vib_forward.3} parent=11 // pred_check
          %p395 = pneg %p146
        $region22: #{ir50_vib_forward.3} parent=11 // pred_check_branch
          %397 = sbr.rel (%p395) target = $region24
        $region23: #{ir50_vib_forward.3} parent=11 // pred_region
          %399 = vsyncadd [#allocation10], 0
          %s401 = sshll.u32 %s4, 4
          %s402 = int_to_ptr.hbm [resolvable:$true] %s401
          %s403 = sshll.u32 [#allocation9], 4
          %s404 = int_to_ptr.vmem [resolvable:$true] %s403
          %406 = dma.hbm_to_vmem [thread:$0]  %s402, 64, %s404, [#allocation10]
        $region24: #{ir50_vib_forward.3} parent=11 // pred_fallthru
          _
        // Predicated region
        $region25: #{ir50_vib_forward.3} parent=11 // pred_check
          %p407 = pneg %p167
        $region26: #{ir50_vib_forward.3} parent=11 // pred_check_branch
          %409 = sbr.rel (%p407) target = $region28
        $region27: #{ir50_vib_forward.3} parent=11 // pred_region
          %411 = vsyncadd [#allocation10], 0
          %s412 = sshll.u32 %s5, 4
          %s413 = int_to_ptr.hbm [resolvable:$true] %s412
          %s414 = sshll.u32 [#allocation11], 4
          %s415 = int_to_ptr.vmem [resolvable:$true] %s414
          %420 = dma.hbm_to_vmem [thread:$0]  %s413, 16384, %s415, [#allocation10], 256, 256, 16
        $region28: #{ir50_vib_forward.3} parent=11 // pred_fallthru
          _
        // Predicated region
        $region29: #{ir50_vib_forward.3} parent=11 // pred_check
          %p421 = pneg %p188
        $region30: #{ir50_vib_forward.3} parent=11 // pred_check_branch
          %423 = sbr.rel (%p421) target = $region32
        $region31: #{ir50_vib_forward.3} parent=11 // pred_region
          %425 = vsyncadd [#allocation13], 0
          %s427 = sshll.u32 %s6, 4
          %s428 = int_to_ptr.hbm [resolvable:$true] %s427
          %s429 = sshll.u32 [#allocation12], 4
          %s430 = int_to_ptr.vmem [resolvable:$true] %s429
          %432 = dma.hbm_to_vmem [thread:$0]  %s428, 64, %s430, [#allocation13]
        $region32: #{ir50_vib_forward.3} parent=11 // pred_fallthru
          _
        // Predicated region
        $region33: #{ir50_vib_forward.3} parent=11 // pred_check
          %p433 = pneg %p209
        $region34: #{ir50_vib_forward.3} parent=11 // pred_check_branch
          %435 = sbr.rel (%p433) target = $region36
        $region35: #{ir50_vib_forward.3} parent=11 // pred_region
          %437 = vsyncadd [#allocation13], 0
          %s439 = sshll.u32 %s7, 4
          %s440 = int_to_ptr.hbm [resolvable:$true] %s439
          %s441 = sshll.u32 [#allocation14], 4
          %s442 = int_to_ptr.vmem [resolvable:$true] %s441
          %444 = dma.hbm_to_vmem [thread:$0]  %s440, 64, %s442, [#allocation13]
        $region36: #{ir50_vib_forward.3} parent=11 // pred_fallthru
          _
        // Predicated region
        $region37: #{ir50_vib_forward.3} parent=11 // pred_check
          %p445 = pneg %p230
        $region38: #{ir50_vib_forward.3} parent=11 // pred_check_branch
          %447 = sbr.rel (%p445) target = $region40
        $region39: #{ir50_vib_forward.3} parent=11 // pred_region
          %449 = vsyncadd [#allocation16], 0
          %s450 = sshll.u32 %s8, 4
          %s451 = int_to_ptr.hbm [resolvable:$true] %s450
          %s452 = sshll.u32 [#allocation15], 4
          %s453 = int_to_ptr.vmem [resolvable:$true] %s452
          %458 = dma.hbm_to_vmem [thread:$0]  %s451, 16384, %s453, [#allocation16], 512, 512, 32
        $region40: #{ir50_vib_forward.3} parent=11 // pred_fallthru
          _
        // Predicated region
        $region41: #{ir50_vib_forward.3} parent=11 // pred_check
          %p459 = pneg %p251
        $region42: #{ir50_vib_forward.3} parent=11 // pred_check_branch
          %461 = sbr.rel (%p459) target = $region44
        $region43: #{ir50_vib_forward.3} parent=11 // pred_region
          %463 = vsyncadd [#allocation16], 0
          %s465 = sshll.u32 %s9, 4
          %s466 = int_to_ptr.hbm [resolvable:$true] %s465
          %s467 = sshll.u32 [#allocation17], 4
          %s468 = int_to_ptr.vmem [resolvable:$true] %s467
          %470 = dma.hbm_to_vmem [thread:$0]  %s466, 128, %s468, [#allocation16]
        $region44: #{ir50_vib_forward.3} parent=11 // pred_fallthru
          _
      $region12: #{ir50_vib_forward.3} parent=5 // pred_fallthru
        _
      %p471 = scmp.lt.s32.totalorder %s31, 4
      // Predicated region
      $region45: #{ir50_vib_forward.3} parent=5 // pred_check
        %p472 = pneg %p471
      $region46: #{ir50_vib_forward.3} parent=5 // pred_check_branch
        %474 = sbr.rel (%p472) target = $region48
      $region47: #{ir50_vib_forward.3} parent=5 // pred_region
        // Predicated region
        $region49: #{ir50_vib_forward.3} parent=47 // pred_check
          %p475 = pneg %p51
        $region50: #{ir50_vib_forward.3} parent=47 // pred_check_branch
          %477 = sbr.rel (%p475) target = $region52
        $region51: #{ir50_vib_forward.3} parent=47 // pred_region
          %s478 = smul.u32 16, %s31
          %p479 = scmp.lt.s32.totalorder %s478, 63
          %s480 = scalar_select %p479, %s478, 63
          %s481 = scalar_lea.vmem %s0, %s480
          %s482 = smul.u32 16, %s31
        $region52: #{ir50_vib_forward.3} parent=47 // pred_fallthru
          _
        // Predicated region
        $region53: #{ir50_vib_forward.3} parent=47 // pred_check
          %p483 = pneg %p77
        $region54: #{ir50_vib_forward.3} parent=47 // pred_check_branch
          %485 = sbr.rel (%p483) target = $region56
        $region55: #{ir50_vib_forward.3} parent=47 // pred_region
          %s486 = sand.u32 %s67, 1
          %s487 = scalar_lea.sflag [#allocation4], %s486
          %s488 = sand.u32 %s67, 1
          %s489 = smul.addr %s488, 4096
          %s490 = scalar_lea.vmem [#allocation3], %s489
          %s491 = smul.u32 256, %s31
          %493 = vsyncadd %s487, 0
          %s494 = smul.addr %s491, 4
          %s495 = smul.addr %s494, 4
          %s496 = scalar_lea.hbm %s1, %s495
          %s497 = sshll.u32 %s496, 4
          %s498 = int_to_ptr.hbm [resolvable:$true] %s497
          %s499 = sshll.u32 %s490, 4
          %s500 = int_to_ptr.vmem [resolvable:$true] %s499
          %505 = dma.hbm_to_vmem [thread:$0]  %s498, 65536, %s500, %s487, 256, 256, 16
        $region56: #{ir50_vib_forward.3} parent=47 // pred_fallthru
          _
      $region48: #{ir50_vib_forward.3} parent=5 // pred_fallthru
        _
      %p506 = scmp.le.s32.totalorder 1, %s31
      %p507 = scmp.lt.s32.totalorder %s31, 5
      %p508 = pnand %p506, %p507
      %p509 = pneg %p508
      // Predicated region
      $region57: #{ir50_vib_forward.3} parent=5 // pred_check
        _
      $region58: #{ir50_vib_forward.3} parent=5 // pred_check_branch
        %511 = sbr.rel (%p508) target = $region60
      $region59: #{ir50_vib_forward.3} parent=5 // pred_region
        %s512 = ssub.s32 %s31, 1
        %s513 = sand.u32 %s70, 1
        %s514 = scalar_lea.sflag [#allocation4], %s513
        %s515 = sand.u32 %s70, 1
        %s516 = smul.addr %s515, 4096
        %s517 = scalar_lea.vmem [#allocation3], %s516
        // Predicated region
        $region61: #{ir50_vib_forward.3} parent=59 // pred_check
          %p518 = pneg %p83
        $region62: #{ir50_vib_forward.3} parent=59 // pred_check_branch
          %520 = sbr.rel (%p518) target = $region64
        $region63: #{ir50_vib_forward.3} parent=59 // pred_region
          %522 = dma.done %s514, 65536
        $region64: #{ir50_vib_forward.3} parent=59 // pred_fallthru
          _
        // Predicated region
        $region65: #{ir50_vib_forward.3} parent=59 // pred_check
          %p523 = pneg %p104
        $region66: #{ir50_vib_forward.3} parent=59 // pred_check_branch
          %525 = sbr.rel (%p523) target = $region68
        $region67: #{ir50_vib_forward.3} parent=59 // pred_region
          %527 = dma.done [#allocation7], 64
        $region68: #{ir50_vib_forward.3} parent=59 // pred_fallthru
          _
        // Predicated region
        $region69: #{ir50_vib_forward.3} parent=59 // pred_check
          %p528 = pneg %p125
        $region70: #{ir50_vib_forward.3} parent=59 // pred_check_branch
          %530 = sbr.rel (%p528) target = $region72
        $region71: #{ir50_vib_forward.3} parent=59 // pred_region
          %532 = dma.done [#allocation7], 64
        $region72: #{ir50_vib_forward.3} parent=59 // pred_fallthru
          _
        // Predicated region
        $region73: #{ir50_vib_forward.3} parent=59 // pred_check
          %p533 = pneg %p146
        $region74: #{ir50_vib_forward.3} parent=59 // pred_check_branch
          %535 = sbr.rel (%p533) target = $region76
        $region75: #{ir50_vib_forward.3} parent=59 // pred_region
          %537 = dma.done [#allocation10], 64
        $region76: #{ir50_vib_forward.3} parent=59 // pred_fallthru
          _
        // Predicated region
        $region77: #{ir50_vib_forward.3} parent=59 // pred_check
          %p538 = pneg %p167
        $region78: #{ir50_vib_forward.3} parent=59 // pred_check_branch
          %540 = sbr.rel (%p538) target = $region80
        $region79: #{ir50_vib_forward.3} parent=59 // pred_region
          %542 = dma.done [#allocation10], 16384
        $region80: #{ir50_vib_forward.3} parent=59 // pred_fallthru
          _
        // Predicated region
        $region81: #{ir50_vib_forward.3} parent=59 // pred_check
          %p543 = pneg %p188
        $region82: #{ir50_vib_forward.3} parent=59 // pred_check_branch
          %545 = sbr.rel (%p543) target = $region84
        $region83: #{ir50_vib_forward.3} parent=59 // pred_region
          %547 = dma.done [#allocation13], 64
        $region84: #{ir50_vib_forward.3} parent=59 // pred_fallthru
          _
        // Predicated region
        $region85: #{ir50_vib_forward.3} parent=59 // pred_check
          %p548 = pneg %p209
        $region86: #{ir50_vib_forward.3} parent=59 // pred_check_branch
          %550 = sbr.rel (%p548) target = $region88
        $region87: #{ir50_vib_forward.3} parent=59 // pred_region
          %552 = dma.done [#allocation13], 64
        $region88: #{ir50_vib_forward.3} parent=59 // pred_fallthru
          _
        // Predicated region
        $region89: #{ir50_vib_forward.3} parent=59 // pred_check
          %p553 = pneg %p230
        $region90: #{ir50_vib_forward.3} parent=59 // pred_check_branch
          %555 = sbr.rel (%p553) target = $region92
        $region91: #{ir50_vib_forward.3} parent=59 // pred_region
          %557 = dma.done [#allocation16], 16384
        $region92: #{ir50_vib_forward.3} parent=59 // pred_fallthru
          _
        // Predicated region
        $region93: #{ir50_vib_forward.3} parent=59 // pred_check
          %p558 = pneg %p251
        $region94: #{ir50_vib_forward.3} parent=59 // pred_check_branch
          %560 = sbr.rel (%p558) target = $region96
        $region95: #{ir50_vib_forward.3} parent=59 // pred_region
          %562 = dma.done [#allocation16], 128
        $region96: #{ir50_vib_forward.3} parent=59 // pred_fallthru
          _
        %s563 = smul.u32 16, %s36
        %p564 = scmp.lt.s32.totalorder %s563, 63
        %s565 = scalar_select %p564, %s563, 63
        %s566 = scalar_lea.vmem %s0, %s565
        %p567 = pneg %p57
        %p568 = pneg %p54
        %s569 = sand.u32 %s70, 1
        %s570 = scalar_lea.sflag [#allocation4], %s569
        %s571 = sand.u32 %s70, 1
        %s572 = smul.addr %s571, 4096
        %s573 = scalar_lea.vmem [#allocation3], %s572
        %p574 = pneg %p83
        %p575 = pneg %p80
        %p576 = pneg %p104
        %p577 = pneg %p101
        %p578 = pneg %p125
        %p579 = pneg %p122
        %p580 = pneg %p146
        %p581 = pneg %p143
        %p582 = pneg %p167
        %p583 = pneg %p164
        %p584 = pneg %p188
        %p585 = pneg %p185
        %p586 = pneg %p209
        %p587 = pneg %p206
        %p588 = pneg %p230
        %p589 = pneg %p227
        %p590 = pneg %p251
        %p591 = pneg %p248
        %p592 = pneg %p272
        %p593 = pneg %p269
        %p594 = pneg %p293
        %p595 = pneg %p290
        %p596 = pneg %p314
        %p597 = pneg %p311
        %p598 = pneg %p335
        %p599 = pneg %p332
        %p600 = pneg %p356
        %p601 = pneg %p353
        %s602 = smul.u32 16, %s36
        %p603 = scmp.lt.s32.totalorder %s602, 63
        %s604 = scalar_select %p603, %s602, 63
        %s605 = scalar_lea.vmem %s0, %s604
        %s606 = smul.u32 16, %s36
        %s607 = smul.u32 256, %s36
        %p608 = scmp.eq.s32.totalorder %s36, 0
        // Predicated region
        $region97: #{ir50_vib_forward.3} parent=59 // pred_check
          %p609 = pneg %p608
        $region98: #{ir50_vib_forward.3} parent=59 // pred_check_branch
          %611 = sbr.rel (%p609) target = $region100
        $region99: #{ir50_vib_forward.3} parent=59 // pred_region
          %612 = vst [vmem:[#allocation2] sm:$0xff] 0.0
        $region100: #{ir50_vib_forward.3} parent=59 // pred_fallthru
          _
        %v613 = vld [vmem:[#allocation2] sm:$0xff]
        %v614 = vld [vmem:[%s605] sm:$0xff]
        %v615 = vld [vmem:[%s605 + $0x8] sm:$0xff]
        %v616 = vld [vmem:[%s517] sm:$0xff]
        %v617 = vld [vmem:[%s517 + $0x8] sm:$0xff]
        %v618 = vld [vmem:[%s517 + $0x10] sm:$0xff]
        %v619 = vld [vmem:[%s517 + $0x18] sm:$0xff]
        %v620 = vld [vmem:[%s517 + $0x20] sm:$0xff]
        %v621 = vld [vmem:[%s517 + $0x28] sm:$0xff]
        %v622 = vld [vmem:[%s517 + $0x30] sm:$0xff]
        %v623 = vld [vmem:[%s517 + $0x38] sm:$0xff]
        %v624 = vld [vmem:[%s517 + $0x40] sm:$0xff]
        %v625 = vld [vmem:[%s517 + $0x48] sm:$0xff]
        %v626 = vld [vmem:[%s517 + $0x50] sm:$0xff]
        %v627 = vld [vmem:[%s517 + $0x58] sm:$0xff]
        %v628 = vld [vmem:[%s517 + $0x60] sm:$0xff]
        %v629 = vld [vmem:[%s517 + $0x68] sm:$0xff]
        %v630 = vld [vmem:[%s517 + $0x70] sm:$0xff]
        %v631 = vld [vmem:[%s517 + $0x78] sm:$0xff]
        %v632 = vld [vmem:[%s517 + $0x80] sm:$0xff]
        %v633 = vld [vmem:[%s517 + $0x88] sm:$0xff]
        %v634 = vld [vmem:[%s517 + $0x90] sm:$0xff]
        %v635 = vld [vmem:[%s517 + $0x98] sm:$0xff]
        %v636 = vld [vmem:[%s517 + $0xa0] sm:$0xff]
        %v637 = vld [vmem:[%s517 + $0xa8] sm:$0xff]
        %v638 = vld [vmem:[%s517 + $0xb0] sm:$0xff]
        %v639 = vld [vmem:[%s517 + $0xb8] sm:$0xff]
        %v640 = vld [vmem:[%s517 + $0xc0] sm:$0xff]
        %v641 = vld [vmem:[%s517 + $0xc8] sm:$0xff]
        %v642 = vld [vmem:[%s517 + $0xd0] sm:$0xff]
        %v643 = vld [vmem:[%s517 + $0xd8] sm:$0xff]
        %v644 = vld [vmem:[%s517 + $0xe0] sm:$0xff]
        %v645 = vld [vmem:[%s517 + $0xe8] sm:$0xff]
        %v646 = vld [vmem:[%s517 + $0xf0] sm:$0xff]
        %v647 = vld [vmem:[%s517 + $0xf8] sm:$0xff]
        %v648 = vld [vmem:[%s517 + $0x100] sm:$0xff]
        %v649 = vld [vmem:[%s517 + $0x108] sm:$0xff]
        %v650 = vld [vmem:[%s517 + $0x110] sm:$0xff]
        %v651 = vld [vmem:[%s517 + $0x118] sm:$0xff]
        %v652 = vld [vmem:[%s517 + $0x120] sm:$0xff]
        %v653 = vld [vmem:[%s517 + $0x128] sm:$0xff]
        %v654 = vld [vmem:[%s517 + $0x130] sm:$0xff]
        %v655 = vld [vmem:[%s517 + $0x138] sm:$0xff]
        %v656 = vld [vmem:[%s517 + $0x140] sm:$0xff]
        %v657 = vld [vmem:[%s517 + $0x148] sm:$0xff]
        %v658 = vld [vmem:[%s517 + $0x150] sm:$0xff]
        %v659 = vld [vmem:[%s517 + $0x158] sm:$0xff]
        %v660 = vld [vmem:[%s517 + $0x160] sm:$0xff]
        %v661 = vld [vmem:[%s517 + $0x168] sm:$0xff]
        %v662 = vld [vmem:[%s517 + $0x170] sm:$0xff]
        %v663 = vld [vmem:[%s517 + $0x178] sm:$0xff]
        %v664 = vld [vmem:[%s517 + $0x180] sm:$0xff]
        %v665 = vld [vmem:[%s517 + $0x188] sm:$0xff]
        %v666 = vld [vmem:[%s517 + $0x190] sm:$0xff]
        %v667 = vld [vmem:[%s517 + $0x198] sm:$0xff]
        %v668 = vld [vmem:[%s517 + $0x1a0] sm:$0xff]
        %v669 = vld [vmem:[%s517 + $0x1a8] sm:$0xff]
        %v670 = vld [vmem:[%s517 + $0x1b0] sm:$0xff]
        %v671 = vld [vmem:[%s517 + $0x1b8] sm:$0xff]
        %v672 = vld [vmem:[%s517 + $0x1c0] sm:$0xff]
        %v673 = vld [vmem:[%s517 + $0x1c8] sm:$0xff]
        %v674 = vld [vmem:[%s517 + $0x1d0] sm:$0xff]
        %v675 = vld [vmem:[%s517 + $0x1d8] sm:$0xff]
        %v676 = vld [vmem:[%s517 + $0x1e0] sm:$0xff]
        %v677 = vld [vmem:[%s517 + $0x1e8] sm:$0xff]
        %v678 = vld [vmem:[%s517 + $0x1f0] sm:$0xff]
        %v679 = vld [vmem:[%s517 + $0x1f8] sm:$0xff]
        %v680 = vld [vmem:[%s517 + $0x200] sm:$0xff]
        %v681 = vld [vmem:[%s517 + $0x208] sm:$0xff]
        %v682 = vld [vmem:[%s517 + $0x210] sm:$0xff]
        %v683 = vld [vmem:[%s517 + $0x218] sm:$0xff]
        %v684 = vld [vmem:[%s517 + $0x220] sm:$0xff]
        %v685 = vld [vmem:[%s517 + $0x228] sm:$0xff]
        %v686 = vld [vmem:[%s517 + $0x230] sm:$0xff]
        %v687 = vld [vmem:[%s517 + $0x238] sm:$0xff]
        %v688 = vld [vmem:[%s517 + $0x240] sm:$0xff]
        %v689 = vld [vmem:[%s517 + $0x248] sm:$0xff]
        %v690 = vld [vmem:[%s517 + $0x250] sm:$0xff]
        %v691 = vld [vmem:[%s517 + $0x258] sm:$0xff]
        %v692 = vld [vmem:[%s517 + $0x260] sm:$0xff]
        %v693 = vld [vmem:[%s517 + $0x268] sm:$0xff]
        %v694 = vld [vmem:[%s517 + $0x270] sm:$0xff]
        %v695 = vld [vmem:[%s517 + $0x278] sm:$0xff]
        %v696 = vld [vmem:[%s517 + $0x280] sm:$0xff]
        %v697 = vld [vmem:[%s517 + $0x288] sm:$0xff]
        %v698 = vld [vmem:[%s517 + $0x290] sm:$0xff]
        %v699 = vld [vmem:[%s517 + $0x298] sm:$0xff]
        %v700 = vld [vmem:[%s517 + $0x2a0] sm:$0xff]
        %v701 = vld [vmem:[%s517 + $0x2a8] sm:$0xff]
        %v702 = vld [vmem:[%s517 + $0x2b0] sm:$0xff]
        %v703 = vld [vmem:[%s517 + $0x2b8] sm:$0xff]
        %v704 = vld [vmem:[%s517 + $0x2c0] sm:$0xff]
        %v705 = vld [vmem:[%s517 + $0x2c8] sm:$0xff]
        %v706 = vld [vmem:[%s517 + $0x2d0] sm:$0xff]
        %v707 = vld [vmem:[%s517 + $0x2d8] sm:$0xff]
        %v708 = vld [vmem:[%s517 + $0x2e0] sm:$0xff]
        %v709 = vld [vmem:[%s517 + $0x2e8] sm:$0xff]
        %v710 = vld [vmem:[%s517 + $0x2f0] sm:$0xff]
        %v711 = vld [vmem:[%s517 + $0x2f8] sm:$0xff]
        %v712 = vld [vmem:[%s517 + $0x300] sm:$0xff]
        %v713 = vld [vmem:[%s517 + $0x308] sm:$0xff]
        %v714 = vld [vmem:[%s517 + $0x310] sm:$0xff]
        %v715 = vld [vmem:[%s517 + $0x318] sm:$0xff]
        %v716 = vld [vmem:[%s517 + $0x320] sm:$0xff]
        %v717 = vld [vmem:[%s517 + $0x328] sm:$0xff]
        %v718 = vld [vmem:[%s517 + $0x330] sm:$0xff]
        %v719 = vld [vmem:[%s517 + $0x338] sm:$0xff]
        %v720 = vld [vmem:[%s517 + $0x340] sm:$0xff]
        %v721 = vld [vmem:[%s517 + $0x348] sm:$0xff]
        %v722 = vld [vmem:[%s517 + $0x350] sm:$0xff]
        %v723 = vld [vmem:[%s517 + $0x358] sm:$0xff]
        %v724 = vld [vmem:[%s517 + $0x360] sm:$0xff]
        %v725 = vld [vmem:[%s517 + $0x368] sm:$0xff]
        %v726 = vld [vmem:[%s517 + $0x370] sm:$0xff]
        %v727 = vld [vmem:[%s517 + $0x378] sm:$0xff]
        %v728 = vld [vmem:[%s517 + $0x380] sm:$0xff]
        %v729 = vld [vmem:[%s517 + $0x388] sm:$0xff]
        %v730 = vld [vmem:[%s517 + $0x390] sm:$0xff]
        %v731 = vld [vmem:[%s517 + $0x398] sm:$0xff]
        %v732 = vld [vmem:[%s517 + $0x3a0] sm:$0xff]
        %v733 = vld [vmem:[%s517 + $0x3a8] sm:$0xff]
        %v734 = vld [vmem:[%s517 + $0x3b0] sm:$0xff]
        %v735 = vld [vmem:[%s517 + $0x3b8] sm:$0xff]
        %v736 = vld [vmem:[%s517 + $0x3c0] sm:$0xff]
        %v737 = vld [vmem:[%s517 + $0x3c8] sm:$0xff]
        %v738 = vld [vmem:[%s517 + $0x3d0] sm:$0xff]
        %v739 = vld [vmem:[%s517 + $0x3d8] sm:$0xff]
        %v740 = vld [vmem:[%s517 + $0x3e0] sm:$0xff]
        %v741 = vld [vmem:[%s517 + $0x3e8] sm:$0xff]
        %v742 = vld [vmem:[%s517 + $0x3f0] sm:$0xff]
        %v743 = vld [vmem:[%s517 + $0x3f8] sm:$0xff]
        %v744 = vld [vmem:[%s517 + $0x400] sm:$0xff]
        %v745 = vld [vmem:[%s517 + $0x408] sm:$0xff]
        %v746 = vld [vmem:[%s517 + $0x410] sm:$0xff]
        %v747 = vld [vmem:[%s517 + $0x418] sm:$0xff]
        %v748 = vld [vmem:[%s517 + $0x420] sm:$0xff]
        %v749 = vld [vmem:[%s517 + $0x428] sm:$0xff]
        %v750 = vld [vmem:[%s517 + $0x430] sm:$0xff]
        %v751 = vld [vmem:[%s517 + $0x438] sm:$0xff]
        %v752 = vld [vmem:[%s517 + $0x440] sm:$0xff]
        %v753 = vld [vmem:[%s517 + $0x448] sm:$0xff]
        %v754 = vld [vmem:[%s517 + $0x450] sm:$0xff]
        %v755 = vld [vmem:[%s517 + $0x458] sm:$0xff]
        %v756 = vld [vmem:[%s517 + $0x460] sm:$0xff]
        %v757 = vld [vmem:[%s517 + $0x468] sm:$0xff]
        %v758 = vld [vmem:[%s517 + $0x470] sm:$0xff]
        %v759 = vld [vmem:[%s517 + $0x478] sm:$0xff]
        %v760 = vld [vmem:[%s517 + $0x480] sm:$0xff]
        %v761 = vld [vmem:[%s517 + $0x488] sm:$0xff]
        %v762 = vld [vmem:[%s517 + $0x490] sm:$0xff]
        %v763 = vld [vmem:[%s517 + $0x498] sm:$0xff]
        %v764 = vld [vmem:[%s517 + $0x4a0] sm:$0xff]
        %v765 = vld [vmem:[%s517 + $0x4a8] sm:$0xff]
        %v766 = vld [vmem:[%s517 + $0x4b0] sm:$0xff]
        %v767 = vld [vmem:[%s517 + $0x4b8] sm:$0xff]
        %v768 = vld [vmem:[%s517 + $0x4c0] sm:$0xff]
        %v769 = vld [vmem:[%s517 + $0x4c8] sm:$0xff]
        %v770 = vld [vmem:[%s517 + $0x4d0] sm:$0xff]
        %v771 = vld [vmem:[%s517 + $0x4d8] sm:$0xff]
        %v772 = vld [vmem:[%s517 + $0x4e0] sm:$0xff]
        %v773 = vld [vmem:[%s517 + $0x4e8] sm:$0xff]
        %v774 = vld [vmem:[%s517 + $0x4f0] sm:$0xff]
        %v775 = vld [vmem:[%s517 + $0x4f8] sm:$0xff]
        %v776 = vld [vmem:[%s517 + $0x500] sm:$0xff]
        %v777 = vld [vmem:[%s517 + $0x508] sm:$0xff]
        %v778 = vld [vmem:[%s517 + $0x510] sm:$0xff]
        %v779 = vld [vmem:[%s517 + $0x518] sm:$0xff]
        %v780 = vld [vmem:[%s517 + $0x520] sm:$0xff]
        %v781 = vld [vmem:[%s517 + $0x528] sm:$0xff]
        %v782 = vld [vmem:[%s517 + $0x530] sm:$0xff]
        %v783 = vld [vmem:[%s517 + $0x538] sm:$0xff]
        %v784 = vld [vmem:[%s517 + $0x540] sm:$0xff]
        %v785 = vld [vmem:[%s517 + $0x548] sm:$0xff]
        %v786 = vld [vmem:[%s517 + $0x550] sm:$0xff]
        %v787 = vld [vmem:[%s517 + $0x558] sm:$0xff]
        %v788 = vld [vmem:[%s517 + $0x560] sm:$0xff]
        %v789 = vld [vmem:[%s517 + $0x568] sm:$0xff]
        %v790 = vld [vmem:[%s517 + $0x570] sm:$0xff]
        %v791 = vld [vmem:[%s517 + $0x578] sm:$0xff]
        %v792 = vld [vmem:[%s517 + $0x580] sm:$0xff]
        %v793 = vld [vmem:[%s517 + $0x588] sm:$0xff]
        %v794 = vld [vmem:[%s517 + $0x590] sm:$0xff]
        %v795 = vld [vmem:[%s517 + $0x598] sm:$0xff]
        %v796 = vld [vmem:[%s517 + $0x5a0] sm:$0xff]
        %v797 = vld [vmem:[%s517 + $0x5a8] sm:$0xff]
        %v798 = vld [vmem:[%s517 + $0x5b0] sm:$0xff]
        %v799 = vld [vmem:[%s517 + $0x5b8] sm:$0xff]
        %v800 = vld [vmem:[%s517 + $0x5c0] sm:$0xff]
        %v801 = vld [vmem:[%s517 + $0x5c8] sm:$0xff]
        %v802 = vld [vmem:[%s517 + $0x5d0] sm:$0xff]
        %v803 = vld [vmem:[%s517 + $0x5d8] sm:$0xff]
        %v804 = vld [vmem:[%s517 + $0x5e0] sm:$0xff]
        %v805 = vld [vmem:[%s517 + $0x5e8] sm:$0xff]
        %v806 = vld [vmem:[%s517 + $0x5f0] sm:$0xff]
        %v807 = vld [vmem:[%s517 + $0x5f8] sm:$0xff]
        %v808 = vld [vmem:[%s517 + $0x600] sm:$0xff]
        %v809 = vld [vmem:[%s517 + $0x608] sm:$0xff]
        %v810 = vld [vmem:[%s517 + $0x610] sm:$0xff]
        %v811 = vld [vmem:[%s517 + $0x618] sm:$0xff]
        %v812 = vld [vmem:[%s517 + $0x620] sm:$0xff]
        %v813 = vld [vmem:[%s517 + $0x628] sm:$0xff]
        %v814 = vld [vmem:[%s517 + $0x630] sm:$0xff]
        %v815 = vld [vmem:[%s517 + $0x638] sm:$0xff]
        %v816 = vld [vmem:[%s517 + $0x640] sm:$0xff]
        %v817 = vld [vmem:[%s517 + $0x648] sm:$0xff]
        %v818 = vld [vmem:[%s517 + $0x650] sm:$0xff]
        %v819 = vld [vmem:[%s517 + $0x658] sm:$0xff]
        %v820 = vld [vmem:[%s517 + $0x660] sm:$0xff]
        %v821 = vld [vmem:[%s517 + $0x668] sm:$0xff]
        %v822 = vld [vmem:[%s517 + $0x670] sm:$0xff]
        %v823 = vld [vmem:[%s517 + $0x678] sm:$0xff]
        %v824 = vld [vmem:[%s517 + $0x680] sm:$0xff]
        %v825 = vld [vmem:[%s517 + $0x688] sm:$0xff]
        %v826 = vld [vmem:[%s517 + $0x690] sm:$0xff]
        %v827 = vld [vmem:[%s517 + $0x698] sm:$0xff]
        %v828 = vld [vmem:[%s517 + $0x6a0] sm:$0xff]
        %v829 = vld [vmem:[%s517 + $0x6a8] sm:$0xff]
        %v830 = vld [vmem:[%s517 + $0x6b0] sm:$0xff]
        %v831 = vld [vmem:[%s517 + $0x6b8] sm:$0xff]
        %v832 = vld [vmem:[%s517 + $0x6c0] sm:$0xff]
        %v833 = vld [vmem:[%s517 + $0x6c8] sm:$0xff]
        %v834 = vld [vmem:[%s517 + $0x6d0] sm:$0xff]
        %v835 = vld [vmem:[%s517 + $0x6d8] sm:$0xff]
        %v836 = vld [vmem:[%s517 + $0x6e0] sm:$0xff]
        %v837 = vld [vmem:[%s517 + $0x6e8] sm:$0xff]
        %v838 = vld [vmem:[%s517 + $0x6f0] sm:$0xff]
        %v839 = vld [vmem:[%s517 + $0x6f8] sm:$0xff]
        %v840 = vld [vmem:[%s517 + $0x700] sm:$0xff]
        %v841 = vld [vmem:[%s517 + $0x708] sm:$0xff]
        %v842 = vld [vmem:[%s517 + $0x710] sm:$0xff]
        %v843 = vld [vmem:[%s517 + $0x718] sm:$0xff]
        %v844 = vld [vmem:[%s517 + $0x720] sm:$0xff]
        %v845 = vld [vmem:[%s517 + $0x728] sm:$0xff]
        %v846 = vld [vmem:[%s517 + $0x730] sm:$0xff]
        %v847 = vld [vmem:[%s517 + $0x738] sm:$0xff]
        %v848 = vld [vmem:[%s517 + $0x740] sm:$0xff]
        %v849 = vld [vmem:[%s517 + $0x748] sm:$0xff]
        %v850 = vld [vmem:[%s517 + $0x750] sm:$0xff]
        %v851 = vld [vmem:[%s517 + $0x758] sm:$0xff]
        %v852 = vld [vmem:[%s517 + $0x760] sm:$0xff]
        %v853 = vld [vmem:[%s517 + $0x768] sm:$0xff]
        %v854 = vld [vmem:[%s517 + $0x770] sm:$0xff]
        %v855 = vld [vmem:[%s517 + $0x778] sm:$0xff]
        %v856 = vld [vmem:[%s517 + $0x780] sm:$0xff]
        %v857 = vld [vmem:[%s517 + $0x788] sm:$0xff]
        %v858 = vld [vmem:[%s517 + $0x790] sm:$0xff]
        %v859 = vld [vmem:[%s517 + $0x798] sm:$0xff]
        %v860 = vld [vmem:[%s517 + $0x7a0] sm:$0xff]
        %v861 = vld [vmem:[%s517 + $0x7a8] sm:$0xff]
        %v862 = vld [vmem:[%s517 + $0x7b0] sm:$0xff]
        %v863 = vld [vmem:[%s517 + $0x7b8] sm:$0xff]
        %v864 = vld [vmem:[%s517 + $0x7c0] sm:$0xff]
        %v865 = vld [vmem:[%s517 + $0x7c8] sm:$0xff]
        %v866 = vld [vmem:[%s517 + $0x7d0] sm:$0xff]
        %v867 = vld [vmem:[%s517 + $0x7d8] sm:$0xff]
        %v868 = vld [vmem:[%s517 + $0x7e0] sm:$0xff]
        %v869 = vld [vmem:[%s517 + $0x7e8] sm:$0xff]
        %v870 = vld [vmem:[%s517 + $0x7f0] sm:$0xff]
        %v871 = vld [vmem:[%s517 + $0x7f8] sm:$0xff]
        %v872 = vld [vmem:[%s517 + $0x800] sm:$0xff]
        %v873 = vld [vmem:[%s517 + $0x808] sm:$0xff]
        %v874 = vld [vmem:[%s517 + $0x810] sm:$0xff]
        %v875 = vld [vmem:[%s517 + $0x818] sm:$0xff]
        %v876 = vld [vmem:[%s517 + $0x820] sm:$0xff]
        %v877 = vld [vmem:[%s517 + $0x828] sm:$0xff]
        %v878 = vld [vmem:[%s517 + $0x830] sm:$0xff]
        %v879 = vld [vmem:[%s517 + $0x838] sm:$0xff]
        %v880 = vld [vmem:[%s517 + $0x840] sm:$0xff]
        %v881 = vld [vmem:[%s517 + $0x848] sm:$0xff]
        %v882 = vld [vmem:[%s517 + $0x850] sm:$0xff]
        %v883 = vld [vmem:[%s517 + $0x858] sm:$0xff]
        %v884 = vld [vmem:[%s517 + $0x860] sm:$0xff]
        %v885 = vld [vmem:[%s517 + $0x868] sm:$0xff]
        %v886 = vld [vmem:[%s517 + $0x870] sm:$0xff]
        %v887 = vld [vmem:[%s517 + $0x878] sm:$0xff]
        %v888 = vld [vmem:[%s517 + $0x880] sm:$0xff]
        %v889 = vld [vmem:[%s517 + $0x888] sm:$0xff]
        %v890 = vld [vmem:[%s517 + $0x890] sm:$0xff]
        %v891 = vld [vmem:[%s517 + $0x898] sm:$0xff]
        %v892 = vld [vmem:[%s517 + $0x8a0] sm:$0xff]
        %v893 = vld [vmem:[%s517 + $0x8a8] sm:$0xff]
        %v894 = vld [vmem:[%s517 + $0x8b0] sm:$0xff]
        %v895 = vld [vmem:[%s517 + $0x8b8] sm:$0xff]
        %v896 = vld [vmem:[%s517 + $0x8c0] sm:$0xff]
        %v897 = vld [vmem:[%s517 + $0x8c8] sm:$0xff]
        %v898 = vld [vmem:[%s517 + $0x8d0] sm:$0xff]
        %v899 = vld [vmem:[%s517 + $0x8d8] sm:$0xff]
        %v900 = vld [vmem:[%s517 + $0x8e0] sm:$0xff]
        %v901 = vld [vmem:[%s517 + $0x8e8] sm:$0xff]
        %v902 = vld [vmem:[%s517 + $0x8f0] sm:$0xff]
        %v903 = vld [vmem:[%s517 + $0x8f8] sm:$0xff]
        %v904 = vld [vmem:[%s517 + $0x900] sm:$0xff]
        %v905 = vld [vmem:[%s517 + $0x908] sm:$0xff]
        %v906 = vld [vmem:[%s517 + $0x910] sm:$0xff]
        %v907 = vld [vmem:[%s517 + $0x918] sm:$0xff]
        %v908 = vld [vmem:[%s517 + $0x920] sm:$0xff]
        %v909 = vld [vmem:[%s517 + $0x928] sm:$0xff]
        %v910 = vld [vmem:[%s517 + $0x930] sm:$0xff]
        %v911 = vld [vmem:[%s517 + $0x938] sm:$0xff]
        %v912 = vld [vmem:[%s517 + $0x940] sm:$0xff]
        %v913 = vld [vmem:[%s517 + $0x948] sm:$0xff]
        %v914 = vld [vmem:[%s517 + $0x950] sm:$0xff]
        %v915 = vld [vmem:[%s517 + $0x958] sm:$0xff]
        %v916 = vld [vmem:[%s517 + $0x960] sm:$0xff]
        %v917 = vld [vmem:[%s517 + $0x968] sm:$0xff]
        %v918 = vld [vmem:[%s517 + $0x970] sm:$0xff]
        %v919 = vld [vmem:[%s517 + $0x978] sm:$0xff]
        %v920 = vld [vmem:[%s517 + $0x980] sm:$0xff]
        %v921 = vld [vmem:[%s517 + $0x988] sm:$0xff]
        %v922 = vld [vmem:[%s517 + $0x990] sm:$0xff]
        %v923 = vld [vmem:[%s517 + $0x998] sm:$0xff]
        %v924 = vld [vmem:[%s517 + $0x9a0] sm:$0xff]
        %v925 = vld [vmem:[%s517 + $0x9a8] sm:$0xff]
        %v926 = vld [vmem:[%s517 + $0x9b0] sm:$0xff]
        %v927 = vld [vmem:[%s517 + $0x9b8] sm:$0xff]
        %v928 = vld [vmem:[%s517 + $0x9c0] sm:$0xff]
        %v929 = vld [vmem:[%s517 + $0x9c8] sm:$0xff]
        %v930 = vld [vmem:[%s517 + $0x9d0] sm:$0xff]
        %v931 = vld [vmem:[%s517 + $0x9d8] sm:$0xff]
        %v932 = vld [vmem:[%s517 + $0x9e0] sm:$0xff]
        %v933 = vld [vmem:[%s517 + $0x9e8] sm:$0xff]
        %v934 = vld [vmem:[%s517 + $0x9f0] sm:$0xff]
        %v935 = vld [vmem:[%s517 + $0x9f8] sm:$0xff]
        %v936 = vld [vmem:[%s517 + $0xa00] sm:$0xff]
        %v937 = vld [vmem:[%s517 + $0xa08] sm:$0xff]
        %v938 = vld [vmem:[%s517 + $0xa10] sm:$0xff]
        %v939 = vld [vmem:[%s517 + $0xa18] sm:$0xff]
        %v940 = vld [vmem:[%s517 + $0xa20] sm:$0xff]
        %v941 = vld [vmem:[%s517 + $0xa28] sm:$0xff]
        %v942 = vld [vmem:[%s517 + $0xa30] sm:$0xff]
        %v943 = vld [vmem:[%s517 + $0xa38] sm:$0xff]
        %v944 = vld [vmem:[%s517 + $0xa40] sm:$0xff]
        %v945 = vld [vmem:[%s517 + $0xa48] sm:$0xff]
        %v946 = vld [vmem:[%s517 + $0xa50] sm:$0xff]
        %v947 = vld [vmem:[%s517 + $0xa58] sm:$0xff]
        %v948 = vld [vmem:[%s517 + $0xa60] sm:$0xff]
        %v949 = vld [vmem:[%s517 + $0xa68] sm:$0xff]
        %v950 = vld [vmem:[%s517 + $0xa70] sm:$0xff]
        %v951 = vld [vmem:[%s517 + $0xa78] sm:$0xff]
        %v952 = vld [vmem:[%s517 + $0xa80] sm:$0xff]
        %v953 = vld [vmem:[%s517 + $0xa88] sm:$0xff]
        %v954 = vld [vmem:[%s517 + $0xa90] sm:$0xff]
        %v955 = vld [vmem:[%s517 + $0xa98] sm:$0xff]
        %v956 = vld [vmem:[%s517 + $0xaa0] sm:$0xff]
        %v957 = vld [vmem:[%s517 + $0xaa8] sm:$0xff]
        %v958 = vld [vmem:[%s517 + $0xab0] sm:$0xff]
        %v959 = vld [vmem:[%s517 + $0xab8] sm:$0xff]
        %v960 = vld [vmem:[%s517 + $0xac0] sm:$0xff]
        %v961 = vld [vmem:[%s517 + $0xac8] sm:$0xff]
        %v962 = vld [vmem:[%s517 + $0xad0] sm:$0xff]
        %v963 = vld [vmem:[%s517 + $0xad8] sm:$0xff]
        %v964 = vld [vmem:[%s517 + $0xae0] sm:$0xff]
        %v965 = vld [vmem:[%s517 + $0xae8] sm:$0xff]
        %v966 = vld [vmem:[%s517 + $0xaf0] sm:$0xff]
        %v967 = vld [vmem:[%s517 + $0xaf8] sm:$0xff]
        %v968 = vld [vmem:[%s517 + $0xb00] sm:$0xff]
        %v969 = vld [vmem:[%s517 + $0xb08] sm:$0xff]
        %v970 = vld [vmem:[%s517 + $0xb10] sm:$0xff]
        %v971 = vld [vmem:[%s517 + $0xb18] sm:$0xff]
        %v972 = vld [vmem:[%s517 + $0xb20] sm:$0xff]
        %v973 = vld [vmem:[%s517 + $0xb28] sm:$0xff]
        %v974 = vld [vmem:[%s517 + $0xb30] sm:$0xff]
        %v975 = vld [vmem:[%s517 + $0xb38] sm:$0xff]
        %v976 = vld [vmem:[%s517 + $0xb40] sm:$0xff]
        %v977 = vld [vmem:[%s517 + $0xb48] sm:$0xff]
        %v978 = vld [vmem:[%s517 + $0xb50] sm:$0xff]
        %v979 = vld [vmem:[%s517 + $0xb58] sm:$0xff]
        %v980 = vld [vmem:[%s517 + $0xb60] sm:$0xff]
        %v981 = vld [vmem:[%s517 + $0xb68] sm:$0xff]
        %v982 = vld [vmem:[%s517 + $0xb70] sm:$0xff]
        %v983 = vld [vmem:[%s517 + $0xb78] sm:$0xff]
        %v984 = vld [vmem:[%s517 + $0xb80] sm:$0xff]
        %v985 = vld [vmem:[%s517 + $0xb88] sm:$0xff]
        %v986 = vld [vmem:[%s517 + $0xb90] sm:$0xff]
        %v987 = vld [vmem:[%s517 + $0xb98] sm:$0xff]
        %v988 = vld [vmem:[%s517 + $0xba0] sm:$0xff]
        %v989 = vld [vmem:[%s517 + $0xba8] sm:$0xff]
        %v990 = vld [vmem:[%s517 + $0xbb0] sm:$0xff]
        %v991 = vld [vmem:[%s517 + $0xbb8] sm:$0xff]
        %v992 = vld [vmem:[%s517 + $0xbc0] sm:$0xff]
        %v993 = vld [vmem:[%s517 + $0xbc8] sm:$0xff]
        %v994 = vld [vmem:[%s517 + $0xbd0] sm:$0xff]
        %v995 = vld [vmem:[%s517 + $0xbd8] sm:$0xff]
        %v996 = vld [vmem:[%s517 + $0xbe0] sm:$0xff]
        %v997 = vld [vmem:[%s517 + $0xbe8] sm:$0xff]
        %v998 = vld [vmem:[%s517 + $0xbf0] sm:$0xff]
        %v999 = vld [vmem:[%s517 + $0xbf8] sm:$0xff]
        %v1000 = vld [vmem:[%s517 + $0xc00] sm:$0xff]
        %v1001 = vld [vmem:[%s517 + $0xc08] sm:$0xff]
        %v1002 = vld [vmem:[%s517 + $0xc10] sm:$0xff]
        %v1003 = vld [vmem:[%s517 + $0xc18] sm:$0xff]
        %v1004 = vld [vmem:[%s517 + $0xc20] sm:$0xff]
        %v1005 = vld [vmem:[%s517 + $0xc28] sm:$0xff]
        %v1006 = vld [vmem:[%s517 + $0xc30] sm:$0xff]
        %v1007 = vld [vmem:[%s517 + $0xc38] sm:$0xff]
        %v1008 = vld [vmem:[%s517 + $0xc40] sm:$0xff]
        %v1009 = vld [vmem:[%s517 + $0xc48] sm:$0xff]
        %v1010 = vld [vmem:[%s517 + $0xc50] sm:$0xff]
        %v1011 = vld [vmem:[%s517 + $0xc58] sm:$0xff]
        %v1012 = vld [vmem:[%s517 + $0xc60] sm:$0xff]
        %v1013 = vld [vmem:[%s517 + $0xc68] sm:$0xff]
        %v1014 = vld [vmem:[%s517 + $0xc70] sm:$0xff]
        %v1015 = vld [vmem:[%s517 + $0xc78] sm:$0xff]
        %v1016 = vld [vmem:[%s517 + $0xc80] sm:$0xff]
        %v1017 = vld [vmem:[%s517 + $0xc88] sm:$0xff]
        %v1018 = vld [vmem:[%s517 + $0xc90] sm:$0xff]
        %v1019 = vld [vmem:[%s517 + $0xc98] sm:$0xff]
        %v1020 = vld [vmem:[%s517 + $0xca0] sm:$0xff]
        %v1021 = vld [vmem:[%s517 + $0xca8] sm:$0xff]
        %v1022 = vld [vmem:[%s517 + $0xcb0] sm:$0xff]
        %v1023 = vld [vmem:[%s517 + $0xcb8] sm:$0xff]
        %v1024 = vld [vmem:[%s517 + $0xcc0] sm:$0xff]
        %v1025 = vld [vmem:[%s517 + $0xcc8] sm:$0xff]
        %v1026 = vld [vmem:[%s517 + $0xcd0] sm:$0xff]
        %v1027 = vld [vmem:[%s517 + $0xcd8] sm:$0xff]
        %v1028 = vld [vmem:[%s517 + $0xce0] sm:$0xff]
        %v1029 = vld [vmem:[%s517 + $0xce8] sm:$0xff]
        %v1030 = vld [vmem:[%s517 + $0xcf0] sm:$0xff]
        %v1031 = vld [vmem:[%s517 + $0xcf8] sm:$0xff]
        %v1032 = vld [vmem:[%s517 + $0xd00] sm:$0xff]
        %v1033 = vld [vmem:[%s517 + $0xd08] sm:$0xff]
        %v1034 = vld [vmem:[%s517 + $0xd10] sm:$0xff]
        %v1035 = vld [vmem:[%s517 + $0xd18] sm:$0xff]
        %v1036 = vld [vmem:[%s517 + $0xd20] sm:$0xff]
        %v1037 = vld [vmem:[%s517 + $0xd28] sm:$0xff]
        %v1038 = vld [vmem:[%s517 + $0xd30] sm:$0xff]
        %v1039 = vld [vmem:[%s517 + $0xd38] sm:$0xff]
        %v1040 = vld [vmem:[%s517 + $0xd40] sm:$0xff]
        %v1041 = vld [vmem:[%s517 + $0xd48] sm:$0xff]
        %v1042 = vld [vmem:[%s517 + $0xd50] sm:$0xff]
        %v1043 = vld [vmem:[%s517 + $0xd58] sm:$0xff]
        %v1044 = vld [vmem:[%s517 + $0xd60] sm:$0xff]
        %v1045 = vld [vmem:[%s517 + $0xd68] sm:$0xff]
        %v1046 = vld [vmem:[%s517 + $0xd70] sm:$0xff]
        %v1047 = vld [vmem:[%s517 + $0xd78] sm:$0xff]
        %v1048 = vld [vmem:[%s517 + $0xd80] sm:$0xff]
        %v1049 = vld [vmem:[%s517 + $0xd88] sm:$0xff]
        %v1050 = vld [vmem:[%s517 + $0xd90] sm:$0xff]
        %v1051 = vld [vmem:[%s517 + $0xd98] sm:$0xff]
        %v1052 = vld [vmem:[%s517 + $0xda0] sm:$0xff]
        %v1053 = vld [vmem:[%s517 + $0xda8] sm:$0xff]
        %v1054 = vld [vmem:[%s517 + $0xdb0] sm:$0xff]
        %v1055 = vld [vmem:[%s517 + $0xdb8] sm:$0xff]
        %v1056 = vld [vmem:[%s517 + $0xdc0] sm:$0xff]
        %v1057 = vld [vmem:[%s517 + $0xdc8] sm:$0xff]
        %v1058 = vld [vmem:[%s517 + $0xdd0] sm:$0xff]
        %v1059 = vld [vmem:[%s517 + $0xdd8] sm:$0xff]
        %v1060 = vld [vmem:[%s517 + $0xde0] sm:$0xff]
        %v1061 = vld [vmem:[%s517 + $0xde8] sm:$0xff]
        %v1062 = vld [vmem:[%s517 + $0xdf0] sm:$0xff]
        %v1063 = vld [vmem:[%s517 + $0xdf8] sm:$0xff]
        %v1064 = vld [vmem:[%s517 + $0xe00] sm:$0xff]
        %v1065 = vld [vmem:[%s517 + $0xe08] sm:$0xff]
        %v1066 = vld [vmem:[%s517 + $0xe10] sm:$0xff]
        %v1067 = vld [vmem:[%s517 + $0xe18] sm:$0xff]
        %v1068 = vld [vmem:[%s517 + $0xe20] sm:$0xff]
        %v1069 = vld [vmem:[%s517 + $0xe28] sm:$0xff]
        %v1070 = vld [vmem:[%s517 + $0xe30] sm:$0xff]
        %v1071 = vld [vmem:[%s517 + $0xe38] sm:$0xff]
        %v1072 = vld [vmem:[%s517 + $0xe40] sm:$0xff]
        %v1073 = vld [vmem:[%s517 + $0xe48] sm:$0xff]
        %v1074 = vld [vmem:[%s517 + $0xe50] sm:$0xff]
        %v1075 = vld [vmem:[%s517 + $0xe58] sm:$0xff]
        %v1076 = vld [vmem:[%s517 + $0xe60] sm:$0xff]
        %v1077 = vld [vmem:[%s517 + $0xe68] sm:$0xff]
        %v1078 = vld [vmem:[%s517 + $0xe70] sm:$0xff]
        %v1079 = vld [vmem:[%s517 + $0xe78] sm:$0xff]
        %v1080 = vld [vmem:[%s517 + $0xe80] sm:$0xff]
        %v1081 = vld [vmem:[%s517 + $0xe88] sm:$0xff]
        %v1082 = vld [vmem:[%s517 + $0xe90] sm:$0xff]
        %v1083 = vld [vmem:[%s517 + $0xe98] sm:$0xff]
        %v1084 = vld [vmem:[%s517 + $0xea0] sm:$0xff]
        %v1085 = vld [vmem:[%s517 + $0xea8] sm:$0xff]
        %v1086 = vld [vmem:[%s517 + $0xeb0] sm:$0xff]
        %v1087 = vld [vmem:[%s517 + $0xeb8] sm:$0xff]
        %v1088 = vld [vmem:[%s517 + $0xec0] sm:$0xff]
        %v1089 = vld [vmem:[%s517 + $0xec8] sm:$0xff]
        %v1090 = vld [vmem:[%s517 + $0xed0] sm:$0xff]
        %v1091 = vld [vmem:[%s517 + $0xed8] sm:$0xff]
        %v1092 = vld [vmem:[%s517 + $0xee0] sm:$0xff]
        %v1093 = vld [vmem:[%s517 + $0xee8] sm:$0xff]
        %v1094 = vld [vmem:[%s517 + $0xef0] sm:$0xff]
        %v1095 = vld [vmem:[%s517 + $0xef8] sm:$0xff]
        %v1096 = vld [vmem:[%s517 + $0xf00] sm:$0xff]
        %v1097 = vld [vmem:[%s517 + $0xf08] sm:$0xff]
        %v1098 = vld [vmem:[%s517 + $0xf10] sm:$0xff]
        %v1099 = vld [vmem:[%s517 + $0xf18] sm:$0xff]
        %v1100 = vld [vmem:[%s517 + $0xf20] sm:$0xff]
        %v1101 = vld [vmem:[%s517 + $0xf28] sm:$0xff]
        %v1102 = vld [vmem:[%s517 + $0xf30] sm:$0xff]
        %v1103 = vld [vmem:[%s517 + $0xf38] sm:$0xff]
        %v1104 = vld [vmem:[%s517 + $0xf40] sm:$0xff]
        %v1105 = vld [vmem:[%s517 + $0xf48] sm:$0xff]
        %v1106 = vld [vmem:[%s517 + $0xf50] sm:$0xff]
        %v1107 = vld [vmem:[%s517 + $0xf58] sm:$0xff]
        %v1108 = vld [vmem:[%s517 + $0xf60] sm:$0xff]
        %v1109 = vld [vmem:[%s517 + $0xf68] sm:$0xff]
        %v1110 = vld [vmem:[%s517 + $0xf70] sm:$0xff]
        %v1111 = vld [vmem:[%s517 + $0xf78] sm:$0xff]
        %v1112 = vld [vmem:[%s517 + $0xf80] sm:$0xff]
        %v1113 = vld [vmem:[%s517 + $0xf88] sm:$0xff]
        %v1114 = vld [vmem:[%s517 + $0xf90] sm:$0xff]
        %v1115 = vld [vmem:[%s517 + $0xf98] sm:$0xff]
        %v1116 = vld [vmem:[%s517 + $0xfa0] sm:$0xff]
        %v1117 = vld [vmem:[%s517 + $0xfa8] sm:$0xff]
        %v1118 = vld [vmem:[%s517 + $0xfb0] sm:$0xff]
        %v1119 = vld [vmem:[%s517 + $0xfb8] sm:$0xff]
        %v1120 = vld [vmem:[%s517 + $0xfc0] sm:$0xff]
        %v1121 = vld [vmem:[%s517 + $0xfc8] sm:$0xff]
        %v1122 = vld [vmem:[%s517 + $0xfd0] sm:$0xff]
        %v1123 = vld [vmem:[%s517 + $0xfd8] sm:$0xff]
        %v1124 = vld [vmem:[%s517 + $0xfe0] sm:$0xff]
        %v1125 = vld [vmem:[%s517 + $0xfe8] sm:$0xff]
        %v1126 = vld [vmem:[%s517 + $0xff0] sm:$0xff]
        %v1127 = vld [vmem:[%s517 + $0xff8] sm:$0xff]
        %1129 = vst [vmem:[#allocation1] ss:$9 sm:$0xff] %v614
        %v1130 = vld [vmem:[#allocation1] sm:$0xff]
        %v1131 = vld [vmem:[#allocation1 + $0x9] sm:$0xff]
        %v1132 = vld [vmem:[#allocation1 + $0x12] sm:$0xff]
        %v1133 = vld [vmem:[#allocation1 + $0x1b] sm:$0xff]
        %v1134 = vld [vmem:[#allocation1 + $0x24] sm:$0xff]
        %v1135 = vld [vmem:[#allocation1 + $0x2d] sm:$0xff]
        %v1136 = vld [vmem:[#allocation1 + $0x36] sm:$0xff]
        %v1137 = vld [vmem:[#allocation1 + $0x3f] sm:$0xff]
        %1139 = vst [vmem:[#allocation1] ss:$9 sm:$0xff] %v615
        %v1140 = vld [vmem:[#allocation1] sm:$0xff]
        %v1141 = vld [vmem:[#allocation1 + $0x9] sm:$0xff]
        %v1142 = vld [vmem:[#allocation1 + $0x12] sm:$0xff]
        %v1143 = vld [vmem:[#allocation1 + $0x1b] sm:$0xff]
        %v1144 = vld [vmem:[#allocation1 + $0x24] sm:$0xff]
        %v1145 = vld [vmem:[#allocation1 + $0x2d] sm:$0xff]
        %v1146 = vld [vmem:[#allocation1 + $0x36] sm:$0xff]
        %v1147 = vld [vmem:[#allocation1 + $0x3f] sm:$0xff]
        %v1676 = vunpack.c.l.b16 %v616
        %v1677 = vunpack.c.h.b16 %v616
        %v1678 = vunpack.c.l.b16 %v617
        %v1679 = vunpack.c.h.b16 %v617
        %v1680 = vunpack.c.l.b16 %v618
        %v1681 = vunpack.c.h.b16 %v618
        %v1682 = vunpack.c.l.b16 %v619
        %v1683 = vunpack.c.h.b16 %v619
        %v1684 = vunpack.c.l.b16 %v620
        %v1685 = vunpack.c.h.b16 %v620
        %v1686 = vunpack.c.l.b16 %v621
        %v1687 = vunpack.c.h.b16 %v621
        %v1688 = vunpack.c.l.b16 %v622
        %v1689 = vunpack.c.h.b16 %v622
        %v1690 = vunpack.c.l.b16 %v623
        %v1691 = vunpack.c.h.b16 %v623
        %v1692 = vunpack.c.l.b16 %v624
        %v1693 = vunpack.c.h.b16 %v624
        %v1694 = vunpack.c.l.b16 %v625
        %v1695 = vunpack.c.h.b16 %v625
        %v1696 = vunpack.c.l.b16 %v626
        %v1697 = vunpack.c.h.b16 %v626
        %v1698 = vunpack.c.l.b16 %v627
        %v1699 = vunpack.c.h.b16 %v627
        %v1700 = vunpack.c.l.b16 %v628
        %v1701 = vunpack.c.h.b16 %v628
        %v1702 = vunpack.c.l.b16 %v629
        %v1703 = vunpack.c.h.b16 %v629
        %v1704 = vunpack.c.l.b16 %v630
        %v1705 = vunpack.c.h.b16 %v630
        %v1706 = vunpack.c.l.b16 %v631
        %v1707 = vunpack.c.h.b16 %v631
        %v1708 = vunpack.c.l.b16 %v632
        %v1709 = vunpack.c.h.b16 %v632
        %v1710 = vunpack.c.l.b16 %v633
        %v1711 = vunpack.c.h.b16 %v633
        %v1712 = vunpack.c.l.b16 %v634
        %v1713 = vunpack.c.h.b16 %v634
        %v1714 = vunpack.c.l.b16 %v635
        %v1715 = vunpack.c.h.b16 %v635
        %v1716 = vunpack.c.l.b16 %v636
        %v1717 = vunpack.c.h.b16 %v636
        %v1718 = vunpack.c.l.b16 %v637
        %v1719 = vunpack.c.h.b16 %v637
        %v1720 = vunpack.c.l.b16 %v638
        %v1721 = vunpack.c.h.b16 %v638
        %v1722 = vunpack.c.l.b16 %v639
        %v1723 = vunpack.c.h.b16 %v639
        %v1724 = vunpack.c.l.b16 %v640
        %v1725 = vunpack.c.h.b16 %v640
        %v1726 = vunpack.c.l.b16 %v641
        %v1727 = vunpack.c.h.b16 %v641
        %v1728 = vunpack.c.l.b16 %v642
        %v1729 = vunpack.c.h.b16 %v642
        %v1730 = vunpack.c.l.b16 %v643
        %v1731 = vunpack.c.h.b16 %v643
        %v1732 = vunpack.c.l.b16 %v644
        %v1733 = vunpack.c.h.b16 %v644
        %v1734 = vunpack.c.l.b16 %v645
        %v1735 = vunpack.c.h.b16 %v645
        %v1736 = vunpack.c.l.b16 %v646
        %v1737 = vunpack.c.h.b16 %v646
        %v1738 = vunpack.c.l.b16 %v647
        %v1739 = vunpack.c.h.b16 %v647
        %v1740 = vunpack.c.l.b16 %v648
        %v1741 = vunpack.c.h.b16 %v648
        %v1742 = vunpack.c.l.b16 %v649
        %v1743 = vunpack.c.h.b16 %v649
        %v1744 = vunpack.c.l.b16 %v650
        %v1745 = vunpack.c.h.b16 %v650
        %v1746 = vunpack.c.l.b16 %v651
        %v1747 = vunpack.c.h.b16 %v651
        %v1748 = vunpack.c.l.b16 %v652
        %v1749 = vunpack.c.h.b16 %v652
        %v1750 = vunpack.c.l.b16 %v653
        %v1751 = vunpack.c.h.b16 %v653
        %v1752 = vunpack.c.l.b16 %v654
        %v1753 = vunpack.c.h.b16 %v654
        %v1754 = vunpack.c.l.b16 %v655
        %v1755 = vunpack.c.h.b16 %v655
        %v1756 = vunpack.c.l.b16 %v656
        %v1757 = vunpack.c.h.b16 %v656
        %v1758 = vunpack.c.l.b16 %v657
        %v1759 = vunpack.c.h.b16 %v657
        %v1760 = vunpack.c.l.b16 %v658
        %v1761 = vunpack.c.h.b16 %v658
        %v1762 = vunpack.c.l.b16 %v659
        %v1763 = vunpack.c.h.b16 %v659
        %v1764 = vunpack.c.l.b16 %v660
        %v1765 = vunpack.c.h.b16 %v660
        %v1766 = vunpack.c.l.b16 %v661
        %v1767 = vunpack.c.h.b16 %v661
        %v1768 = vunpack.c.l.b16 %v662
        %v1769 = vunpack.c.h.b16 %v662
        %v1770 = vunpack.c.l.b16 %v663
        %v1771 = vunpack.c.h.b16 %v663
        %v1772 = vunpack.c.l.b16 %v664
        %v1773 = vunpack.c.h.b16 %v664
        %v1774 = vunpack.c.l.b16 %v665
        %v1775 = vunpack.c.h.b16 %v665
        %v1776 = vunpack.c.l.b16 %v666
        %v1777 = vunpack.c.h.b16 %v666
        %v1778 = vunpack.c.l.b16 %v667
        %v1779 = vunpack.c.h.b16 %v667
        %v1780 = vunpack.c.l.b16 %v668
        %v1781 = vunpack.c.h.b16 %v668
        %v1782 = vunpack.c.l.b16 %v669
        %v1783 = vunpack.c.h.b16 %v669
        %v1784 = vunpack.c.l.b16 %v670
        %v1785 = vunpack.c.h.b16 %v670
        %v1786 = vunpack.c.l.b16 %v671
        %v1787 = vunpack.c.h.b16 %v671
        %v1788 = vunpack.c.l.b16 %v672
        %v1789 = vunpack.c.h.b16 %v672
        %v1790 = vunpack.c.l.b16 %v673
        %v1791 = vunpack.c.h.b16 %v673
        %v1792 = vunpack.c.l.b16 %v674
        %v1793 = vunpack.c.h.b16 %v674
        %v1794 = vunpack.c.l.b16 %v675
        %v1795 = vunpack.c.h.b16 %v675
        %v1796 = vunpack.c.l.b16 %v676
        %v1797 = vunpack.c.h.b16 %v676
        %v1798 = vunpack.c.l.b16 %v677
        %v1799 = vunpack.c.h.b16 %v677
        %v1800 = vunpack.c.l.b16 %v678
        %v1801 = vunpack.c.h.b16 %v678
        %v1802 = vunpack.c.l.b16 %v679
        %v1803 = vunpack.c.h.b16 %v679
        %v1804 = vunpack.c.l.b16 %v680
        %v1805 = vunpack.c.h.b16 %v680
        %v1806 = vunpack.c.l.b16 %v681
        %v1807 = vunpack.c.h.b16 %v681
        %v1808 = vunpack.c.l.b16 %v682
        %v1809 = vunpack.c.h.b16 %v682
        %v1810 = vunpack.c.l.b16 %v683
        %v1811 = vunpack.c.h.b16 %v683
        %v1812 = vunpack.c.l.b16 %v684
        %v1813 = vunpack.c.h.b16 %v684
        %v1814 = vunpack.c.l.b16 %v685
        %v1815 = vunpack.c.h.b16 %v685
        %v1816 = vunpack.c.l.b16 %v686
        %v1817 = vunpack.c.h.b16 %v686
        %v1818 = vunpack.c.l.b16 %v687
        %v1819 = vunpack.c.h.b16 %v687
        %v1820 = vunpack.c.l.b16 %v688
        %v1821 = vunpack.c.h.b16 %v688
        %v1822 = vunpack.c.l.b16 %v689
        %v1823 = vunpack.c.h.b16 %v689
        %v1824 = vunpack.c.l.b16 %v690
        %v1825 = vunpack.c.h.b16 %v690
        %v1826 = vunpack.c.l.b16 %v691
        %v1827 = vunpack.c.h.b16 %v691
        %v1828 = vunpack.c.l.b16 %v692
        %v1829 = vunpack.c.h.b16 %v692
        %v1830 = vunpack.c.l.b16 %v693
        %v1831 = vunpack.c.h.b16 %v693
        %v1832 = vunpack.c.l.b16 %v694
        %v1833 = vunpack.c.h.b16 %v694
        %v1834 = vunpack.c.l.b16 %v695
        %v1835 = vunpack.c.h.b16 %v695
        %v1836 = vunpack.c.l.b16 %v696
        %v1837 = vunpack.c.h.b16 %v696
        %v1838 = vunpack.c.l.b16 %v697
        %v1839 = vunpack.c.h.b16 %v697
        %v1840 = vunpack.c.l.b16 %v698
        %v1841 = vunpack.c.h.b16 %v698
        %v1842 = vunpack.c.l.b16 %v699
        %v1843 = vunpack.c.h.b16 %v699
        %v1844 = vunpack.c.l.b16 %v700
        %v1845 = vunpack.c.h.b16 %v700
        %v1846 = vunpack.c.l.b16 %v701
        %v1847 = vunpack.c.h.b16 %v701
        %v1848 = vunpack.c.l.b16 %v702
        %v1849 = vunpack.c.h.b16 %v702
        %v1850 = vunpack.c.l.b16 %v703
        %v1851 = vunpack.c.h.b16 %v703
        %v1852 = vunpack.c.l.b16 %v704
        %v1853 = vunpack.c.h.b16 %v704
        %v1854 = vunpack.c.l.b16 %v705
        %v1855 = vunpack.c.h.b16 %v705
        %v1856 = vunpack.c.l.b16 %v706
        %v1857 = vunpack.c.h.b16 %v706
        %v1858 = vunpack.c.l.b16 %v707
        %v1859 = vunpack.c.h.b16 %v707
        %v1860 = vunpack.c.l.b16 %v708
        %v1861 = vunpack.c.h.b16 %v708
        %v1862 = vunpack.c.l.b16 %v709
        %v1863 = vunpack.c.h.b16 %v709
        %v1864 = vunpack.c.l.b16 %v710
        %v1865 = vunpack.c.h.b16 %v710
        %v1866 = vunpack.c.l.b16 %v711
        %v1867 = vunpack.c.h.b16 %v711
        %v1868 = vunpack.c.l.b16 %v712
        %v1869 = vunpack.c.h.b16 %v712
        %v1870 = vunpack.c.l.b16 %v713
        %v1871 = vunpack.c.h.b16 %v713
        %v1872 = vunpack.c.l.b16 %v714
        %v1873 = vunpack.c.h.b16 %v714
        %v1874 = vunpack.c.l.b16 %v715
        %v1875 = vunpack.c.h.b16 %v715
        %v1876 = vunpack.c.l.b16 %v716
        %v1877 = vunpack.c.h.b16 %v716
        %v1878 = vunpack.c.l.b16 %v717
        %v1879 = vunpack.c.h.b16 %v717
        %v1880 = vunpack.c.l.b16 %v718
        %v1881 = vunpack.c.h.b16 %v718
        %v1882 = vunpack.c.l.b16 %v719
        %v1883 = vunpack.c.h.b16 %v719
        %v1884 = vunpack.c.l.b16 %v720
        %v1885 = vunpack.c.h.b16 %v720
        %v1886 = vunpack.c.l.b16 %v721
        %v1887 = vunpack.c.h.b16 %v721
        %v1888 = vunpack.c.l.b16 %v722
        %v1889 = vunpack.c.h.b16 %v722
        %v1890 = vunpack.c.l.b16 %v723
        %v1891 = vunpack.c.h.b16 %v723
        %v1892 = vunpack.c.l.b16 %v724
        %v1893 = vunpack.c.h.b16 %v724
        %v1894 = vunpack.c.l.b16 %v725
        %v1895 = vunpack.c.h.b16 %v725
        %v1896 = vunpack.c.l.b16 %v726
        %v1897 = vunpack.c.h.b16 %v726
        %v1898 = vunpack.c.l.b16 %v727
        %v1899 = vunpack.c.h.b16 %v727
        %v1900 = vunpack.c.l.b16 %v728
        %v1901 = vunpack.c.h.b16 %v728
        %v1902 = vunpack.c.l.b16 %v729
        %v1903 = vunpack.c.h.b16 %v729
        %v1904 = vunpack.c.l.b16 %v730
        %v1905 = vunpack.c.h.b16 %v730
        %v1906 = vunpack.c.l.b16 %v731
        %v1907 = vunpack.c.h.b16 %v731
        %v1908 = vunpack.c.l.b16 %v732
        %v1909 = vunpack.c.h.b16 %v732
        %v1910 = vunpack.c.l.b16 %v733
        %v1911 = vunpack.c.h.b16 %v733
        %v1912 = vunpack.c.l.b16 %v734
        %v1913 = vunpack.c.h.b16 %v734
        %v1914 = vunpack.c.l.b16 %v735
        %v1915 = vunpack.c.h.b16 %v735
        %v1916 = vunpack.c.l.b16 %v736
        %v1917 = vunpack.c.h.b16 %v736
        %v1918 = vunpack.c.l.b16 %v737
        %v1919 = vunpack.c.h.b16 %v737
        %v1920 = vunpack.c.l.b16 %v738
        %v1921 = vunpack.c.h.b16 %v738
        %v1922 = vunpack.c.l.b16 %v739
        %v1923 = vunpack.c.h.b16 %v739
        %v1924 = vunpack.c.l.b16 %v740
        %v1925 = vunpack.c.h.b16 %v740
        %v1926 = vunpack.c.l.b16 %v741
        %v1927 = vunpack.c.h.b16 %v741
        %v1928 = vunpack.c.l.b16 %v742
        %v1929 = vunpack.c.h.b16 %v742
        %v1930 = vunpack.c.l.b16 %v743
        %v1931 = vunpack.c.h.b16 %v743
        %v1932 = vunpack.c.l.b16 %v744
        %v1933 = vunpack.c.h.b16 %v744
        %v1934 = vunpack.c.l.b16 %v745
        %v1935 = vunpack.c.h.b16 %v745
        %v1936 = vunpack.c.l.b16 %v746
        %v1937 = vunpack.c.h.b16 %v746
        %v1938 = vunpack.c.l.b16 %v747
        %v1939 = vunpack.c.h.b16 %v747
        %v1940 = vunpack.c.l.b16 %v748
        %v1941 = vunpack.c.h.b16 %v748
        %v1942 = vunpack.c.l.b16 %v749
        %v1943 = vunpack.c.h.b16 %v749
        %v1944 = vunpack.c.l.b16 %v750
        %v1945 = vunpack.c.h.b16 %v750
        %v1946 = vunpack.c.l.b16 %v751
        %v1947 = vunpack.c.h.b16 %v751
        %v1948 = vunpack.c.l.b16 %v752
        %v1949 = vunpack.c.h.b16 %v752
        %v1950 = vunpack.c.l.b16 %v753
        %v1951 = vunpack.c.h.b16 %v753
        %v1952 = vunpack.c.l.b16 %v754
        %v1953 = vunpack.c.h.b16 %v754
        %v1954 = vunpack.c.l.b16 %v755
        %v1955 = vunpack.c.h.b16 %v755
        %v1956 = vunpack.c.l.b16 %v756
        %v1957 = vunpack.c.h.b16 %v756
        %v1958 = vunpack.c.l.b16 %v757
        %v1959 = vunpack.c.h.b16 %v757
        %v1960 = vunpack.c.l.b16 %v758
        %v1961 = vunpack.c.h.b16 %v758
        %v1962 = vunpack.c.l.b16 %v759
        %v1963 = vunpack.c.h.b16 %v759
        %v1964 = vunpack.c.l.b16 %v760
        %v1965 = vunpack.c.h.b16 %v760
        %v1966 = vunpack.c.l.b16 %v761
        %v1967 = vunpack.c.h.b16 %v761
        %v1968 = vunpack.c.l.b16 %v762
        %v1969 = vunpack.c.h.b16 %v762
        %v1970 = vunpack.c.l.b16 %v763
        %v1971 = vunpack.c.h.b16 %v763
        %v1972 = vunpack.c.l.b16 %v764
        %v1973 = vunpack.c.h.b16 %v764
        %v1974 = vunpack.c.l.b16 %v765
        %v1975 = vunpack.c.h.b16 %v765
        %v1976 = vunpack.c.l.b16 %v766
        %v1977 = vunpack.c.h.b16 %v766
        %v1978 = vunpack.c.l.b16 %v767
        %v1979 = vunpack.c.h.b16 %v767
        %v1980 = vunpack.c.l.b16 %v768
        %v1981 = vunpack.c.h.b16 %v768
        %v1982 = vunpack.c.l.b16 %v769
        %v1983 = vunpack.c.h.b16 %v769
        %v1984 = vunpack.c.l.b16 %v770
        %v1985 = vunpack.c.h.b16 %v770
        %v1986 = vunpack.c.l.b16 %v771
        %v1987 = vunpack.c.h.b16 %v771
        %v1988 = vunpack.c.l.b16 %v772
        %v1989 = vunpack.c.h.b16 %v772
        %v1990 = vunpack.c.l.b16 %v773
        %v1991 = vunpack.c.h.b16 %v773
        %v1992 = vunpack.c.l.b16 %v774
        %v1993 = vunpack.c.h.b16 %v774
        %v1994 = vunpack.c.l.b16 %v775
        %v1995 = vunpack.c.h.b16 %v775
        %v1996 = vunpack.c.l.b16 %v776
        %v1997 = vunpack.c.h.b16 %v776
        %v1998 = vunpack.c.l.b16 %v777
        %v1999 = vunpack.c.h.b16 %v777
        %v2000 = vunpack.c.l.b16 %v778
        %v2001 = vunpack.c.h.b16 %v778
        %v2002 = vunpack.c.l.b16 %v779
        %v2003 = vunpack.c.h.b16 %v779
        %v2004 = vunpack.c.l.b16 %v780
        %v2005 = vunpack.c.h.b16 %v780
        %v2006 = vunpack.c.l.b16 %v781
        %v2007 = vunpack.c.h.b16 %v781
        %v2008 = vunpack.c.l.b16 %v782
        %v2009 = vunpack.c.h.b16 %v782
        %v2010 = vunpack.c.l.b16 %v783
        %v2011 = vunpack.c.h.b16 %v783
        %v2012 = vunpack.c.l.b16 %v784
        %v2013 = vunpack.c.h.b16 %v784
        %v2014 = vunpack.c.l.b16 %v785
        %v2015 = vunpack.c.h.b16 %v785
        %v2016 = vunpack.c.l.b16 %v786
        %v2017 = vunpack.c.h.b16 %v786
        %v2018 = vunpack.c.l.b16 %v787
        %v2019 = vunpack.c.h.b16 %v787
        %v2020 = vunpack.c.l.b16 %v788
        %v2021 = vunpack.c.h.b16 %v788
        %v2022 = vunpack.c.l.b16 %v789
        %v2023 = vunpack.c.h.b16 %v789
        %v2024 = vunpack.c.l.b16 %v790
        %v2025 = vunpack.c.h.b16 %v790
        %v2026 = vunpack.c.l.b16 %v791
        %v2027 = vunpack.c.h.b16 %v791
        %v2028 = vunpack.c.l.b16 %v792
        %v2029 = vunpack.c.h.b16 %v792
        %v2030 = vunpack.c.l.b16 %v793
        %v2031 = vunpack.c.h.b16 %v793
        %v2032 = vunpack.c.l.b16 %v794
        %v2033 = vunpack.c.h.b16 %v794
        %v2034 = vunpack.c.l.b16 %v795
        %v2035 = vunpack.c.h.b16 %v795
        %v2036 = vunpack.c.l.b16 %v796
        %v2037 = vunpack.c.h.b16 %v796
        %v2038 = vunpack.c.l.b16 %v797
        %v2039 = vunpack.c.h.b16 %v797
        %v2040 = vunpack.c.l.b16 %v798
        %v2041 = vunpack.c.h.b16 %v798
        %v2042 = vunpack.c.l.b16 %v799
        %v2043 = vunpack.c.h.b16 %v799
        %v2044 = vunpack.c.l.b16 %v800
        %v2045 = vunpack.c.h.b16 %v800
        %v2046 = vunpack.c.l.b16 %v801
        %v2047 = vunpack.c.h.b16 %v801
        %v2048 = vunpack.c.l.b16 %v802
        %v2049 = vunpack.c.h.b16 %v802
        %v2050 = vunpack.c.l.b16 %v803
        %v2051 = vunpack.c.h.b16 %v803
        %v2052 = vunpack.c.l.b16 %v804
        %v2053 = vunpack.c.h.b16 %v804
        %v2054 = vunpack.c.l.b16 %v805
        %v2055 = vunpack.c.h.b16 %v805
        %v2056 = vunpack.c.l.b16 %v806
        %v2057 = vunpack.c.h.b16 %v806
        %v2058 = vunpack.c.l.b16 %v807
        %v2059 = vunpack.c.h.b16 %v807
        %v2060 = vunpack.c.l.b16 %v808
        %v2061 = vunpack.c.h.b16 %v808
        %v2062 = vunpack.c.l.b16 %v809
        %v2063 = vunpack.c.h.b16 %v809
        %v2064 = vunpack.c.l.b16 %v810
        %v2065 = vunpack.c.h.b16 %v810
        %v2066 = vunpack.c.l.b16 %v811
        %v2067 = vunpack.c.h.b16 %v811
        %v2068 = vunpack.c.l.b16 %v812
        %v2069 = vunpack.c.h.b16 %v812
        %v2070 = vunpack.c.l.b16 %v813
        %v2071 = vunpack.c.h.b16 %v813
        %v2072 = vunpack.c.l.b16 %v814
        %v2073 = vunpack.c.h.b16 %v814
        %v2074 = vunpack.c.l.b16 %v815
        %v2075 = vunpack.c.h.b16 %v815
        %v2076 = vunpack.c.l.b16 %v816
        %v2077 = vunpack.c.h.b16 %v816
        %v2078 = vunpack.c.l.b16 %v817
        %v2079 = vunpack.c.h.b16 %v817
        %v2080 = vunpack.c.l.b16 %v818
        %v2081 = vunpack.c.h.b16 %v818
        %v2082 = vunpack.c.l.b16 %v819
        %v2083 = vunpack.c.h.b16 %v819
        %v2084 = vunpack.c.l.b16 %v820
        %v2085 = vunpack.c.h.b16 %v820
        %v2086 = vunpack.c.l.b16 %v821
        %v2087 = vunpack.c.h.b16 %v821
        %v2088 = vunpack.c.l.b16 %v822
        %v2089 = vunpack.c.h.b16 %v822
        %v2090 = vunpack.c.l.b16 %v823
        %v2091 = vunpack.c.h.b16 %v823
        %v2092 = vunpack.c.l.b16 %v824
        %v2093 = vunpack.c.h.b16 %v824
        %v2094 = vunpack.c.l.b16 %v825
        %v2095 = vunpack.c.h.b16 %v825
        %v2096 = vunpack.c.l.b16 %v826
        %v2097 = vunpack.c.h.b16 %v826
        %v2098 = vunpack.c.l.b16 %v827
        %v2099 = vunpack.c.h.b16 %v827
        %v2100 = vunpack.c.l.b16 %v828
        %v2101 = vunpack.c.h.b16 %v828
        %v2102 = vunpack.c.l.b16 %v829
        %v2103 = vunpack.c.h.b16 %v829
        %v2104 = vunpack.c.l.b16 %v830
        %v2105 = vunpack.c.h.b16 %v830
        %v2106 = vunpack.c.l.b16 %v831
        %v2107 = vunpack.c.h.b16 %v831
        %v2108 = vunpack.c.l.b16 %v832
        %v2109 = vunpack.c.h.b16 %v832
        %v2110 = vunpack.c.l.b16 %v833
        %v2111 = vunpack.c.h.b16 %v833
        %v2112 = vunpack.c.l.b16 %v834
        %v2113 = vunpack.c.h.b16 %v834
        %v2114 = vunpack.c.l.b16 %v835
        %v2115 = vunpack.c.h.b16 %v835
        %v2116 = vunpack.c.l.b16 %v836
        %v2117 = vunpack.c.h.b16 %v836
        %v2118 = vunpack.c.l.b16 %v837
        %v2119 = vunpack.c.h.b16 %v837
        %v2120 = vunpack.c.l.b16 %v838
        %v2121 = vunpack.c.h.b16 %v838
        %v2122 = vunpack.c.l.b16 %v839
        %v2123 = vunpack.c.h.b16 %v839
        %v2124 = vunpack.c.l.b16 %v840
        %v2125 = vunpack.c.h.b16 %v840
        %v2126 = vunpack.c.l.b16 %v841
        %v2127 = vunpack.c.h.b16 %v841
        %v2128 = vunpack.c.l.b16 %v842
        %v2129 = vunpack.c.h.b16 %v842
        %v2130 = vunpack.c.l.b16 %v843
        %v2131 = vunpack.c.h.b16 %v843
        %v2132 = vunpack.c.l.b16 %v844
        %v2133 = vunpack.c.h.b16 %v844
        %v2134 = vunpack.c.l.b16 %v845
        %v2135 = vunpack.c.h.b16 %v845
        %v2136 = vunpack.c.l.b16 %v846
        %v2137 = vunpack.c.h.b16 %v846
        %v2138 = vunpack.c.l.b16 %v847
        %v2139 = vunpack.c.h.b16 %v847
        %v2140 = vunpack.c.l.b16 %v848
        %v2141 = vunpack.c.h.b16 %v848
        %v2142 = vunpack.c.l.b16 %v849
        %v2143 = vunpack.c.h.b16 %v849
        %v2144 = vunpack.c.l.b16 %v850
        %v2145 = vunpack.c.h.b16 %v850
        %v2146 = vunpack.c.l.b16 %v851
        %v2147 = vunpack.c.h.b16 %v851
        %v2148 = vunpack.c.l.b16 %v852
        %v2149 = vunpack.c.h.b16 %v852
        %v2150 = vunpack.c.l.b16 %v853
        %v2151 = vunpack.c.h.b16 %v853
        %v2152 = vunpack.c.l.b16 %v854
        %v2153 = vunpack.c.h.b16 %v854
        %v2154 = vunpack.c.l.b16 %v855
        %v2155 = vunpack.c.h.b16 %v855
        %v2156 = vunpack.c.l.b16 %v856
        %v2157 = vunpack.c.h.b16 %v856
        %v2158 = vunpack.c.l.b16 %v857
        %v2159 = vunpack.c.h.b16 %v857
        %v2160 = vunpack.c.l.b16 %v858
        %v2161 = vunpack.c.h.b16 %v858
        %v2162 = vunpack.c.l.b16 %v859
        %v2163 = vunpack.c.h.b16 %v859
        %v2164 = vunpack.c.l.b16 %v860
        %v2165 = vunpack.c.h.b16 %v860
        %v2166 = vunpack.c.l.b16 %v861
        %v2167 = vunpack.c.h.b16 %v861
        %v2168 = vunpack.c.l.b16 %v862
        %v2169 = vunpack.c.h.b16 %v862
        %v2170 = vunpack.c.l.b16 %v863
        %v2171 = vunpack.c.h.b16 %v863
        %v2172 = vunpack.c.l.b16 %v864
        %v2173 = vunpack.c.h.b16 %v864
        %v2174 = vunpack.c.l.b16 %v865
        %v2175 = vunpack.c.h.b16 %v865
        %v2176 = vunpack.c.l.b16 %v866
        %v2177 = vunpack.c.h.b16 %v866
        %v2178 = vunpack.c.l.b16 %v867
        %v2179 = vunpack.c.h.b16 %v867
        %v2180 = vunpack.c.l.b16 %v868
        %v2181 = vunpack.c.h.b16 %v868
        %v2182 = vunpack.c.l.b16 %v869
        %v2183 = vunpack.c.h.b16 %v869
        %v2184 = vunpack.c.l.b16 %v870
        %v2185 = vunpack.c.h.b16 %v870
        %v2186 = vunpack.c.l.b16 %v871
        %v2187 = vunpack.c.h.b16 %v871
        %v2188 = vunpack.c.l.b16 %v872
        %v2189 = vunpack.c.h.b16 %v872
        %v2190 = vunpack.c.l.b16 %v873
        %v2191 = vunpack.c.h.b16 %v873
        %v2192 = vunpack.c.l.b16 %v874
        %v2193 = vunpack.c.h.b16 %v874
        %v2194 = vunpack.c.l.b16 %v875
        %v2195 = vunpack.c.h.b16 %v875
        %v2196 = vunpack.c.l.b16 %v876
        %v2197 = vunpack.c.h.b16 %v876
        %v2198 = vunpack.c.l.b16 %v877
        %v2199 = vunpack.c.h.b16 %v877
        %v2200 = vunpack.c.l.b16 %v878
        %v2201 = vunpack.c.h.b16 %v878
        %v2202 = vunpack.c.l.b16 %v879
        %v2203 = vunpack.c.h.b16 %v879
        %v2204 = vunpack.c.l.b16 %v880
        %v2205 = vunpack.c.h.b16 %v880
        %v2206 = vunpack.c.l.b16 %v881
        %v2207 = vunpack.c.h.b16 %v881
        %v2208 = vunpack.c.l.b16 %v882
        %v2209 = vunpack.c.h.b16 %v882
        %v2210 = vunpack.c.l.b16 %v883
        %v2211 = vunpack.c.h.b16 %v883
        %v2212 = vunpack.c.l.b16 %v884
        %v2213 = vunpack.c.h.b16 %v884
        %v2214 = vunpack.c.l.b16 %v885
        %v2215 = vunpack.c.h.b16 %v885
        %v2216 = vunpack.c.l.b16 %v886
        %v2217 = vunpack.c.h.b16 %v886
        %v2218 = vunpack.c.l.b16 %v887
        %v2219 = vunpack.c.h.b16 %v887
        %v2220 = vunpack.c.l.b16 %v888
        %v2221 = vunpack.c.h.b16 %v888
        %v2222 = vunpack.c.l.b16 %v889
        %v2223 = vunpack.c.h.b16 %v889
        %v2224 = vunpack.c.l.b16 %v890
        %v2225 = vunpack.c.h.b16 %v890
        %v2226 = vunpack.c.l.b16 %v891
        %v2227 = vunpack.c.h.b16 %v891
        %v2228 = vunpack.c.l.b16 %v892
        %v2229 = vunpack.c.h.b16 %v892
        %v2230 = vunpack.c.l.b16 %v893
        %v2231 = vunpack.c.h.b16 %v893
        %v2232 = vunpack.c.l.b16 %v894
        %v2233 = vunpack.c.h.b16 %v894
        %v2234 = vunpack.c.l.b16 %v895
        %v2235 = vunpack.c.h.b16 %v895
        %v2236 = vunpack.c.l.b16 %v896
        %v2237 = vunpack.c.h.b16 %v896
        %v2238 = vunpack.c.l.b16 %v897
        %v2239 = vunpack.c.h.b16 %v897
        %v2240 = vunpack.c.l.b16 %v898
        %v2241 = vunpack.c.h.b16 %v898
        %v2242 = vunpack.c.l.b16 %v899
        %v2243 = vunpack.c.h.b16 %v899
        %v2244 = vunpack.c.l.b16 %v900
        %v2245 = vunpack.c.h.b16 %v900
        %v2246 = vunpack.c.l.b16 %v901
        %v2247 = vunpack.c.h.b16 %v901
        %v2248 = vunpack.c.l.b16 %v902
        %v2249 = vunpack.c.h.b16 %v902
        %v2250 = vunpack.c.l.b16 %v903
        %v2251 = vunpack.c.h.b16 %v903
        %v2252 = vunpack.c.l.b16 %v904
        %v2253 = vunpack.c.h.b16 %v904
        %v2254 = vunpack.c.l.b16 %v905
        %v2255 = vunpack.c.h.b16 %v905
        %v2256 = vunpack.c.l.b16 %v906
        %v2257 = vunpack.c.h.b16 %v906
        %v2258 = vunpack.c.l.b16 %v907
        %v2259 = vunpack.c.h.b16 %v907
        %v2260 = vunpack.c.l.b16 %v908
        %v2261 = vunpack.c.h.b16 %v908
        %v2262 = vunpack.c.l.b16 %v909
        %v2263 = vunpack.c.h.b16 %v909
        %v2264 = vunpack.c.l.b16 %v910
        %v2265 = vunpack.c.h.b16 %v910
        %v2266 = vunpack.c.l.b16 %v911
        %v2267 = vunpack.c.h.b16 %v911
        %v2268 = vunpack.c.l.b16 %v912
        %v2269 = vunpack.c.h.b16 %v912
        %v2270 = vunpack.c.l.b16 %v913
        %v2271 = vunpack.c.h.b16 %v913
        %v2272 = vunpack.c.l.b16 %v914
        %v2273 = vunpack.c.h.b16 %v914
        %v2274 = vunpack.c.l.b16 %v915
        %v2275 = vunpack.c.h.b16 %v915
        %v2276 = vunpack.c.l.b16 %v916
        %v2277 = vunpack.c.h.b16 %v916
        %v2278 = vunpack.c.l.b16 %v917
        %v2279 = vunpack.c.h.b16 %v917
        %v2280 = vunpack.c.l.b16 %v918
        %v2281 = vunpack.c.h.b16 %v918
        %v2282 = vunpack.c.l.b16 %v919
        %v2283 = vunpack.c.h.b16 %v919
        %v2284 = vunpack.c.l.b16 %v920
        %v2285 = vunpack.c.h.b16 %v920
        %v2286 = vunpack.c.l.b16 %v921
        %v2287 = vunpack.c.h.b16 %v921
        %v2288 = vunpack.c.l.b16 %v922
        %v2289 = vunpack.c.h.b16 %v922
        %v2290 = vunpack.c.l.b16 %v923
        %v2291 = vunpack.c.h.b16 %v923
        %v2292 = vunpack.c.l.b16 %v924
        %v2293 = vunpack.c.h.b16 %v924
        %v2294 = vunpack.c.l.b16 %v925
        %v2295 = vunpack.c.h.b16 %v925
        %v2296 = vunpack.c.l.b16 %v926
        %v2297 = vunpack.c.h.b16 %v926
        %v2298 = vunpack.c.l.b16 %v927
        %v2299 = vunpack.c.h.b16 %v927
        %v2300 = vunpack.c.l.b16 %v928
        %v2301 = vunpack.c.h.b16 %v928
        %v2302 = vunpack.c.l.b16 %v929
        %v2303 = vunpack.c.h.b16 %v929
        %v2304 = vunpack.c.l.b16 %v930
        %v2305 = vunpack.c.h.b16 %v930
        %v2306 = vunpack.c.l.b16 %v931
        %v2307 = vunpack.c.h.b16 %v931
        %v2308 = vunpack.c.l.b16 %v932
        %v2309 = vunpack.c.h.b16 %v932
        %v2310 = vunpack.c.l.b16 %v933
        %v2311 = vunpack.c.h.b16 %v933
        %v2312 = vunpack.c.l.b16 %v934
        %v2313 = vunpack.c.h.b16 %v934
        %v2314 = vunpack.c.l.b16 %v935
        %v2315 = vunpack.c.h.b16 %v935
        %v2316 = vunpack.c.l.b16 %v936
        %v2317 = vunpack.c.h.b16 %v936
        %v2318 = vunpack.c.l.b16 %v937
        %v2319 = vunpack.c.h.b16 %v937
        %v2320 = vunpack.c.l.b16 %v938
        %v2321 = vunpack.c.h.b16 %v938
        %v2322 = vunpack.c.l.b16 %v939
        %v2323 = vunpack.c.h.b16 %v939
        %v2324 = vunpack.c.l.b16 %v940
        %v2325 = vunpack.c.h.b16 %v940
        %v2326 = vunpack.c.l.b16 %v941
        %v2327 = vunpack.c.h.b16 %v941
        %v2328 = vunpack.c.l.b16 %v942
        %v2329 = vunpack.c.h.b16 %v942
        %v2330 = vunpack.c.l.b16 %v943
        %v2331 = vunpack.c.h.b16 %v943
        %v2332 = vunpack.c.l.b16 %v944
        %v2333 = vunpack.c.h.b16 %v944
        %v2334 = vunpack.c.l.b16 %v945
        %v2335 = vunpack.c.h.b16 %v945
        %v2336 = vunpack.c.l.b16 %v946
        %v2337 = vunpack.c.h.b16 %v946
        %v2338 = vunpack.c.l.b16 %v947
        %v2339 = vunpack.c.h.b16 %v947
        %v2340 = vunpack.c.l.b16 %v948
        %v2341 = vunpack.c.h.b16 %v948
        %v2342 = vunpack.c.l.b16 %v949
        %v2343 = vunpack.c.h.b16 %v949
        %v2344 = vunpack.c.l.b16 %v950
        %v2345 = vunpack.c.h.b16 %v950
        %v2346 = vunpack.c.l.b16 %v951
        %v2347 = vunpack.c.h.b16 %v951
        %v2348 = vunpack.c.l.b16 %v952
        %v2349 = vunpack.c.h.b16 %v952
        %v2350 = vunpack.c.l.b16 %v953
        %v2351 = vunpack.c.h.b16 %v953
        %v2352 = vunpack.c.l.b16 %v954
        %v2353 = vunpack.c.h.b16 %v954
        %v2354 = vunpack.c.l.b16 %v955
        %v2355 = vunpack.c.h.b16 %v955
        %v2356 = vunpack.c.l.b16 %v956
        %v2357 = vunpack.c.h.b16 %v956
        %v2358 = vunpack.c.l.b16 %v957
        %v2359 = vunpack.c.h.b16 %v957
        %v2360 = vunpack.c.l.b16 %v958
        %v2361 = vunpack.c.h.b16 %v958
        %v2362 = vunpack.c.l.b16 %v959
        %v2363 = vunpack.c.h.b16 %v959
        %v2364 = vunpack.c.l.b16 %v960
        %v2365 = vunpack.c.h.b16 %v960
        %v2366 = vunpack.c.l.b16 %v961
        %v2367 = vunpack.c.h.b16 %v961
        %v2368 = vunpack.c.l.b16 %v962
        %v2369 = vunpack.c.h.b16 %v962
        %v2370 = vunpack.c.l.b16 %v963
        %v2371 = vunpack.c.h.b16 %v963
        %v2372 = vunpack.c.l.b16 %v964
        %v2373 = vunpack.c.h.b16 %v964
        %v2374 = vunpack.c.l.b16 %v965
        %v2375 = vunpack.c.h.b16 %v965
        %v2376 = vunpack.c.l.b16 %v966
        %v2377 = vunpack.c.h.b16 %v966
        %v2378 = vunpack.c.l.b16 %v967
        %v2379 = vunpack.c.h.b16 %v967
        %v2380 = vunpack.c.l.b16 %v968
        %v2381 = vunpack.c.h.b16 %v968
        %v2382 = vunpack.c.l.b16 %v969
        %v2383 = vunpack.c.h.b16 %v969
        %v2384 = vunpack.c.l.b16 %v970
        %v2385 = vunpack.c.h.b16 %v970
        %v2386 = vunpack.c.l.b16 %v971
        %v2387 = vunpack.c.h.b16 %v971
        %v2388 = vunpack.c.l.b16 %v972
        %v2389 = vunpack.c.h.b16 %v972
        %v2390 = vunpack.c.l.b16 %v973
        %v2391 = vunpack.c.h.b16 %v973
        %v2392 = vunpack.c.l.b16 %v974
        %v2393 = vunpack.c.h.b16 %v974
        %v2394 = vunpack.c.l.b16 %v975
        %v2395 = vunpack.c.h.b16 %v975
        %v2396 = vunpack.c.l.b16 %v976
        %v2397 = vunpack.c.h.b16 %v976
        %v2398 = vunpack.c.l.b16 %v977
        %v2399 = vunpack.c.h.b16 %v977
        %v2400 = vunpack.c.l.b16 %v978
        %v2401 = vunpack.c.h.b16 %v978
        %v2402 = vunpack.c.l.b16 %v979
        %v2403 = vunpack.c.h.b16 %v979
        %v2404 = vunpack.c.l.b16 %v980
        %v2405 = vunpack.c.h.b16 %v980
        %v2406 = vunpack.c.l.b16 %v981
        %v2407 = vunpack.c.h.b16 %v981
        %v2408 = vunpack.c.l.b16 %v982
        %v2409 = vunpack.c.h.b16 %v982
        %v2410 = vunpack.c.l.b16 %v983
        %v2411 = vunpack.c.h.b16 %v983
        %v2412 = vunpack.c.l.b16 %v984
        %v2413 = vunpack.c.h.b16 %v984
        %v2414 = vunpack.c.l.b16 %v985
        %v2415 = vunpack.c.h.b16 %v985
        %v2416 = vunpack.c.l.b16 %v986
        %v2417 = vunpack.c.h.b16 %v986
        %v2418 = vunpack.c.l.b16 %v987
        %v2419 = vunpack.c.h.b16 %v987
        %v2420 = vunpack.c.l.b16 %v988
        %v2421 = vunpack.c.h.b16 %v988
        %v2422 = vunpack.c.l.b16 %v989
        %v2423 = vunpack.c.h.b16 %v989
        %v2424 = vunpack.c.l.b16 %v990
        %v2425 = vunpack.c.h.b16 %v990
        %v2426 = vunpack.c.l.b16 %v991
        %v2427 = vunpack.c.h.b16 %v991
        %v2428 = vunpack.c.l.b16 %v992
        %v2429 = vunpack.c.h.b16 %v992
        %v2430 = vunpack.c.l.b16 %v993
        %v2431 = vunpack.c.h.b16 %v993
        %v2432 = vunpack.c.l.b16 %v994
        %v2433 = vunpack.c.h.b16 %v994
        %v2434 = vunpack.c.l.b16 %v995
        %v2435 = vunpack.c.h.b16 %v995
        %v2436 = vunpack.c.l.b16 %v996
        %v2437 = vunpack.c.h.b16 %v996
        %v2438 = vunpack.c.l.b16 %v997
        %v2439 = vunpack.c.h.b16 %v997
        %v2440 = vunpack.c.l.b16 %v998
        %v2441 = vunpack.c.h.b16 %v998
        %v2442 = vunpack.c.l.b16 %v999
        %v2443 = vunpack.c.h.b16 %v999
        %v2444 = vunpack.c.l.b16 %v1000
        %v2445 = vunpack.c.h.b16 %v1000
        %v2446 = vunpack.c.l.b16 %v1001
        %v2447 = vunpack.c.h.b16 %v1001
        %v2448 = vunpack.c.l.b16 %v1002
        %v2449 = vunpack.c.h.b16 %v1002
        %v2450 = vunpack.c.l.b16 %v1003
        %v2451 = vunpack.c.h.b16 %v1003
        %v2452 = vunpack.c.l.b16 %v1004
        %v2453 = vunpack.c.h.b16 %v1004
        %v2454 = vunpack.c.l.b16 %v1005
        %v2455 = vunpack.c.h.b16 %v1005
        %v2456 = vunpack.c.l.b16 %v1006
        %v2457 = vunpack.c.h.b16 %v1006
        %v2458 = vunpack.c.l.b16 %v1007
        %v2459 = vunpack.c.h.b16 %v1007
        %v2460 = vunpack.c.l.b16 %v1008
        %v2461 = vunpack.c.h.b16 %v1008
        %v2462 = vunpack.c.l.b16 %v1009
        %v2463 = vunpack.c.h.b16 %v1009
        %v2464 = vunpack.c.l.b16 %v1010
        %v2465 = vunpack.c.h.b16 %v1010
        %v2466 = vunpack.c.l.b16 %v1011
        %v2467 = vunpack.c.h.b16 %v1011
        %v2468 = vunpack.c.l.b16 %v1012
        %v2469 = vunpack.c.h.b16 %v1012
        %v2470 = vunpack.c.l.b16 %v1013
        %v2471 = vunpack.c.h.b16 %v1013
        %v2472 = vunpack.c.l.b16 %v1014
        %v2473 = vunpack.c.h.b16 %v1014
        %v2474 = vunpack.c.l.b16 %v1015
        %v2475 = vunpack.c.h.b16 %v1015
        %v2476 = vunpack.c.l.b16 %v1016
        %v2477 = vunpack.c.h.b16 %v1016
        %v2478 = vunpack.c.l.b16 %v1017
        %v2479 = vunpack.c.h.b16 %v1017
        %v2480 = vunpack.c.l.b16 %v1018
        %v2481 = vunpack.c.h.b16 %v1018
        %v2482 = vunpack.c.l.b16 %v1019
        %v2483 = vunpack.c.h.b16 %v1019
        %v2484 = vunpack.c.l.b16 %v1020
        %v2485 = vunpack.c.h.b16 %v1020
        %v2486 = vunpack.c.l.b16 %v1021
        %v2487 = vunpack.c.h.b16 %v1021
        %v2488 = vunpack.c.l.b16 %v1022
        %v2489 = vunpack.c.h.b16 %v1022
        %v2490 = vunpack.c.l.b16 %v1023
        %v2491 = vunpack.c.h.b16 %v1023
        %v2492 = vunpack.c.l.b16 %v1024
        %v2493 = vunpack.c.h.b16 %v1024
        %v2494 = vunpack.c.l.b16 %v1025
        %v2495 = vunpack.c.h.b16 %v1025
        %v2496 = vunpack.c.l.b16 %v1026
        %v2497 = vunpack.c.h.b16 %v1026
        %v2498 = vunpack.c.l.b16 %v1027
        %v2499 = vunpack.c.h.b16 %v1027
        %v2500 = vunpack.c.l.b16 %v1028
        %v2501 = vunpack.c.h.b16 %v1028
        %v2502 = vunpack.c.l.b16 %v1029
        %v2503 = vunpack.c.h.b16 %v1029
        %v2504 = vunpack.c.l.b16 %v1030
        %v2505 = vunpack.c.h.b16 %v1030
        %v2506 = vunpack.c.l.b16 %v1031
        %v2507 = vunpack.c.h.b16 %v1031
        %v2508 = vunpack.c.l.b16 %v1032
        %v2509 = vunpack.c.h.b16 %v1032
        %v2510 = vunpack.c.l.b16 %v1033
        %v2511 = vunpack.c.h.b16 %v1033
        %v2512 = vunpack.c.l.b16 %v1034
        %v2513 = vunpack.c.h.b16 %v1034
        %v2514 = vunpack.c.l.b16 %v1035
        %v2515 = vunpack.c.h.b16 %v1035
        %v2516 = vunpack.c.l.b16 %v1036
        %v2517 = vunpack.c.h.b16 %v1036
        %v2518 = vunpack.c.l.b16 %v1037
        %v2519 = vunpack.c.h.b16 %v1037
        %v2520 = vunpack.c.l.b16 %v1038
        %v2521 = vunpack.c.h.b16 %v1038
        %v2522 = vunpack.c.l.b16 %v1039
        %v2523 = vunpack.c.h.b16 %v1039
        %v2524 = vunpack.c.l.b16 %v1040
        %v2525 = vunpack.c.h.b16 %v1040
        %v2526 = vunpack.c.l.b16 %v1041
        %v2527 = vunpack.c.h.b16 %v1041
        %v2528 = vunpack.c.l.b16 %v1042
        %v2529 = vunpack.c.h.b16 %v1042
        %v2530 = vunpack.c.l.b16 %v1043
        %v2531 = vunpack.c.h.b16 %v1043
        %v2532 = vunpack.c.l.b16 %v1044
        %v2533 = vunpack.c.h.b16 %v1044
        %v2534 = vunpack.c.l.b16 %v1045
        %v2535 = vunpack.c.h.b16 %v1045
        %v2536 = vunpack.c.l.b16 %v1046
        %v2537 = vunpack.c.h.b16 %v1046
        %v2538 = vunpack.c.l.b16 %v1047
        %v2539 = vunpack.c.h.b16 %v1047
        %v2540 = vunpack.c.l.b16 %v1048
        %v2541 = vunpack.c.h.b16 %v1048
        %v2542 = vunpack.c.l.b16 %v1049
        %v2543 = vunpack.c.h.b16 %v1049
        %v2544 = vunpack.c.l.b16 %v1050
        %v2545 = vunpack.c.h.b16 %v1050
        %v2546 = vunpack.c.l.b16 %v1051
        %v2547 = vunpack.c.h.b16 %v1051
        %v2548 = vunpack.c.l.b16 %v1052
        %v2549 = vunpack.c.h.b16 %v1052
        %v2550 = vunpack.c.l.b16 %v1053
        %v2551 = vunpack.c.h.b16 %v1053
        %v2552 = vunpack.c.l.b16 %v1054
        %v2553 = vunpack.c.h.b16 %v1054
        %v2554 = vunpack.c.l.b16 %v1055
        %v2555 = vunpack.c.h.b16 %v1055
        %v2556 = vunpack.c.l.b16 %v1056
        %v2557 = vunpack.c.h.b16 %v1056
        %v2558 = vunpack.c.l.b16 %v1057
        %v2559 = vunpack.c.h.b16 %v1057
        %v2560 = vunpack.c.l.b16 %v1058
        %v2561 = vunpack.c.h.b16 %v1058
        %v2562 = vunpack.c.l.b16 %v1059
        %v2563 = vunpack.c.h.b16 %v1059
        %v2564 = vunpack.c.l.b16 %v1060
        %v2565 = vunpack.c.h.b16 %v1060
        %v2566 = vunpack.c.l.b16 %v1061
        %v2567 = vunpack.c.h.b16 %v1061
        %v2568 = vunpack.c.l.b16 %v1062
        %v2569 = vunpack.c.h.b16 %v1062
        %v2570 = vunpack.c.l.b16 %v1063
        %v2571 = vunpack.c.h.b16 %v1063
        %v2572 = vunpack.c.l.b16 %v1064
        %v2573 = vunpack.c.h.b16 %v1064
        %v2574 = vunpack.c.l.b16 %v1065
        %v2575 = vunpack.c.h.b16 %v1065
        %v2576 = vunpack.c.l.b16 %v1066
        %v2577 = vunpack.c.h.b16 %v1066
        %v2578 = vunpack.c.l.b16 %v1067
        %v2579 = vunpack.c.h.b16 %v1067
        %v2580 = vunpack.c.l.b16 %v1068
        %v2581 = vunpack.c.h.b16 %v1068
        %v2582 = vunpack.c.l.b16 %v1069
        %v2583 = vunpack.c.h.b16 %v1069
        %v2584 = vunpack.c.l.b16 %v1070
        %v2585 = vunpack.c.h.b16 %v1070
        %v2586 = vunpack.c.l.b16 %v1071
        %v2587 = vunpack.c.h.b16 %v1071
        %v2588 = vunpack.c.l.b16 %v1072
        %v2589 = vunpack.c.h.b16 %v1072
        %v2590 = vunpack.c.l.b16 %v1073
        %v2591 = vunpack.c.h.b16 %v1073
        %v2592 = vunpack.c.l.b16 %v1074
        %v2593 = vunpack.c.h.b16 %v1074
        %v2594 = vunpack.c.l.b16 %v1075
        %v2595 = vunpack.c.h.b16 %v1075
        %v2596 = vunpack.c.l.b16 %v1076
        %v2597 = vunpack.c.h.b16 %v1076
        %v2598 = vunpack.c.l.b16 %v1077
        %v2599 = vunpack.c.h.b16 %v1077
        %v2600 = vunpack.c.l.b16 %v1078
        %v2601 = vunpack.c.h.b16 %v1078
        %v2602 = vunpack.c.l.b16 %v1079
        %v2603 = vunpack.c.h.b16 %v1079
        %v2604 = vunpack.c.l.b16 %v1080
        %v2605 = vunpack.c.h.b16 %v1080
        %v2606 = vunpack.c.l.b16 %v1081
        %v2607 = vunpack.c.h.b16 %v1081
        %v2608 = vunpack.c.l.b16 %v1082
        %v2609 = vunpack.c.h.b16 %v1082
        %v2610 = vunpack.c.l.b16 %v1083
        %v2611 = vunpack.c.h.b16 %v1083
        %v2612 = vunpack.c.l.b16 %v1084
        %v2613 = vunpack.c.h.b16 %v1084
        %v2614 = vunpack.c.l.b16 %v1085
        %v2615 = vunpack.c.h.b16 %v1085
        %v2616 = vunpack.c.l.b16 %v1086
        %v2617 = vunpack.c.h.b16 %v1086
        %v2618 = vunpack.c.l.b16 %v1087
        %v2619 = vunpack.c.h.b16 %v1087
        %v2620 = vunpack.c.l.b16 %v1088
        %v2621 = vunpack.c.h.b16 %v1088
        %v2622 = vunpack.c.l.b16 %v1089
        %v2623 = vunpack.c.h.b16 %v1089
        %v2624 = vunpack.c.l.b16 %v1090
        %v2625 = vunpack.c.h.b16 %v1090
        %v2626 = vunpack.c.l.b16 %v1091
        %v2627 = vunpack.c.h.b16 %v1091
        %v2628 = vunpack.c.l.b16 %v1092
        %v2629 = vunpack.c.h.b16 %v1092
        %v2630 = vunpack.c.l.b16 %v1093
        %v2631 = vunpack.c.h.b16 %v1093
        %v2632 = vunpack.c.l.b16 %v1094
        %v2633 = vunpack.c.h.b16 %v1094
        %v2634 = vunpack.c.l.b16 %v1095
        %v2635 = vunpack.c.h.b16 %v1095
        %v2636 = vunpack.c.l.b16 %v1096
        %v2637 = vunpack.c.h.b16 %v1096
        %v2638 = vunpack.c.l.b16 %v1097
        %v2639 = vunpack.c.h.b16 %v1097
        %v2640 = vunpack.c.l.b16 %v1098
        %v2641 = vunpack.c.h.b16 %v1098
        %v2642 = vunpack.c.l.b16 %v1099
        %v2643 = vunpack.c.h.b16 %v1099
        %v2644 = vunpack.c.l.b16 %v1100
        %v2645 = vunpack.c.h.b16 %v1100
        %v2646 = vunpack.c.l.b16 %v1101
        %v2647 = vunpack.c.h.b16 %v1101
        %v2648 = vunpack.c.l.b16 %v1102
        %v2649 = vunpack.c.h.b16 %v1102
        %v2650 = vunpack.c.l.b16 %v1103
        %v2651 = vunpack.c.h.b16 %v1103
        %v2652 = vunpack.c.l.b16 %v1104
        %v2653 = vunpack.c.h.b16 %v1104
        %v2654 = vunpack.c.l.b16 %v1105
        %v2655 = vunpack.c.h.b16 %v1105
        %v2656 = vunpack.c.l.b16 %v1106
        %v2657 = vunpack.c.h.b16 %v1106
        %v2658 = vunpack.c.l.b16 %v1107
        %v2659 = vunpack.c.h.b16 %v1107
        %v2660 = vunpack.c.l.b16 %v1108
        %v2661 = vunpack.c.h.b16 %v1108
        %v2662 = vunpack.c.l.b16 %v1109
        %v2663 = vunpack.c.h.b16 %v1109
        %v2664 = vunpack.c.l.b16 %v1110
        %v2665 = vunpack.c.h.b16 %v1110
        %v2666 = vunpack.c.l.b16 %v1111
        %v2667 = vunpack.c.h.b16 %v1111
        %v2668 = vunpack.c.l.b16 %v1112
        %v2669 = vunpack.c.h.b16 %v1112
        %v2670 = vunpack.c.l.b16 %v1113
        %v2671 = vunpack.c.h.b16 %v1113
        %v2672 = vunpack.c.l.b16 %v1114
        %v2673 = vunpack.c.h.b16 %v1114
        %v2674 = vunpack.c.l.b16 %v1115
        %v2675 = vunpack.c.h.b16 %v1115
        %v2676 = vunpack.c.l.b16 %v1116
        %v2677 = vunpack.c.h.b16 %v1116
        %v2678 = vunpack.c.l.b16 %v1117
        %v2679 = vunpack.c.h.b16 %v1117
        %v2680 = vunpack.c.l.b16 %v1118
        %v2681 = vunpack.c.h.b16 %v1118
        %v2682 = vunpack.c.l.b16 %v1119
        %v2683 = vunpack.c.h.b16 %v1119
        %v2684 = vunpack.c.l.b16 %v1120
        %v2685 = vunpack.c.h.b16 %v1120
        %v2686 = vunpack.c.l.b16 %v1121
        %v2687 = vunpack.c.h.b16 %v1121
        %v2688 = vunpack.c.l.b16 %v1122
        %v2689 = vunpack.c.h.b16 %v1122
        %v2690 = vunpack.c.l.b16 %v1123
        %v2691 = vunpack.c.h.b16 %v1123
        %v2692 = vunpack.c.l.b16 %v1124
        %v2693 = vunpack.c.h.b16 %v1124
        %v2694 = vunpack.c.l.b16 %v1125
        %v2695 = vunpack.c.h.b16 %v1125
        %v2696 = vunpack.c.l.b16 %v1126
        %v2697 = vunpack.c.h.b16 %v1126
        %v2698 = vunpack.c.l.b16 %v1127
        %v2699 = vunpack.c.h.b16 %v1127
        %v2700 = vpack.c.b16 %v1680, %v1676
        %v2701 = vpack.c.b16 %v1681, %v1677
        %v2702 = vpack.c.b16 %v1682, %v1678
        %v2703 = vpack.c.b16 %v1683, %v1679
        %v2704 = vpack.c.b16 %v1688, %v1684
        %v2705 = vpack.c.b16 %v1689, %v1685
        %v2706 = vpack.c.b16 %v1690, %v1686
        %v2707 = vpack.c.b16 %v1691, %v1687
        %v2708 = vpack.c.b16 %v1696, %v1692
        %v2709 = vpack.c.b16 %v1697, %v1693
        %v2710 = vpack.c.b16 %v1698, %v1694
        %v2711 = vpack.c.b16 %v1699, %v1695
        %v2712 = vpack.c.b16 %v1704, %v1700
        %v2713 = vpack.c.b16 %v1705, %v1701
        %v2714 = vpack.c.b16 %v1706, %v1702
        %v2715 = vpack.c.b16 %v1707, %v1703
        %v2716 = vpack.c.b16 %v1712, %v1708
        %v2717 = vpack.c.b16 %v1713, %v1709
        %v2718 = vpack.c.b16 %v1714, %v1710
        %v2719 = vpack.c.b16 %v1715, %v1711
        %v2720 = vpack.c.b16 %v1720, %v1716
        %v2721 = vpack.c.b16 %v1721, %v1717
        %v2722 = vpack.c.b16 %v1722, %v1718
        %v2723 = vpack.c.b16 %v1723, %v1719
        %v2724 = vpack.c.b16 %v1728, %v1724
        %v2725 = vpack.c.b16 %v1729, %v1725
        %v2726 = vpack.c.b16 %v1730, %v1726
        %v2727 = vpack.c.b16 %v1731, %v1727
        %v2728 = vpack.c.b16 %v1736, %v1732
        %v2729 = vpack.c.b16 %v1737, %v1733
        %v2730 = vpack.c.b16 %v1738, %v1734
        %v2731 = vpack.c.b16 %v1739, %v1735
        %v2732 = vpack.c.b16 %v1744, %v1740
        %v2733 = vpack.c.b16 %v1745, %v1741
        %v2734 = vpack.c.b16 %v1746, %v1742
        %v2735 = vpack.c.b16 %v1747, %v1743
        %v2736 = vpack.c.b16 %v1752, %v1748
        %v2737 = vpack.c.b16 %v1753, %v1749
        %v2738 = vpack.c.b16 %v1754, %v1750
        %v2739 = vpack.c.b16 %v1755, %v1751
        %v2740 = vpack.c.b16 %v1760, %v1756
        %v2741 = vpack.c.b16 %v1761, %v1757
        %v2742 = vpack.c.b16 %v1762, %v1758
        %v2743 = vpack.c.b16 %v1763, %v1759
        %v2744 = vpack.c.b16 %v1768, %v1764
        %v2745 = vpack.c.b16 %v1769, %v1765
        %v2746 = vpack.c.b16 %v1770, %v1766
        %v2747 = vpack.c.b16 %v1771, %v1767
        %v2748 = vpack.c.b16 %v1776, %v1772
        %v2749 = vpack.c.b16 %v1777, %v1773
        %v2750 = vpack.c.b16 %v1778, %v1774
        %v2751 = vpack.c.b16 %v1779, %v1775
        %v2752 = vpack.c.b16 %v1784, %v1780
        %v2753 = vpack.c.b16 %v1785, %v1781
        %v2754 = vpack.c.b16 %v1786, %v1782
        %v2755 = vpack.c.b16 %v1787, %v1783
        %v2756 = vpack.c.b16 %v1792, %v1788
        %v2757 = vpack.c.b16 %v1793, %v1789
        %v2758 = vpack.c.b16 %v1794, %v1790
        %v2759 = vpack.c.b16 %v1795, %v1791
        %v2760 = vpack.c.b16 %v1800, %v1796
        %v2761 = vpack.c.b16 %v1801, %v1797
        %v2762 = vpack.c.b16 %v1802, %v1798
        %v2763 = vpack.c.b16 %v1803, %v1799
        %v2764 = vpack.c.b16 %v1808, %v1804
        %v2765 = vpack.c.b16 %v1809, %v1805
        %v2766 = vpack.c.b16 %v1810, %v1806
        %v2767 = vpack.c.b16 %v1811, %v1807
        %v2768 = vpack.c.b16 %v1816, %v1812
        %v2769 = vpack.c.b16 %v1817, %v1813
        %v2770 = vpack.c.b16 %v1818, %v1814
        %v2771 = vpack.c.b16 %v1819, %v1815
        %v2772 = vpack.c.b16 %v1824, %v1820
        %v2773 = vpack.c.b16 %v1825, %v1821
        %v2774 = vpack.c.b16 %v1826, %v1822
        %v2775 = vpack.c.b16 %v1827, %v1823
        %v2776 = vpack.c.b16 %v1832, %v1828
        %v2777 = vpack.c.b16 %v1833, %v1829
        %v2778 = vpack.c.b16 %v1834, %v1830
        %v2779 = vpack.c.b16 %v1835, %v1831
        %v2780 = vpack.c.b16 %v1840, %v1836
        %v2781 = vpack.c.b16 %v1841, %v1837
        %v2782 = vpack.c.b16 %v1842, %v1838
        %v2783 = vpack.c.b16 %v1843, %v1839
        %v2784 = vpack.c.b16 %v1848, %v1844
        %v2785 = vpack.c.b16 %v1849, %v1845
        %v2786 = vpack.c.b16 %v1850, %v1846
        %v2787 = vpack.c.b16 %v1851, %v1847
        %v2788 = vpack.c.b16 %v1856, %v1852
        %v2789 = vpack.c.b16 %v1857, %v1853
        %v2790 = vpack.c.b16 %v1858, %v1854
        %v2791 = vpack.c.b16 %v1859, %v1855
        %v2792 = vpack.c.b16 %v1864, %v1860
        %v2793 = vpack.c.b16 %v1865, %v1861
        %v2794 = vpack.c.b16 %v1866, %v1862
        %v2795 = vpack.c.b16 %v1867, %v1863
        %v2796 = vpack.c.b16 %v1872, %v1868
        %v2797 = vpack.c.b16 %v1873, %v1869
        %v2798 = vpack.c.b16 %v1874, %v1870
        %v2799 = vpack.c.b16 %v1875, %v1871
        %v2800 = vpack.c.b16 %v1880, %v1876
        %v2801 = vpack.c.b16 %v1881, %v1877
        %v2802 = vpack.c.b16 %v1882, %v1878
        %v2803 = vpack.c.b16 %v1883, %v1879
        %v2804 = vpack.c.b16 %v1888, %v1884
        %v2805 = vpack.c.b16 %v1889, %v1885
        %v2806 = vpack.c.b16 %v1890, %v1886
        %v2807 = vpack.c.b16 %v1891, %v1887
        %v2808 = vpack.c.b16 %v1896, %v1892
        %v2809 = vpack.c.b16 %v1897, %v1893
        %v2810 = vpack.c.b16 %v1898, %v1894
        %v2811 = vpack.c.b16 %v1899, %v1895
        %v2812 = vpack.c.b16 %v1904, %v1900
        %v2813 = vpack.c.b16 %v1905, %v1901
        %v2814 = vpack.c.b16 %v1906, %v1902
        %v2815 = vpack.c.b16 %v1907, %v1903
        %v2816 = vpack.c.b16 %v1912, %v1908
        %v2817 = vpack.c.b16 %v1913, %v1909
        %v2818 = vpack.c.b16 %v1914, %v1910
        %v2819 = vpack.c.b16 %v1915, %v1911
        %v2820 = vpack.c.b16 %v1920, %v1916
        %v2821 = vpack.c.b16 %v1921, %v1917
        %v2822 = vpack.c.b16 %v1922, %v1918
        %v2823 = vpack.c.b16 %v1923, %v1919
        %v2824 = vpack.c.b16 %v1928, %v1924
        %v2825 = vpack.c.b16 %v1929, %v1925
        %v2826 = vpack.c.b16 %v1930, %v1926
        %v2827 = vpack.c.b16 %v1931, %v1927
        %v2828 = vpack.c.b16 %v1936, %v1932
        %v2829 = vpack.c.b16 %v1937, %v1933
        %v2830 = vpack.c.b16 %v1938, %v1934
        %v2831 = vpack.c.b16 %v1939, %v1935
        %v2832 = vpack.c.b16 %v1944, %v1940
        %v2833 = vpack.c.b16 %v1945, %v1941
        %v2834 = vpack.c.b16 %v1946, %v1942
        %v2835 = vpack.c.b16 %v1947, %v1943
        %v2836 = vpack.c.b16 %v1952, %v1948
        %v2837 = vpack.c.b16 %v1953, %v1949
        %v2838 = vpack.c.b16 %v1954, %v1950
        %v2839 = vpack.c.b16 %v1955, %v1951
        %v2840 = vpack.c.b16 %v1960, %v1956
        %v2841 = vpack.c.b16 %v1961, %v1957
        %v2842 = vpack.c.b16 %v1962, %v1958
        %v2843 = vpack.c.b16 %v1963, %v1959
        %v2844 = vpack.c.b16 %v1968, %v1964
        %v2845 = vpack.c.b16 %v1969, %v1965
        %v2846 = vpack.c.b16 %v1970, %v1966
        %v2847 = vpack.c.b16 %v1971, %v1967
        %v2848 = vpack.c.b16 %v1976, %v1972
        %v2849 = vpack.c.b16 %v1977, %v1973
        %v2850 = vpack.c.b16 %v1978, %v1974
        %v2851 = vpack.c.b16 %v1979, %v1975
        %v2852 = vpack.c.b16 %v1984, %v1980
        %v2853 = vpack.c.b16 %v1985, %v1981
        %v2854 = vpack.c.b16 %v1986, %v1982
        %v2855 = vpack.c.b16 %v1987, %v1983
        %v2856 = vpack.c.b16 %v1992, %v1988
        %v2857 = vpack.c.b16 %v1993, %v1989
        %v2858 = vpack.c.b16 %v1994, %v1990
        %v2859 = vpack.c.b16 %v1995, %v1991
        %v2860 = vpack.c.b16 %v2000, %v1996
        %v2861 = vpack.c.b16 %v2001, %v1997
        %v2862 = vpack.c.b16 %v2002, %v1998
        %v2863 = vpack.c.b16 %v2003, %v1999
        %v2864 = vpack.c.b16 %v2008, %v2004
        %v2865 = vpack.c.b16 %v2009, %v2005
        %v2866 = vpack.c.b16 %v2010, %v2006
        %v2867 = vpack.c.b16 %v2011, %v2007
        %v2868 = vpack.c.b16 %v2016, %v2012
        %v2869 = vpack.c.b16 %v2017, %v2013
        %v2870 = vpack.c.b16 %v2018, %v2014
        %v2871 = vpack.c.b16 %v2019, %v2015
        %v2872 = vpack.c.b16 %v2024, %v2020
        %v2873 = vpack.c.b16 %v2025, %v2021
        %v2874 = vpack.c.b16 %v2026, %v2022
        %v2875 = vpack.c.b16 %v2027, %v2023
        %v2876 = vpack.c.b16 %v2032, %v2028
        %v2877 = vpack.c.b16 %v2033, %v2029
        %v2878 = vpack.c.b16 %v2034, %v2030
        %v2879 = vpack.c.b16 %v2035, %v2031
        %v2880 = vpack.c.b16 %v2040, %v2036
        %v2881 = vpack.c.b16 %v2041, %v2037
        %v2882 = vpack.c.b16 %v2042, %v2038
        %v2883 = vpack.c.b16 %v2043, %v2039
        %v2884 = vpack.c.b16 %v2048, %v2044
        %v2885 = vpack.c.b16 %v2049, %v2045
        %v2886 = vpack.c.b16 %v2050, %v2046
        %v2887 = vpack.c.b16 %v2051, %v2047
        %v2888 = vpack.c.b16 %v2056, %v2052
        %v2889 = vpack.c.b16 %v2057, %v2053
        %v2890 = vpack.c.b16 %v2058, %v2054
        %v2891 = vpack.c.b16 %v2059, %v2055
        %v2892 = vpack.c.b16 %v2064, %v2060
        %v2893 = vpack.c.b16 %v2065, %v2061
        %v2894 = vpack.c.b16 %v2066, %v2062
        %v2895 = vpack.c.b16 %v2067, %v2063
        %v2896 = vpack.c.b16 %v2072, %v2068
        %v2897 = vpack.c.b16 %v2073, %v2069
        %v2898 = vpack.c.b16 %v2074, %v2070
        %v2899 = vpack.c.b16 %v2075, %v2071
        %v2900 = vpack.c.b16 %v2080, %v2076
        %v2901 = vpack.c.b16 %v2081, %v2077
        %v2902 = vpack.c.b16 %v2082, %v2078
        %v2903 = vpack.c.b16 %v2083, %v2079
        %v2904 = vpack.c.b16 %v2088, %v2084
        %v2905 = vpack.c.b16 %v2089, %v2085
        %v2906 = vpack.c.b16 %v2090, %v2086
        %v2907 = vpack.c.b16 %v2091, %v2087
        %v2908 = vpack.c.b16 %v2096, %v2092
        %v2909 = vpack.c.b16 %v2097, %v2093
        %v2910 = vpack.c.b16 %v2098, %v2094
        %v2911 = vpack.c.b16 %v2099, %v2095
        %v2912 = vpack.c.b16 %v2104, %v2100
        %v2913 = vpack.c.b16 %v2105, %v2101
        %v2914 = vpack.c.b16 %v2106, %v2102
        %v2915 = vpack.c.b16 %v2107, %v2103
        %v2916 = vpack.c.b16 %v2112, %v2108
        %v2917 = vpack.c.b16 %v2113, %v2109
        %v2918 = vpack.c.b16 %v2114, %v2110
        %v2919 = vpack.c.b16 %v2115, %v2111
        %v2920 = vpack.c.b16 %v2120, %v2116
        %v2921 = vpack.c.b16 %v2121, %v2117
        %v2922 = vpack.c.b16 %v2122, %v2118
        %v2923 = vpack.c.b16 %v2123, %v2119
        %v2924 = vpack.c.b16 %v2128, %v2124
        %v2925 = vpack.c.b16 %v2129, %v2125
        %v2926 = vpack.c.b16 %v2130, %v2126
        %v2927 = vpack.c.b16 %v2131, %v2127
        %v2928 = vpack.c.b16 %v2136, %v2132
        %v2929 = vpack.c.b16 %v2137, %v2133
        %v2930 = vpack.c.b16 %v2138, %v2134
        %v2931 = vpack.c.b16 %v2139, %v2135
        %v2932 = vpack.c.b16 %v2144, %v2140
        %v2933 = vpack.c.b16 %v2145, %v2141
        %v2934 = vpack.c.b16 %v2146, %v2142
        %v2935 = vpack.c.b16 %v2147, %v2143
        %v2936 = vpack.c.b16 %v2152, %v2148
        %v2937 = vpack.c.b16 %v2153, %v2149
        %v2938 = vpack.c.b16 %v2154, %v2150
        %v2939 = vpack.c.b16 %v2155, %v2151
        %v2940 = vpack.c.b16 %v2160, %v2156
        %v2941 = vpack.c.b16 %v2161, %v2157
        %v2942 = vpack.c.b16 %v2162, %v2158
        %v2943 = vpack.c.b16 %v2163, %v2159
        %v2944 = vpack.c.b16 %v2168, %v2164
        %v2945 = vpack.c.b16 %v2169, %v2165
        %v2946 = vpack.c.b16 %v2170, %v2166
        %v2947 = vpack.c.b16 %v2171, %v2167
        %v2948 = vpack.c.b16 %v2176, %v2172
        %v2949 = vpack.c.b16 %v2177, %v2173
        %v2950 = vpack.c.b16 %v2178, %v2174
        %v2951 = vpack.c.b16 %v2179, %v2175
        %v2952 = vpack.c.b16 %v2184, %v2180
        %v2953 = vpack.c.b16 %v2185, %v2181
        %v2954 = vpack.c.b16 %v2186, %v2182
        %v2955 = vpack.c.b16 %v2187, %v2183
        %v2956 = vpack.c.b16 %v2192, %v2188
        %v2957 = vpack.c.b16 %v2193, %v2189
        %v2958 = vpack.c.b16 %v2194, %v2190
        %v2959 = vpack.c.b16 %v2195, %v2191
        %v2960 = vpack.c.b16 %v2200, %v2196
        %v2961 = vpack.c.b16 %v2201, %v2197
        %v2962 = vpack.c.b16 %v2202, %v2198
        %v2963 = vpack.c.b16 %v2203, %v2199
        %v2964 = vpack.c.b16 %v2208, %v2204
        %v2965 = vpack.c.b16 %v2209, %v2205
        %v2966 = vpack.c.b16 %v2210, %v2206
        %v2967 = vpack.c.b16 %v2211, %v2207
        %v2968 = vpack.c.b16 %v2216, %v2212
        %v2969 = vpack.c.b16 %v2217, %v2213
        %v2970 = vpack.c.b16 %v2218, %v2214
        %v2971 = vpack.c.b16 %v2219, %v2215
        %v2972 = vpack.c.b16 %v2224, %v2220
        %v2973 = vpack.c.b16 %v2225, %v2221
        %v2974 = vpack.c.b16 %v2226, %v2222
        %v2975 = vpack.c.b16 %v2227, %v2223
        %v2976 = vpack.c.b16 %v2232, %v2228
        %v2977 = vpack.c.b16 %v2233, %v2229
        %v2978 = vpack.c.b16 %v2234, %v2230
        %v2979 = vpack.c.b16 %v2235, %v2231
        %v2980 = vpack.c.b16 %v2240, %v2236
        %v2981 = vpack.c.b16 %v2241, %v2237
        %v2982 = vpack.c.b16 %v2242, %v2238
        %v2983 = vpack.c.b16 %v2243, %v2239
        %v2984 = vpack.c.b16 %v2248, %v2244
        %v2985 = vpack.c.b16 %v2249, %v2245
        %v2986 = vpack.c.b16 %v2250, %v2246
        %v2987 = vpack.c.b16 %v2251, %v2247
        %v2988 = vpack.c.b16 %v2256, %v2252
        %v2989 = vpack.c.b16 %v2257, %v2253
        %v2990 = vpack.c.b16 %v2258, %v2254
        %v2991 = vpack.c.b16 %v2259, %v2255
        %v2992 = vpack.c.b16 %v2264, %v2260
        %v2993 = vpack.c.b16 %v2265, %v2261
        %v2994 = vpack.c.b16 %v2266, %v2262
        %v2995 = vpack.c.b16 %v2267, %v2263
        %v2996 = vpack.c.b16 %v2272, %v2268
        %v2997 = vpack.c.b16 %v2273, %v2269
        %v2998 = vpack.c.b16 %v2274, %v2270
        %v2999 = vpack.c.b16 %v2275, %v2271
        %v3000 = vpack.c.b16 %v2280, %v2276
        %v3001 = vpack.c.b16 %v2281, %v2277
        %v3002 = vpack.c.b16 %v2282, %v2278
        %v3003 = vpack.c.b16 %v2283, %v2279
        %v3004 = vpack.c.b16 %v2288, %v2284
        %v3005 = vpack.c.b16 %v2289, %v2285
        %v3006 = vpack.c.b16 %v2290, %v2286
        %v3007 = vpack.c.b16 %v2291, %v2287
        %v3008 = vpack.c.b16 %v2296, %v2292
        %v3009 = vpack.c.b16 %v2297, %v2293
        %v3010 = vpack.c.b16 %v2298, %v2294
        %v3011 = vpack.c.b16 %v2299, %v2295
        %v3012 = vpack.c.b16 %v2304, %v2300
        %v3013 = vpack.c.b16 %v2305, %v2301
        %v3014 = vpack.c.b16 %v2306, %v2302
        %v3015 = vpack.c.b16 %v2307, %v2303
        %v3016 = vpack.c.b16 %v2312, %v2308
        %v3017 = vpack.c.b16 %v2313, %v2309
        %v3018 = vpack.c.b16 %v2314, %v2310
        %v3019 = vpack.c.b16 %v2315, %v2311
        %v3020 = vpack.c.b16 %v2320, %v2316
        %v3021 = vpack.c.b16 %v2321, %v2317
        %v3022 = vpack.c.b16 %v2322, %v2318
        %v3023 = vpack.c.b16 %v2323, %v2319
        %v3024 = vpack.c.b16 %v2328, %v2324
        %v3025 = vpack.c.b16 %v2329, %v2325
        %v3026 = vpack.c.b16 %v2330, %v2326
        %v3027 = vpack.c.b16 %v2331, %v2327
        %v3028 = vpack.c.b16 %v2336, %v2332
        %v3029 = vpack.c.b16 %v2337, %v2333
        %v3030 = vpack.c.b16 %v2338, %v2334
        %v3031 = vpack.c.b16 %v2339, %v2335
        %v3032 = vpack.c.b16 %v2344, %v2340
        %v3033 = vpack.c.b16 %v2345, %v2341
        %v3034 = vpack.c.b16 %v2346, %v2342
        %v3035 = vpack.c.b16 %v2347, %v2343
        %v3036 = vpack.c.b16 %v2352, %v2348
        %v3037 = vpack.c.b16 %v2353, %v2349
        %v3038 = vpack.c.b16 %v2354, %v2350
        %v3039 = vpack.c.b16 %v2355, %v2351
        %v3040 = vpack.c.b16 %v2360, %v2356
        %v3041 = vpack.c.b16 %v2361, %v2357
        %v3042 = vpack.c.b16 %v2362, %v2358
        %v3043 = vpack.c.b16 %v2363, %v2359
        %v3044 = vpack.c.b16 %v2368, %v2364
        %v3045 = vpack.c.b16 %v2369, %v2365
        %v3046 = vpack.c.b16 %v2370, %v2366
        %v3047 = vpack.c.b16 %v2371, %v2367
        %v3048 = vpack.c.b16 %v2376, %v2372
        %v3049 = vpack.c.b16 %v2377, %v2373
        %v3050 = vpack.c.b16 %v2378, %v2374
        %v3051 = vpack.c.b16 %v2379, %v2375
        %v3052 = vpack.c.b16 %v2384, %v2380
        %v3053 = vpack.c.b16 %v2385, %v2381
        %v3054 = vpack.c.b16 %v2386, %v2382
        %v3055 = vpack.c.b16 %v2387, %v2383
        %v3056 = vpack.c.b16 %v2392, %v2388
        %v3057 = vpack.c.b16 %v2393, %v2389
        %v3058 = vpack.c.b16 %v2394, %v2390
        %v3059 = vpack.c.b16 %v2395, %v2391
        %v3060 = vpack.c.b16 %v2400, %v2396
        %v3061 = vpack.c.b16 %v2401, %v2397
        %v3062 = vpack.c.b16 %v2402, %v2398
        %v3063 = vpack.c.b16 %v2403, %v2399
        %v3064 = vpack.c.b16 %v2408, %v2404
        %v3065 = vpack.c.b16 %v2409, %v2405
        %v3066 = vpack.c.b16 %v2410, %v2406
        %v3067 = vpack.c.b16 %v2411, %v2407
        %v3068 = vpack.c.b16 %v2416, %v2412
        %v3069 = vpack.c.b16 %v2417, %v2413
        %v3070 = vpack.c.b16 %v2418, %v2414
        %v3071 = vpack.c.b16 %v2419, %v2415
        %v3072 = vpack.c.b16 %v2424, %v2420
        %v3073 = vpack.c.b16 %v2425, %v2421
        %v3074 = vpack.c.b16 %v2426, %v2422
        %v3075 = vpack.c.b16 %v2427, %v2423
        %v3076 = vpack.c.b16 %v2432, %v2428
        %v3077 = vpack.c.b16 %v2433, %v2429
        %v3078 = vpack.c.b16 %v2434, %v2430
        %v3079 = vpack.c.b16 %v2435, %v2431
        %v3080 = vpack.c.b16 %v2440, %v2436
        %v3081 = vpack.c.b16 %v2441, %v2437
        %v3082 = vpack.c.b16 %v2442, %v2438
        %v3083 = vpack.c.b16 %v2443, %v2439
        %v3084 = vpack.c.b16 %v2448, %v2444
        %v3085 = vpack.c.b16 %v2449, %v2445
        %v3086 = vpack.c.b16 %v2450, %v2446
        %v3087 = vpack.c.b16 %v2451, %v2447
        %v3088 = vpack.c.b16 %v2456, %v2452
        %v3089 = vpack.c.b16 %v2457, %v2453
        %v3090 = vpack.c.b16 %v2458, %v2454
        %v3091 = vpack.c.b16 %v2459, %v2455
        %v3092 = vpack.c.b16 %v2464, %v2460
        %v3093 = vpack.c.b16 %v2465, %v2461
        %v3094 = vpack.c.b16 %v2466, %v2462
        %v3095 = vpack.c.b16 %v2467, %v2463
        %v3096 = vpack.c.b16 %v2472, %v2468
        %v3097 = vpack.c.b16 %v2473, %v2469
        %v3098 = vpack.c.b16 %v2474, %v2470
        %v3099 = vpack.c.b16 %v2475, %v2471
        %v3100 = vpack.c.b16 %v2480, %v2476
        %v3101 = vpack.c.b16 %v2481, %v2477
        %v3102 = vpack.c.b16 %v2482, %v2478
        %v3103 = vpack.c.b16 %v2483, %v2479
        %v3104 = vpack.c.b16 %v2488, %v2484
        %v3105 = vpack.c.b16 %v2489, %v2485
        %v3106 = vpack.c.b16 %v2490, %v2486
        %v3107 = vpack.c.b16 %v2491, %v2487
        %v3108 = vpack.c.b16 %v2496, %v2492
        %v3109 = vpack.c.b16 %v2497, %v2493
        %v3110 = vpack.c.b16 %v2498, %v2494
        %v3111 = vpack.c.b16 %v2499, %v2495
        %v3112 = vpack.c.b16 %v2504, %v2500
        %v3113 = vpack.c.b16 %v2505, %v2501
        %v3114 = vpack.c.b16 %v2506, %v2502
        %v3115 = vpack.c.b16 %v2507, %v2503
        %v3116 = vpack.c.b16 %v2512, %v2508
        %v3117 = vpack.c.b16 %v2513, %v2509
        %v3118 = vpack.c.b16 %v2514, %v2510
        %v3119 = vpack.c.b16 %v2515, %v2511
        %v3120 = vpack.c.b16 %v2520, %v2516
        %v3121 = vpack.c.b16 %v2521, %v2517
        %v3122 = vpack.c.b16 %v2522, %v2518
        %v3123 = vpack.c.b16 %v2523, %v2519
        %v3124 = vpack.c.b16 %v2528, %v2524
        %v3125 = vpack.c.b16 %v2529, %v2525
        %v3126 = vpack.c.b16 %v2530, %v2526
        %v3127 = vpack.c.b16 %v2531, %v2527
        %v3128 = vpack.c.b16 %v2536, %v2532
        %v3129 = vpack.c.b16 %v2537, %v2533
        %v3130 = vpack.c.b16 %v2538, %v2534
        %v3131 = vpack.c.b16 %v2539, %v2535
        %v3132 = vpack.c.b16 %v2544, %v2540
        %v3133 = vpack.c.b16 %v2545, %v2541
        %v3134 = vpack.c.b16 %v2546, %v2542
        %v3135 = vpack.c.b16 %v2547, %v2543
        %v3136 = vpack.c.b16 %v2552, %v2548
        %v3137 = vpack.c.b16 %v2553, %v2549
        %v3138 = vpack.c.b16 %v2554, %v2550
        %v3139 = vpack.c.b16 %v2555, %v2551
        %v3140 = vpack.c.b16 %v2560, %v2556
        %v3141 = vpack.c.b16 %v2561, %v2557
        %v3142 = vpack.c.b16 %v2562, %v2558
        %v3143 = vpack.c.b16 %v2563, %v2559
        %v3144 = vpack.c.b16 %v2568, %v2564
        %v3145 = vpack.c.b16 %v2569, %v2565
        %v3146 = vpack.c.b16 %v2570, %v2566
        %v3147 = vpack.c.b16 %v2571, %v2567
        %v3148 = vpack.c.b16 %v2576, %v2572
        %v3149 = vpack.c.b16 %v2577, %v2573
        %v3150 = vpack.c.b16 %v2578, %v2574
        %v3151 = vpack.c.b16 %v2579, %v2575
        %v3152 = vpack.c.b16 %v2584, %v2580
        %v3153 = vpack.c.b16 %v2585, %v2581
        %v3154 = vpack.c.b16 %v2586, %v2582
        %v3155 = vpack.c.b16 %v2587, %v2583
        %v3156 = vpack.c.b16 %v2592, %v2588
        %v3157 = vpack.c.b16 %v2593, %v2589
        %v3158 = vpack.c.b16 %v2594, %v2590
        %v3159 = vpack.c.b16 %v2595, %v2591
        %v3160 = vpack.c.b16 %v2600, %v2596
        %v3161 = vpack.c.b16 %v2601, %v2597
        %v3162 = vpack.c.b16 %v2602, %v2598
        %v3163 = vpack.c.b16 %v2603, %v2599
        %v3164 = vpack.c.b16 %v2608, %v2604
        %v3165 = vpack.c.b16 %v2609, %v2605
        %v3166 = vpack.c.b16 %v2610, %v2606
        %v3167 = vpack.c.b16 %v2611, %v2607
        %v3168 = vpack.c.b16 %v2616, %v2612
        %v3169 = vpack.c.b16 %v2617, %v2613
        %v3170 = vpack.c.b16 %v2618, %v2614
        %v3171 = vpack.c.b16 %v2619, %v2615
        %v3172 = vpack.c.b16 %v2624, %v2620
        %v3173 = vpack.c.b16 %v2625, %v2621
        %v3174 = vpack.c.b16 %v2626, %v2622
        %v3175 = vpack.c.b16 %v2627, %v2623
        %v3176 = vpack.c.b16 %v2632, %v2628
        %v3177 = vpack.c.b16 %v2633, %v2629
        %v3178 = vpack.c.b16 %v2634, %v2630
        %v3179 = vpack.c.b16 %v2635, %v2631
        %v3180 = vpack.c.b16 %v2640, %v2636
        %v3181 = vpack.c.b16 %v2641, %v2637
        %v3182 = vpack.c.b16 %v2642, %v2638
        %v3183 = vpack.c.b16 %v2643, %v2639
        %v3184 = vpack.c.b16 %v2648, %v2644
        %v3185 = vpack.c.b16 %v2649, %v2645
        %v3186 = vpack.c.b16 %v2650, %v2646
        %v3187 = vpack.c.b16 %v2651, %v2647
        %v3188 = vpack.c.b16 %v2656, %v2652
        %v3189 = vpack.c.b16 %v2657, %v2653
        %v3190 = vpack.c.b16 %v2658, %v2654
        %v3191 = vpack.c.b16 %v2659, %v2655
        %v3192 = vpack.c.b16 %v2664, %v2660
        %v3193 = vpack.c.b16 %v2665, %v2661
        %v3194 = vpack.c.b16 %v2666, %v2662
        %v3195 = vpack.c.b16 %v2667, %v2663
        %v3196 = vpack.c.b16 %v2672, %v2668
        %v3197 = vpack.c.b16 %v2673, %v2669
        %v3198 = vpack.c.b16 %v2674, %v2670
        %v3199 = vpack.c.b16 %v2675, %v2671
        %v3200 = vpack.c.b16 %v2680, %v2676
        %v3201 = vpack.c.b16 %v2681, %v2677
        %v3202 = vpack.c.b16 %v2682, %v2678
        %v3203 = vpack.c.b16 %v2683, %v2679
        %v3204 = vpack.c.b16 %v2688, %v2684
        %v3205 = vpack.c.b16 %v2689, %v2685
        %v3206 = vpack.c.b16 %v2690, %v2686
        %v3207 = vpack.c.b16 %v2691, %v2687
        %v3208 = vpack.c.b16 %v2696, %v2692
        %v3209 = vpack.c.b16 %v2697, %v2693
        %v3210 = vpack.c.b16 %v2698, %v2694
        %v3211 = vpack.c.b16 %v2699, %v2695
        %3724 = vmatpush.bf16.msra.mxu0 %v2728
        %3725 = vmatpush.bf16.msra.mxu0 %v2724
        %3726 = vmatpush.bf16.msra.mxu0 %v2720
        %3727 = vmatpush.bf16.msra.mxu0 %v2716
        %3728 = vmatpush.bf16.msra.mxu0 %v2712
        %3729 = vmatpush.bf16.msra.mxu0 %v2708
        %3730 = vmatpush.bf16.msra.mxu0 %v2704
        %3731 = vmatpush.bf16.msra.mxu0 %v2700
        %3732 = vmatmul.bf16.gmra.mxu0 %v1130
        %v3733 = vpop.f32.mrf.mxu0
        %v3734 = vadd.f32 0.0, %v3733
        %v3735 = vpop.f32.mrf.mxu0
        %3736 = vdwg.mxu0
        %3737 = vmatpush.bf16.msra.mxu0 %v2760
        %3738 = vmatpush.bf16.msra.mxu0 %v2756
        %3739 = vmatpush.bf16.msra.mxu0 %v2752
        %3740 = vmatpush.bf16.msra.mxu0 %v2748
        %3741 = vmatpush.bf16.msra.mxu0 %v2744
        %3742 = vmatpush.bf16.msra.mxu0 %v2740
        %3743 = vmatpush.bf16.msra.mxu0 %v2736
        %3744 = vmatpush.bf16.msra.mxu0 %v2732
        %3745 = vmatmul.bf16.gmra.mxu0 %v1131
        %v3746 = vpop.f32.mrf.mxu0
        %v3747 = vadd.f32 %v3734, %v3746
        %v3748 = vpop.f32.mrf.mxu0
        %3749 = vdwg.mxu0
        %3750 = vmatpush.bf16.msra.mxu0 %v2792
        %3751 = vmatpush.bf16.msra.mxu0 %v2788
        %3752 = vmatpush.bf16.msra.mxu0 %v2784
        %3753 = vmatpush.bf16.msra.mxu0 %v2780
        %3754 = vmatpush.bf16.msra.mxu0 %v2776
        %3755 = vmatpush.bf16.msra.mxu0 %v2772
        %3756 = vmatpush.bf16.msra.mxu0 %v2768
        %3757 = vmatpush.bf16.msra.mxu0 %v2764
        %3758 = vmatmul.bf16.gmra.mxu0 %v1132
        %v3759 = vpop.f32.mrf.mxu0
        %v3760 = vadd.f32 %v3747, %v3759
        %v3761 = vpop.f32.mrf.mxu0
        %3762 = vdwg.mxu0
        %3763 = vmatpush.bf16.msra.mxu0 %v2824
        %3764 = vmatpush.bf16.msra.mxu0 %v2820
        %3765 = vmatpush.bf16.msra.mxu0 %v2816
        %3766 = vmatpush.bf16.msra.mxu0 %v2812
        %3767 = vmatpush.bf16.msra.mxu0 %v2808
        %3768 = vmatpush.bf16.msra.mxu0 %v2804
        %3769 = vmatpush.bf16.msra.mxu0 %v2800
        %3770 = vmatpush.bf16.msra.mxu0 %v2796
        %3771 = vmatmul.bf16.gmra.mxu0 %v1133
        %v3772 = vpop.f32.mrf.mxu0
        %v3773 = vadd.f32 %v3760, %v3772
        %v3774 = vpop.f32.mrf.mxu0
        %3775 = vdwg.mxu0
        %3776 = vmatpush.bf16.msra.mxu0 %v2856
        %3777 = vmatpush.bf16.msra.mxu0 %v2852
        %3778 = vmatpush.bf16.msra.mxu0 %v2848
        %3779 = vmatpush.bf16.msra.mxu0 %v2844
        %3780 = vmatpush.bf16.msra.mxu0 %v2840
        %3781 = vmatpush.bf16.msra.mxu0 %v2836
        %3782 = vmatpush.bf16.msra.mxu0 %v2832
        %3783 = vmatpush.bf16.msra.mxu0 %v2828
        %3784 = vmatmul.bf16.gmra.mxu0 %v1134
        %v3785 = vpop.f32.mrf.mxu0
        %v3786 = vadd.f32 %v3773, %v3785
        %v3787 = vpop.f32.mrf.mxu0
        %3788 = vdwg.mxu0
        %3789 = vmatpush.bf16.msra.mxu0 %v2888
        %3790 = vmatpush.bf16.msra.mxu0 %v2884
        %3791 = vmatpush.bf16.msra.mxu0 %v2880
        %3792 = vmatpush.bf16.msra.mxu0 %v2876
        %3793 = vmatpush.bf16.msra.mxu0 %v2872
        %3794 = vmatpush.bf16.msra.mxu0 %v2868
        %3795 = vmatpush.bf16.msra.mxu0 %v2864
        %3796 = vmatpush.bf16.msra.mxu0 %v2860
        %3797 = vmatmul.bf16.gmra.mxu0 %v1135
        %v3798 = vpop.f32.mrf.mxu0
        %v3799 = vadd.f32 %v3786, %v3798
        %v3800 = vpop.f32.mrf.mxu0
        %3801 = vdwg.mxu0
        %3802 = vmatpush.bf16.msra.mxu0 %v2920
        %3803 = vmatpush.bf16.msra.mxu0 %v2916
        %3804 = vmatpush.bf16.msra.mxu0 %v2912
        %3805 = vmatpush.bf16.msra.mxu0 %v2908
        %3806 = vmatpush.bf16.msra.mxu0 %v2904
        %3807 = vmatpush.bf16.msra.mxu0 %v2900
        %3808 = vmatpush.bf16.msra.mxu0 %v2896
        %3809 = vmatpush.bf16.msra.mxu0 %v2892
        %3810 = vmatmul.bf16.gmra.mxu0 %v1136
        %v3811 = vpop.f32.mrf.mxu0
        %v3812 = vadd.f32 %v3799, %v3811
        %v3813 = vpop.f32.mrf.mxu0
        %3814 = vdwg.mxu0
        %3815 = vmatpush.bf16.msra.mxu0 %v2952
        %3816 = vmatpush.bf16.msra.mxu0 %v2948
        %3817 = vmatpush.bf16.msra.mxu0 %v2944
        %3818 = vmatpush.bf16.msra.mxu0 %v2940
        %3819 = vmatpush.bf16.msra.mxu0 %v2936
        %3820 = vmatpush.bf16.msra.mxu0 %v2932
        %3821 = vmatpush.bf16.msra.mxu0 %v2928
        %3822 = vmatpush.bf16.msra.mxu0 %v2924
        %3823 = vmatmul.bf16.gmra.mxu0 %v1137
        %v3824 = vpop.f32.mrf.mxu0
        %v3825 = vadd.f32 %v3812, %v3824
        %v3826 = vpop.f32.mrf.mxu0
        %3827 = vdwg.mxu0
        %3828 = vmatpush.bf16.msra.mxu0 %v2984
        %3829 = vmatpush.bf16.msra.mxu0 %v2980
        %3830 = vmatpush.bf16.msra.mxu0 %v2976
        %3831 = vmatpush.bf16.msra.mxu0 %v2972
        %3832 = vmatpush.bf16.msra.mxu0 %v2968
        %3833 = vmatpush.bf16.msra.mxu0 %v2964
        %3834 = vmatpush.bf16.msra.mxu0 %v2960
        %3835 = vmatpush.bf16.msra.mxu0 %v2956
        %3836 = vmatmul.bf16.gmra.mxu0 %v1140
        %v3837 = vpop.f32.mrf.mxu0
        %v3838 = vadd.f32 %v3825, %v3837
        %v3839 = vpop.f32.mrf.mxu0
        %3840 = vdwg.mxu0
        %3841 = vmatpush.bf16.msra.mxu0 %v3016
        %3842 = vmatpush.bf16.msra.mxu0 %v3012
        %3843 = vmatpush.bf16.msra.mxu0 %v3008
        %3844 = vmatpush.bf16.msra.mxu0 %v3004
        %3845 = vmatpush.bf16.msra.mxu0 %v3000
        %3846 = vmatpush.bf16.msra.mxu0 %v2996
        %3847 = vmatpush.bf16.msra.mxu0 %v2992
        %3848 = vmatpush.bf16.msra.mxu0 %v2988
        %3849 = vmatmul.bf16.gmra.mxu0 %v1141
        %v3850 = vpop.f32.mrf.mxu0
        %v3851 = vadd.f32 %v3838, %v3850
        %v3852 = vpop.f32.mrf.mxu0
        %3853 = vdwg.mxu0
        %3854 = vmatpush.bf16.msra.mxu0 %v3048
        %3855 = vmatpush.bf16.msra.mxu0 %v3044
        %3856 = vmatpush.bf16.msra.mxu0 %v3040
        %3857 = vmatpush.bf16.msra.mxu0 %v3036
        %3858 = vmatpush.bf16.msra.mxu0 %v3032
        %3859 = vmatpush.bf16.msra.mxu0 %v3028
        %3860 = vmatpush.bf16.msra.mxu0 %v3024
        %3861 = vmatpush.bf16.msra.mxu0 %v3020
        %3862 = vmatmul.bf16.gmra.mxu0 %v1142
        %v3863 = vpop.f32.mrf.mxu0
        %v3864 = vadd.f32 %v3851, %v3863
        %v3865 = vpop.f32.mrf.mxu0
        %3866 = vdwg.mxu0
        %3867 = vmatpush.bf16.msra.mxu0 %v3080
        %3868 = vmatpush.bf16.msra.mxu0 %v3076
        %3869 = vmatpush.bf16.msra.mxu0 %v3072
        %3870 = vmatpush.bf16.msra.mxu0 %v3068
        %3871 = vmatpush.bf16.msra.mxu0 %v3064
        %3872 = vmatpush.bf16.msra.mxu0 %v3060
        %3873 = vmatpush.bf16.msra.mxu0 %v3056
        %3874 = vmatpush.bf16.msra.mxu0 %v3052
        %3875 = vmatmul.bf16.gmra.mxu0 %v1143
        %v3876 = vpop.f32.mrf.mxu0
        %v3877 = vadd.f32 %v3864, %v3876
        %v3878 = vpop.f32.mrf.mxu0
        %3879 = vdwg.mxu0
        %3880 = vmatpush.bf16.msra.mxu0 %v3112
        %3881 = vmatpush.bf16.msra.mxu0 %v3108
        %3882 = vmatpush.bf16.msra.mxu0 %v3104
        %3883 = vmatpush.bf16.msra.mxu0 %v3100
        %3884 = vmatpush.bf16.msra.mxu0 %v3096
        %3885 = vmatpush.bf16.msra.mxu0 %v3092
        %3886 = vmatpush.bf16.msra.mxu0 %v3088
        %3887 = vmatpush.bf16.msra.mxu0 %v3084
        %3888 = vmatmul.bf16.gmra.mxu0 %v1144
        %v3889 = vpop.f32.mrf.mxu0
        %v3890 = vadd.f32 %v3877, %v3889
        %v3891 = vpop.f32.mrf.mxu0
        %3892 = vdwg.mxu0
        %3893 = vmatpush.bf16.msra.mxu0 %v3144
        %3894 = vmatpush.bf16.msra.mxu0 %v3140
        %3895 = vmatpush.bf16.msra.mxu0 %v3136
        %3896 = vmatpush.bf16.msra.mxu0 %v3132
        %3897 = vmatpush.bf16.msra.mxu0 %v3128
        %3898 = vmatpush.bf16.msra.mxu0 %v3124
        %3899 = vmatpush.bf16.msra.mxu0 %v3120
        %3900 = vmatpush.bf16.msra.mxu0 %v3116
        %3901 = vmatmul.bf16.gmra.mxu0 %v1145
        %v3902 = vpop.f32.mrf.mxu0
        %v3903 = vadd.f32 %v3890, %v3902
        %v3904 = vpop.f32.mrf.mxu0
        %3905 = vdwg.mxu0
        %3906 = vmatpush.bf16.msra.mxu0 %v3176
        %3907 = vmatpush.bf16.msra.mxu0 %v3172
        %3908 = vmatpush.bf16.msra.mxu0 %v3168
        %3909 = vmatpush.bf16.msra.mxu0 %v3164
        %3910 = vmatpush.bf16.msra.mxu0 %v3160
        %3911 = vmatpush.bf16.msra.mxu0 %v3156
        %3912 = vmatpush.bf16.msra.mxu0 %v3152
        %3913 = vmatpush.bf16.msra.mxu0 %v3148
        %3914 = vmatmul.bf16.gmra.mxu0 %v1146
        %v3915 = vpop.f32.mrf.mxu0
        %v3916 = vadd.f32 %v3903, %v3915
        %v3917 = vpop.f32.mrf.mxu0
        %3918 = vdwg.mxu0
        %3919 = vmatpush.bf16.msra.mxu0 %v3208
        %3920 = vmatpush.bf16.msra.mxu0 %v3204
        %3921 = vmatpush.bf16.msra.mxu0 %v3200
        %3922 = vmatpush.bf16.msra.mxu0 %v3196
        %3923 = vmatpush.bf16.msra.mxu0 %v3192
        %3924 = vmatpush.bf16.msra.mxu0 %v3188
        %3925 = vmatpush.bf16.msra.mxu0 %v3184
        %3926 = vmatpush.bf16.msra.mxu0 %v3180
        %3927 = vmatmul.bf16.gmra.mxu0 %v1147
        %v3928 = vpop.f32.mrf.mxu0
        %v3929 = vadd.f32 %v3916, %v3928
        %v3930 = vpop.f32.mrf.mxu0
        %3931 = vdwg.mxu0
        %3932 = vmatpush.bf16.msra.mxu0 %v2729
        %3933 = vmatpush.bf16.msra.mxu0 %v2725
        %3934 = vmatpush.bf16.msra.mxu0 %v2721
        %3935 = vmatpush.bf16.msra.mxu0 %v2717
        %3936 = vmatpush.bf16.msra.mxu0 %v2713
        %3937 = vmatpush.bf16.msra.mxu0 %v2709
        %3938 = vmatpush.bf16.msra.mxu0 %v2705
        %3939 = vmatpush.bf16.msra.mxu0 %v2701
        %3940 = vmatmul.bf16.gmra.mxu0 %v1130
        %v3941 = vpop.f32.mrf.mxu0
        %v3942 = vadd.f32 0.0, %v3941
        %v3943 = vpop.f32.mrf.mxu0
        %3944 = vdwg.mxu0
        %3945 = vmatpush.bf16.msra.mxu0 %v2761
        %3946 = vmatpush.bf16.msra.mxu0 %v2757
        %3947 = vmatpush.bf16.msra.mxu0 %v2753
        %3948 = vmatpush.bf16.msra.mxu0 %v2749
        %3949 = vmatpush.bf16.msra.mxu0 %v2745
        %3950 = vmatpush.bf16.msra.mxu0 %v2741
        %3951 = vmatpush.bf16.msra.mxu0 %v2737
        %3952 = vmatpush.bf16.msra.mxu0 %v2733
        %3953 = vmatmul.bf16.gmra.mxu0 %v1131
        %v3954 = vpop.f32.mrf.mxu0
        %v3955 = vadd.f32 %v3942, %v3954
        %v3956 = vpop.f32.mrf.mxu0
        %3957 = vdwg.mxu0
        %3958 = vmatpush.bf16.msra.mxu0 %v2793
        %3959 = vmatpush.bf16.msra.mxu0 %v2789
        %3960 = vmatpush.bf16.msra.mxu0 %v2785
        %3961 = vmatpush.bf16.msra.mxu0 %v2781
        %3962 = vmatpush.bf16.msra.mxu0 %v2777
        %3963 = vmatpush.bf16.msra.mxu0 %v2773
        %3964 = vmatpush.bf16.msra.mxu0 %v2769
        %3965 = vmatpush.bf16.msra.mxu0 %v2765
        %3966 = vmatmul.bf16.gmra.mxu0 %v1132
        %v3967 = vpop.f32.mrf.mxu0
        %v3968 = vadd.f32 %v3955, %v3967
        %v3969 = vpop.f32.mrf.mxu0
        %3970 = vdwg.mxu0
        %3971 = vmatpush.bf16.msra.mxu0 %v2825
        %3972 = vmatpush.bf16.msra.mxu0 %v2821
        %3973 = vmatpush.bf16.msra.mxu0 %v2817
        %3974 = vmatpush.bf16.msra.mxu0 %v2813
        %3975 = vmatpush.bf16.msra.mxu0 %v2809
        %3976 = vmatpush.bf16.msra.mxu0 %v2805
        %3977 = vmatpush.bf16.msra.mxu0 %v2801
        %3978 = vmatpush.bf16.msra.mxu0 %v2797
        %3979 = vmatmul.bf16.gmra.mxu0 %v1133
        %v3980 = vpop.f32.mrf.mxu0
        %v3981 = vadd.f32 %v3968, %v3980
        %v3982 = vpop.f32.mrf.mxu0
        %3983 = vdwg.mxu0
        %3984 = vmatpush.bf16.msra.mxu0 %v2857
        %3985 = vmatpush.bf16.msra.mxu0 %v2853
        %3986 = vmatpush.bf16.msra.mxu0 %v2849
        %3987 = vmatpush.bf16.msra.mxu0 %v2845
        %3988 = vmatpush.bf16.msra.mxu0 %v2841
        %3989 = vmatpush.bf16.msra.mxu0 %v2837
        %3990 = vmatpush.bf16.msra.mxu0 %v2833
        %3991 = vmatpush.bf16.msra.mxu0 %v2829
        %3992 = vmatmul.bf16.gmra.mxu0 %v1134
        %v3993 = vpop.f32.mrf.mxu0
        %v3994 = vadd.f32 %v3981, %v3993
        %v3995 = vpop.f32.mrf.mxu0
        %3996 = vdwg.mxu0
        %3997 = vmatpush.bf16.msra.mxu0 %v2889
        %3998 = vmatpush.bf16.msra.mxu0 %v2885
        %3999 = vmatpush.bf16.msra.mxu0 %v2881
        %4000 = vmatpush.bf16.msra.mxu0 %v2877
        %4001 = vmatpush.bf16.msra.mxu0 %v2873
        %4002 = vmatpush.bf16.msra.mxu0 %v2869
        %4003 = vmatpush.bf16.msra.mxu0 %v2865
        %4004 = vmatpush.bf16.msra.mxu0 %v2861
        %4005 = vmatmul.bf16.gmra.mxu0 %v1135
        %v4006 = vpop.f32.mrf.mxu0
        %v4007 = vadd.f32 %v3994, %v4006
        %v4008 = vpop.f32.mrf.mxu0
        %4009 = vdwg.mxu0
        %4010 = vmatpush.bf16.msra.mxu0 %v2921
        %4011 = vmatpush.bf16.msra.mxu0 %v2917
        %4012 = vmatpush.bf16.msra.mxu0 %v2913
        %4013 = vmatpush.bf16.msra.mxu0 %v2909
        %4014 = vmatpush.bf16.msra.mxu0 %v2905
        %4015 = vmatpush.bf16.msra.mxu0 %v2901
        %4016 = vmatpush.bf16.msra.mxu0 %v2897
        %4017 = vmatpush.bf16.msra.mxu0 %v2893
        %4018 = vmatmul.bf16.gmra.mxu0 %v1136
        %v4019 = vpop.f32.mrf.mxu0
        %v4020 = vadd.f32 %v4007, %v4019
        %v4021 = vpop.f32.mrf.mxu0
        %4022 = vdwg.mxu0
        %4023 = vmatpush.bf16.msra.mxu0 %v2953
        %4024 = vmatpush.bf16.msra.mxu0 %v2949
        %4025 = vmatpush.bf16.msra.mxu0 %v2945
        %4026 = vmatpush.bf16.msra.mxu0 %v2941
        %4027 = vmatpush.bf16.msra.mxu0 %v2937
        %4028 = vmatpush.bf16.msra.mxu0 %v2933
        %4029 = vmatpush.bf16.msra.mxu0 %v2929
        %4030 = vmatpush.bf16.msra.mxu0 %v2925
        %4031 = vmatmul.bf16.gmra.mxu0 %v1137
        %v4032 = vpop.f32.mrf.mxu0
        %v4033 = vadd.f32 %v4020, %v4032
        %v4034 = vpop.f32.mrf.mxu0
        %4035 = vdwg.mxu0
        %4036 = vmatpush.bf16.msra.mxu0 %v2985
        %4037 = vmatpush.bf16.msra.mxu0 %v2981
        %4038 = vmatpush.bf16.msra.mxu0 %v2977
        %4039 = vmatpush.bf16.msra.mxu0 %v2973
        %4040 = vmatpush.bf16.msra.mxu0 %v2969
        %4041 = vmatpush.bf16.msra.mxu0 %v2965
        %4042 = vmatpush.bf16.msra.mxu0 %v2961
        %4043 = vmatpush.bf16.msra.mxu0 %v2957
        %4044 = vmatmul.bf16.gmra.mxu0 %v1140
        %v4045 = vpop.f32.mrf.mxu0
        %v4046 = vadd.f32 %v4033, %v4045
        %v4047 = vpop.f32.mrf.mxu0
        %4048 = vdwg.mxu0
        %4049 = vmatpush.bf16.msra.mxu0 %v3017
        %4050 = vmatpush.bf16.msra.mxu0 %v3013
        %4051 = vmatpush.bf16.msra.mxu0 %v3009
        %4052 = vmatpush.bf16.msra.mxu0 %v3005
        %4053 = vmatpush.bf16.msra.mxu0 %v3001
        %4054 = vmatpush.bf16.msra.mxu0 %v2997
        %4055 = vmatpush.bf16.msra.mxu0 %v2993
        %4056 = vmatpush.bf16.msra.mxu0 %v2989
        %4057 = vmatmul.bf16.gmra.mxu0 %v1141
        %v4058 = vpop.f32.mrf.mxu0
        %v4059 = vadd.f32 %v4046, %v4058
        %v4060 = vpop.f32.mrf.mxu0
        %4061 = vdwg.mxu0
        %4062 = vmatpush.bf16.msra.mxu0 %v3049
        %4063 = vmatpush.bf16.msra.mxu0 %v3045
        %4064 = vmatpush.bf16.msra.mxu0 %v3041
        %4065 = vmatpush.bf16.msra.mxu0 %v3037
        %4066 = vmatpush.bf16.msra.mxu0 %v3033
        %4067 = vmatpush.bf16.msra.mxu0 %v3029
        %4068 = vmatpush.bf16.msra.mxu0 %v3025
        %4069 = vmatpush.bf16.msra.mxu0 %v3021
        %4070 = vmatmul.bf16.gmra.mxu0 %v1142
        %v4071 = vpop.f32.mrf.mxu0
        %v4072 = vadd.f32 %v4059, %v4071
        %v4073 = vpop.f32.mrf.mxu0
        %4074 = vdwg.mxu0
        %4075 = vmatpush.bf16.msra.mxu0 %v3081
        %4076 = vmatpush.bf16.msra.mxu0 %v3077
        %4077 = vmatpush.bf16.msra.mxu0 %v3073
        %4078 = vmatpush.bf16.msra.mxu0 %v3069
        %4079 = vmatpush.bf16.msra.mxu0 %v3065
        %4080 = vmatpush.bf16.msra.mxu0 %v3061
        %4081 = vmatpush.bf16.msra.mxu0 %v3057
        %4082 = vmatpush.bf16.msra.mxu0 %v3053
        %4083 = vmatmul.bf16.gmra.mxu0 %v1143
        %v4084 = vpop.f32.mrf.mxu0
        %v4085 = vadd.f32 %v4072, %v4084
        %v4086 = vpop.f32.mrf.mxu0
        %4087 = vdwg.mxu0
        %4088 = vmatpush.bf16.msra.mxu0 %v3113
        %4089 = vmatpush.bf16.msra.mxu0 %v3109
        %4090 = vmatpush.bf16.msra.mxu0 %v3105
        %4091 = vmatpush.bf16.msra.mxu0 %v3101
        %4092 = vmatpush.bf16.msra.mxu0 %v3097
        %4093 = vmatpush.bf16.msra.mxu0 %v3093
        %4094 = vmatpush.bf16.msra.mxu0 %v3089
        %4095 = vmatpush.bf16.msra.mxu0 %v3085
        %4096 = vmatmul.bf16.gmra.mxu0 %v1144
        %v4097 = vpop.f32.mrf.mxu0
        %v4098 = vadd.f32 %v4085, %v4097
        %v4099 = vpop.f32.mrf.mxu0
        %4100 = vdwg.mxu0
        %4101 = vmatpush.bf16.msra.mxu0 %v3145
        %4102 = vmatpush.bf16.msra.mxu0 %v3141
        %4103 = vmatpush.bf16.msra.mxu0 %v3137
        %4104 = vmatpush.bf16.msra.mxu0 %v3133
        %4105 = vmatpush.bf16.msra.mxu0 %v3129
        %4106 = vmatpush.bf16.msra.mxu0 %v3125
        %4107 = vmatpush.bf16.msra.mxu0 %v3121
        %4108 = vmatpush.bf16.msra.mxu0 %v3117
        %4109 = vmatmul.bf16.gmra.mxu0 %v1145
        %v4110 = vpop.f32.mrf.mxu0
        %v4111 = vadd.f32 %v4098, %v4110
        %v4112 = vpop.f32.mrf.mxu0
        %4113 = vdwg.mxu0
        %4114 = vmatpush.bf16.msra.mxu0 %v3177
        %4115 = vmatpush.bf16.msra.mxu0 %v3173
        %4116 = vmatpush.bf16.msra.mxu0 %v3169
        %4117 = vmatpush.bf16.msra.mxu0 %v3165
        %4118 = vmatpush.bf16.msra.mxu0 %v3161
        %4119 = vmatpush.bf16.msra.mxu0 %v3157
        %4120 = vmatpush.bf16.msra.mxu0 %v3153
        %4121 = vmatpush.bf16.msra.mxu0 %v3149
        %4122 = vmatmul.bf16.gmra.mxu0 %v1146
        %v4123 = vpop.f32.mrf.mxu0
        %v4124 = vadd.f32 %v4111, %v4123
        %v4125 = vpop.f32.mrf.mxu0
        %4126 = vdwg.mxu0
        %4127 = vmatpush.bf16.msra.mxu0 %v3209
        %4128 = vmatpush.bf16.msra.mxu0 %v3205
        %4129 = vmatpush.bf16.msra.mxu0 %v3201
        %4130 = vmatpush.bf16.msra.mxu0 %v3197
        %4131 = vmatpush.bf16.msra.mxu0 %v3193
        %4132 = vmatpush.bf16.msra.mxu0 %v3189
        %4133 = vmatpush.bf16.msra.mxu0 %v3185
        %4134 = vmatpush.bf16.msra.mxu0 %v3181
        %4135 = vmatmul.bf16.gmra.mxu0 %v1147
        %v4136 = vpop.f32.mrf.mxu0
        %v4137 = vadd.f32 %v4124, %v4136
        %v4138 = vpop.f32.mrf.mxu0
        %4139 = vdwg.mxu0
        %4140 = vmatpush.bf16.msra.mxu0 %v2730
        %4141 = vmatpush.bf16.msra.mxu0 %v2726
        %4142 = vmatpush.bf16.msra.mxu0 %v2722
        %4143 = vmatpush.bf16.msra.mxu0 %v2718
        %4144 = vmatpush.bf16.msra.mxu0 %v2714
        %4145 = vmatpush.bf16.msra.mxu0 %v2710
        %4146 = vmatpush.bf16.msra.mxu0 %v2706
        %4147 = vmatpush.bf16.msra.mxu0 %v2702
        %4148 = vmatmul.bf16.gmra.mxu0 %v1130
        %v4149 = vpop.f32.mrf.mxu0
        %v4150 = vadd.f32 0.0, %v4149
        %v4151 = vpop.f32.mrf.mxu0
        %4152 = vdwg.mxu0
        %4153 = vmatpush.bf16.msra.mxu0 %v2762
        %4154 = vmatpush.bf16.msra.mxu0 %v2758
        %4155 = vmatpush.bf16.msra.mxu0 %v2754
        %4156 = vmatpush.bf16.msra.mxu0 %v2750
        %4157 = vmatpush.bf16.msra.mxu0 %v2746
        %4158 = vmatpush.bf16.msra.mxu0 %v2742
        %4159 = vmatpush.bf16.msra.mxu0 %v2738
        %4160 = vmatpush.bf16.msra.mxu0 %v2734
        %4161 = vmatmul.bf16.gmra.mxu0 %v1131
        %v4162 = vpop.f32.mrf.mxu0
        %v4163 = vadd.f32 %v4150, %v4162
        %v4164 = vpop.f32.mrf.mxu0
        %4165 = vdwg.mxu0
        %4166 = vmatpush.bf16.msra.mxu0 %v2794
        %4167 = vmatpush.bf16.msra.mxu0 %v2790
        %4168 = vmatpush.bf16.msra.mxu0 %v2786
        %4169 = vmatpush.bf16.msra.mxu0 %v2782
        %4170 = vmatpush.bf16.msra.mxu0 %v2778
        %4171 = vmatpush.bf16.msra.mxu0 %v2774
        %4172 = vmatpush.bf16.msra.mxu0 %v2770
        %4173 = vmatpush.bf16.msra.mxu0 %v2766
        %4174 = vmatmul.bf16.gmra.mxu0 %v1132
        %v4175 = vpop.f32.mrf.mxu0
        %v4176 = vadd.f32 %v4163, %v4175
        %v4177 = vpop.f32.mrf.mxu0
        %4178 = vdwg.mxu0
        %4179 = vmatpush.bf16.msra.mxu0 %v2826
        %4180 = vmatpush.bf16.msra.mxu0 %v2822
        %4181 = vmatpush.bf16.msra.mxu0 %v2818
        %4182 = vmatpush.bf16.msra.mxu0 %v2814
        %4183 = vmatpush.bf16.msra.mxu0 %v2810
        %4184 = vmatpush.bf16.msra.mxu0 %v2806
        %4185 = vmatpush.bf16.msra.mxu0 %v2802
        %4186 = vmatpush.bf16.msra.mxu0 %v2798
        %4187 = vmatmul.bf16.gmra.mxu0 %v1133
        %v4188 = vpop.f32.mrf.mxu0
        %v4189 = vadd.f32 %v4176, %v4188
        %v4190 = vpop.f32.mrf.mxu0
        %4191 = vdwg.mxu0
        %4192 = vmatpush.bf16.msra.mxu0 %v2858
        %4193 = vmatpush.bf16.msra.mxu0 %v2854
        %4194 = vmatpush.bf16.msra.mxu0 %v2850
        %4195 = vmatpush.bf16.msra.mxu0 %v2846
        %4196 = vmatpush.bf16.msra.mxu0 %v2842
        %4197 = vmatpush.bf16.msra.mxu0 %v2838
        %4198 = vmatpush.bf16.msra.mxu0 %v2834
        %4199 = vmatpush.bf16.msra.mxu0 %v2830
        %4200 = vmatmul.bf16.gmra.mxu0 %v1134
        %v4201 = vpop.f32.mrf.mxu0
        %v4202 = vadd.f32 %v4189, %v4201
        %v4203 = vpop.f32.mrf.mxu0
        %4204 = vdwg.mxu0
        %4205 = vmatpush.bf16.msra.mxu0 %v2890
        %4206 = vmatpush.bf16.msra.mxu0 %v2886
        %4207 = vmatpush.bf16.msra.mxu0 %v2882
        %4208 = vmatpush.bf16.msra.mxu0 %v2878
        %4209 = vmatpush.bf16.msra.mxu0 %v2874
        %4210 = vmatpush.bf16.msra.mxu0 %v2870
        %4211 = vmatpush.bf16.msra.mxu0 %v2866
        %4212 = vmatpush.bf16.msra.mxu0 %v2862
        %4213 = vmatmul.bf16.gmra.mxu0 %v1135
        %v4214 = vpop.f32.mrf.mxu0
        %v4215 = vadd.f32 %v4202, %v4214
        %v4216 = vpop.f32.mrf.mxu0
        %4217 = vdwg.mxu0
        %4218 = vmatpush.bf16.msra.mxu0 %v2922
        %4219 = vmatpush.bf16.msra.mxu0 %v2918
        %4220 = vmatpush.bf16.msra.mxu0 %v2914
        %4221 = vmatpush.bf16.msra.mxu0 %v2910
        %4222 = vmatpush.bf16.msra.mxu0 %v2906
        %4223 = vmatpush.bf16.msra.mxu0 %v2902
        %4224 = vmatpush.bf16.msra.mxu0 %v2898
        %4225 = vmatpush.bf16.msra.mxu0 %v2894
        %4226 = vmatmul.bf16.gmra.mxu0 %v1136
        %v4227 = vpop.f32.mrf.mxu0
        %v4228 = vadd.f32 %v4215, %v4227
        %v4229 = vpop.f32.mrf.mxu0
        %4230 = vdwg.mxu0
        %4231 = vmatpush.bf16.msra.mxu0 %v2954
        %4232 = vmatpush.bf16.msra.mxu0 %v2950
        %4233 = vmatpush.bf16.msra.mxu0 %v2946
        %4234 = vmatpush.bf16.msra.mxu0 %v2942
        %4235 = vmatpush.bf16.msra.mxu0 %v2938
        %4236 = vmatpush.bf16.msra.mxu0 %v2934
        %4237 = vmatpush.bf16.msra.mxu0 %v2930
        %4238 = vmatpush.bf16.msra.mxu0 %v2926
        %4239 = vmatmul.bf16.gmra.mxu0 %v1137
        %v4240 = vpop.f32.mrf.mxu0
        %v4241 = vadd.f32 %v4228, %v4240
        %v4242 = vpop.f32.mrf.mxu0
        %4243 = vdwg.mxu0
        %4244 = vmatpush.bf16.msra.mxu0 %v2986
        %4245 = vmatpush.bf16.msra.mxu0 %v2982
        %4246 = vmatpush.bf16.msra.mxu0 %v2978
        %4247 = vmatpush.bf16.msra.mxu0 %v2974
        %4248 = vmatpush.bf16.msra.mxu0 %v2970
        %4249 = vmatpush.bf16.msra.mxu0 %v2966
        %4250 = vmatpush.bf16.msra.mxu0 %v2962
        %4251 = vmatpush.bf16.msra.mxu0 %v2958
        %4252 = vmatmul.bf16.gmra.mxu0 %v1140
        %v4253 = vpop.f32.mrf.mxu0
        %v4254 = vadd.f32 %v4241, %v4253
        %v4255 = vpop.f32.mrf.mxu0
        %4256 = vdwg.mxu0
        %4257 = vmatpush.bf16.msra.mxu0 %v3018
        %4258 = vmatpush.bf16.msra.mxu0 %v3014
        %4259 = vmatpush.bf16.msra.mxu0 %v3010
        %4260 = vmatpush.bf16.msra.mxu0 %v3006
        %4261 = vmatpush.bf16.msra.mxu0 %v3002
        %4262 = vmatpush.bf16.msra.mxu0 %v2998
        %4263 = vmatpush.bf16.msra.mxu0 %v2994
        %4264 = vmatpush.bf16.msra.mxu0 %v2990
        %4265 = vmatmul.bf16.gmra.mxu0 %v1141
        %v4266 = vpop.f32.mrf.mxu0
        %v4267 = vadd.f32 %v4254, %v4266
        %v4268 = vpop.f32.mrf.mxu0
        %4269 = vdwg.mxu0
        %4270 = vmatpush.bf16.msra.mxu0 %v3050
        %4271 = vmatpush.bf16.msra.mxu0 %v3046
        %4272 = vmatpush.bf16.msra.mxu0 %v3042
        %4273 = vmatpush.bf16.msra.mxu0 %v3038
        %4274 = vmatpush.bf16.msra.mxu0 %v3034
        %4275 = vmatpush.bf16.msra.mxu0 %v3030
        %4276 = vmatpush.bf16.msra.mxu0 %v3026
        %4277 = vmatpush.bf16.msra.mxu0 %v3022
        %4278 = vmatmul.bf16.gmra.mxu0 %v1142
        %v4279 = vpop.f32.mrf.mxu0
        %v4280 = vadd.f32 %v4267, %v4279
        %v4281 = vpop.f32.mrf.mxu0
        %4282 = vdwg.mxu0
        %4283 = vmatpush.bf16.msra.mxu0 %v3082
        %4284 = vmatpush.bf16.msra.mxu0 %v3078
        %4285 = vmatpush.bf16.msra.mxu0 %v3074
        %4286 = vmatpush.bf16.msra.mxu0 %v3070
        %4287 = vmatpush.bf16.msra.mxu0 %v3066
        %4288 = vmatpush.bf16.msra.mxu0 %v3062
        %4289 = vmatpush.bf16.msra.mxu0 %v3058
        %4290 = vmatpush.bf16.msra.mxu0 %v3054
        %4291 = vmatmul.bf16.gmra.mxu0 %v1143
        %v4292 = vpop.f32.mrf.mxu0
        %v4293 = vadd.f32 %v4280, %v4292
        %v4294 = vpop.f32.mrf.mxu0
        %4295 = vdwg.mxu0
        %4296 = vmatpush.bf16.msra.mxu0 %v3114
        %4297 = vmatpush.bf16.msra.mxu0 %v3110
        %4298 = vmatpush.bf16.msra.mxu0 %v3106
        %4299 = vmatpush.bf16.msra.mxu0 %v3102
        %4300 = vmatpush.bf16.msra.mxu0 %v3098
        %4301 = vmatpush.bf16.msra.mxu0 %v3094
        %4302 = vmatpush.bf16.msra.mxu0 %v3090
        %4303 = vmatpush.bf16.msra.mxu0 %v3086
        %4304 = vmatmul.bf16.gmra.mxu0 %v1144
        %v4305 = vpop.f32.mrf.mxu0
        %v4306 = vadd.f32 %v4293, %v4305
        %v4307 = vpop.f32.mrf.mxu0
        %4308 = vdwg.mxu0
        %4309 = vmatpush.bf16.msra.mxu0 %v3146
        %4310 = vmatpush.bf16.msra.mxu0 %v3142
        %4311 = vmatpush.bf16.msra.mxu0 %v3138
        %4312 = vmatpush.bf16.msra.mxu0 %v3134
        %4313 = vmatpush.bf16.msra.mxu0 %v3130
        %4314 = vmatpush.bf16.msra.mxu0 %v3126
        %4315 = vmatpush.bf16.msra.mxu0 %v3122
        %4316 = vmatpush.bf16.msra.mxu0 %v3118
        %4317 = vmatmul.bf16.gmra.mxu0 %v1145
        %v4318 = vpop.f32.mrf.mxu0
        %v4319 = vadd.f32 %v4306, %v4318
        %v4320 = vpop.f32.mrf.mxu0
        %4321 = vdwg.mxu0
        %4322 = vmatpush.bf16.msra.mxu0 %v3178
        %4323 = vmatpush.bf16.msra.mxu0 %v3174
        %4324 = vmatpush.bf16.msra.mxu0 %v3170
        %4325 = vmatpush.bf16.msra.mxu0 %v3166
        %4326 = vmatpush.bf16.msra.mxu0 %v3162
        %4327 = vmatpush.bf16.msra.mxu0 %v3158
        %4328 = vmatpush.bf16.msra.mxu0 %v3154
        %4329 = vmatpush.bf16.msra.mxu0 %v3150
        %4330 = vmatmul.bf16.gmra.mxu0 %v1146
        %v4331 = vpop.f32.mrf.mxu0
        %v4332 = vadd.f32 %v4319, %v4331
        %v4333 = vpop.f32.mrf.mxu0
        %4334 = vdwg.mxu0
        %4335 = vmatpush.bf16.msra.mxu0 %v3210
        %4336 = vmatpush.bf16.msra.mxu0 %v3206
        %4337 = vmatpush.bf16.msra.mxu0 %v3202
        %4338 = vmatpush.bf16.msra.mxu0 %v3198
        %4339 = vmatpush.bf16.msra.mxu0 %v3194
        %4340 = vmatpush.bf16.msra.mxu0 %v3190
        %4341 = vmatpush.bf16.msra.mxu0 %v3186
        %4342 = vmatpush.bf16.msra.mxu0 %v3182
        %4343 = vmatmul.bf16.gmra.mxu0 %v1147
        %v4344 = vpop.f32.mrf.mxu0
        %v4345 = vadd.f32 %v4332, %v4344
        %v4346 = vpop.f32.mrf.mxu0
        %4347 = vdwg.mxu0
        %4348 = vmatpush.bf16.msra.mxu0 %v2731
        %4349 = vmatpush.bf16.msra.mxu0 %v2727
        %4350 = vmatpush.bf16.msra.mxu0 %v2723
        %4351 = vmatpush.bf16.msra.mxu0 %v2719
        %4352 = vmatpush.bf16.msra.mxu0 %v2715
        %4353 = vmatpush.bf16.msra.mxu0 %v2711
        %4354 = vmatpush.bf16.msra.mxu0 %v2707
        %4355 = vmatpush.bf16.msra.mxu0 %v2703
        %4356 = vmatmul.bf16.gmra.mxu0 %v1130
        %v4357 = vpop.f32.mrf.mxu0
        %v4358 = vadd.f32 0.0, %v4357
        %v4359 = vpop.f32.mrf.mxu0
        %4360 = vdwg.mxu0
        %4361 = vmatpush.bf16.msra.mxu0 %v2763
        %4362 = vmatpush.bf16.msra.mxu0 %v2759
        %4363 = vmatpush.bf16.msra.mxu0 %v2755
        %4364 = vmatpush.bf16.msra.mxu0 %v2751
        %4365 = vmatpush.bf16.msra.mxu0 %v2747
        %4366 = vmatpush.bf16.msra.mxu0 %v2743
        %4367 = vmatpush.bf16.msra.mxu0 %v2739
        %4368 = vmatpush.bf16.msra.mxu0 %v2735
        %4369 = vmatmul.bf16.gmra.mxu0 %v1131
        %v4370 = vpop.f32.mrf.mxu0
        %v4371 = vadd.f32 %v4358, %v4370
        %v4372 = vpop.f32.mrf.mxu0
        %4373 = vdwg.mxu0
        %4374 = vmatpush.bf16.msra.mxu0 %v2795
        %4375 = vmatpush.bf16.msra.mxu0 %v2791
        %4376 = vmatpush.bf16.msra.mxu0 %v2787
        %4377 = vmatpush.bf16.msra.mxu0 %v2783
        %4378 = vmatpush.bf16.msra.mxu0 %v2779
        %4379 = vmatpush.bf16.msra.mxu0 %v2775
        %4380 = vmatpush.bf16.msra.mxu0 %v2771
        %4381 = vmatpush.bf16.msra.mxu0 %v2767
        %4382 = vmatmul.bf16.gmra.mxu0 %v1132
        %v4383 = vpop.f32.mrf.mxu0
        %v4384 = vadd.f32 %v4371, %v4383
        %v4385 = vpop.f32.mrf.mxu0
        %4386 = vdwg.mxu0
        %4387 = vmatpush.bf16.msra.mxu0 %v2827
        %4388 = vmatpush.bf16.msra.mxu0 %v2823
        %4389 = vmatpush.bf16.msra.mxu0 %v2819
        %4390 = vmatpush.bf16.msra.mxu0 %v2815
        %4391 = vmatpush.bf16.msra.mxu0 %v2811
        %4392 = vmatpush.bf16.msra.mxu0 %v2807
        %4393 = vmatpush.bf16.msra.mxu0 %v2803
        %4394 = vmatpush.bf16.msra.mxu0 %v2799
        %4395 = vmatmul.bf16.gmra.mxu0 %v1133
        %v4396 = vpop.f32.mrf.mxu0
        %v4397 = vadd.f32 %v4384, %v4396
        %v4398 = vpop.f32.mrf.mxu0
        %4399 = vdwg.mxu0
        %4400 = vmatpush.bf16.msra.mxu0 %v2859
        %4401 = vmatpush.bf16.msra.mxu0 %v2855
        %4402 = vmatpush.bf16.msra.mxu0 %v2851
        %4403 = vmatpush.bf16.msra.mxu0 %v2847
        %4404 = vmatpush.bf16.msra.mxu0 %v2843
        %4405 = vmatpush.bf16.msra.mxu0 %v2839
        %4406 = vmatpush.bf16.msra.mxu0 %v2835
        %4407 = vmatpush.bf16.msra.mxu0 %v2831
        %4408 = vmatmul.bf16.gmra.mxu0 %v1134
        %v4409 = vpop.f32.mrf.mxu0
        %v4410 = vadd.f32 %v4397, %v4409
        %v4411 = vpop.f32.mrf.mxu0
        %4412 = vdwg.mxu0
        %4413 = vmatpush.bf16.msra.mxu0 %v2891
        %4414 = vmatpush.bf16.msra.mxu0 %v2887
        %4415 = vmatpush.bf16.msra.mxu0 %v2883
        %4416 = vmatpush.bf16.msra.mxu0 %v2879
        %4417 = vmatpush.bf16.msra.mxu0 %v2875
        %4418 = vmatpush.bf16.msra.mxu0 %v2871
        %4419 = vmatpush.bf16.msra.mxu0 %v2867
        %4420 = vmatpush.bf16.msra.mxu0 %v2863
        %4421 = vmatmul.bf16.gmra.mxu0 %v1135
        %v4422 = vpop.f32.mrf.mxu0
        %v4423 = vadd.f32 %v4410, %v4422
        %v4424 = vpop.f32.mrf.mxu0
        %4425 = vdwg.mxu0
        %4426 = vmatpush.bf16.msra.mxu0 %v2923
        %4427 = vmatpush.bf16.msra.mxu0 %v2919
        %4428 = vmatpush.bf16.msra.mxu0 %v2915
        %4429 = vmatpush.bf16.msra.mxu0 %v2911
        %4430 = vmatpush.bf16.msra.mxu0 %v2907
        %4431 = vmatpush.bf16.msra.mxu0 %v2903
        %4432 = vmatpush.bf16.msra.mxu0 %v2899
        %4433 = vmatpush.bf16.msra.mxu0 %v2895
        %4434 = vmatmul.bf16.gmra.mxu0 %v1136
        %v4435 = vpop.f32.mrf.mxu0
        %v4436 = vadd.f32 %v4423, %v4435
        %v4437 = vpop.f32.mrf.mxu0
        %4438 = vdwg.mxu0
        %4439 = vmatpush.bf16.msra.mxu0 %v2955
        %4440 = vmatpush.bf16.msra.mxu0 %v2951
        %4441 = vmatpush.bf16.msra.mxu0 %v2947
        %4442 = vmatpush.bf16.msra.mxu0 %v2943
        %4443 = vmatpush.bf16.msra.mxu0 %v2939
        %4444 = vmatpush.bf16.msra.mxu0 %v2935
        %4445 = vmatpush.bf16.msra.mxu0 %v2931
        %4446 = vmatpush.bf16.msra.mxu0 %v2927
        %4447 = vmatmul.bf16.gmra.mxu0 %v1137
        %v4448 = vpop.f32.mrf.mxu0
        %v4449 = vadd.f32 %v4436, %v4448
        %v4450 = vpop.f32.mrf.mxu0
        %4451 = vdwg.mxu0
        %4452 = vmatpush.bf16.msra.mxu0 %v2987
        %4453 = vmatpush.bf16.msra.mxu0 %v2983
        %4454 = vmatpush.bf16.msra.mxu0 %v2979
        %4455 = vmatpush.bf16.msra.mxu0 %v2975
        %4456 = vmatpush.bf16.msra.mxu0 %v2971
        %4457 = vmatpush.bf16.msra.mxu0 %v2967
        %4458 = vmatpush.bf16.msra.mxu0 %v2963
        %4459 = vmatpush.bf16.msra.mxu0 %v2959
        %4460 = vmatmul.bf16.gmra.mxu0 %v1140
        %v4461 = vpop.f32.mrf.mxu0
        %v4462 = vadd.f32 %v4449, %v4461
        %v4463 = vpop.f32.mrf.mxu0
        %4464 = vdwg.mxu0
        %4465 = vmatpush.bf16.msra.mxu0 %v3019
        %4466 = vmatpush.bf16.msra.mxu0 %v3015
        %4467 = vmatpush.bf16.msra.mxu0 %v3011
        %4468 = vmatpush.bf16.msra.mxu0 %v3007
        %4469 = vmatpush.bf16.msra.mxu0 %v3003
        %4470 = vmatpush.bf16.msra.mxu0 %v2999
        %4471 = vmatpush.bf16.msra.mxu0 %v2995
        %4472 = vmatpush.bf16.msra.mxu0 %v2991
        %4473 = vmatmul.bf16.gmra.mxu0 %v1141
        %v4474 = vpop.f32.mrf.mxu0
        %v4475 = vadd.f32 %v4462, %v4474
        %v4476 = vpop.f32.mrf.mxu0
        %4477 = vdwg.mxu0
        %4478 = vmatpush.bf16.msra.mxu0 %v3051
        %4479 = vmatpush.bf16.msra.mxu0 %v3047
        %4480 = vmatpush.bf16.msra.mxu0 %v3043
        %4481 = vmatpush.bf16.msra.mxu0 %v3039
        %4482 = vmatpush.bf16.msra.mxu0 %v3035
        %4483 = vmatpush.bf16.msra.mxu0 %v3031
        %4484 = vmatpush.bf16.msra.mxu0 %v3027
        %4485 = vmatpush.bf16.msra.mxu0 %v3023
        %4486 = vmatmul.bf16.gmra.mxu0 %v1142
        %v4487 = vpop.f32.mrf.mxu0
        %v4488 = vadd.f32 %v4475, %v4487
        %v4489 = vpop.f32.mrf.mxu0
        %4490 = vdwg.mxu0
        %4491 = vmatpush.bf16.msra.mxu0 %v3083
        %4492 = vmatpush.bf16.msra.mxu0 %v3079
        %4493 = vmatpush.bf16.msra.mxu0 %v3075
        %4494 = vmatpush.bf16.msra.mxu0 %v3071
        %4495 = vmatpush.bf16.msra.mxu0 %v3067
        %4496 = vmatpush.bf16.msra.mxu0 %v3063
        %4497 = vmatpush.bf16.msra.mxu0 %v3059
        %4498 = vmatpush.bf16.msra.mxu0 %v3055
        %4499 = vmatmul.bf16.gmra.mxu0 %v1143
        %v4500 = vpop.f32.mrf.mxu0
        %v4501 = vadd.f32 %v4488, %v4500
        %v4502 = vpop.f32.mrf.mxu0
        %4503 = vdwg.mxu0
        %4504 = vmatpush.bf16.msra.mxu0 %v3115
        %4505 = vmatpush.bf16.msra.mxu0 %v3111
        %4506 = vmatpush.bf16.msra.mxu0 %v3107
        %4507 = vmatpush.bf16.msra.mxu0 %v3103
        %4508 = vmatpush.bf16.msra.mxu0 %v3099
        %4509 = vmatpush.bf16.msra.mxu0 %v3095
        %4510 = vmatpush.bf16.msra.mxu0 %v3091
        %4511 = vmatpush.bf16.msra.mxu0 %v3087
        %4512 = vmatmul.bf16.gmra.mxu0 %v1144
        %v4513 = vpop.f32.mrf.mxu0
        %v4514 = vadd.f32 %v4501, %v4513
        %v4515 = vpop.f32.mrf.mxu0
        %4516 = vdwg.mxu0
        %4517 = vmatpush.bf16.msra.mxu0 %v3147
        %4518 = vmatpush.bf16.msra.mxu0 %v3143
        %4519 = vmatpush.bf16.msra.mxu0 %v3139
        %4520 = vmatpush.bf16.msra.mxu0 %v3135
        %4521 = vmatpush.bf16.msra.mxu0 %v3131
        %4522 = vmatpush.bf16.msra.mxu0 %v3127
        %4523 = vmatpush.bf16.msra.mxu0 %v3123
        %4524 = vmatpush.bf16.msra.mxu0 %v3119
        %4525 = vmatmul.bf16.gmra.mxu0 %v1145
        %v4526 = vpop.f32.mrf.mxu0
        %v4527 = vadd.f32 %v4514, %v4526
        %v4528 = vpop.f32.mrf.mxu0
        %4529 = vdwg.mxu0
        %4530 = vmatpush.bf16.msra.mxu0 %v3179
        %4531 = vmatpush.bf16.msra.mxu0 %v3175
        %4532 = vmatpush.bf16.msra.mxu0 %v3171
        %4533 = vmatpush.bf16.msra.mxu0 %v3167
        %4534 = vmatpush.bf16.msra.mxu0 %v3163
        %4535 = vmatpush.bf16.msra.mxu0 %v3159
        %4536 = vmatpush.bf16.msra.mxu0 %v3155
        %4537 = vmatpush.bf16.msra.mxu0 %v3151
        %4538 = vmatmul.bf16.gmra.mxu0 %v1146
        %v4539 = vpop.f32.mrf.mxu0
        %v4540 = vadd.f32 %v4527, %v4539
        %v4541 = vpop.f32.mrf.mxu0
        %4542 = vdwg.mxu0
        %4543 = vmatpush.bf16.msra.mxu0 %v3211
        %4544 = vmatpush.bf16.msra.mxu0 %v3207
        %4545 = vmatpush.bf16.msra.mxu0 %v3203
        %4546 = vmatpush.bf16.msra.mxu0 %v3199
        %4547 = vmatpush.bf16.msra.mxu0 %v3195
        %4548 = vmatpush.bf16.msra.mxu0 %v3191
        %4549 = vmatpush.bf16.msra.mxu0 %v3187
        %4550 = vmatpush.bf16.msra.mxu0 %v3183
        %4551 = vmatmul.bf16.gmra.mxu0 %v1147
        %v4552 = vpop.f32.mrf.mxu0
        %v4553 = vadd.f32 %v4540, %v4552
        %v4554 = vpop.f32.mrf.mxu0
        %4555 = vdwg.mxu0
        %v4560 = vrot.slane %v4137, 6
        %v4561 = vrot.slane %v4345, 4
        %v4562 = vrot.slane %v4553, 2
        %vm4563 = vcmask 1041408
        %v4564 = vsel %vm4563, %v3929, %v4560
        %vm4565 = vcmask 1045508
        %v4566 = vsel %vm4565, %v4561, %v4562
        %vm4567 = vcmask 1043456
        %v4568 = vsel %vm4567, %v4564, %v4566
        %v4570 = vadd.f32 %v613, %v4568
        %4571 = vst [vmem:[#allocation2] sm:$0xff] %v4570
        %p4572 = scmp.eq.s32.totalorder %s36, 3
        // Predicated region
        $region101: #{ir50_vib_forward.3} parent=59 // pred_check
          %p4573 = pneg %p4572
        $region102: #{ir50_vib_forward.3} parent=59 // pred_check_branch
          %4575 = sbr.rel (%p4573) target = $region104
        $region103: #{ir50_vib_forward.3} parent=59 // pred_region
          %v4576 = vld [vmem:[#allocation2] sm:$0xff]
          %v4577 = vld [vmem:[#allocation6] sm:$0xf]
          %v4579 = vperm.slane %v4577, 0
          %v4580 = vperm.slane %v4577, 1
          %v4581 = vperm.slane %v4577, 2
          %v4582 = vperm.slane %v4577, 3
          %v4583 = vrot.slane %v4580, 6
          %v4584 = vrot.slane %v4581, 4
          %v4585 = vrot.slane %v4582, 2
          %v4586 = vsel %vm4563, %v4579, %v4583
          %v4587 = vsel %vm4565, %v4584, %v4585
          %v4588 = vsel %vm4567, %v4586, %v4587
          %v4590 = vadd.f32 %v4576, %v4588
          %v4591 = vld [vmem:[#allocation8] sm:$0xf]
          %v4593 = vperm.slane %v4591, 0
          %v4594 = vperm.slane %v4591, 1
          %v4595 = vperm.slane %v4591, 2
          %v4596 = vperm.slane %v4591, 3
          %v4597 = vrot.slane %v4594, 6
          %v4598 = vrot.slane %v4595, 4
          %v4599 = vrot.slane %v4596, 2
          %v4600 = vsel %vm4563, %v4593, %v4597
          %v4601 = vsel %vm4565, %v4598, %v4599
          %v4602 = vsel %vm4567, %v4600, %v4601
          %v4604 = vmul.f32 %v4590, %v4602
          %v4605 = vld [vmem:[#allocation9] sm:$0xf]
          %v4607 = vperm.slane %v4605, 0
          %v4608 = vperm.slane %v4605, 1
          %v4609 = vperm.slane %v4605, 2
          %v4610 = vperm.slane %v4605, 3
          %v4611 = vrot.slane %v4608, 6
          %v4612 = vrot.slane %v4609, 4
          %v4613 = vrot.slane %v4610, 2
          %v4614 = vsel %vm4563, %v4607, %v4611
          %v4615 = vsel %vm4565, %v4612, %v4613
          %v4616 = vsel %vm4567, %v4614, %v4615
          %v4618 = vadd.f32 %v4604, %v4616
          %4619 = vst [vmem:[#allocation18] sm:$0xff] %v4618
          %4621 = vst [vmem:[#allocation1] ss:$4 sm:$0xff] %v4618
          %v4622 = vld.sshfl [vmem:[#allocation1] sm:$0xff pattern:$0x73625140]
          %v4623 = vld.sshfl [vmem:[#allocation1 + $0x8] sm:$0xff pattern:$0x73625140]
          %v4624 = vld.sshfl [vmem:[#allocation1 + $0x10] sm:$0xff pattern:$0x73625140]
          %v4625 = vld.sshfl [vmem:[#allocation1 + $0x18] sm:$0xff pattern:$0x73625140]
          %v4630 = vpack.c.bf16 %v4622, %v4622
          %v4631 = vpack.c.bf16 %v4623, %v4623
          %v4632 = vpack.c.bf16 %v4624, %v4624
          %v4633 = vpack.c.bf16 %v4625, %v4625
          %v4634 = vld [vmem:[#allocation11] sm:$0xff]
          %v4635 = vld [vmem:[#allocation11 + $0x8] sm:$0xff]
          %v4636 = vld [vmem:[#allocation11 + $0x10] sm:$0xff]
          %v4637 = vld [vmem:[#allocation11 + $0x18] sm:$0xff]
          %v4638 = vld [vmem:[#allocation11 + $0x20] sm:$0xff]
          %v4639 = vld [vmem:[#allocation11 + $0x28] sm:$0xff]
          %v4640 = vld [vmem:[#allocation11 + $0x30] sm:$0xff]
          %v4641 = vld [vmem:[#allocation11 + $0x38] sm:$0xff]
          %v4642 = vld [vmem:[#allocation11 + $0x40] sm:$0xff]
          %v4643 = vld [vmem:[#allocation11 + $0x48] sm:$0xff]
          %v4644 = vld [vmem:[#allocation11 + $0x50] sm:$0xff]
          %v4645 = vld [vmem:[#allocation11 + $0x58] sm:$0xff]
          %v4646 = vld [vmem:[#allocation11 + $0x60] sm:$0xff]
          %v4647 = vld [vmem:[#allocation11 + $0x68] sm:$0xff]
          %v4648 = vld [vmem:[#allocation11 + $0x70] sm:$0xff]
          %v4649 = vld [vmem:[#allocation11 + $0x78] sm:$0xff]
          %v4650 = vld [vmem:[#allocation11 + $0x80] sm:$0xff]
          %v4651 = vld [vmem:[#allocation11 + $0x88] sm:$0xff]
          %v4652 = vld [vmem:[#allocation11 + $0x90] sm:$0xff]
          %v4653 = vld [vmem:[#allocation11 + $0x98] sm:$0xff]
          %v4654 = vld [vmem:[#allocation11 + $0xa0] sm:$0xff]
          %v4655 = vld [vmem:[#allocation11 + $0xa8] sm:$0xff]
          %v4656 = vld [vmem:[#allocation11 + $0xb0] sm:$0xff]
          %v4657 = vld [vmem:[#allocation11 + $0xb8] sm:$0xff]
          %v4658 = vld [vmem:[#allocation11 + $0xc0] sm:$0xff]
          %v4659 = vld [vmem:[#allocation11 + $0xc8] sm:$0xff]
          %v4660 = vld [vmem:[#allocation11 + $0xd0] sm:$0xff]
          %v4661 = vld [vmem:[#allocation11 + $0xd8] sm:$0xff]
          %v4662 = vld [vmem:[#allocation11 + $0xe0] sm:$0xff]
          %v4663 = vld [vmem:[#allocation11 + $0xe8] sm:$0xff]
          %v4664 = vld [vmem:[#allocation11 + $0xf0] sm:$0xff]
          %v4665 = vld [vmem:[#allocation11 + $0xf8] sm:$0xff]
          %v4666 = vld [vmem:[#allocation11 + $0x100] sm:$0xff]
          %v4667 = vld [vmem:[#allocation11 + $0x108] sm:$0xff]
          %v4668 = vld [vmem:[#allocation11 + $0x110] sm:$0xff]
          %v4669 = vld [vmem:[#allocation11 + $0x118] sm:$0xff]
          %v4670 = vld [vmem:[#allocation11 + $0x120] sm:$0xff]
          %v4671 = vld [vmem:[#allocation11 + $0x128] sm:$0xff]
          %v4672 = vld [vmem:[#allocation11 + $0x130] sm:$0xff]
          %v4673 = vld [vmem:[#allocation11 + $0x138] sm:$0xff]
          %v4674 = vld [vmem:[#allocation11 + $0x140] sm:$0xff]
          %v4675 = vld [vmem:[#allocation11 + $0x148] sm:$0xff]
          %v4676 = vld [vmem:[#allocation11 + $0x150] sm:$0xff]
          %v4677 = vld [vmem:[#allocation11 + $0x158] sm:$0xff]
          %v4678 = vld [vmem:[#allocation11 + $0x160] sm:$0xff]
          %v4679 = vld [vmem:[#allocation11 + $0x168] sm:$0xff]
          %v4680 = vld [vmem:[#allocation11 + $0x170] sm:$0xff]
          %v4681 = vld [vmem:[#allocation11 + $0x178] sm:$0xff]
          %v4682 = vld [vmem:[#allocation11 + $0x180] sm:$0xff]
          %v4683 = vld [vmem:[#allocation11 + $0x188] sm:$0xff]
          %v4684 = vld [vmem:[#allocation11 + $0x190] sm:$0xff]
          %v4685 = vld [vmem:[#allocation11 + $0x198] sm:$0xff]
          %v4686 = vld [vmem:[#allocation11 + $0x1a0] sm:$0xff]
          %v4687 = vld [vmem:[#allocation11 + $0x1a8] sm:$0xff]
          %v4688 = vld [vmem:[#allocation11 + $0x1b0] sm:$0xff]
          %v4689 = vld [vmem:[#allocation11 + $0x1b8] sm:$0xff]
          %v4690 = vld [vmem:[#allocation11 + $0x1c0] sm:$0xff]
          %v4691 = vld [vmem:[#allocation11 + $0x1c8] sm:$0xff]
          %v4692 = vld [vmem:[#allocation11 + $0x1d0] sm:$0xff]
          %v4693 = vld [vmem:[#allocation11 + $0x1d8] sm:$0xff]
          %v4694 = vld [vmem:[#allocation11 + $0x1e0] sm:$0xff]
          %v4695 = vld [vmem:[#allocation11 + $0x1e8] sm:$0xff]
          %v4696 = vld [vmem:[#allocation11 + $0x1f0] sm:$0xff]
          %v4697 = vld [vmem:[#allocation11 + $0x1f8] sm:$0xff]
          %v4698 = vld [vmem:[#allocation11 + $0x200] sm:$0xff]
          %v4699 = vld [vmem:[#allocation11 + $0x208] sm:$0xff]
          %v4700 = vld [vmem:[#allocation11 + $0x210] sm:$0xff]
          %v4701 = vld [vmem:[#allocation11 + $0x218] sm:$0xff]
          %v4702 = vld [vmem:[#allocation11 + $0x220] sm:$0xff]
          %v4703 = vld [vmem:[#allocation11 + $0x228] sm:$0xff]
          %v4704 = vld [vmem:[#allocation11 + $0x230] sm:$0xff]
          %v4705 = vld [vmem:[#allocation11 + $0x238] sm:$0xff]
          %v4706 = vld [vmem:[#allocation11 + $0x240] sm:$0xff]
          %v4707 = vld [vmem:[#allocation11 + $0x248] sm:$0xff]
          %v4708 = vld [vmem:[#allocation11 + $0x250] sm:$0xff]
          %v4709 = vld [vmem:[#allocation11 + $0x258] sm:$0xff]
          %v4710 = vld [vmem:[#allocation11 + $0x260] sm:$0xff]
          %v4711 = vld [vmem:[#allocation11 + $0x268] sm:$0xff]
          %v4712 = vld [vmem:[#allocation11 + $0x270] sm:$0xff]
          %v4713 = vld [vmem:[#allocation11 + $0x278] sm:$0xff]
          %v4714 = vld [vmem:[#allocation11 + $0x280] sm:$0xff]
          %v4715 = vld [vmem:[#allocation11 + $0x288] sm:$0xff]
          %v4716 = vld [vmem:[#allocation11 + $0x290] sm:$0xff]
          %v4717 = vld [vmem:[#allocation11 + $0x298] sm:$0xff]
          %v4718 = vld [vmem:[#allocation11 + $0x2a0] sm:$0xff]
          %v4719 = vld [vmem:[#allocation11 + $0x2a8] sm:$0xff]
          %v4720 = vld [vmem:[#allocation11 + $0x2b0] sm:$0xff]
          %v4721 = vld [vmem:[#allocation11 + $0x2b8] sm:$0xff]
          %v4722 = vld [vmem:[#allocation11 + $0x2c0] sm:$0xff]
          %v4723 = vld [vmem:[#allocation11 + $0x2c8] sm:$0xff]
          %v4724 = vld [vmem:[#allocation11 + $0x2d0] sm:$0xff]
          %v4725 = vld [vmem:[#allocation11 + $0x2d8] sm:$0xff]
          %v4726 = vld [vmem:[#allocation11 + $0x2e0] sm:$0xff]
          %v4727 = vld [vmem:[#allocation11 + $0x2e8] sm:$0xff]
          %v4728 = vld [vmem:[#allocation11 + $0x2f0] sm:$0xff]
          %v4729 = vld [vmem:[#allocation11 + $0x2f8] sm:$0xff]
          %v4730 = vld [vmem:[#allocation11 + $0x300] sm:$0xff]
          %v4731 = vld [vmem:[#allocation11 + $0x308] sm:$0xff]
          %v4732 = vld [vmem:[#allocation11 + $0x310] sm:$0xff]
          %v4733 = vld [vmem:[#allocation11 + $0x318] sm:$0xff]
          %v4734 = vld [vmem:[#allocation11 + $0x320] sm:$0xff]
          %v4735 = vld [vmem:[#allocation11 + $0x328] sm:$0xff]
          %v4736 = vld [vmem:[#allocation11 + $0x330] sm:$0xff]
          %v4737 = vld [vmem:[#allocation11 + $0x338] sm:$0xff]
          %v4738 = vld [vmem:[#allocation11 + $0x340] sm:$0xff]
          %v4739 = vld [vmem:[#allocation11 + $0x348] sm:$0xff]
          %v4740 = vld [vmem:[#allocation11 + $0x350] sm:$0xff]
          %v4741 = vld [vmem:[#allocation11 + $0x358] sm:$0xff]
          %v4742 = vld [vmem:[#allocation11 + $0x360] sm:$0xff]
          %v4743 = vld [vmem:[#allocation11 + $0x368] sm:$0xff]
          %v4744 = vld [vmem:[#allocation11 + $0x370] sm:$0xff]
          %v4745 = vld [vmem:[#allocation11 + $0x378] sm:$0xff]
          %v4746 = vld [vmem:[#allocation11 + $0x380] sm:$0xff]
          %v4747 = vld [vmem:[#allocation11 + $0x388] sm:$0xff]
          %v4748 = vld [vmem:[#allocation11 + $0x390] sm:$0xff]
          %v4749 = vld [vmem:[#allocation11 + $0x398] sm:$0xff]
          %v4750 = vld [vmem:[#allocation11 + $0x3a0] sm:$0xff]
          %v4751 = vld [vmem:[#allocation11 + $0x3a8] sm:$0xff]
          %v4752 = vld [vmem:[#allocation11 + $0x3b0] sm:$0xff]
          %v4753 = vld [vmem:[#allocation11 + $0x3b8] sm:$0xff]
          %v4754 = vld [vmem:[#allocation11 + $0x3c0] sm:$0xff]
          %v4755 = vld [vmem:[#allocation11 + $0x3c8] sm:$0xff]
          %v4756 = vld [vmem:[#allocation11 + $0x3d0] sm:$0xff]
          %v4757 = vld [vmem:[#allocation11 + $0x3d8] sm:$0xff]
          %v4758 = vld [vmem:[#allocation11 + $0x3e0] sm:$0xff]
          %v4759 = vld [vmem:[#allocation11 + $0x3e8] sm:$0xff]
          %v4760 = vld [vmem:[#allocation11 + $0x3f0] sm:$0xff]
          %v4761 = vld [vmem:[#allocation11 + $0x3f8] sm:$0xff]
          %v4762 = vld [vmem:[#allocation12] sm:$0xf]
          %v4764 = vperm.slane %v4762, 0
          %v4765 = vperm.slane %v4762, 1
          %v4766 = vperm.slane %v4762, 2
          %v4767 = vperm.slane %v4762, 3
          %v4900 = vunpack.c.l.b16 %v4634
          %v4901 = vunpack.c.h.b16 %v4634
          %v4902 = vunpack.c.l.b16 %v4635
          %v4903 = vunpack.c.h.b16 %v4635
          %v4904 = vunpack.c.l.b16 %v4636
          %v4905 = vunpack.c.h.b16 %v4636
          %v4906 = vunpack.c.l.b16 %v4637
          %v4907 = vunpack.c.h.b16 %v4637
          %v4908 = vunpack.c.l.b16 %v4638
          %v4909 = vunpack.c.h.b16 %v4638
          %v4910 = vunpack.c.l.b16 %v4639
          %v4911 = vunpack.c.h.b16 %v4639
          %v4912 = vunpack.c.l.b16 %v4640
          %v4913 = vunpack.c.h.b16 %v4640
          %v4914 = vunpack.c.l.b16 %v4641
          %v4915 = vunpack.c.h.b16 %v4641
          %v4916 = vunpack.c.l.b16 %v4642
          %v4917 = vunpack.c.h.b16 %v4642
          %v4918 = vunpack.c.l.b16 %v4643
          %v4919 = vunpack.c.h.b16 %v4643
          %v4920 = vunpack.c.l.b16 %v4644
          %v4921 = vunpack.c.h.b16 %v4644
          %v4922 = vunpack.c.l.b16 %v4645
          %v4923 = vunpack.c.h.b16 %v4645
          %v4924 = vunpack.c.l.b16 %v4646
          %v4925 = vunpack.c.h.b16 %v4646
          %v4926 = vunpack.c.l.b16 %v4647
          %v4927 = vunpack.c.h.b16 %v4647
          %v4928 = vunpack.c.l.b16 %v4648
          %v4929 = vunpack.c.h.b16 %v4648
          %v4930 = vunpack.c.l.b16 %v4649
          %v4931 = vunpack.c.h.b16 %v4649
          %v4932 = vunpack.c.l.b16 %v4650
          %v4933 = vunpack.c.h.b16 %v4650
          %v4934 = vunpack.c.l.b16 %v4651
          %v4935 = vunpack.c.h.b16 %v4651
          %v4936 = vunpack.c.l.b16 %v4652
          %v4937 = vunpack.c.h.b16 %v4652
          %v4938 = vunpack.c.l.b16 %v4653
          %v4939 = vunpack.c.h.b16 %v4653
          %v4940 = vunpack.c.l.b16 %v4654
          %v4941 = vunpack.c.h.b16 %v4654
          %v4942 = vunpack.c.l.b16 %v4655
          %v4943 = vunpack.c.h.b16 %v4655
          %v4944 = vunpack.c.l.b16 %v4656
          %v4945 = vunpack.c.h.b16 %v4656
          %v4946 = vunpack.c.l.b16 %v4657
          %v4947 = vunpack.c.h.b16 %v4657
          %v4948 = vunpack.c.l.b16 %v4658
          %v4949 = vunpack.c.h.b16 %v4658
          %v4950 = vunpack.c.l.b16 %v4659
          %v4951 = vunpack.c.h.b16 %v4659
          %v4952 = vunpack.c.l.b16 %v4660
          %v4953 = vunpack.c.h.b16 %v4660
          %v4954 = vunpack.c.l.b16 %v4661
          %v4955 = vunpack.c.h.b16 %v4661
          %v4956 = vunpack.c.l.b16 %v4662
          %v4957 = vunpack.c.h.b16 %v4662
          %v4958 = vunpack.c.l.b16 %v4663
          %v4959 = vunpack.c.h.b16 %v4663
          %v4960 = vunpack.c.l.b16 %v4664
          %v4961 = vunpack.c.h.b16 %v4664
          %v4962 = vunpack.c.l.b16 %v4665
          %v4963 = vunpack.c.h.b16 %v4665
          %v4964 = vunpack.c.l.b16 %v4666
          %v4965 = vunpack.c.h.b16 %v4666
          %v4966 = vunpack.c.l.b16 %v4667
          %v4967 = vunpack.c.h.b16 %v4667
          %v4968 = vunpack.c.l.b16 %v4668
          %v4969 = vunpack.c.h.b16 %v4668
          %v4970 = vunpack.c.l.b16 %v4669
          %v4971 = vunpack.c.h.b16 %v4669
          %v4972 = vunpack.c.l.b16 %v4670
          %v4973 = vunpack.c.h.b16 %v4670
          %v4974 = vunpack.c.l.b16 %v4671
          %v4975 = vunpack.c.h.b16 %v4671
          %v4976 = vunpack.c.l.b16 %v4672
          %v4977 = vunpack.c.h.b16 %v4672
          %v4978 = vunpack.c.l.b16 %v4673
          %v4979 = vunpack.c.h.b16 %v4673
          %v4980 = vunpack.c.l.b16 %v4674
          %v4981 = vunpack.c.h.b16 %v4674
          %v4982 = vunpack.c.l.b16 %v4675
          %v4983 = vunpack.c.h.b16 %v4675
          %v4984 = vunpack.c.l.b16 %v4676
          %v4985 = vunpack.c.h.b16 %v4676
          %v4986 = vunpack.c.l.b16 %v4677
          %v4987 = vunpack.c.h.b16 %v4677
          %v4988 = vunpack.c.l.b16 %v4678
          %v4989 = vunpack.c.h.b16 %v4678
          %v4990 = vunpack.c.l.b16 %v4679
          %v4991 = vunpack.c.h.b16 %v4679
          %v4992 = vunpack.c.l.b16 %v4680
          %v4993 = vunpack.c.h.b16 %v4680
          %v4994 = vunpack.c.l.b16 %v4681
          %v4995 = vunpack.c.h.b16 %v4681
          %v4996 = vunpack.c.l.b16 %v4682
          %v4997 = vunpack.c.h.b16 %v4682
          %v4998 = vunpack.c.l.b16 %v4683
          %v4999 = vunpack.c.h.b16 %v4683
          %v5000 = vunpack.c.l.b16 %v4684
          %v5001 = vunpack.c.h.b16 %v4684
          %v5002 = vunpack.c.l.b16 %v4685
          %v5003 = vunpack.c.h.b16 %v4685
          %v5004 = vunpack.c.l.b16 %v4686
          %v5005 = vunpack.c.h.b16 %v4686
          %v5006 = vunpack.c.l.b16 %v4687
          %v5007 = vunpack.c.h.b16 %v4687
          %v5008 = vunpack.c.l.b16 %v4688
          %v5009 = vunpack.c.h.b16 %v4688
          %v5010 = vunpack.c.l.b16 %v4689
          %v5011 = vunpack.c.h.b16 %v4689
          %v5012 = vunpack.c.l.b16 %v4690
          %v5013 = vunpack.c.h.b16 %v4690
          %v5014 = vunpack.c.l.b16 %v4691
          %v5015 = vunpack.c.h.b16 %v4691
          %v5016 = vunpack.c.l.b16 %v4692
          %v5017 = vunpack.c.h.b16 %v4692
          %v5018 = vunpack.c.l.b16 %v4693
          %v5019 = vunpack.c.h.b16 %v4693
          %v5020 = vunpack.c.l.b16 %v4694
          %v5021 = vunpack.c.h.b16 %v4694
          %v5022 = vunpack.c.l.b16 %v4695
          %v5023 = vunpack.c.h.b16 %v4695
          %v5024 = vunpack.c.l.b16 %v4696
          %v5025 = vunpack.c.h.b16 %v4696
          %v5026 = vunpack.c.l.b16 %v4697
          %v5027 = vunpack.c.h.b16 %v4697
          %v5028 = vunpack.c.l.b16 %v4698
          %v5029 = vunpack.c.h.b16 %v4698
          %v5030 = vunpack.c.l.b16 %v4699
          %v5031 = vunpack.c.h.b16 %v4699
          %v5032 = vunpack.c.l.b16 %v4700
          %v5033 = vunpack.c.h.b16 %v4700
          %v5034 = vunpack.c.l.b16 %v4701
          %v5035 = vunpack.c.h.b16 %v4701
          %v5036 = vunpack.c.l.b16 %v4702
          %v5037 = vunpack.c.h.b16 %v4702
          %v5038 = vunpack.c.l.b16 %v4703
          %v5039 = vunpack.c.h.b16 %v4703
          %v5040 = vunpack.c.l.b16 %v4704
          %v5041 = vunpack.c.h.b16 %v4704
          %v5042 = vunpack.c.l.b16 %v4705
          %v5043 = vunpack.c.h.b16 %v4705
          %v5044 = vunpack.c.l.b16 %v4706
          %v5045 = vunpack.c.h.b16 %v4706
          %v5046 = vunpack.c.l.b16 %v4707
          %v5047 = vunpack.c.h.b16 %v4707
          %v5048 = vunpack.c.l.b16 %v4708
          %v5049 = vunpack.c.h.b16 %v4708
          %v5050 = vunpack.c.l.b16 %v4709
          %v5051 = vunpack.c.h.b16 %v4709
          %v5052 = vunpack.c.l.b16 %v4710
          %v5053 = vunpack.c.h.b16 %v4710
          %v5054 = vunpack.c.l.b16 %v4711
          %v5055 = vunpack.c.h.b16 %v4711
          %v5056 = vunpack.c.l.b16 %v4712
          %v5057 = vunpack.c.h.b16 %v4712
          %v5058 = vunpack.c.l.b16 %v4713
          %v5059 = vunpack.c.h.b16 %v4713
          %v5060 = vunpack.c.l.b16 %v4714
          %v5061 = vunpack.c.h.b16 %v4714
          %v5062 = vunpack.c.l.b16 %v4715
          %v5063 = vunpack.c.h.b16 %v4715
          %v5064 = vunpack.c.l.b16 %v4716
          %v5065 = vunpack.c.h.b16 %v4716
          %v5066 = vunpack.c.l.b16 %v4717
          %v5067 = vunpack.c.h.b16 %v4717
          %v5068 = vunpack.c.l.b16 %v4718
          %v5069 = vunpack.c.h.b16 %v4718
          %v5070 = vunpack.c.l.b16 %v4719
          %v5071 = vunpack.c.h.b16 %v4719
          %v5072 = vunpack.c.l.b16 %v4720
          %v5073 = vunpack.c.h.b16 %v4720
          %v5074 = vunpack.c.l.b16 %v4721
          %v5075 = vunpack.c.h.b16 %v4721
          %v5076 = vunpack.c.l.b16 %v4722
          %v5077 = vunpack.c.h.b16 %v4722
          %v5078 = vunpack.c.l.b16 %v4723
          %v5079 = vunpack.c.h.b16 %v4723
          %v5080 = vunpack.c.l.b16 %v4724
          %v5081 = vunpack.c.h.b16 %v4724
          %v5082 = vunpack.c.l.b16 %v4725
          %v5083 = vunpack.c.h.b16 %v4725
          %v5084 = vunpack.c.l.b16 %v4726
          %v5085 = vunpack.c.h.b16 %v4726
          %v5086 = vunpack.c.l.b16 %v4727
          %v5087 = vunpack.c.h.b16 %v4727
          %v5088 = vunpack.c.l.b16 %v4728
          %v5089 = vunpack.c.h.b16 %v4728
          %v5090 = vunpack.c.l.b16 %v4729
          %v5091 = vunpack.c.h.b16 %v4729
          %v5092 = vunpack.c.l.b16 %v4730
          %v5093 = vunpack.c.h.b16 %v4730
          %v5094 = vunpack.c.l.b16 %v4731
          %v5095 = vunpack.c.h.b16 %v4731
          %v5096 = vunpack.c.l.b16 %v4732
          %v5097 = vunpack.c.h.b16 %v4732
          %v5098 = vunpack.c.l.b16 %v4733
          %v5099 = vunpack.c.h.b16 %v4733
          %v5100 = vunpack.c.l.b16 %v4734
          %v5101 = vunpack.c.h.b16 %v4734
          %v5102 = vunpack.c.l.b16 %v4735
          %v5103 = vunpack.c.h.b16 %v4735
          %v5104 = vunpack.c.l.b16 %v4736
          %v5105 = vunpack.c.h.b16 %v4736
          %v5106 = vunpack.c.l.b16 %v4737
          %v5107 = vunpack.c.h.b16 %v4737
          %v5108 = vunpack.c.l.b16 %v4738
          %v5109 = vunpack.c.h.b16 %v4738
          %v5110 = vunpack.c.l.b16 %v4739
          %v5111 = vunpack.c.h.b16 %v4739
          %v5112 = vunpack.c.l.b16 %v4740
          %v5113 = vunpack.c.h.b16 %v4740
          %v5114 = vunpack.c.l.b16 %v4741
          %v5115 = vunpack.c.h.b16 %v4741
          %v5116 = vunpack.c.l.b16 %v4742
          %v5117 = vunpack.c.h.b16 %v4742
          %v5118 = vunpack.c.l.b16 %v4743
          %v5119 = vunpack.c.h.b16 %v4743
          %v5120 = vunpack.c.l.b16 %v4744
          %v5121 = vunpack.c.h.b16 %v4744
          %v5122 = vunpack.c.l.b16 %v4745
          %v5123 = vunpack.c.h.b16 %v4745
          %v5124 = vunpack.c.l.b16 %v4746
          %v5125 = vunpack.c.h.b16 %v4746
          %v5126 = vunpack.c.l.b16 %v4747
          %v5127 = vunpack.c.h.b16 %v4747
          %v5128 = vunpack.c.l.b16 %v4748
          %v5129 = vunpack.c.h.b16 %v4748
          %v5130 = vunpack.c.l.b16 %v4749
          %v5131 = vunpack.c.h.b16 %v4749
          %v5132 = vunpack.c.l.b16 %v4750
          %v5133 = vunpack.c.h.b16 %v4750
          %v5134 = vunpack.c.l.b16 %v4751
          %v5135 = vunpack.c.h.b16 %v4751
          %v5136 = vunpack.c.l.b16 %v4752
          %v5137 = vunpack.c.h.b16 %v4752
          %v5138 = vunpack.c.l.b16 %v4753
          %v5139 = vunpack.c.h.b16 %v4753
          %v5140 = vunpack.c.l.b16 %v4754
          %v5141 = vunpack.c.h.b16 %v4754
          %v5142 = vunpack.c.l.b16 %v4755
          %v5143 = vunpack.c.h.b16 %v4755
          %v5144 = vunpack.c.l.b16 %v4756
          %v5145 = vunpack.c.h.b16 %v4756
          %v5146 = vunpack.c.l.b16 %v4757
          %v5147 = vunpack.c.h.b16 %v4757
          %v5148 = vunpack.c.l.b16 %v4758
          %v5149 = vunpack.c.h.b16 %v4758
          %v5150 = vunpack.c.l.b16 %v4759
          %v5151 = vunpack.c.h.b16 %v4759
          %v5152 = vunpack.c.l.b16 %v4760
          %v5153 = vunpack.c.h.b16 %v4760
          %v5154 = vunpack.c.l.b16 %v4761
          %v5155 = vunpack.c.h.b16 %v4761
          %v5156 = vpack.c.b16 %v4904, %v4900
          %v5157 = vpack.c.b16 %v4905, %v4901
          %v5158 = vpack.c.b16 %v4906, %v4902
          %v5159 = vpack.c.b16 %v4907, %v4903
          %v5160 = vpack.c.b16 %v4912, %v4908
          %v5161 = vpack.c.b16 %v4913, %v4909
          %v5162 = vpack.c.b16 %v4914, %v4910
          %v5163 = vpack.c.b16 %v4915, %v4911
          %v5164 = vpack.c.b16 %v4920, %v4916
          %v5165 = vpack.c.b16 %v4921, %v4917
          %v5166 = vpack.c.b16 %v4922, %v4918
          %v5167 = vpack.c.b16 %v4923, %v4919
          %v5168 = vpack.c.b16 %v4928, %v4924
          %v5169 = vpack.c.b16 %v4929, %v4925
          %v5170 = vpack.c.b16 %v4930, %v4926
          %v5171 = vpack.c.b16 %v4931, %v4927
          %v5172 = vpack.c.b16 %v4936, %v4932
          %v5173 = vpack.c.b16 %v4937, %v4933
          %v5174 = vpack.c.b16 %v4938, %v4934
          %v5175 = vpack.c.b16 %v4939, %v4935
          %v5176 = vpack.c.b16 %v4944, %v4940
          %v5177 = vpack.c.b16 %v4945, %v4941
          %v5178 = vpack.c.b16 %v4946, %v4942
          %v5179 = vpack.c.b16 %v4947, %v4943
          %v5180 = vpack.c.b16 %v4952, %v4948
          %v5181 = vpack.c.b16 %v4953, %v4949
          %v5182 = vpack.c.b16 %v4954, %v4950
          %v5183 = vpack.c.b16 %v4955, %v4951
          %v5184 = vpack.c.b16 %v4960, %v4956
          %v5185 = vpack.c.b16 %v4961, %v4957
          %v5186 = vpack.c.b16 %v4962, %v4958
          %v5187 = vpack.c.b16 %v4963, %v4959
          %v5188 = vpack.c.b16 %v4968, %v4964
          %v5189 = vpack.c.b16 %v4969, %v4965
          %v5190 = vpack.c.b16 %v4970, %v4966
          %v5191 = vpack.c.b16 %v4971, %v4967
          %v5192 = vpack.c.b16 %v4976, %v4972
          %v5193 = vpack.c.b16 %v4977, %v4973
          %v5194 = vpack.c.b16 %v4978, %v4974
          %v5195 = vpack.c.b16 %v4979, %v4975
          %v5196 = vpack.c.b16 %v4984, %v4980
          %v5197 = vpack.c.b16 %v4985, %v4981
          %v5198 = vpack.c.b16 %v4986, %v4982
          %v5199 = vpack.c.b16 %v4987, %v4983
          %v5200 = vpack.c.b16 %v4992, %v4988
          %v5201 = vpack.c.b16 %v4993, %v4989
          %v5202 = vpack.c.b16 %v4994, %v4990
          %v5203 = vpack.c.b16 %v4995, %v4991
          %v5204 = vpack.c.b16 %v5000, %v4996
          %v5205 = vpack.c.b16 %v5001, %v4997
          %v5206 = vpack.c.b16 %v5002, %v4998
          %v5207 = vpack.c.b16 %v5003, %v4999
          %v5208 = vpack.c.b16 %v5008, %v5004
          %v5209 = vpack.c.b16 %v5009, %v5005
          %v5210 = vpack.c.b16 %v5010, %v5006
          %v5211 = vpack.c.b16 %v5011, %v5007
          %v5212 = vpack.c.b16 %v5016, %v5012
          %v5213 = vpack.c.b16 %v5017, %v5013
          %v5214 = vpack.c.b16 %v5018, %v5014
          %v5215 = vpack.c.b16 %v5019, %v5015
          %v5216 = vpack.c.b16 %v5024, %v5020
          %v5217 = vpack.c.b16 %v5025, %v5021
          %v5218 = vpack.c.b16 %v5026, %v5022
          %v5219 = vpack.c.b16 %v5027, %v5023
          %v5220 = vpack.c.b16 %v5032, %v5028
          %v5221 = vpack.c.b16 %v5033, %v5029
          %v5222 = vpack.c.b16 %v5034, %v5030
          %v5223 = vpack.c.b16 %v5035, %v5031
          %v5224 = vpack.c.b16 %v5040, %v5036
          %v5225 = vpack.c.b16 %v5041, %v5037
          %v5226 = vpack.c.b16 %v5042, %v5038
          %v5227 = vpack.c.b16 %v5043, %v5039
          %v5228 = vpack.c.b16 %v5048, %v5044
          %v5229 = vpack.c.b16 %v5049, %v5045
          %v5230 = vpack.c.b16 %v5050, %v5046
          %v5231 = vpack.c.b16 %v5051, %v5047
          %v5232 = vpack.c.b16 %v5056, %v5052
          %v5233 = vpack.c.b16 %v5057, %v5053
          %v5234 = vpack.c.b16 %v5058, %v5054
          %v5235 = vpack.c.b16 %v5059, %v5055
          %v5236 = vpack.c.b16 %v5064, %v5060
          %v5237 = vpack.c.b16 %v5065, %v5061
          %v5238 = vpack.c.b16 %v5066, %v5062
          %v5239 = vpack.c.b16 %v5067, %v5063
          %v5240 = vpack.c.b16 %v5072, %v5068
          %v5241 = vpack.c.b16 %v5073, %v5069
          %v5242 = vpack.c.b16 %v5074, %v5070
          %v5243 = vpack.c.b16 %v5075, %v5071
          %v5244 = vpack.c.b16 %v5080, %v5076
          %v5245 = vpack.c.b16 %v5081, %v5077
          %v5246 = vpack.c.b16 %v5082, %v5078
          %v5247 = vpack.c.b16 %v5083, %v5079
          %v5248 = vpack.c.b16 %v5088, %v5084
          %v5249 = vpack.c.b16 %v5089, %v5085
          %v5250 = vpack.c.b16 %v5090, %v5086
          %v5251 = vpack.c.b16 %v5091, %v5087
          %v5252 = vpack.c.b16 %v5096, %v5092
          %v5253 = vpack.c.b16 %v5097, %v5093
          %v5254 = vpack.c.b16 %v5098, %v5094
          %v5255 = vpack.c.b16 %v5099, %v5095
          %v5256 = vpack.c.b16 %v5104, %v5100
          %v5257 = vpack.c.b16 %v5105, %v5101
          %v5258 = vpack.c.b16 %v5106, %v5102
          %v5259 = vpack.c.b16 %v5107, %v5103
          %v5260 = vpack.c.b16 %v5112, %v5108
          %v5261 = vpack.c.b16 %v5113, %v5109
          %v5262 = vpack.c.b16 %v5114, %v5110
          %v5263 = vpack.c.b16 %v5115, %v5111
          %v5264 = vpack.c.b16 %v5120, %v5116
          %v5265 = vpack.c.b16 %v5121, %v5117
          %v5266 = vpack.c.b16 %v5122, %v5118
          %v5267 = vpack.c.b16 %v5123, %v5119
          %v5268 = vpack.c.b16 %v5128, %v5124
          %v5269 = vpack.c.b16 %v5129, %v5125
          %v5270 = vpack.c.b16 %v5130, %v5126
          %v5271 = vpack.c.b16 %v5131, %v5127
          %v5272 = vpack.c.b16 %v5136, %v5132
          %v5273 = vpack.c.b16 %v5137, %v5133
          %v5274 = vpack.c.b16 %v5138, %v5134
          %v5275 = vpack.c.b16 %v5139, %v5135
          %v5276 = vpack.c.b16 %v5144, %v5140
          %v5277 = vpack.c.b16 %v5145, %v5141
          %v5278 = vpack.c.b16 %v5146, %v5142
          %v5279 = vpack.c.b16 %v5147, %v5143
          %v5280 = vpack.c.b16 %v5152, %v5148
          %v5281 = vpack.c.b16 %v5153, %v5149
          %v5282 = vpack.c.b16 %v5154, %v5150
          %v5283 = vpack.c.b16 %v5155, %v5151
          %5412 = vmatpush.bf16.msra.mxu0 %v5184
          %5413 = vmatpush.bf16.msra.mxu0 %v5180
          %5414 = vmatpush.bf16.msra.mxu0 %v5176
          %5415 = vmatpush.bf16.msra.mxu0 %v5172
          %5416 = vmatpush.bf16.msra.mxu0 %v5168
          %5417 = vmatpush.bf16.msra.mxu0 %v5164
          %5418 = vmatpush.bf16.msra.mxu0 %v5160
          %5419 = vmatpush.bf16.msra.mxu0 %v5156
          %5420 = vmatmul.bf16.gmra.mxu0 %v4630
          %v5421 = vpop.f32.mrf.mxu0
          %v5422 = vadd.f32 %v4764, %v5421
          %v5423 = vpop.f32.mrf.mxu0
          %5424 = vdwg.mxu0
          %5425 = vmatpush.bf16.msra.mxu0 %v5216
          %5426 = vmatpush.bf16.msra.mxu0 %v5212
          %5427 = vmatpush.bf16.msra.mxu0 %v5208
          %5428 = vmatpush.bf16.msra.mxu0 %v5204
          %5429 = vmatpush.bf16.msra.mxu0 %v5200
          %5430 = vmatpush.bf16.msra.mxu0 %v5196
          %5431 = vmatpush.bf16.msra.mxu0 %v5192
          %5432 = vmatpush.bf16.msra.mxu0 %v5188
          %5433 = vmatmul.bf16.gmra.mxu0 %v4631
          %v5434 = vpop.f32.mrf.mxu0
          %v5435 = vadd.f32 %v5422, %v5434
          %v5436 = vpop.f32.mrf.mxu0
          %5437 = vdwg.mxu0
          %5438 = vmatpush.bf16.msra.mxu0 %v5248
          %5439 = vmatpush.bf16.msra.mxu0 %v5244
          %5440 = vmatpush.bf16.msra.mxu0 %v5240
          %5441 = vmatpush.bf16.msra.mxu0 %v5236
          %5442 = vmatpush.bf16.msra.mxu0 %v5232
          %5443 = vmatpush.bf16.msra.mxu0 %v5228
          %5444 = vmatpush.bf16.msra.mxu0 %v5224
          %5445 = vmatpush.bf16.msra.mxu0 %v5220
          %5446 = vmatmul.bf16.gmra.mxu0 %v4632
          %v5447 = vpop.f32.mrf.mxu0
          %v5448 = vadd.f32 %v5435, %v5447
          %v5449 = vpop.f32.mrf.mxu0
          %5450 = vdwg.mxu0
          %5451 = vmatpush.bf16.msra.mxu0 %v5280
          %5452 = vmatpush.bf16.msra.mxu0 %v5276
          %5453 = vmatpush.bf16.msra.mxu0 %v5272
          %5454 = vmatpush.bf16.msra.mxu0 %v5268
          %5455 = vmatpush.bf16.msra.mxu0 %v5264
          %5456 = vmatpush.bf16.msra.mxu0 %v5260
          %5457 = vmatpush.bf16.msra.mxu0 %v5256
          %5458 = vmatpush.bf16.msra.mxu0 %v5252
          %5459 = vmatmul.bf16.gmra.mxu0 %v4633
          %v5460 = vpop.f32.mrf.mxu0
          %v5461 = vadd.f32 %v5448, %v5460
          %v5462 = vpop.f32.mrf.mxu0
          %5463 = vdwg.mxu0
          %5464 = vmatpush.bf16.msra.mxu0 %v5185
          %5465 = vmatpush.bf16.msra.mxu0 %v5181
          %5466 = vmatpush.bf16.msra.mxu0 %v5177
          %5467 = vmatpush.bf16.msra.mxu0 %v5173
          %5468 = vmatpush.bf16.msra.mxu0 %v5169
          %5469 = vmatpush.bf16.msra.mxu0 %v5165
          %5470 = vmatpush.bf16.msra.mxu0 %v5161
          %5471 = vmatpush.bf16.msra.mxu0 %v5157
          %5472 = vmatmul.bf16.gmra.mxu0 %v4630
          %v5473 = vpop.f32.mrf.mxu0
          %v5474 = vadd.f32 %v4765, %v5473
          %v5475 = vpop.f32.mrf.mxu0
          %5476 = vdwg.mxu0
          %5477 = vmatpush.bf16.msra.mxu0 %v5217
          %5478 = vmatpush.bf16.msra.mxu0 %v5213
          %5479 = vmatpush.bf16.msra.mxu0 %v5209
          %5480 = vmatpush.bf16.msra.mxu0 %v5205
          %5481 = vmatpush.bf16.msra.mxu0 %v5201
          %5482 = vmatpush.bf16.msra.mxu0 %v5197
          %5483 = vmatpush.bf16.msra.mxu0 %v5193
          %5484 = vmatpush.bf16.msra.mxu0 %v5189
          %5485 = vmatmul.bf16.gmra.mxu0 %v4631
          %v5486 = vpop.f32.mrf.mxu0
          %v5487 = vadd.f32 %v5474, %v5486
          %v5488 = vpop.f32.mrf.mxu0
          %5489 = vdwg.mxu0
          %5490 = vmatpush.bf16.msra.mxu0 %v5249
          %5491 = vmatpush.bf16.msra.mxu0 %v5245
          %5492 = vmatpush.bf16.msra.mxu0 %v5241
          %5493 = vmatpush.bf16.msra.mxu0 %v5237
          %5494 = vmatpush.bf16.msra.mxu0 %v5233
          %5495 = vmatpush.bf16.msra.mxu0 %v5229
          %5496 = vmatpush.bf16.msra.mxu0 %v5225
          %5497 = vmatpush.bf16.msra.mxu0 %v5221
          %5498 = vmatmul.bf16.gmra.mxu0 %v4632
          %v5499 = vpop.f32.mrf.mxu0
          %v5500 = vadd.f32 %v5487, %v5499
          %v5501 = vpop.f32.mrf.mxu0
          %5502 = vdwg.mxu0
          %5503 = vmatpush.bf16.msra.mxu0 %v5281
          %5504 = vmatpush.bf16.msra.mxu0 %v5277
          %5505 = vmatpush.bf16.msra.mxu0 %v5273
          %5506 = vmatpush.bf16.msra.mxu0 %v5269
          %5507 = vmatpush.bf16.msra.mxu0 %v5265
          %5508 = vmatpush.bf16.msra.mxu0 %v5261
          %5509 = vmatpush.bf16.msra.mxu0 %v5257
          %5510 = vmatpush.bf16.msra.mxu0 %v5253
          %5511 = vmatmul.bf16.gmra.mxu0 %v4633
          %v5512 = vpop.f32.mrf.mxu0
          %v5513 = vadd.f32 %v5500, %v5512
          %v5514 = vpop.f32.mrf.mxu0
          %5515 = vdwg.mxu0
          %5516 = vmatpush.bf16.msra.mxu0 %v5186
          %5517 = vmatpush.bf16.msra.mxu0 %v5182
          %5518 = vmatpush.bf16.msra.mxu0 %v5178
          %5519 = vmatpush.bf16.msra.mxu0 %v5174
          %5520 = vmatpush.bf16.msra.mxu0 %v5170
          %5521 = vmatpush.bf16.msra.mxu0 %v5166
          %5522 = vmatpush.bf16.msra.mxu0 %v5162
          %5523 = vmatpush.bf16.msra.mxu0 %v5158
          %5524 = vmatmul.bf16.gmra.mxu0 %v4630
          %v5525 = vpop.f32.mrf.mxu0
          %v5526 = vadd.f32 %v4766, %v5525
          %v5527 = vpop.f32.mrf.mxu0
          %5528 = vdwg.mxu0
          %5529 = vmatpush.bf16.msra.mxu0 %v5218
          %5530 = vmatpush.bf16.msra.mxu0 %v5214
          %5531 = vmatpush.bf16.msra.mxu0 %v5210
          %5532 = vmatpush.bf16.msra.mxu0 %v5206
          %5533 = vmatpush.bf16.msra.mxu0 %v5202
          %5534 = vmatpush.bf16.msra.mxu0 %v5198
          %5535 = vmatpush.bf16.msra.mxu0 %v5194
          %5536 = vmatpush.bf16.msra.mxu0 %v5190
          %5537 = vmatmul.bf16.gmra.mxu0 %v4631
          %v5538 = vpop.f32.mrf.mxu0
          %v5539 = vadd.f32 %v5526, %v5538
          %v5540 = vpop.f32.mrf.mxu0
          %5541 = vdwg.mxu0
          %5542 = vmatpush.bf16.msra.mxu0 %v5250
          %5543 = vmatpush.bf16.msra.mxu0 %v5246
          %5544 = vmatpush.bf16.msra.mxu0 %v5242
          %5545 = vmatpush.bf16.msra.mxu0 %v5238
          %5546 = vmatpush.bf16.msra.mxu0 %v5234
          %5547 = vmatpush.bf16.msra.mxu0 %v5230
          %5548 = vmatpush.bf16.msra.mxu0 %v5226
          %5549 = vmatpush.bf16.msra.mxu0 %v5222
          %5550 = vmatmul.bf16.gmra.mxu0 %v4632
          %v5551 = vpop.f32.mrf.mxu0
          %v5552 = vadd.f32 %v5539, %v5551
          %v5553 = vpop.f32.mrf.mxu0
          %5554 = vdwg.mxu0
          %5555 = vmatpush.bf16.msra.mxu0 %v5282
          %5556 = vmatpush.bf16.msra.mxu0 %v5278
          %5557 = vmatpush.bf16.msra.mxu0 %v5274
          %5558 = vmatpush.bf16.msra.mxu0 %v5270
          %5559 = vmatpush.bf16.msra.mxu0 %v5266
          %5560 = vmatpush.bf16.msra.mxu0 %v5262
          %5561 = vmatpush.bf16.msra.mxu0 %v5258
          %5562 = vmatpush.bf16.msra.mxu0 %v5254
          %5563 = vmatmul.bf16.gmra.mxu0 %v4633
          %v5564 = vpop.f32.mrf.mxu0
          %v5565 = vadd.f32 %v5552, %v5564
          %v5566 = vpop.f32.mrf.mxu0
          %5567 = vdwg.mxu0
          %5568 = vmatpush.bf16.msra.mxu0 %v5187
          %5569 = vmatpush.bf16.msra.mxu0 %v5183
          %5570 = vmatpush.bf16.msra.mxu0 %v5179
          %5571 = vmatpush.bf16.msra.mxu0 %v5175
          %5572 = vmatpush.bf16.msra.mxu0 %v5171
          %5573 = vmatpush.bf16.msra.mxu0 %v5167
          %5574 = vmatpush.bf16.msra.mxu0 %v5163
          %5575 = vmatpush.bf16.msra.mxu0 %v5159
          %5576 = vmatmul.bf16.gmra.mxu0 %v4630
          %v5577 = vpop.f32.mrf.mxu0
          %v5578 = vadd.f32 %v4767, %v5577
          %v5579 = vpop.f32.mrf.mxu0
          %5580 = vdwg.mxu0
          %5581 = vmatpush.bf16.msra.mxu0 %v5219
          %5582 = vmatpush.bf16.msra.mxu0 %v5215
          %5583 = vmatpush.bf16.msra.mxu0 %v5211
          %5584 = vmatpush.bf16.msra.mxu0 %v5207
          %5585 = vmatpush.bf16.msra.mxu0 %v5203
          %5586 = vmatpush.bf16.msra.mxu0 %v5199
          %5587 = vmatpush.bf16.msra.mxu0 %v5195
          %5588 = vmatpush.bf16.msra.mxu0 %v5191
          %5589 = vmatmul.bf16.gmra.mxu0 %v4631
          %v5590 = vpop.f32.mrf.mxu0
          %v5591 = vadd.f32 %v5578, %v5590
          %v5592 = vpop.f32.mrf.mxu0
          %5593 = vdwg.mxu0
          %5594 = vmatpush.bf16.msra.mxu0 %v5251
          %5595 = vmatpush.bf16.msra.mxu0 %v5247
          %5596 = vmatpush.bf16.msra.mxu0 %v5243
          %5597 = vmatpush.bf16.msra.mxu0 %v5239
          %5598 = vmatpush.bf16.msra.mxu0 %v5235
          %5599 = vmatpush.bf16.msra.mxu0 %v5231
          %5600 = vmatpush.bf16.msra.mxu0 %v5227
          %5601 = vmatpush.bf16.msra.mxu0 %v5223
          %5602 = vmatmul.bf16.gmra.mxu0 %v4632
          %v5603 = vpop.f32.mrf.mxu0
          %v5604 = vadd.f32 %v5591, %v5603
          %v5605 = vpop.f32.mrf.mxu0
          %5606 = vdwg.mxu0
          %5607 = vmatpush.bf16.msra.mxu0 %v5283
          %5608 = vmatpush.bf16.msra.mxu0 %v5279
          %5609 = vmatpush.bf16.msra.mxu0 %v5275
          %5610 = vmatpush.bf16.msra.mxu0 %v5271
          %5611 = vmatpush.bf16.msra.mxu0 %v5267
          %5612 = vmatpush.bf16.msra.mxu0 %v5263
          %5613 = vmatpush.bf16.msra.mxu0 %v5259
          %5614 = vmatpush.bf16.msra.mxu0 %v5255
          %5615 = vmatmul.bf16.gmra.mxu0 %v4633
          %v5616 = vpop.f32.mrf.mxu0
          %v5617 = vadd.f32 %v5604, %v5616
          %v5618 = vpop.f32.mrf.mxu0
          %5619 = vdwg.mxu0
          %v5620 = vsub.f32 %v5565, 5.0
          %v5621 = vsub.f32 %v5617, 5.0
          %v5622 = vmax.f32 %v5620, 0.0
          %v5623 = vmax.f32 %v5621, 0.0
          %v5624 = vand.u32 2147483647, %v5620
          %v5625 = vand.u32 2147483647, %v5621
          %v5626 = vsub.f32 0.0, %v5624
          %v5627 = vsub.f32 0.0, %v5625
          %v5628 = vmul.f32 %v5626, 1.442695
          %v5629 = vpow.pop %v5628
          %v5630 = vmul.f32 %v5627, 1.442695
          %v5631 = vpow.pop %v5630
          %v5632 = vadd.f32 %v5629, 1.0
          %v5633 = vadd.f32 %v5631, 1.0
          %v5634 = vlog2.pop %v5632
          %v5635 = vmul.f32 %v5634, 0.6931472
          %v5636 = vlog2.pop %v5633
          %v5637 = vmul.f32 %v5636, 0.6931472
          %v5638 = vadd.f32 %v5622, %v5635
          %v5639 = vadd.f32 %v5623, %v5637
          %v5642 = vrot.slane %v5513, 6
          %v5643 = vsel %vm4563, %v5461, %v5642
          %5645 = vst [vmem:[#allocation21] sm:$0xf] %v5643
          %v5648 = vrot.slane %v5639, 6
          %v5649 = vsel %vm4563, %v5638, %v5648
          %5651 = vst [vmem:[#allocation22] sm:$0xf] %v5649
          %v5652 = vld [vmem:[#allocation14] sm:$0xf]
          %5654 = vst [vmem:[#allocation1] ss:$4 sm:$0xff] %v5652
          %v5655 = vld.sshfl [vmem:[#allocation1] sm:$0xff pattern:$0x73625140]
          %v5656 = vld.sshfl [vmem:[#allocation1 + $0x8] sm:$0xff pattern:$0x73625140]
          %v5659 = vmul.f32 %v5638, %v5655
          %v5660 = vmul.f32 %v5639, %v5656
          %v5661 = vadd.f32 %v5461, %v5659
          %v5662 = vadd.f32 %v5513, %v5660
          %v5663 = vpack.c.bf16 %v5661, %v5661
          %v5664 = vpack.c.bf16 %v5662, %v5662
          %v5665 = vld [vmem:[#allocation15] sm:$0xff]
          %v5666 = vld [vmem:[#allocation15 + $0x8] sm:$0xff]
          %v5667 = vld [vmem:[#allocation15 + $0x10] sm:$0xff]
          %v5668 = vld [vmem:[#allocation15 + $0x18] sm:$0xff]
          %v5669 = vld [vmem:[#allocation15 + $0x20] sm:$0xff]
          %v5670 = vld [vmem:[#allocation15 + $0x28] sm:$0xff]
          %v5671 = vld [vmem:[#allocation15 + $0x30] sm:$0xff]
          %v5672 = vld [vmem:[#allocation15 + $0x38] sm:$0xff]
          %v5673 = vld [vmem:[#allocation15 + $0x40] sm:$0xff]
          %v5674 = vld [vmem:[#allocation15 + $0x48] sm:$0xff]
          %v5675 = vld [vmem:[#allocation15 + $0x50] sm:$0xff]
          %v5676 = vld [vmem:[#allocation15 + $0x58] sm:$0xff]
          %v5677 = vld [vmem:[#allocation15 + $0x60] sm:$0xff]
          %v5678 = vld [vmem:[#allocation15 + $0x68] sm:$0xff]
          %v5679 = vld [vmem:[#allocation15 + $0x70] sm:$0xff]
          %v5680 = vld [vmem:[#allocation15 + $0x78] sm:$0xff]
          %v5681 = vld [vmem:[#allocation15 + $0x80] sm:$0xff]
          %v5682 = vld [vmem:[#allocation15 + $0x88] sm:$0xff]
          %v5683 = vld [vmem:[#allocation15 + $0x90] sm:$0xff]
          %v5684 = vld [vmem:[#allocation15 + $0x98] sm:$0xff]
          %v5685 = vld [vmem:[#allocation15 + $0xa0] sm:$0xff]
          %v5686 = vld [vmem:[#allocation15 + $0xa8] sm:$0xff]
          %v5687 = vld [vmem:[#allocation15 + $0xb0] sm:$0xff]
          %v5688 = vld [vmem:[#allocation15 + $0xb8] sm:$0xff]
          %v5689 = vld [vmem:[#allocation15 + $0xc0] sm:$0xff]
          %v5690 = vld [vmem:[#allocation15 + $0xc8] sm:$0xff]
          %v5691 = vld [vmem:[#allocation15 + $0xd0] sm:$0xff]
          %v5692 = vld [vmem:[#allocation15 + $0xd8] sm:$0xff]
          %v5693 = vld [vmem:[#allocation15 + $0xe0] sm:$0xff]
          %v5694 = vld [vmem:[#allocation15 + $0xe8] sm:$0xff]
          %v5695 = vld [vmem:[#allocation15 + $0xf0] sm:$0xff]
          %v5696 = vld [vmem:[#allocation15 + $0xf8] sm:$0xff]
          %v5697 = vld [vmem:[#allocation15 + $0x100] sm:$0xff]
          %v5698 = vld [vmem:[#allocation15 + $0x108] sm:$0xff]
          %v5699 = vld [vmem:[#allocation15 + $0x110] sm:$0xff]
          %v5700 = vld [vmem:[#allocation15 + $0x118] sm:$0xff]
          %v5701 = vld [vmem:[#allocation15 + $0x120] sm:$0xff]
          %v5702 = vld [vmem:[#allocation15 + $0x128] sm:$0xff]
          %v5703 = vld [vmem:[#allocation15 + $0x130] sm:$0xff]
          %v5704 = vld [vmem:[#allocation15 + $0x138] sm:$0xff]
          %v5705 = vld [vmem:[#allocation15 + $0x140] sm:$0xff]
          %v5706 = vld [vmem:[#allocation15 + $0x148] sm:$0xff]
          %v5707 = vld [vmem:[#allocation15 + $0x150] sm:$0xff]
          %v5708 = vld [vmem:[#allocation15 + $0x158] sm:$0xff]
          %v5709 = vld [vmem:[#allocation15 + $0x160] sm:$0xff]
          %v5710 = vld [vmem:[#allocation15 + $0x168] sm:$0xff]
          %v5711 = vld [vmem:[#allocation15 + $0x170] sm:$0xff]
          %v5712 = vld [vmem:[#allocation15 + $0x178] sm:$0xff]
          %v5713 = vld [vmem:[#allocation15 + $0x180] sm:$0xff]
          %v5714 = vld [vmem:[#allocation15 + $0x188] sm:$0xff]
          %v5715 = vld [vmem:[#allocation15 + $0x190] sm:$0xff]
          %v5716 = vld [vmem:[#allocation15 + $0x198] sm:$0xff]
          %v5717 = vld [vmem:[#allocation15 + $0x1a0] sm:$0xff]
          %v5718 = vld [vmem:[#allocation15 + $0x1a8] sm:$0xff]
          %v5719 = vld [vmem:[#allocation15 + $0x1b0] sm:$0xff]
          %v5720 = vld [vmem:[#allocation15 + $0x1b8] sm:$0xff]
          %v5721 = vld [vmem:[#allocation15 + $0x1c0] sm:$0xff]
          %v5722 = vld [vmem:[#allocation15 + $0x1c8] sm:$0xff]
          %v5723 = vld [vmem:[#allocation15 + $0x1d0] sm:$0xff]
          %v5724 = vld [vmem:[#allocation15 + $0x1d8] sm:$0xff]
          %v5725 = vld [vmem:[#allocation15 + $0x1e0] sm:$0xff]
          %v5726 = vld [vmem:[#allocation15 + $0x1e8] sm:$0xff]
          %v5727 = vld [vmem:[#allocation15 + $0x1f0] sm:$0xff]
          %v5728 = vld [vmem:[#allocation15 + $0x1f8] sm:$0xff]
          %v5729 = vld [vmem:[#allocation15 + $0x200] sm:$0xff]
          %v5730 = vld [vmem:[#allocation15 + $0x208] sm:$0xff]
          %v5731 = vld [vmem:[#allocation15 + $0x210] sm:$0xff]
          %v5732 = vld [vmem:[#allocation15 + $0x218] sm:$0xff]
          %v5733 = vld [vmem:[#allocation15 + $0x220] sm:$0xff]
          %v5734 = vld [vmem:[#allocation15 + $0x228] sm:$0xff]
          %v5735 = vld [vmem:[#allocation15 + $0x230] sm:$0xff]
          %v5736 = vld [vmem:[#allocation15 + $0x238] sm:$0xff]
          %v5737 = vld [vmem:[#allocation15 + $0x240] sm:$0xff]
          %v5738 = vld [vmem:[#allocation15 + $0x248] sm:$0xff]
          %v5739 = vld [vmem:[#allocation15 + $0x250] sm:$0xff]
          %v5740 = vld [vmem:[#allocation15 + $0x258] sm:$0xff]
          %v5741 = vld [vmem:[#allocation15 + $0x260] sm:$0xff]
          %v5742 = vld [vmem:[#allocation15 + $0x268] sm:$0xff]
          %v5743 = vld [vmem:[#allocation15 + $0x270] sm:$0xff]
          %v5744 = vld [vmem:[#allocation15 + $0x278] sm:$0xff]
          %v5745 = vld [vmem:[#allocation15 + $0x280] sm:$0xff]
          %v5746 = vld [vmem:[#allocation15 + $0x288] sm:$0xff]
          %v5747 = vld [vmem:[#allocation15 + $0x290] sm:$0xff]
          %v5748 = vld [vmem:[#allocation15 + $0x298] sm:$0xff]
          %v5749 = vld [vmem:[#allocation15 + $0x2a0] sm:$0xff]
          %v5750 = vld [vmem:[#allocation15 + $0x2a8] sm:$0xff]
          %v5751 = vld [vmem:[#allocation15 + $0x2b0] sm:$0xff]
          %v5752 = vld [vmem:[#allocation15 + $0x2b8] sm:$0xff]
          %v5753 = vld [vmem:[#allocation15 + $0x2c0] sm:$0xff]
          %v5754 = vld [vmem:[#allocation15 + $0x2c8] sm:$0xff]
          %v5755 = vld [vmem:[#allocation15 + $0x2d0] sm:$0xff]
          %v5756 = vld [vmem:[#allocation15 + $0x2d8] sm:$0xff]
          %v5757 = vld [vmem:[#allocation15 + $0x2e0] sm:$0xff]
          %v5758 = vld [vmem:[#allocation15 + $0x2e8] sm:$0xff]
          %v5759 = vld [vmem:[#allocation15 + $0x2f0] sm:$0xff]
          %v5760 = vld [vmem:[#allocation15 + $0x2f8] sm:$0xff]
          %v5761 = vld [vmem:[#allocation15 + $0x300] sm:$0xff]
          %v5762 = vld [vmem:[#allocation15 + $0x308] sm:$0xff]
          %v5763 = vld [vmem:[#allocation15 + $0x310] sm:$0xff]
          %v5764 = vld [vmem:[#allocation15 + $0x318] sm:$0xff]
          %v5765 = vld [vmem:[#allocation15 + $0x320] sm:$0xff]
          %v5766 = vld [vmem:[#allocation15 + $0x328] sm:$0xff]
          %v5767 = vld [vmem:[#allocation15 + $0x330] sm:$0xff]
          %v5768 = vld [vmem:[#allocation15 + $0x338] sm:$0xff]
          %v5769 = vld [vmem:[#allocation15 + $0x340] sm:$0xff]
          %v5770 = vld [vmem:[#allocation15 + $0x348] sm:$0xff]
          %v5771 = vld [vmem:[#allocation15 + $0x350] sm:$0xff]
          %v5772 = vld [vmem:[#allocation15 + $0x358] sm:$0xff]
          %v5773 = vld [vmem:[#allocation15 + $0x360] sm:$0xff]
          %v5774 = vld [vmem:[#allocation15 + $0x368] sm:$0xff]
          %v5775 = vld [vmem:[#allocation15 + $0x370] sm:$0xff]
          %v5776 = vld [vmem:[#allocation15 + $0x378] sm:$0xff]
          %v5777 = vld [vmem:[#allocation15 + $0x380] sm:$0xff]
          %v5778 = vld [vmem:[#allocation15 + $0x388] sm:$0xff]
          %v5779 = vld [vmem:[#allocation15 + $0x390] sm:$0xff]
          %v5780 = vld [vmem:[#allocation15 + $0x398] sm:$0xff]
          %v5781 = vld [vmem:[#allocation15 + $0x3a0] sm:$0xff]
          %v5782 = vld [vmem:[#allocation15 + $0x3a8] sm:$0xff]
          %v5783 = vld [vmem:[#allocation15 + $0x3b0] sm:$0xff]
          %v5784 = vld [vmem:[#allocation15 + $0x3b8] sm:$0xff]
          %v5785 = vld [vmem:[#allocation15 + $0x3c0] sm:$0xff]
          %v5786 = vld [vmem:[#allocation15 + $0x3c8] sm:$0xff]
          %v5787 = vld [vmem:[#allocation15 + $0x3d0] sm:$0xff]
          %v5788 = vld [vmem:[#allocation15 + $0x3d8] sm:$0xff]
          %v5789 = vld [vmem:[#allocation15 + $0x3e0] sm:$0xff]
          %v5790 = vld [vmem:[#allocation15 + $0x3e8] sm:$0xff]
          %v5791 = vld [vmem:[#allocation15 + $0x3f0] sm:$0xff]
          %v5792 = vld [vmem:[#allocation15 + $0x3f8] sm:$0xff]
          %v5793 = vld [vmem:[#allocation17] sm:$0xff]
          %v5795 = vperm.slane %v5793, 0
          %v5796 = vperm.slane %v5793, 1
          %v5797 = vperm.slane %v5793, 2
          %v5798 = vperm.slane %v5793, 3
          %v5799 = vperm.slane %v5793, 4
          %v5800 = vperm.slane %v5793, 5
          %v5801 = vperm.slane %v5793, 6
          %v5802 = vperm.slane %v5793, 7
          %v5939 = vunpack.c.l.b16 %v5665
          %v5940 = vunpack.c.h.b16 %v5665
          %v5941 = vunpack.c.l.b16 %v5666
          %v5942 = vunpack.c.h.b16 %v5666
          %v5943 = vunpack.c.l.b16 %v5667
          %v5944 = vunpack.c.h.b16 %v5667
          %v5945 = vunpack.c.l.b16 %v5668
          %v5946 = vunpack.c.h.b16 %v5668
          %v5947 = vunpack.c.l.b16 %v5669
          %v5948 = vunpack.c.h.b16 %v5669
          %v5949 = vunpack.c.l.b16 %v5670
          %v5950 = vunpack.c.h.b16 %v5670
          %v5951 = vunpack.c.l.b16 %v5671
          %v5952 = vunpack.c.h.b16 %v5671
          %v5953 = vunpack.c.l.b16 %v5672
          %v5954 = vunpack.c.h.b16 %v5672
          %v5955 = vunpack.c.l.b16 %v5673
          %v5956 = vunpack.c.h.b16 %v5673
          %v5957 = vunpack.c.l.b16 %v5674
          %v5958 = vunpack.c.h.b16 %v5674
          %v5959 = vunpack.c.l.b16 %v5675
          %v5960 = vunpack.c.h.b16 %v5675
          %v5961 = vunpack.c.l.b16 %v5676
          %v5962 = vunpack.c.h.b16 %v5676
          %v5963 = vunpack.c.l.b16 %v5677
          %v5964 = vunpack.c.h.b16 %v5677
          %v5965 = vunpack.c.l.b16 %v5678
          %v5966 = vunpack.c.h.b16 %v5678
          %v5967 = vunpack.c.l.b16 %v5679
          %v5968 = vunpack.c.h.b16 %v5679
          %v5969 = vunpack.c.l.b16 %v5680
          %v5970 = vunpack.c.h.b16 %v5680
          %v5971 = vunpack.c.l.b16 %v5681
          %v5972 = vunpack.c.h.b16 %v5681
          %v5973 = vunpack.c.l.b16 %v5682
          %v5974 = vunpack.c.h.b16 %v5682
          %v5975 = vunpack.c.l.b16 %v5683
          %v5976 = vunpack.c.h.b16 %v5683
          %v5977 = vunpack.c.l.b16 %v5684
          %v5978 = vunpack.c.h.b16 %v5684
          %v5979 = vunpack.c.l.b16 %v5685
          %v5980 = vunpack.c.h.b16 %v5685
          %v5981 = vunpack.c.l.b16 %v5686
          %v5982 = vunpack.c.h.b16 %v5686
          %v5983 = vunpack.c.l.b16 %v5687
          %v5984 = vunpack.c.h.b16 %v5687
          %v5985 = vunpack.c.l.b16 %v5688
          %v5986 = vunpack.c.h.b16 %v5688
          %v5987 = vunpack.c.l.b16 %v5689
          %v5988 = vunpack.c.h.b16 %v5689
          %v5989 = vunpack.c.l.b16 %v5690
          %v5990 = vunpack.c.h.b16 %v5690
          %v5991 = vunpack.c.l.b16 %v5691
          %v5992 = vunpack.c.h.b16 %v5691
          %v5993 = vunpack.c.l.b16 %v5692
          %v5994 = vunpack.c.h.b16 %v5692
          %v5995 = vunpack.c.l.b16 %v5693
          %v5996 = vunpack.c.h.b16 %v5693
          %v5997 = vunpack.c.l.b16 %v5694
          %v5998 = vunpack.c.h.b16 %v5694
          %v5999 = vunpack.c.l.b16 %v5695
          %v6000 = vunpack.c.h.b16 %v5695
          %v6001 = vunpack.c.l.b16 %v5696
          %v6002 = vunpack.c.h.b16 %v5696
          %v6003 = vunpack.c.l.b16 %v5697
          %v6004 = vunpack.c.h.b16 %v5697
          %v6005 = vunpack.c.l.b16 %v5698
          %v6006 = vunpack.c.h.b16 %v5698
          %v6007 = vunpack.c.l.b16 %v5699
          %v6008 = vunpack.c.h.b16 %v5699
          %v6009 = vunpack.c.l.b16 %v5700
          %v6010 = vunpack.c.h.b16 %v5700
          %v6011 = vunpack.c.l.b16 %v5701
          %v6012 = vunpack.c.h.b16 %v5701
          %v6013 = vunpack.c.l.b16 %v5702
          %v6014 = vunpack.c.h.b16 %v5702
          %v6015 = vunpack.c.l.b16 %v5703
          %v6016 = vunpack.c.h.b16 %v5703
          %v6017 = vunpack.c.l.b16 %v5704
          %v6018 = vunpack.c.h.b16 %v5704
          %v6019 = vunpack.c.l.b16 %v5705
          %v6020 = vunpack.c.h.b16 %v5705
          %v6021 = vunpack.c.l.b16 %v5706
          %v6022 = vunpack.c.h.b16 %v5706
          %v6023 = vunpack.c.l.b16 %v5707
          %v6024 = vunpack.c.h.b16 %v5707
          %v6025 = vunpack.c.l.b16 %v5708
          %v6026 = vunpack.c.h.b16 %v5708
          %v6027 = vunpack.c.l.b16 %v5709
          %v6028 = vunpack.c.h.b16 %v5709
          %v6029 = vunpack.c.l.b16 %v5710
          %v6030 = vunpack.c.h.b16 %v5710
          %v6031 = vunpack.c.l.b16 %v5711
          %v6032 = vunpack.c.h.b16 %v5711
          %v6033 = vunpack.c.l.b16 %v5712
          %v6034 = vunpack.c.h.b16 %v5712
          %v6035 = vunpack.c.l.b16 %v5713
          %v6036 = vunpack.c.h.b16 %v5713
          %v6037 = vunpack.c.l.b16 %v5714
          %v6038 = vunpack.c.h.b16 %v5714
          %v6039 = vunpack.c.l.b16 %v5715
          %v6040 = vunpack.c.h.b16 %v5715
          %v6041 = vunpack.c.l.b16 %v5716
          %v6042 = vunpack.c.h.b16 %v5716
          %v6043 = vunpack.c.l.b16 %v5717
          %v6044 = vunpack.c.h.b16 %v5717
          %v6045 = vunpack.c.l.b16 %v5718
          %v6046 = vunpack.c.h.b16 %v5718
          %v6047 = vunpack.c.l.b16 %v5719
          %v6048 = vunpack.c.h.b16 %v5719
          %v6049 = vunpack.c.l.b16 %v5720
          %v6050 = vunpack.c.h.b16 %v5720
          %v6051 = vunpack.c.l.b16 %v5721
          %v6052 = vunpack.c.h.b16 %v5721
          %v6053 = vunpack.c.l.b16 %v5722
          %v6054 = vunpack.c.h.b16 %v5722
          %v6055 = vunpack.c.l.b16 %v5723
          %v6056 = vunpack.c.h.b16 %v5723
          %v6057 = vunpack.c.l.b16 %v5724
          %v6058 = vunpack.c.h.b16 %v5724
          %v6059 = vunpack.c.l.b16 %v5725
          %v6060 = vunpack.c.h.b16 %v5725
          %v6061 = vunpack.c.l.b16 %v5726
          %v6062 = vunpack.c.h.b16 %v5726
          %v6063 = vunpack.c.l.b16 %v5727
          %v6064 = vunpack.c.h.b16 %v5727
          %v6065 = vunpack.c.l.b16 %v5728
          %v6066 = vunpack.c.h.b16 %v5728
          %v6067 = vunpack.c.l.b16 %v5729
          %v6068 = vunpack.c.h.b16 %v5729
          %v6069 = vunpack.c.l.b16 %v5730
          %v6070 = vunpack.c.h.b16 %v5730
          %v6071 = vunpack.c.l.b16 %v5731
          %v6072 = vunpack.c.h.b16 %v5731
          %v6073 = vunpack.c.l.b16 %v5732
          %v6074 = vunpack.c.h.b16 %v5732
          %v6075 = vunpack.c.l.b16 %v5733
          %v6076 = vunpack.c.h.b16 %v5733
          %v6077 = vunpack.c.l.b16 %v5734
          %v6078 = vunpack.c.h.b16 %v5734
          %v6079 = vunpack.c.l.b16 %v5735
          %v6080 = vunpack.c.h.b16 %v5735
          %v6081 = vunpack.c.l.b16 %v5736
          %v6082 = vunpack.c.h.b16 %v5736
          %v6083 = vunpack.c.l.b16 %v5737
          %v6084 = vunpack.c.h.b16 %v5737
          %v6085 = vunpack.c.l.b16 %v5738
          %v6086 = vunpack.c.h.b16 %v5738
          %v6087 = vunpack.c.l.b16 %v5739
          %v6088 = vunpack.c.h.b16 %v5739
          %v6089 = vunpack.c.l.b16 %v5740
          %v6090 = vunpack.c.h.b16 %v5740
          %v6091 = vunpack.c.l.b16 %v5741
          %v6092 = vunpack.c.h.b16 %v5741
          %v6093 = vunpack.c.l.b16 %v5742
          %v6094 = vunpack.c.h.b16 %v5742
          %v6095 = vunpack.c.l.b16 %v5743
          %v6096 = vunpack.c.h.b16 %v5743
          %v6097 = vunpack.c.l.b16 %v5744
          %v6098 = vunpack.c.h.b16 %v5744
          %v6099 = vunpack.c.l.b16 %v5745
          %v6100 = vunpack.c.h.b16 %v5745
          %v6101 = vunpack.c.l.b16 %v5746
          %v6102 = vunpack.c.h.b16 %v5746
          %v6103 = vunpack.c.l.b16 %v5747
          %v6104 = vunpack.c.h.b16 %v5747
          %v6105 = vunpack.c.l.b16 %v5748
          %v6106 = vunpack.c.h.b16 %v5748
          %v6107 = vunpack.c.l.b16 %v5749
          %v6108 = vunpack.c.h.b16 %v5749
          %v6109 = vunpack.c.l.b16 %v5750
          %v6110 = vunpack.c.h.b16 %v5750
          %v6111 = vunpack.c.l.b16 %v5751
          %v6112 = vunpack.c.h.b16 %v5751
          %v6113 = vunpack.c.l.b16 %v5752
          %v6114 = vunpack.c.h.b16 %v5752
          %v6115 = vunpack.c.l.b16 %v5753
          %v6116 = vunpack.c.h.b16 %v5753
          %v6117 = vunpack.c.l.b16 %v5754
          %v6118 = vunpack.c.h.b16 %v5754
          %v6119 = vunpack.c.l.b16 %v5755
          %v6120 = vunpack.c.h.b16 %v5755
          %v6121 = vunpack.c.l.b16 %v5756
          %v6122 = vunpack.c.h.b16 %v5756
          %v6123 = vunpack.c.l.b16 %v5757
          %v6124 = vunpack.c.h.b16 %v5757
          %v6125 = vunpack.c.l.b16 %v5758
          %v6126 = vunpack.c.h.b16 %v5758
          %v6127 = vunpack.c.l.b16 %v5759
          %v6128 = vunpack.c.h.b16 %v5759
          %v6129 = vunpack.c.l.b16 %v5760
          %v6130 = vunpack.c.h.b16 %v5760
          %v6131 = vunpack.c.l.b16 %v5761
          %v6132 = vunpack.c.h.b16 %v5761
          %v6133 = vunpack.c.l.b16 %v5762
          %v6134 = vunpack.c.h.b16 %v5762
          %v6135 = vunpack.c.l.b16 %v5763
          %v6136 = vunpack.c.h.b16 %v5763
          %v6137 = vunpack.c.l.b16 %v5764
          %v6138 = vunpack.c.h.b16 %v5764
          %v6139 = vunpack.c.l.b16 %v5765
          %v6140 = vunpack.c.h.b16 %v5765
          %v6141 = vunpack.c.l.b16 %v5766
          %v6142 = vunpack.c.h.b16 %v5766
          %v6143 = vunpack.c.l.b16 %v5767
          %v6144 = vunpack.c.h.b16 %v5767
          %v6145 = vunpack.c.l.b16 %v5768
          %v6146 = vunpack.c.h.b16 %v5768
          %v6147 = vunpack.c.l.b16 %v5769
          %v6148 = vunpack.c.h.b16 %v5769
          %v6149 = vunpack.c.l.b16 %v5770
          %v6150 = vunpack.c.h.b16 %v5770
          %v6151 = vunpack.c.l.b16 %v5771
          %v6152 = vunpack.c.h.b16 %v5771
          %v6153 = vunpack.c.l.b16 %v5772
          %v6154 = vunpack.c.h.b16 %v5772
          %v6155 = vunpack.c.l.b16 %v5773
          %v6156 = vunpack.c.h.b16 %v5773
          %v6157 = vunpack.c.l.b16 %v5774
          %v6158 = vunpack.c.h.b16 %v5774
          %v6159 = vunpack.c.l.b16 %v5775
          %v6160 = vunpack.c.h.b16 %v5775
          %v6161 = vunpack.c.l.b16 %v5776
          %v6162 = vunpack.c.h.b16 %v5776
          %v6163 = vunpack.c.l.b16 %v5777
          %v6164 = vunpack.c.h.b16 %v5777
          %v6165 = vunpack.c.l.b16 %v5778
          %v6166 = vunpack.c.h.b16 %v5778
          %v6167 = vunpack.c.l.b16 %v5779
          %v6168 = vunpack.c.h.b16 %v5779
          %v6169 = vunpack.c.l.b16 %v5780
          %v6170 = vunpack.c.h.b16 %v5780
          %v6171 = vunpack.c.l.b16 %v5781
          %v6172 = vunpack.c.h.b16 %v5781
          %v6173 = vunpack.c.l.b16 %v5782
          %v6174 = vunpack.c.h.b16 %v5782
          %v6175 = vunpack.c.l.b16 %v5783
          %v6176 = vunpack.c.h.b16 %v5783
          %v6177 = vunpack.c.l.b16 %v5784
          %v6178 = vunpack.c.h.b16 %v5784
          %v6179 = vunpack.c.l.b16 %v5785
          %v6180 = vunpack.c.h.b16 %v5785
          %v6181 = vunpack.c.l.b16 %v5786
          %v6182 = vunpack.c.h.b16 %v5786
          %v6183 = vunpack.c.l.b16 %v5787
          %v6184 = vunpack.c.h.b16 %v5787
          %v6185 = vunpack.c.l.b16 %v5788
          %v6186 = vunpack.c.h.b16 %v5788
          %v6187 = vunpack.c.l.b16 %v5789
          %v6188 = vunpack.c.h.b16 %v5789
          %v6189 = vunpack.c.l.b16 %v5790
          %v6190 = vunpack.c.h.b16 %v5790
          %v6191 = vunpack.c.l.b16 %v5791
          %v6192 = vunpack.c.h.b16 %v5791
          %v6193 = vunpack.c.l.b16 %v5792
          %v6194 = vunpack.c.h.b16 %v5792
          %v6195 = vpack.c.b16 %v5947, %v5939
          %v6196 = vpack.c.b16 %v5948, %v5940
          %v6197 = vpack.c.b16 %v5949, %v5941
          %v6198 = vpack.c.b16 %v5950, %v5942
          %v6199 = vpack.c.b16 %v5951, %v5943
          %v6200 = vpack.c.b16 %v5952, %v5944
          %v6201 = vpack.c.b16 %v5953, %v5945
          %v6202 = vpack.c.b16 %v5954, %v5946
          %v6203 = vpack.c.b16 %v5963, %v5955
          %v6204 = vpack.c.b16 %v5964, %v5956
          %v6205 = vpack.c.b16 %v5965, %v5957
          %v6206 = vpack.c.b16 %v5966, %v5958
          %v6207 = vpack.c.b16 %v5967, %v5959
          %v6208 = vpack.c.b16 %v5968, %v5960
          %v6209 = vpack.c.b16 %v5969, %v5961
          %v6210 = vpack.c.b16 %v5970, %v5962
          %v6211 = vpack.c.b16 %v5979, %v5971
          %v6212 = vpack.c.b16 %v5980, %v5972
          %v6213 = vpack.c.b16 %v5981, %v5973
          %v6214 = vpack.c.b16 %v5982, %v5974
          %v6215 = vpack.c.b16 %v5983, %v5975
          %v6216 = vpack.c.b16 %v5984, %v5976
          %v6217 = vpack.c.b16 %v5985, %v5977
          %v6218 = vpack.c.b16 %v5986, %v5978
          %v6219 = vpack.c.b16 %v5995, %v5987
          %v6220 = vpack.c.b16 %v5996, %v5988
          %v6221 = vpack.c.b16 %v5997, %v5989
          %v6222 = vpack.c.b16 %v5998, %v5990
          %v6223 = vpack.c.b16 %v5999, %v5991
          %v6224 = vpack.c.b16 %v6000, %v5992
          %v6225 = vpack.c.b16 %v6001, %v5993
          %v6226 = vpack.c.b16 %v6002, %v5994
          %v6227 = vpack.c.b16 %v6011, %v6003
          %v6228 = vpack.c.b16 %v6012, %v6004
          %v6229 = vpack.c.b16 %v6013, %v6005
          %v6230 = vpack.c.b16 %v6014, %v6006
          %v6231 = vpack.c.b16 %v6015, %v6007
          %v6232 = vpack.c.b16 %v6016, %v6008
          %v6233 = vpack.c.b16 %v6017, %v6009
          %v6234 = vpack.c.b16 %v6018, %v6010
          %v6235 = vpack.c.b16 %v6027, %v6019
          %v6236 = vpack.c.b16 %v6028, %v6020
          %v6237 = vpack.c.b16 %v6029, %v6021
          %v6238 = vpack.c.b16 %v6030, %v6022
          %v6239 = vpack.c.b16 %v6031, %v6023
          %v6240 = vpack.c.b16 %v6032, %v6024
          %v6241 = vpack.c.b16 %v6033, %v6025
          %v6242 = vpack.c.b16 %v6034, %v6026
          %v6243 = vpack.c.b16 %v6043, %v6035
          %v6244 = vpack.c.b16 %v6044, %v6036
          %v6245 = vpack.c.b16 %v6045, %v6037
          %v6246 = vpack.c.b16 %v6046, %v6038
          %v6247 = vpack.c.b16 %v6047, %v6039
          %v6248 = vpack.c.b16 %v6048, %v6040
          %v6249 = vpack.c.b16 %v6049, %v6041
          %v6250 = vpack.c.b16 %v6050, %v6042
          %v6251 = vpack.c.b16 %v6059, %v6051
          %v6252 = vpack.c.b16 %v6060, %v6052
          %v6253 = vpack.c.b16 %v6061, %v6053
          %v6254 = vpack.c.b16 %v6062, %v6054
          %v6255 = vpack.c.b16 %v6063, %v6055
          %v6256 = vpack.c.b16 %v6064, %v6056
          %v6257 = vpack.c.b16 %v6065, %v6057
          %v6258 = vpack.c.b16 %v6066, %v6058
          %v6259 = vpack.c.b16 %v6075, %v6067
          %v6260 = vpack.c.b16 %v6076, %v6068
          %v6261 = vpack.c.b16 %v6077, %v6069
          %v6262 = vpack.c.b16 %v6078, %v6070
          %v6263 = vpack.c.b16 %v6079, %v6071
          %v6264 = vpack.c.b16 %v6080, %v6072
          %v6265 = vpack.c.b16 %v6081, %v6073
          %v6266 = vpack.c.b16 %v6082, %v6074
          %v6267 = vpack.c.b16 %v6091, %v6083
          %v6268 = vpack.c.b16 %v6092, %v6084
          %v6269 = vpack.c.b16 %v6093, %v6085
          %v6270 = vpack.c.b16 %v6094, %v6086
          %v6271 = vpack.c.b16 %v6095, %v6087
          %v6272 = vpack.c.b16 %v6096, %v6088
          %v6273 = vpack.c.b16 %v6097, %v6089
          %v6274 = vpack.c.b16 %v6098, %v6090
          %v6275 = vpack.c.b16 %v6107, %v6099
          %v6276 = vpack.c.b16 %v6108, %v6100
          %v6277 = vpack.c.b16 %v6109, %v6101
          %v6278 = vpack.c.b16 %v6110, %v6102
          %v6279 = vpack.c.b16 %v6111, %v6103
          %v6280 = vpack.c.b16 %v6112, %v6104
          %v6281 = vpack.c.b16 %v6113, %v6105
          %v6282 = vpack.c.b16 %v6114, %v6106
          %v6283 = vpack.c.b16 %v6123, %v6115
          %v6284 = vpack.c.b16 %v6124, %v6116
          %v6285 = vpack.c.b16 %v6125, %v6117
          %v6286 = vpack.c.b16 %v6126, %v6118
          %v6287 = vpack.c.b16 %v6127, %v6119
          %v6288 = vpack.c.b16 %v6128, %v6120
          %v6289 = vpack.c.b16 %v6129, %v6121
          %v6290 = vpack.c.b16 %v6130, %v6122
          %v6291 = vpack.c.b16 %v6139, %v6131
          %v6292 = vpack.c.b16 %v6140, %v6132
          %v6293 = vpack.c.b16 %v6141, %v6133
          %v6294 = vpack.c.b16 %v6142, %v6134
          %v6295 = vpack.c.b16 %v6143, %v6135
          %v6296 = vpack.c.b16 %v6144, %v6136
          %v6297 = vpack.c.b16 %v6145, %v6137
          %v6298 = vpack.c.b16 %v6146, %v6138
          %v6299 = vpack.c.b16 %v6155, %v6147
          %v6300 = vpack.c.b16 %v6156, %v6148
          %v6301 = vpack.c.b16 %v6157, %v6149
          %v6302 = vpack.c.b16 %v6158, %v6150
          %v6303 = vpack.c.b16 %v6159, %v6151
          %v6304 = vpack.c.b16 %v6160, %v6152
          %v6305 = vpack.c.b16 %v6161, %v6153
          %v6306 = vpack.c.b16 %v6162, %v6154
          %v6307 = vpack.c.b16 %v6171, %v6163
          %v6308 = vpack.c.b16 %v6172, %v6164
          %v6309 = vpack.c.b16 %v6173, %v6165
          %v6310 = vpack.c.b16 %v6174, %v6166
          %v6311 = vpack.c.b16 %v6175, %v6167
          %v6312 = vpack.c.b16 %v6176, %v6168
          %v6313 = vpack.c.b16 %v6177, %v6169
          %v6314 = vpack.c.b16 %v6178, %v6170
          %v6315 = vpack.c.b16 %v6187, %v6179
          %v6316 = vpack.c.b16 %v6188, %v6180
          %v6317 = vpack.c.b16 %v6189, %v6181
          %v6318 = vpack.c.b16 %v6190, %v6182
          %v6319 = vpack.c.b16 %v6191, %v6183
          %v6320 = vpack.c.b16 %v6192, %v6184
          %v6321 = vpack.c.b16 %v6193, %v6185
          %v6322 = vpack.c.b16 %v6194, %v6186
          %6451 = vmatpush.bf16.msra.mxu0 %v6251
          %6452 = vmatpush.bf16.msra.mxu0 %v6243
          %6453 = vmatpush.bf16.msra.mxu0 %v6235
          %6454 = vmatpush.bf16.msra.mxu0 %v6227
          %6455 = vmatpush.bf16.msra.mxu0 %v6219
          %6456 = vmatpush.bf16.msra.mxu0 %v6211
          %6457 = vmatpush.bf16.msra.mxu0 %v6203
          %6458 = vmatpush.bf16.msra.mxu0 %v6195
          %6459 = vmatmul.bf16.gmra.mxu0 %v5663
          %v6460 = vpop.f32.mrf.mxu0
          %v6461 = vadd.f32 %v5795, %v6460
          %v6462 = vpop.f32.mrf.mxu0
          %6463 = vdwg.mxu0
          %6464 = vmatpush.bf16.msra.mxu0 %v6315
          %6465 = vmatpush.bf16.msra.mxu0 %v6307
          %6466 = vmatpush.bf16.msra.mxu0 %v6299
          %6467 = vmatpush.bf16.msra.mxu0 %v6291
          %6468 = vmatpush.bf16.msra.mxu0 %v6283
          %6469 = vmatpush.bf16.msra.mxu0 %v6275
          %6470 = vmatpush.bf16.msra.mxu0 %v6267
          %6471 = vmatpush.bf16.msra.mxu0 %v6259
          %6472 = vmatmul.bf16.gmra.mxu0 %v5664
          %v6473 = vpop.f32.mrf.mxu0
          %v6474 = vadd.f32 %v6461, %v6473
          %v6475 = vpop.f32.mrf.mxu0
          %6476 = vdwg.mxu0
          %6477 = vmatpush.bf16.msra.mxu0 %v6252
          %6478 = vmatpush.bf16.msra.mxu0 %v6244
          %6479 = vmatpush.bf16.msra.mxu0 %v6236
          %6480 = vmatpush.bf16.msra.mxu0 %v6228
          %6481 = vmatpush.bf16.msra.mxu0 %v6220
          %6482 = vmatpush.bf16.msra.mxu0 %v6212
          %6483 = vmatpush.bf16.msra.mxu0 %v6204
          %6484 = vmatpush.bf16.msra.mxu0 %v6196
          %6485 = vmatmul.bf16.gmra.mxu0 %v5663
          %v6486 = vpop.f32.mrf.mxu0
          %v6487 = vadd.f32 %v5796, %v6486
          %v6488 = vpop.f32.mrf.mxu0
          %6489 = vdwg.mxu0
          %6490 = vmatpush.bf16.msra.mxu0 %v6316
          %6491 = vmatpush.bf16.msra.mxu0 %v6308
          %6492 = vmatpush.bf16.msra.mxu0 %v6300
          %6493 = vmatpush.bf16.msra.mxu0 %v6292
          %6494 = vmatpush.bf16.msra.mxu0 %v6284
          %6495 = vmatpush.bf16.msra.mxu0 %v6276
          %6496 = vmatpush.bf16.msra.mxu0 %v6268
          %6497 = vmatpush.bf16.msra.mxu0 %v6260
          %6498 = vmatmul.bf16.gmra.mxu0 %v5664
          %v6499 = vpop.f32.mrf.mxu0
          %v6500 = vadd.f32 %v6487, %v6499
          %v6501 = vpop.f32.mrf.mxu0
          %6502 = vdwg.mxu0
          %6503 = vmatpush.bf16.msra.mxu0 %v6253
          %6504 = vmatpush.bf16.msra.mxu0 %v6245
          %6505 = vmatpush.bf16.msra.mxu0 %v6237
          %6506 = vmatpush.bf16.msra.mxu0 %v6229
          %6507 = vmatpush.bf16.msra.mxu0 %v6221
          %6508 = vmatpush.bf16.msra.mxu0 %v6213
          %6509 = vmatpush.bf16.msra.mxu0 %v6205
          %6510 = vmatpush.bf16.msra.mxu0 %v6197
          %6511 = vmatmul.bf16.gmra.mxu0 %v5663
          %v6512 = vpop.f32.mrf.mxu0
          %v6513 = vadd.f32 %v5797, %v6512
          %v6514 = vpop.f32.mrf.mxu0
          %6515 = vdwg.mxu0
          %6516 = vmatpush.bf16.msra.mxu0 %v6317
          %6517 = vmatpush.bf16.msra.mxu0 %v6309
          %6518 = vmatpush.bf16.msra.mxu0 %v6301
          %6519 = vmatpush.bf16.msra.mxu0 %v6293
          %6520 = vmatpush.bf16.msra.mxu0 %v6285
          %6521 = vmatpush.bf16.msra.mxu0 %v6277
          %6522 = vmatpush.bf16.msra.mxu0 %v6269
          %6523 = vmatpush.bf16.msra.mxu0 %v6261
          %6524 = vmatmul.bf16.gmra.mxu0 %v5664
          %v6525 = vpop.f32.mrf.mxu0
          %v6526 = vadd.f32 %v6513, %v6525
          %v6527 = vpop.f32.mrf.mxu0
          %6528 = vdwg.mxu0
          %6529 = vmatpush.bf16.msra.mxu0 %v6254
          %6530 = vmatpush.bf16.msra.mxu0 %v6246
          %6531 = vmatpush.bf16.msra.mxu0 %v6238
          %6532 = vmatpush.bf16.msra.mxu0 %v6230
          %6533 = vmatpush.bf16.msra.mxu0 %v6222
          %6534 = vmatpush.bf16.msra.mxu0 %v6214
          %6535 = vmatpush.bf16.msra.mxu0 %v6206
          %6536 = vmatpush.bf16.msra.mxu0 %v6198
          %6537 = vmatmul.bf16.gmra.mxu0 %v5663
          %v6538 = vpop.f32.mrf.mxu0
          %v6539 = vadd.f32 %v5798, %v6538
          %v6540 = vpop.f32.mrf.mxu0
          %6541 = vdwg.mxu0
          %6542 = vmatpush.bf16.msra.mxu0 %v6318
          %6543 = vmatpush.bf16.msra.mxu0 %v6310
          %6544 = vmatpush.bf16.msra.mxu0 %v6302
          %6545 = vmatpush.bf16.msra.mxu0 %v6294
          %6546 = vmatpush.bf16.msra.mxu0 %v6286
          %6547 = vmatpush.bf16.msra.mxu0 %v6278
          %6548 = vmatpush.bf16.msra.mxu0 %v6270
          %6549 = vmatpush.bf16.msra.mxu0 %v6262
          %6550 = vmatmul.bf16.gmra.mxu0 %v5664
          %v6551 = vpop.f32.mrf.mxu0
          %v6552 = vadd.f32 %v6539, %v6551
          %v6553 = vpop.f32.mrf.mxu0
          %6554 = vdwg.mxu0
          %6555 = vmatpush.bf16.msra.mxu0 %v6255
          %6556 = vmatpush.bf16.msra.mxu0 %v6247
          %6557 = vmatpush.bf16.msra.mxu0 %v6239
          %6558 = vmatpush.bf16.msra.mxu0 %v6231
          %6559 = vmatpush.bf16.msra.mxu0 %v6223
          %6560 = vmatpush.bf16.msra.mxu0 %v6215
          %6561 = vmatpush.bf16.msra.mxu0 %v6207
          %6562 = vmatpush.bf16.msra.mxu0 %v6199
          %6563 = vmatmul.bf16.gmra.mxu0 %v5663
          %v6564 = vpop.f32.mrf.mxu0
          %v6565 = vadd.f32 %v5799, %v6564
          %v6566 = vpop.f32.mrf.mxu0
          %6567 = vdwg.mxu0
          %6568 = vmatpush.bf16.msra.mxu0 %v6319
          %6569 = vmatpush.bf16.msra.mxu0 %v6311
          %6570 = vmatpush.bf16.msra.mxu0 %v6303
          %6571 = vmatpush.bf16.msra.mxu0 %v6295
          %6572 = vmatpush.bf16.msra.mxu0 %v6287
          %6573 = vmatpush.bf16.msra.mxu0 %v6279
          %6574 = vmatpush.bf16.msra.mxu0 %v6271
          %6575 = vmatpush.bf16.msra.mxu0 %v6263
          %6576 = vmatmul.bf16.gmra.mxu0 %v5664
          %v6577 = vpop.f32.mrf.mxu0
          %v6578 = vadd.f32 %v6565, %v6577
          %v6579 = vpop.f32.mrf.mxu0
          %6580 = vdwg.mxu0
          %6581 = vmatpush.bf16.msra.mxu0 %v6256
          %6582 = vmatpush.bf16.msra.mxu0 %v6248
          %6583 = vmatpush.bf16.msra.mxu0 %v6240
          %6584 = vmatpush.bf16.msra.mxu0 %v6232
          %6585 = vmatpush.bf16.msra.mxu0 %v6224
          %6586 = vmatpush.bf16.msra.mxu0 %v6216
          %6587 = vmatpush.bf16.msra.mxu0 %v6208
          %6588 = vmatpush.bf16.msra.mxu0 %v6200
          %6589 = vmatmul.bf16.gmra.mxu0 %v5663
          %v6590 = vpop.f32.mrf.mxu0
          %v6591 = vadd.f32 %v5800, %v6590
          %v6592 = vpop.f32.mrf.mxu0
          %6593 = vdwg.mxu0
          %6594 = vmatpush.bf16.msra.mxu0 %v6320
          %6595 = vmatpush.bf16.msra.mxu0 %v6312
          %6596 = vmatpush.bf16.msra.mxu0 %v6304
          %6597 = vmatpush.bf16.msra.mxu0 %v6296
          %6598 = vmatpush.bf16.msra.mxu0 %v6288
          %6599 = vmatpush.bf16.msra.mxu0 %v6280
          %6600 = vmatpush.bf16.msra.mxu0 %v6272
          %6601 = vmatpush.bf16.msra.mxu0 %v6264
          %6602 = vmatmul.bf16.gmra.mxu0 %v5664
          %v6603 = vpop.f32.mrf.mxu0
          %v6604 = vadd.f32 %v6591, %v6603
          %v6605 = vpop.f32.mrf.mxu0
          %6606 = vdwg.mxu0
          %6607 = vmatpush.bf16.msra.mxu0 %v6257
          %6608 = vmatpush.bf16.msra.mxu0 %v6249
          %6609 = vmatpush.bf16.msra.mxu0 %v6241
          %6610 = vmatpush.bf16.msra.mxu0 %v6233
          %6611 = vmatpush.bf16.msra.mxu0 %v6225
          %6612 = vmatpush.bf16.msra.mxu0 %v6217
          %6613 = vmatpush.bf16.msra.mxu0 %v6209
          %6614 = vmatpush.bf16.msra.mxu0 %v6201
          %6615 = vmatmul.bf16.gmra.mxu0 %v5663
          %v6616 = vpop.f32.mrf.mxu0
          %v6617 = vadd.f32 %v5801, %v6616
          %v6618 = vpop.f32.mrf.mxu0
          %6619 = vdwg.mxu0
          %6620 = vmatpush.bf16.msra.mxu0 %v6321
          %6621 = vmatpush.bf16.msra.mxu0 %v6313
          %6622 = vmatpush.bf16.msra.mxu0 %v6305
          %6623 = vmatpush.bf16.msra.mxu0 %v6297
          %6624 = vmatpush.bf16.msra.mxu0 %v6289
          %6625 = vmatpush.bf16.msra.mxu0 %v6281
          %6626 = vmatpush.bf16.msra.mxu0 %v6273
          %6627 = vmatpush.bf16.msra.mxu0 %v6265
          %6628 = vmatmul.bf16.gmra.mxu0 %v5664
          %v6629 = vpop.f32.mrf.mxu0
          %v6630 = vadd.f32 %v6617, %v6629
          %v6631 = vpop.f32.mrf.mxu0
          %6632 = vdwg.mxu0
          %6633 = vmatpush.bf16.msra.mxu0 %v6258
          %6634 = vmatpush.bf16.msra.mxu0 %v6250
          %6635 = vmatpush.bf16.msra.mxu0 %v6242
          %6636 = vmatpush.bf16.msra.mxu0 %v6234
          %6637 = vmatpush.bf16.msra.mxu0 %v6226
          %6638 = vmatpush.bf16.msra.mxu0 %v6218
          %6639 = vmatpush.bf16.msra.mxu0 %v6210
          %6640 = vmatpush.bf16.msra.mxu0 %v6202
          %6641 = vmatmul.bf16.gmra.mxu0 %v5663
          %v6642 = vpop.f32.mrf.mxu0
          %v6643 = vadd.f32 %v5802, %v6642
          %v6644 = vpop.f32.mrf.mxu0
          %6645 = vdwg.mxu0
          %6646 = vmatpush.bf16.msra.mxu0 %v6322
          %6647 = vmatpush.bf16.msra.mxu0 %v6314
          %6648 = vmatpush.bf16.msra.mxu0 %v6306
          %6649 = vmatpush.bf16.msra.mxu0 %v6298
          %6650 = vmatpush.bf16.msra.mxu0 %v6290
          %6651 = vmatpush.bf16.msra.mxu0 %v6282
          %6652 = vmatpush.bf16.msra.mxu0 %v6274
          %6653 = vmatpush.bf16.msra.mxu0 %v6266
          %6654 = vmatmul.bf16.gmra.mxu0 %v5664
          %v6655 = vpop.f32.mrf.mxu0
          %v6656 = vadd.f32 %v6643, %v6655
          %v6657 = vpop.f32.mrf.mxu0
          %6658 = vdwg.mxu0
          %v6659 = vlaneseq
          %v6660 = vand.u32 %v6659, 127
          %v6661 = vadd.s32 %v6660, 128
          %v6662 = vadd.s32 %v6660, 256
          %v6663 = vadd.s32 %v6660, 384
          %v6664 = vadd.s32 %v6660, 512
          %v6665 = vadd.s32 %v6660, 640
          %v6666 = vadd.s32 %v6660, 768
          %v6667 = vadd.s32 %v6660, 896
          %vm6668 = vcmp.lt.s32.totalorder %v6660, 1000
          %vm6669 = vcmp.lt.s32.totalorder %v6661, 1000
          %vm6670 = vcmp.lt.s32.totalorder %v6662, 1000
          %vm6671 = vcmp.lt.s32.totalorder %v6663, 1000
          %vm6672 = vcmp.lt.s32.totalorder %v6664, 1000
          %vm6673 = vcmp.lt.s32.totalorder %v6665, 1000
          %vm6674 = vcmp.lt.s32.totalorder %v6666, 1000
          %vm6675 = vcmp.lt.s32.totalorder %v6667, 1000
          %v6676 = vsel %vm6668, %v6474, -1e+30
          %v6677 = vsel %vm6669, %v6500, -1e+30
          %v6678 = vsel %vm6670, %v6526, -1e+30
          %v6679 = vsel %vm6671, %v6552, -1e+30
          %v6680 = vsel %vm6672, %v6578, -1e+30
          %v6681 = vsel %vm6673, %v6604, -1e+30
          %v6682 = vsel %vm6674, %v6630, -1e+30
          %v6683 = vsel %vm6675, %v6656, -1e+30
          %v6684 = vsel %vm4563, %v6676, -inf
          %v6685 = vsel %vm4563, %v6677, -inf
          %v6686 = vsel %vm4563, %v6678, -inf
          %v6687 = vsel %vm4563, %v6679, -inf
          %v6688 = vsel %vm4563, %v6680, -inf
          %v6689 = vmax.f32 %v6684, %v6688
          %v6690 = vsel %vm4563, %v6681, -inf
          %v6691 = vmax.f32 %v6685, %v6690
          %v6692 = vsel %vm4563, %v6682, -inf
          %v6693 = vmax.f32 %v6686, %v6692
          %v6694 = vsel %vm4563, %v6683, -inf
          %v6695 = vmax.f32 %v6687, %v6694
          %v6696 = vmax.f32 %v6689, %v6691
          %v6697 = vmax.f32 %v6693, %v6695
          %v6698 = vmax.f32 %v6696, %v6697
          %6699 = vmax.xlane.f32.xlu0 %v6698
          %v6700 = vpop.xlane.xlu0 %6699
          %v6701 = vsub.f32 %v6676, %v6700
          %v6702 = vsub.f32 %v6677, %v6700
          %v6703 = vsub.f32 %v6678, %v6700
          %v6704 = vsub.f32 %v6679, %v6700
          %v6705 = vsub.f32 %v6680, %v6700
          %v6706 = vsub.f32 %v6681, %v6700
          %v6707 = vsub.f32 %v6682, %v6700
          %v6708 = vsub.f32 %v6683, %v6700
          %v6709 = vmul.f32 %v6701, 1.442695
          %v6710 = vpow.pop %v6709
          %v6711 = vmul.f32 %v6702, 1.442695
          %v6712 = vpow.pop %v6711
          %v6713 = vmul.f32 %v6703, 1.442695
          %v6714 = vpow.pop %v6713
          %v6715 = vmul.f32 %v6704, 1.442695
          %v6716 = vpow.pop %v6715
          %v6717 = vmul.f32 %v6705, 1.442695
          %v6718 = vpow.pop %v6717
          %v6719 = vmul.f32 %v6706, 1.442695
          %v6720 = vpow.pop %v6719
          %v6721 = vmul.f32 %v6707, 1.442695
          %v6722 = vpow.pop %v6721
          %v6723 = vmul.f32 %v6708, 1.442695
          %v6724 = vpow.pop %v6723
          %v6725 = vsel %vm4563, %v6710, 0.0
          %v6726 = vsel %vm4563, %v6712, 0.0
          %v6727 = vadd.f32 %v6725, %v6726
          %v6728 = vsel %vm4563, %v6714, 0.0
          %v6729 = vadd.f32 %v6727, %v6728
          %v6730 = vsel %vm4563, %v6716, 0.0
          %v6731 = vadd.f32 %v6729, %v6730
          %v6732 = vsel %vm4563, %v6718, 0.0
          %v6733 = vadd.f32 %v6731, %v6732
          %v6734 = vsel %vm4563, %v6720, 0.0
          %v6735 = vadd.f32 %v6733, %v6734
          %v6736 = vsel %vm4563, %v6722, 0.0
          %v6737 = vadd.f32 %v6735, %v6736
          %v6738 = vsel %vm4563, %v6724, 0.0
          %v6739 = vadd.f32 %v6737, %v6738
          %6740 = vadd.xlane.f32.xlu0 %v6739
          %v6741 = vpop.xlane.xlu0 %6740
          %v6742 = vrcp.pop %v6741
          %v6743 = vmul.f32 %v6741, %v6742
          %v6744 = vsub.f32 1.0, %v6743
          %v6745 = vmul.f32 %v6742, %v6744
          %v6746 = vadd.f32 %v6742, %v6745
          %vm6747 = vweird.f32 %v6741
          %vm6748 = vweird.f32 %v6742
          %vm6749 = vmor %vm6747, %vm6748
          %v6750 = vsel %vm6749, %v6742, %v6746
          %v6751 = vand.u32 2147483647, %v6741
          %vm6752 = vcmp.eq.f32.partialorder %v6751, 8.507059e+37
          %v6753 = vand.u32 %v6741, 2147483648
          %v6754 = vor.u32 1.1754944e-38, %v6753
          %v6755 = vsel %vm6752, %v6754, %v6750
          %v6756 = vmul.f32 %v6710, %v6755
          %v6757 = vmul.f32 %v6712, %v6755
          %v6758 = vmul.f32 %v6714, %v6755
          %v6759 = vmul.f32 %v6716, %v6755
          %v6760 = vmul.f32 %v6718, %v6755
          %v6761 = vmul.f32 %v6720, %v6755
          %v6762 = vmul.f32 %v6722, %v6755
          %v6763 = vmul.f32 %v6724, %v6755
          %v6772 = vrot.slane %v6757, 6
          %v6773 = vrot.slane %v6758, 4
          %v6774 = vrot.slane %v6759, 2
          %v6775 = vrot.slane %v6761, 6
          %v6776 = vrot.slane %v6762, 4
          %v6777 = vrot.slane %v6763, 2
          %v6778 = vsel %vm4563, %v6756, %v6772
          %v6779 = vsel %vm4565, %v6773, %v6774
          %v6780 = vsel %vm4567, %v6778, %v6779
          %v6781 = vsel %vm4563, %v6760, %v6775
          %v6782 = vsel %vm4565, %v6776, %v6777
          %v6783 = vsel %vm4567, %v6781, %v6782
          %6786 = vst [vmem:[#allocation19] sm:$0xff] %v6780
          %6787 = vst [vmem:[#allocation19 + $0x8] sm:$0xff] %v6783
          %v6788 = vsel %vm4563, %v6756, -inf
          %v6789 = vsel %vm4563, %v6757, -inf
          %v6790 = vsel %vm4563, %v6758, -inf
          %v6791 = vsel %vm4563, %v6759, -inf
          %v6792 = vsel %vm4563, %v6760, -inf
          %v6793 = vmax.f32 %v6788, %v6792
          %v6794 = vsel %vm4563, %v6761, -inf
          %v6795 = vmax.f32 %v6789, %v6794
          %v6796 = vsel %vm4563, %v6762, -inf
          %v6797 = vmax.f32 %v6790, %v6796
          %v6798 = vsel %vm4563, %v6763, -inf
          %v6799 = vmax.f32 %v6791, %v6798
          %v6800 = vmax.f32 %v6793, %v6795
          %v6801 = vmax.f32 %v6797, %v6799
          %v6802 = vmax.f32 %v6800, %v6801
          %6803 = vmax.xlane.f32.xlu0 %v6802
          %v6804 = vpop.xlane.xlu0 %6803
          %vm6805 = vcmp.eq.f32.partialorder %v6756, %v6804
          %vm6806 = vcmp.eq.f32.partialorder %v6757, %v6804
          %vm6807 = vcmp.eq.f32.partialorder %v6758, %v6804
          %vm6808 = vcmp.eq.f32.partialorder %v6759, %v6804
          %vm6809 = vcmp.eq.f32.partialorder %v6760, %v6804
          %vm6810 = vcmp.eq.f32.partialorder %v6761, %v6804
          %vm6811 = vcmp.eq.f32.partialorder %v6762, %v6804
          %vm6812 = vcmp.eq.f32.partialorder %v6763, %v6804
          %v6813 = vcvt.s32.f32 %v6660
          %v6814 = vcvt.s32.f32 %v6661
          %v6815 = vcvt.s32.f32 %v6662
          %v6816 = vcvt.s32.f32 %v6663
          %v6817 = vcvt.s32.f32 %v6664
          %v6818 = vcvt.s32.f32 %v6665
          %v6819 = vcvt.s32.f32 %v6666
          %v6820 = vcvt.s32.f32 %v6667
          %v6821 = vsel %vm6805, %v6813, 1024.0
          %v6822 = vsel %vm6806, %v6814, 1024.0
          %v6823 = vsel %vm6807, %v6815, 1024.0
          %v6824 = vsel %vm6808, %v6816, 1024.0
          %v6825 = vsel %vm6809, %v6817, 1024.0
          %v6826 = vsel %vm6810, %v6818, 1024.0
          %v6827 = vsel %vm6811, %v6819, 1024.0
          %v6828 = vsel %vm6812, %v6820, 1024.0
          %v6829 = vsel %vm4563, %v6821, inf
          %v6830 = vsel %vm4563, %v6822, inf
          %v6831 = vsel %vm4563, %v6823, inf
          %v6832 = vsel %vm4563, %v6824, inf
          %v6833 = vsel %vm4563, %v6825, inf
          %v6834 = vmin.f32 %v6829, %v6833
          %v6835 = vsel %vm4563, %v6826, inf
          %v6836 = vmin.f32 %v6830, %v6835
          %v6837 = vsel %vm4563, %v6827, inf
          %v6838 = vmin.f32 %v6831, %v6837
          %v6839 = vsel %vm4563, %v6828, inf
          %v6840 = vmin.f32 %v6832, %v6839
          %v6841 = vmin.f32 %v6834, %v6836
          %v6842 = vmin.f32 %v6838, %v6840
          %v6843 = vmin.f32 %v6841, %v6842
          %6844 = vmin.xlane.f32.xlu0 %v6843
          %v6845 = vpop.xlane.xlu0 %6844
          %v6846 = vcvt.f32.s32.to.zero.pseudo %v6845
          %vm6847 = vcmask 1024
          %6848 = vst.msk [vmem:[%s12] sm:$0x3] %vm6847, %v6846
        $region104: #{ir50_vib_forward.3} parent=59 // pred_fallthru
          _
        // Predicated region
        $region105: #{ir50_vib_forward.3} parent=59 // pred_check
          %p6849 = pneg %p269
        $region106: #{ir50_vib_forward.3} parent=59 // pred_check_branch
          %6851 = sbr.rel (%p6849) target = $region108
        $region107: #{ir50_vib_forward.3} parent=59 // pred_region
          %6853 = vsyncadd [#allocation5], 0
          %s6855 = sshll.u32 [#allocation18], 4
          %s6856 = int_to_ptr.vmem [resolvable:$true] %s6855
          %s6857 = sshll.u32 %s10, 4
          %s6858 = int_to_ptr.hbm [resolvable:$true] %s6857
          %6860 = dma.vmem_to_hbm [thread:$0]  %s6856, 128, %s6858, [#allocation5]
        $region108: #{ir50_vib_forward.3} parent=59 // pred_fallthru
          _
        // Predicated region
        $region109: #{ir50_vib_forward.3} parent=59 // pred_check
          %p6861 = pneg %p290
        $region110: #{ir50_vib_forward.3} parent=59 // pred_check_branch
          %6863 = sbr.rel (%p6861) target = $region112
        $region111: #{ir50_vib_forward.3} parent=59 // pred_region
          %6865 = vsyncadd [#allocation20], 0
          %s6867 = sshll.u32 [#allocation19], 4
          %s6868 = int_to_ptr.vmem [resolvable:$true] %s6867
          %s6869 = sshll.u32 %s11, 4
          %s6870 = int_to_ptr.hbm [resolvable:$true] %s6869
          %6872 = dma.vmem_to_hbm [thread:$0]  %s6868, 256, %s6870, [#allocation20]
        $region112: #{ir50_vib_forward.3} parent=59 // pred_fallthru
          _
        // Predicated region
        $region113: #{ir50_vib_forward.3} parent=59 // pred_check
          %p6873 = pneg %p311
        $region114: #{ir50_vib_forward.3} parent=59 // pred_check_branch
          %6875 = sbr.rel (%p6873) target = $region116
        $region115: #{ir50_vib_forward.3} parent=59 // pred_region
          _
        $region116: #{ir50_vib_forward.3} parent=59 // pred_fallthru
          _
        // Predicated region
        $region117: #{ir50_vib_forward.3} parent=59 // pred_check
          %p6876 = pneg %p332
        $region118: #{ir50_vib_forward.3} parent=59 // pred_check_branch
          %6878 = sbr.rel (%p6876) target = $region120
        $region119: #{ir50_vib_forward.3} parent=59 // pred_region
          %6880 = vsyncadd [#allocation20], 0
          %s6882 = sshll.u32 [#allocation21], 4
          %s6883 = int_to_ptr.vmem [resolvable:$true] %s6882
          %s6884 = sshll.u32 %s13, 4
          %s6885 = int_to_ptr.hbm [resolvable:$true] %s6884
          %6887 = dma.vmem_to_hbm [thread:$0]  %s6883, 64, %s6885, [#allocation20]
        $region120: #{ir50_vib_forward.3} parent=59 // pred_fallthru
          _
        // Predicated region
        $region121: #{ir50_vib_forward.3} parent=59 // pred_check
          %p6888 = pneg %p353
        $region122: #{ir50_vib_forward.3} parent=59 // pred_check_branch
          %6890 = sbr.rel (%p6888) target = $region124
        $region123: #{ir50_vib_forward.3} parent=59 // pred_region
          %6892 = vsyncadd [#allocation23], 0
          %s6894 = sshll.u32 [#allocation22], 4
          %s6895 = int_to_ptr.vmem [resolvable:$true] %s6894
          %s6896 = sshll.u32 %s14, 4
          %s6897 = int_to_ptr.hbm [resolvable:$true] %s6896
          %6899 = dma.vmem_to_hbm [thread:$0]  %s6895, 64, %s6897, [#allocation23]
        $region124: #{ir50_vib_forward.3} parent=59 // pred_fallthru
          _
        // Predicated region
        $region125: #{ir50_vib_forward.3} parent=59 // pred_check
          %p6900 = pneg %p269
        $region126: #{ir50_vib_forward.3} parent=59 // pred_check_branch
          %6902 = sbr.rel (%p6900) target = $region128
        $region127: #{ir50_vib_forward.3} parent=59 // pred_region
          %6904 = dma.done [#allocation5], 128
        $region128: #{ir50_vib_forward.3} parent=59 // pred_fallthru
          _
        // Predicated region
        $region129: #{ir50_vib_forward.3} parent=59 // pred_check
          %p6905 = pneg %p290
        $region130: #{ir50_vib_forward.3} parent=59 // pred_check_branch
          %6907 = sbr.rel (%p6905) target = $region132
        $region131: #{ir50_vib_forward.3} parent=59 // pred_region
          %6909 = dma.done [#allocation20], 256
        $region132: #{ir50_vib_forward.3} parent=59 // pred_fallthru
          _
        // Predicated region
        $region133: #{ir50_vib_forward.3} parent=59 // pred_check
          %p6910 = pneg %p311
        $region134: #{ir50_vib_forward.3} parent=59 // pred_check_branch
          %6912 = sbr.rel (%p6910) target = $region136
        $region135: #{ir50_vib_forward.3} parent=59 // pred_region
          _
        $region136: #{ir50_vib_forward.3} parent=59 // pred_fallthru
          _
        // Predicated region
        $region137: #{ir50_vib_forward.3} parent=59 // pred_check
          %p6913 = pneg %p332
        $region138: #{ir50_vib_forward.3} parent=59 // pred_check_branch
          %6915 = sbr.rel (%p6913) target = $region140
        $region139: #{ir50_vib_forward.3} parent=59 // pred_region
          %6917 = dma.done [#allocation20], 64
        $region140: #{ir50_vib_forward.3} parent=59 // pred_fallthru
          _
        // Predicated region
        $region141: #{ir50_vib_forward.3} parent=59 // pred_check
          %p6918 = pneg %p353
        $region142: #{ir50_vib_forward.3} parent=59 // pred_check_branch
          %6920 = sbr.rel (%p6918) target = $region144
        $region143: #{ir50_vib_forward.3} parent=59 // pred_region
          %6922 = dma.done [#allocation23], 64
        $region144: #{ir50_vib_forward.3} parent=59 // pred_fallthru
          _
      $region60: #{ir50_vib_forward.3} parent=5 // pred_fallthru
        _
      %p6923 = scmp.le.s32.totalorder 2, %s31
      // Predicated region
      $region145: #{ir50_vib_forward.3} parent=5 // pred_check
        %p6924 = pneg %p6923
      $region146: #{ir50_vib_forward.3} parent=5 // pred_check_branch
        %6926 = sbr.rel (%p6924) target = $region148
      $region147: #{ir50_vib_forward.3} parent=5 // pred_region
        %s6927 = ssub.s32 %s31, 2
      $region148: #{ir50_vib_forward.3} parent=5 // pred_fallthru
        _
    $region6: #{ir50_vib_forward.3} parent=1 // loop_footer
      %s35 = sadd.s32 1, %s31
    $region7: #{ir50_vib_forward.3} parent=1 // loop_footer_branch
      %30 = sbr.rel target = $region3
    $region8: #{ir50_vib_forward.3} parent=1 // loop_exit
      _
    %6928 = vsyncpa [#allocation4], 1
    %s6929 = scalar_lea.sflag [#allocation4], 1
    %6930 = vsyncpa %s6929, 1
    %6931 = vsyncpa [#allocation7], 1
    %6932 = vsyncpa [#allocation10], 1
    %6933 = vsyncpa [#allocation13], 1
    %6934 = vsyncpa [#allocation16], 1
    %6935 = vsyncpa [#allocation5], 1
    %s6936 = scalar_lea.sflag [#allocation5], 1
    %6937 = vsyncpa %s6936, 1
    %6938 = vsyncpa [#allocation20], 1
    %6939 = vsyncpa [#allocation23], 1

</llo_original>
